<compile_context>
chip_gen: v7x
topology: tpu7x:2x2x1
jax: 0.10.0
libtpu: 0.0.40
codegen_flags: <defaults>
</compile_context>

<pallas_src>
import functools

import jax
import jax.numpy as jnp
from jax import lax
from jax.experimental import pallas as pl
from jax.experimental.pallas import tpu as pltpu

EPS = 1e-5
_LANE = 128


def _rup(x, m):
    return -(-x // m) * m


def _hw_config():
    # Generation-aware tiling: 128 MiB VMEM parts (v5e/v6e) get big row tiles
    # and a generous scoped-VMEM limit; v7x (64 MiB/TC) or unknown stays tight.
    try:
        cap = pltpu.get_tpu_info().vmem_capacity_bytes
    except Exception:
        cap = 0
    if cap >= 100 * 1024 * 1024:
        return 1024, 96 * 1024 * 1024
    return 512, 40 * 1024 * 1024


_TM, _VMEM_LIMIT = _hw_config()


def _row_tile(m):
    return min(_TM, _rup(m, 8))


def _cparams(n_parallel):
    return pltpu.CompilerParams(
        dimension_semantics=("parallel",) * n_parallel,
        vmem_limit_bytes=_VMEM_LIMIT)


def _bn_affine(gamma, beta, mean, var):
    scale = gamma * lax.rsqrt(var + EPS)
    shift = beta - mean * scale
    return scale[None, :], shift[None, :]


def _pack_stats(s, sq, cols):
    # One (8, cols) slab: sum in sublane 0, sum-of-squares in sublane 1.
    row = lax.broadcasted_iota(jnp.int32, (8, cols), 0)
    return (jnp.where(row == 0, s[None, :], 0.0)
            + jnp.where(row == 1, sq[None, :], 0.0))


def _reduce_stats(stats, m):
    mean = stats[:, 0, :].sum(axis=0) / m
    ex2 = stats[:, 1, :].sum(axis=0) / m
    var = jnp.maximum(ex2 - mean * mean, 0.0)   # clamp: E[x^2]-mean^2 can cancel
    return mean, var


# --------------------------------------------------------------------------
# BN batch statistics of the input (per-tile partials, reduced in JAX).
# --------------------------------------------------------------------------
def _stats_partials(x2d, tm):
    m, c = x2d.shape
    nt = pl.cdiv(m, tm)

    def kernel(x_ref, st_ref):
        i = pl.program_id(0)
        x = x_ref[...].astype(jnp.float32)
        rows = lax.broadcasted_iota(jnp.int32, x.shape, 0)
        xm = jnp.where(rows < (m - i * tm), x, 0.0)   # mask ragged last tile
        st_ref[...] = _pack_stats(jnp.sum(xm, axis=0),
                                  jnp.sum(xm * xm, axis=0), c)[None]

    stats = pl.pallas_call(
        kernel,
        out_shape=jax.ShapeDtypeStruct((nt, 8, c), jnp.float32),
        grid=(nt,),
        in_specs=[pl.BlockSpec((tm, c), lambda i: (i, 0))],
        out_specs=pl.BlockSpec((1, 8, c), lambda i: (i, 0, 0)),
        compiler_params=_cparams(1),
    )(x2d)
    return _reduce_stats(stats, m)


# --------------------------------------------------------------------------
# Stage A: t1 = relu(bn1(x)) @ w1   (+ shortcut = relu(bn1(x)) @ wproj)
#          also emits packed sum / sumsq partials of t1 (stats for bn2).
# --------------------------------------------------------------------------
def _stage_a(x2d, scale, shift, w1, wproj, tm):
    m, cin = x2d.shape
    cout = w1.shape[1]
    nt = pl.cdiv(m, tm)
    with_proj = wproj is not None

    def kernel(*refs):
        if with_proj:
            x_ref, sc_ref, sh_ref, w1_ref, wp_ref, t1_ref, p_ref, st_ref = refs
        else:
            x_ref, sc_ref, sh_ref, w1_ref, t1_ref, st_ref = refs
        i = pl.program_id(0)
        # BN affine + ReLU in f32 (VPU-native), bf16 only at the MXU inputs.
        h = jnp.maximum(x_ref[...].astype(jnp.float32) * sc_ref[...]
                        + sh_ref[...], 0.0)
        hb = h.astype(jnp.bfloat16)
        t1 = jnp.dot(hb, w1_ref[...], preferred_element_type=jnp.float32)
        rows = lax.broadcasted_iota(jnp.int32, t1.shape, 0)
        t1 = jnp.where(rows < (m - i * tm), t1, 0.0)  # mask ragged rows (stats)
        t1_ref[...] = t1.astype(jnp.bfloat16)
        if with_proj:
            p_ref[...] = jnp.dot(hb, wp_ref[...],
                                 preferred_element_type=jnp.float32
                                 ).astype(jnp.bfloat16)
        st_ref[...] = _pack_stats(jnp.sum(t1, axis=0),
                                  jnp.sum(t1 * t1, axis=0), cout)[None]

    in_specs = [pl.BlockSpec((tm, cin), lambda i: (i, 0)),
                pl.BlockSpec((1, cin), lambda i: (0, 0)),
                pl.BlockSpec((1, cin), lambda i: (0, 0)),
                pl.BlockSpec((cin, cout), lambda i: (0, 0))]
    args = [x2d, scale, shift, w1]
    out_shapes = [jax.ShapeDtypeStruct((m, cout), jnp.bfloat16)]
    out_specs = [pl.BlockSpec((tm, cout), lambda i: (i, 0))]
    if with_proj:
        cexp = wproj.shape[1]
        in_specs.append(pl.BlockSpec((cin, cexp), lambda i: (0, 0)))
        args.append(wproj)
        out_shapes.append(jax.ShapeDtypeStruct((m, cexp), jnp.bfloat16))
        out_specs.append(pl.BlockSpec((tm, cexp), lambda i: (i, 0)))
    out_shapes.append(jax.ShapeDtypeStruct((nt, 8, cout), jnp.float32))
    out_specs.append(pl.BlockSpec((1, 8, cout), lambda i: (i, 0, 0)))

    outs = pl.pallas_call(
        kernel,
        out_shape=tuple(out_shapes),
        grid=(nt,),
        in_specs=in_specs,
        out_specs=tuple(out_specs),
        compiler_params=_cparams(1),
    )(*args)

    if with_proj:
        t1, shortcut, stats = outs
    else:
        t1, stats = outs
        shortcut = None
    mean, var = _reduce_stats(stats, m)
    return t1, shortcut, mean, var


# Plain relu(bn(x)) @ w (used only for the strided shortcut when stride > 1).
def _bn_relu_matmul(x2d, scale, shift, w, tm):
    m, cin = x2d.shape
    cout = w.shape[1]
    nt = pl.cdiv(m, tm)

    def kernel(x_ref, sc_ref, sh_ref, w_ref, o_ref):
        h = jnp.maximum(x_ref[...].astype(jnp.float32) * sc_ref[...]
                        + sh_ref[...], 0.0)
        o_ref[...] = jnp.dot(h.astype(jnp.bfloat16), w_ref[...],
                             preferred_element_type=jnp.float32
                             ).astype(jnp.bfloat16)

    return pl.pallas_call(
        kernel,
        out_shape=jax.ShapeDtypeStruct((m, cout), jnp.bfloat16),
        grid=(nt,),
        in_specs=[pl.BlockSpec((tm, cin), lambda i: (i, 0)),
                  pl.BlockSpec((1, cin), lambda i: (0, 0)),
                  pl.BlockSpec((1, cin), lambda i: (0, 0)),
                  pl.BlockSpec((cin, cout), lambda i: (0, 0))],
        out_specs=pl.BlockSpec((tm, cout), lambda i: (i, 0)),
        compiler_params=_cparams(1),
    )(x2d, scale, shift, w)


# --------------------------------------------------------------------------
# Stage B: t2 = conv_kxk(relu(bn2(t1)))  fused per image via a VMEM halo
#          scratch + k*k shifted-window matmuls accumulated into a VMEM
#          scratch; also emits packed bn3 stats partials.
# --------------------------------------------------------------------------
def _stage_b(t1_nhwc, scale, shift, w2kk, *, k, padding, stride, dilation):
    n, h, w, c = t1_nhwc.shape
    ho = (h + 2 * padding - dilation * (k - 1) - 1) // stride + 1
    wo = (w + 2 * padding - dilation * (k - 1) - 1) // stride + 1
    cout = w2kk.shape[2]
    hpad, wpad = h + 2 * padding, w + 2 * padding
    # TODO(synk): for very large H*W*C on v7x, re-tile to a (n, row-slab) grid so
    # the halo / input per step is a slab rather than a whole image.
    # TODO(synk): stride/dilation > 1 relies on strided static ref slices.

    def kernel(x_ref, sc_ref, sh_ref, w_ref, o_ref, st_ref, halo_ref, acc_ref):
        # Zero only the halo BORDER each step (interior is fully overwritten);
        # keeps grid iterations independent so the batch axis stays "parallel".
        if padding > 0:
            zrow = jnp.zeros((padding, wpad, c), jnp.float32)
            zcol = jnp.zeros((hpad, padding, c), jnp.float32)
            halo_ref[:padding, :, :] = zrow
            halo_ref[padding + h:, :, :] = zrow
            halo_ref[:, :padding, :] = zcol
            halo_ref[:, padding + w:, :] = zcol
        act = jnp.maximum(x_ref[0].astype(jnp.float32) * sc_ref[...]
                          + sh_ref[...], 0.0)
        halo_ref[padding:padding + h, padding:padding + w, :] = act

        first = True
        for i in range(k):
            for j in range(k):
                win = halo_ref[
                    i * dilation:i * dilation + (ho - 1) * stride + 1:stride,
                    j * dilation:j * dilation + (wo - 1) * stride + 1:stride, :]
                contrib = jnp.dot(win.reshape(ho * wo, c).astype(jnp.bfloat16),
                                  w_ref[i * k + j],
                                  preferred_element_type=jnp.float32)
                if first:
                    acc_ref[...] = contrib
                    first = False
                else:
                    acc_ref[...] += contrib

        acc = acc_ref[...]
        o_ref[...] = acc.reshape(1, ho, wo, cout).astype(jnp.bfloat16)
        st_ref[...] = _pack_stats(jnp.sum(acc, axis=0),
                                  jnp.sum(acc * acc, axis=0), cout)[None]

    t2, stats = pl.pallas_call(
        kernel,
        out_shape=(jax.ShapeDtypeStruct((n, ho, wo, cout), jnp.bfloat16),
                   jax.ShapeDtypeStruct((n, 8, cout), jnp.float32)),
        grid=(n,),
        in_specs=[pl.BlockSpec((1, h, w, c), lambda b: (b, 0, 0, 0)),
                  pl.BlockSpec((1, c), lambda b: (0, 0)),
                  pl.BlockSpec((1, c), lambda b: (0, 0)),
                  pl.BlockSpec((k * k, c, cout), lambda b: (0, 0, 0))],
        out_specs=(pl.BlockSpec((1, ho, wo, cout), lambda b: (b, 0, 0, 0)),
                   pl.BlockSpec((1, 8, cout), lambda b: (b, 0, 0))),
        scratch_shapes=[pltpu.VMEM((hpad, wpad, c), jnp.float32),
                        pltpu.VMEM((ho * wo, cout), jnp.float32)],
        compiler_params=_cparams(1),
    )(t1_nhwc, scale, shift, w2kk)

    m2 = n * ho * wo
    mean, var = _reduce_stats(stats, m2)
    return t2, mean, var


# --------------------------------------------------------------------------
# Stage C: out = relu(bn3(t2)) @ w3 + shortcut
# --------------------------------------------------------------------------
def _stage_c(t2_flat, scale, shift, w3, shortcut, tm):
    m, cin = t2_flat.shape
    cout = w3.shape[1]
    nt = pl.cdiv(m, tm)
    # TODO(synk): shortcut could alias the output via input_output_aliases if it
    # were kept in f32; the bf16 shortcut (half the HBM re-read) won here.

    def kernel(x_ref, sc_ref, sh_ref, w_ref, r_ref, o_ref):
        h = jnp.maximum(x_ref[...].astype(jnp.float32) * sc_ref[...]
                        + sh_ref[...], 0.0)
        o_ref[...] = (jnp.dot(h.astype(jnp.bfloat16), w_ref[...],
                              preferred_element_type=jnp.float32)
                      + r_ref[...].astype(jnp.float32))

    return pl.pallas_call(
        kernel,
        out_shape=jax.ShapeDtypeStruct((m, cout), jnp.float32),
        grid=(nt,),
        in_specs=[pl.BlockSpec((tm, cin), lambda i: (i, 0)),
                  pl.BlockSpec((1, cin), lambda i: (0, 0)),
                  pl.BlockSpec((1, cin), lambda i: (0, 0)),
                  pl.BlockSpec((cin, cout), lambda i: (0, 0)),
                  pl.BlockSpec((tm, cout), lambda i: (i, 0))],
        out_specs=pl.BlockSpec((tm, cout), lambda i: (i, 0)),
        compiler_params=_cparams(1),
    )(t2_flat, scale, shift, w3, shortcut)


# --------------------------------------------------------------------------
# Full ResidualBlock forward.
# --------------------------------------------------------------------------
def residual_block_forward(x_nchw, p, *, kernel_size, padding=0, stride=1,
                           dilation=1, groups=1, expansion=4):
    assert groups == 1  # TODO(synk): grouped conv2 (groups > 1) not implemented
    k = kernel_size
    n, cin, h, w = x_nchw.shape
    cout = p['w1'].shape[0]
    cexp = p['w3'].shape[0]
    cin_p, cout_p, cexp_p = (_rup(c, _LANE) for c in (cin, cout, cexp))

    # lane-dense layout: NCHW -> NHWC, channels zero-padded to a 128-multiple
    xh = jnp.transpose(x_nchw, (0, 2, 3, 1)).astype(jnp.float32)
    xh = jnp.pad(xh, ((0, 0), (0, 0), (0, 0), (0, cin_p - cin)))
    m = n * h * w
    x_flat = xh.reshape(m, cin_p)

    # channel-padded weights (bf16, cast once) / BN parameters (f32)
    bf = jnp.bfloat16
    w1p = jnp.pad(p['w1'][:, :, 0, 0].T,
                  ((0, cin_p - cin), (0, cout_p - cout))).astype(bf)
    wpp = jnp.pad(p['wproj'][:, :, 0, 0].T,
                  ((0, cin_p - cin), (0, cexp_p - cexp))).astype(bf)
    w3p = jnp.pad(p['w3'][:, :, 0, 0].T,
                  ((0, cout_p - cout), (0, cexp_p - cexp))).astype(bf)
    w2r = jnp.transpose(p['w2'], (2, 3, 1, 0)).reshape(k * k, cout, cout)
    w2p = jnp.pad(w2r, ((0, 0), (0, cout_p - cout), (0, cout_p - cout))).astype(bf)
    g1 = jnp.pad(p['gamma1'], (0, cin_p - cin))
    b1 = jnp.pad(p['beta1'], (0, cin_p - cin))
    g2 = jnp.pad(p['gamma2'], (0, cout_p - cout))
    b2 = jnp.pad(p['beta2'], (0, cout_p - cout))
    g3 = jnp.pad(p['gamma3'], (0, cout_p - cout))
    b3 = jnp.pad(p['beta3'], (0, cout_p - cout))

    tm = _row_tile(m)

    # ---- norm1 batch stats (training-mode BN) ----
    mean1, var1 = _stats_partials(x_flat, tm)
    scale1, shift1 = _bn_affine(g1, b1, mean1, var1)

    # ---- stage A: conv1 (+ fused shortcut when stride==1) + t1 stats ----
    if stride == 1:
        t1, shortcut, mean2, var2 = _stage_a(x_flat, scale1, shift1, w1p, wpp, tm)
    else:
        t1, _, mean2, var2 = _stage_a(x_flat, scale1, shift1, w1p, None, tm)
        xs = xh[:, ::stride, ::stride, :]
        ms = xs.shape[0] * xs.shape[1] * xs.shape[2]
        shortcut = _bn_relu_matmul(xs.reshape(ms, cin_p), scale1, shift1, wpp,
                                   _row_tile(ms))
    scale2, shift2 = _bn_affine(g2, b2, mean2, var2)

    # ---- stage B: fused bn2+relu + k x k conv (halo scratch) + t2 stats ----
    t2, mean3, var3 = _stage_b(t1.reshape(n, h, w, cout_p), scale2, shift2, w2p,
                               k=k, padding=padding, stride=stride,
                               dilation=dilation)
    scale3, shift3 = _bn_affine(g3, b3, mean3, var3)
    _, ho, wo, _ = t2.shape
    m2 = n * ho * wo
    assert shortcut.shape[0] == m2, "main path / shortcut spatial mismatch"

    # ---- stage C: fused bn3+relu + conv3 + residual add ----
    out_flat = _stage_c(t2.reshape(m2, cout_p), scale3, shift3, w3p, shortcut,
                        _row_tile(m2))

    out = out_flat.reshape(n, ho, wo, cexp_p)[..., :cexp]
    return jnp.transpose(out, (0, 3, 1, 2))  # NCHW


# --------------------------- pure-JAX reference -----------------------------
def _reference(x, p, *, kernel_size, padding, stride, dilation, groups):
    def bn(t, gamma, beta):
        mu = t.mean(axis=(0, 2, 3), keepdims=True)
        v = t.var(axis=(0, 2, 3), keepdims=True)
        return ((t - mu) / jnp.sqrt(v + EPS) * gamma.reshape(1, -1, 1, 1)
                + beta.reshape(1, -1, 1, 1))

    def conv(t, wt, s=1, pd=0, d=1, g=1):
        return jax.lax.conv_general_dilated(
            t, wt, (s, s), [(pd, pd), (pd, pd)], rhs_dilation=(d, d),
            dimension_numbers=('NCHW', 'OIHW', 'NCHW'),
            feature_group_count=g, precision=lax.Precision.HIGHEST)

    pre = jax.nn.relu(bn(x, p['gamma1'], p['beta1']))
    sc = conv(pre, p['wproj'], s=stride)
    t = conv(pre, p['w1'])
    t = jax.nn.relu(bn(t, p['gamma2'], p['beta2']))
    t = conv(t, p['w2'], s=stride, pd=padding, d=dilation, g=groups)
    t = jax.nn.relu(bn(t, p['gamma3'], p['beta3']))
    t = conv(t, p['w3'])
    return t + sc


# --------------------------------- main -------------------------------------
if __name__ == "__main__":
    N, Cin, H, W = 2, 4, 16, 16
    Cout, K, PAD, STRIDE, DIL, GROUPS, EXP = 8, 3, 1, 1, 1, 1, 4
    Cexp = Cout * EXP

    keys = jax.random.split(jax.random.PRNGKey(0), 11)
    x = jax.random.normal(keys[0], (N, Cin, H, W), jnp.float32)
    params = {
        'gamma1': 1.0 + 0.1 * jax.random.normal(keys[1], (Cin,), jnp.float32),
        'beta1': 0.1 * jax.random.normal(keys[2], (Cin,), jnp.float32),
        'w1': 0.2 * jax.random.normal(keys[3], (Cout, Cin, 1, 1), jnp.float32),
        'gamma2': 1.0 + 0.1 * jax.random.normal(keys[4], (Cout,), jnp.float32),
        'beta2': 0.1 * jax.random.normal(keys[5], (Cout,), jnp.float32),
        'w2': 0.1 * jax.random.normal(keys[6], (Cout, Cout // GROUPS, K, K), jnp.float32),
        'gamma3': 1.0 + 0.1 * jax.random.normal(keys[7], (Cout,), jnp.float32),
        'beta3': 0.1 * jax.random.normal(keys[8], (Cout,), jnp.float32),
        'w3': 0.2 * jax.random.normal(keys[9], (Cexp, Cout, 1, 1), jnp.float32),
        'wproj': 0.2 * jax.random.normal(keys[10], (Cexp, Cin, 1, 1), jnp.float32),
    }

    fwd = jax.jit(functools.partial(
        residual_block_forward, kernel_size=K, padding=PAD, stride=STRIDE,
        dilation=DIL, groups=GROUPS, expansion=EXP))
    out = jax.block_until_ready(fwd(x, params))

    ref = _reference(x, params, kernel_size=K, padding=PAD, stride=STRIDE,
                     dilation=DIL, groups=GROUPS)
    assert out.shape == (N, Cexp, H, W), out.shape
    # bf16 MXU operands + bf16 intermediates (per perf review) => bf16-level
    # tolerance against the f32 reference.
    assert jnp.allclose(out, ref, atol=5e-2, rtol=5e-2), \
        float(jnp.max(jnp.abs(out - ref)))
    print("KERNEL_OK")
</pallas_src>

<mosaic_0001>
module attributes {stable_mosaic.version = 11 : i64} {
  func.func @kernel(%arg0: i32, %arg1: memref<512x128xf32, #tpu.memory_space<vmem>>, %arg2: memref<1x8x128xf32, #tpu.memory_space<vmem>>) attributes {dimension_semantics = [#tpu.dimension_semantics<parallel>], iteration_bounds = array<i64: 1>, scalar_prefetch = 0 : i64, scratch_operands = 0 : i64, tpu.core_type = #tpu.core_type<tc>, window_params = [{transform_indices = @transform_0, window_bounds = array<i64: 512, 128>}, {transform_indices = @transform_1, window_bounds = array<i64: 1, 8, 128>}]} {
    %c0 = arith.constant 0 : index
    %c0_0 = arith.constant 0 : index
    %0 = vector.load %arg1[%c0, %c0_0] : memref<512x128xf32, #tpu.memory_space<vmem>>, vector<512x128xf32>
    %1 = tpu.iota {dimensions = array<i32: 0>} : vector<512x128xi32>
    %c512_i32 = arith.constant 512 : i32
    %2 = arith.muli %arg0, %c512_i32 : i32
    %c512_i32_1 = arith.constant 512 : i32
    %3 = arith.subi %c512_i32_1, %2 : i32
    %4 = vector.broadcast %3 : i32 to vector<512x128xi32>
    %5 = arith.cmpi slt, %1, %4 : vector<512x128xi32>
    %cst = arith.constant 0.000000e+00 : f32
    %6 = vector.broadcast %cst : f32 to vector<512x128xf32>
    %7 = arith.select %5, %0, %6 : vector<512x128xi1>, vector<512x128xf32>
    %cst_2 = arith.constant dense<0.000000e+00> : vector<128xf32>
    %8 = vector.multi_reduction <add>, %7, %cst_2 [0] : vector<512x128xf32> to vector<128xf32>
    %9 = arith.mulf %7, %7 : vector<512x128xf32>
    %cst_3 = arith.constant dense<0.000000e+00> : vector<128xf32>
    %10 = vector.multi_reduction <add>, %9, %cst_3 [0] : vector<512x128xf32> to vector<128xf32>
    %11 = tpu.iota {dimensions = array<i32: 0>} : vector<8x128xi32>
    %c0_i32 = arith.constant 0 : i32
    %12 = vector.broadcast %c0_i32 : i32 to vector<8x128xi32>
    %13 = arith.cmpi eq, %11, %12 : vector<8x128xi32>
    %14 = vector.shape_cast %8 : vector<128xf32> to vector<1x128xf32>
    %cst_4 = arith.constant 0.000000e+00 : f32
    %15 = vector.shape_cast %14 : vector<1x128xf32> to vector<1x128xf32>
    %16 = vector.broadcast %15 : vector<1x128xf32> to vector<8x128xf32>
    %17 = vector.broadcast %cst_4 : f32 to vector<8x128xf32>
    %18 = arith.select %13, %16, %17 : vector<8x128xi1>, vector<8x128xf32>
    %c1_i32 = arith.constant 1 : i32
    %19 = vector.broadcast %c1_i32 : i32 to vector<8x128xi32>
    %20 = arith.cmpi eq, %11, %19 : vector<8x128xi32>
    %21 = vector.shape_cast %10 : vector<128xf32> to vector<1x128xf32>
    %cst_5 = arith.constant 0.000000e+00 : f32
    %22 = vector.shape_cast %21 : vector<1x128xf32> to vector<1x128xf32>
    %23 = vector.broadcast %22 : vector<1x128xf32> to vector<8x128xf32>
    %24 = vector.broadcast %cst_5 : f32 to vector<8x128xf32>
    %25 = arith.select %20, %23, %24 : vector<8x128xi1>, vector<8x128xf32>
    %26 = arith.addf %18, %25 : vector<8x128xf32>
    %27 = vector.shape_cast %26 : vector<8x128xf32> to vector<1x8x128xf32>
    %c0_6 = arith.constant 0 : index
    %c0_7 = arith.constant 0 : index
    %c0_8 = arith.constant 0 : index
    %28 = vector.load %arg2[%c0_6, %c0_7, %c0_8] : memref<1x8x128xf32, #tpu.memory_space<vmem>>, vector<1x8x128xf32>
    tpu.vector_store %arg2[%c0_6, %c0_7, %c0_8], %27 {strides = array<i32>} : memref<1x8x128xf32, #tpu.memory_space<vmem>>, vector<1x8x128xf32>,
    return
  }
  func.func @transform_0(%arg0: i32) -> (i32, i32) {
    %c0_i32 = arith.constant 0 : i32
    %c0_i32_0 = arith.constant 0 : i32
    return %arg0, %c0_i32 : i32, i32
  }
  func.func @transform_1(%arg0: i32) -> (i32, i32, i32) {
    %c0_i32 = arith.constant 0 : i32
    %c0_i32_0 = arith.constant 0 : i32
    %c0_i32_1 = arith.constant 0 : i32
    return %arg0, %c0_i32, %c0_i32_0 : i32, i32, i32
  }
}

module attributes {stable_mosaic.version = 11 : i64} {
  func.func @kernel(%arg0: i32, %arg1: memref<512x128xf32, #tpu.memory_space<vmem>>, %arg2: memref<1x128xf32, #tpu.memory_space<vmem>>, %arg3: memref<1x128xf32, #tpu.memory_space<vmem>>, %arg4: memref<128x128xbf16, #tpu.memory_space<vmem>>, %arg5: memref<128x128xbf16, #tpu.memory_space<vmem>>, %arg6: memref<512x128xbf16, #tpu.memory_space<vmem>>, %arg7: memref<512x128xbf16, #tpu.memory_space<vmem>>, %arg8: memref<1x8x128xf32, #tpu.memory_space<vmem>>) attributes {dimension_semantics = [#tpu.dimension_semantics<parallel>], iteration_bounds = array<i64: 1>, scalar_prefetch = 0 : i64, scratch_operands = 0 : i64, tpu.core_type = #tpu.core_type<tc>, window_params = [{transform_indices = @transform_0, window_bounds = array<i64: 512, 128>}, {pipeline_mode = #tpu.pipeline_mode<synchronous>, transform_indices = @transform_1, window_bounds = array<i64: 1, 128>}, {pipeline_mode = #tpu.pipeline_mode<synchronous>, transform_indices = @transform_2, window_bounds = array<i64: 1, 128>}, {pipeline_mode = #tpu.pipeline_mode<synchronous>, transform_indices = @transform_3, window_bounds = array<i64: 128, 128>}, {pipeline_mode = #tpu.pipeline_mode<synchronous>, transform_indices = @transform_4, window_bounds = array<i64: 128, 128>}, {transform_indices = @transform_5, window_bounds = array<i64: 512, 128>}, {transform_indices = @transform_6, window_bounds = array<i64: 512, 128>}, {transform_indices = @transform_7, window_bounds = array<i64: 1, 8, 128>}]} {
    %c0 = arith.constant 0 : index
    %c0_0 = arith.constant 0 : index
    %0 = vector.load %arg1[%c0, %c0_0] : memref<512x128xf32, #tpu.memory_space<vmem>>, vector<512x128xf32>
    %c0_1 = arith.constant 0 : index
    %c0_2 = arith.constant 0 : index
    %1 = vector.load %arg2[%c0_1, %c0_2] : memref<1x128xf32, #tpu.memory_space<vmem>>, vector<1x128xf32>
    %2 = vector.broadcast %1 : vector<1x128xf32> to vector<512x128xf32>
    %3 = arith.mulf %0, %2 : vector<512x128xf32>
    %c0_3 = arith.constant 0 : index
    %c0_4 = arith.constant 0 : index
    %4 = vector.load %arg3[%c0_3, %c0_4] : memref<1x128xf32, #tpu.memory_space<vmem>>, vector<1x128xf32>
    %5 = vector.broadcast %4 : vector<1x128xf32> to vector<512x128xf32>
    %6 = arith.addf %3, %5 : vector<512x128xf32>
    %cst = arith.constant 0.000000e+00 : f32
    %7 = vector.broadcast %cst : f32 to vector<512x128xf32>
    %8 = arith.maximumf %6, %7 : vector<512x128xf32>
    %9 = arith.truncf %8 : vector<512x128xf32> to vector<512x128xbf16>
    %c0_5 = arith.constant 0 : index
    %c0_6 = arith.constant 0 : index
    %10 = vector.load %arg4[%c0_5, %c0_6] : memref<128x128xbf16, #tpu.memory_space<vmem>>, vector<128x128xbf16>
    %cst_7 = arith.constant dense<0.000000e+00> : vector<512x128xf32>
    %11 = tpu.matmul %9, %10, %cst_7 {dimension_numbers = #tpu.dot_dimension_numbers<[1], [0], [0], [1], [0, 0, 1, 1], [], []>} : vector<512x128xbf16>, vector<128x128xbf16>, vector<512x128xf32> -> vector<512x128xf32>
    %12 = tpu.iota {dimensions = array<i32: 0>} : vector<512x128xi32>
    %c512_i32 = arith.constant 512 : i32
    %13 = arith.muli %arg0, %c512_i32 : i32
    %c512_i32_8 = arith.constant 512 : i32
    %14 = arith.subi %c512_i32_8, %13 : i32
    %15 = vector.broadcast %14 : i32 to vector<512x128xi32>
    %16 = arith.cmpi slt, %12, %15 : vector<512x128xi32>
    %cst_9 = arith.constant 0.000000e+00 : f32
    %17 = vector.broadcast %cst_9 : f32 to vector<512x128xf32>
    %18 = arith.select %16, %11, %17 : vector<512x128xi1>, vector<512x128xf32>
    %19 = arith.truncf %18 : vector<512x128xf32> to vector<512x128xbf16>
    %c0_10 = arith.constant 0 : index
    %c0_11 = arith.constant 0 : index
    %20 = vector.load %arg6[%c0_10, %c0_11] : memref<512x128xbf16, #tpu.memory_space<vmem>>, vector<512x128xbf16>
    tpu.vector_store %arg6[%c0_10, %c0_11], %19 {strides = array<i32>} : memref<512x128xbf16, #tpu.memory_space<vmem>>, vector<512x128xbf16>,
    %c0_12 = arith.constant 0 : index
    %c0_13 = arith.constant 0 : index
    %21 = vector.load %arg5[%c0_12, %c0_13] : memref<128x128xbf16, #tpu.memory_space<vmem>>, vector<128x128xbf16>
    %cst_14 = arith.constant dense<0.000000e+00> : vector<512x128xf32>
    %22 = tpu.matmul %9, %21, %cst_14 {dimension_numbers = #tpu.dot_dimension_numbers<[1], [0], [0], [1], [0, 0, 1, 1], [], []>} : vector<512x128xbf16>, vector<128x128xbf16>, vector<512x128xf32> -> vector<512x128xf32>
    %23 = arith.truncf %22 : vector<512x128xf32> to vector<512x128xbf16>
    %c0_15 = arith.constant 0 : index
    %c0_16 = arith.constant 0 : index
    %24 = vector.load %arg7[%c0_15, %c0_16] : memref<512x128xbf16, #tpu.memory_space<vmem>>, vector<512x128xbf16>
    tpu.vector_store %arg7[%c0_15, %c0_16], %23 {strides = array<i32>} : memref<512x128xbf16, #tpu.memory_space<vmem>>, vector<512x128xbf16>,
    %cst_17 = arith.constant dense<0.000000e+00> : vector<128xf32>
    %25 = vector.multi_reduction <add>, %18, %cst_17 [0] : vector<512x128xf32> to vector<128xf32>
    %26 = arith.mulf %18, %18 : vector<512x128xf32>
    %cst_18 = arith.constant dense<0.000000e+00> : vector<128xf32>
    %27 = vector.multi_reduction <add>, %26, %cst_18 [0] : vector<512x128xf32> to vector<128xf32>
    %28 = tpu.iota {dimensions = array<i32: 0>} : vector<8x128xi32>
    %c0_i32 = arith.constant 0 : i32
    %29 = vector.broadcast %c0_i32 : i32 to vector<8x128xi32>
    %30 = arith.cmpi eq, %28, %29 : vector<8x128xi32>
    %31 = vector.shape_cast %25 : vector<128xf32> to vector<1x128xf32>
    %cst_19 = arith.constant 0.000000e+00 : f32
    %32 = vector.shape_cast %31 : vector<1x128xf32> to vector<1x128xf32>
    %33 = vector.broadcast %32 : vector<1x128xf32> to vector<8x128xf32>
    %34 = vector.broadcast %cst_19 : f32 to vector<8x128xf32>
    %35 = arith.select %30, %33, %34 : vector<8x128xi1>, vector<8x128xf32>
    %c1_i32 = arith.constant 1 : i32
    %36 = vector.broadcast %c1_i32 : i32 to vector<8x128xi32>
    %37 = arith.cmpi eq, %28, %36 : vector<8x128xi32>
    %38 = vector.shape_cast %27 : vector<128xf32> to vector<1x128xf32>
    %cst_20 = arith.constant 0.000000e+00 : f32
    %39 = vector.shape_cast %38 : vector<1x128xf32> to vector<1x128xf32>
    %40 = vector.broadcast %39 : vector<1x128xf32> to vector<8x128xf32>
    %41 = vector.broadcast %cst_20 : f32 to vector<8x128xf32>
    %42 = arith.select %37, %40, %41 : vector<8x128xi1>, vector<8x128xf32>
    %43 = arith.addf %35, %42 : vector<8x128xf32>
    %44 = vector.shape_cast %43 : vector<8x128xf32> to vector<1x8x128xf32>
    %c0_21 = arith.constant 0 : index
    %c0_22 = arith.constant 0 : index
    %c0_23 = arith.constant 0 : index
    %45 = vector.load %arg8[%c0_21, %c0_22, %c0_23] : memref<1x8x128xf32, #tpu.memory_space<vmem>>, vector<1x8x128xf32>
    tpu.vector_store %arg8[%c0_21, %c0_22, %c0_23], %44 {strides = array<i32>} : memref<1x8x128xf32, #tpu.memory_space<vmem>>, vector<1x8x128xf32>,
    return
  }
  func.func @transform_0(%arg0: i32) -> (i32, i32) {
    %c0_i32 = arith.constant 0 : i32
    %c0_i32_0 = arith.constant 0 : i32
    return %arg0, %c0_i32 : i32, i32
  }
  func.func @transform_1(%arg0: i32) -> (i32, i32) {
    %c0_i32 = arith.constant 0 : i32
    %c0_i32_0 = arith.constant 0 : i32
    %c0_i32_1 = arith.constant 0 : i32
    return %c0_i32, %c0_i32_0 : i32, i32
  }
  func.func @transform_2(%arg0: i32) -> (i32, i32) {
    %c0_i32 = arith.constant 0 : i32
    %c0_i32_0 = arith.constant 0 : i32
    %c0_i32_1 = arith.constant 0 : i32
    return %c0_i32, %c0_i32_0 : i32, i32
  }
  func.func @transform_3(%arg0: i32) -> (i32, i32) {
    %c0_i32 = arith.constant 0 : i32
    %c0_i32_0 = arith.constant 0 : i32
    %c0_i32_1 = arith.constant 0 : i32
    return %c0_i32, %c0_i32_0 : i32, i32
  }
  func.func @transform_4(%arg0: i32) -> (i32, i32) {
    %c0_i32 = arith.constant 0 : i32
    %c0_i32_0 = arith.constant 0 : i32
    %c0_i32_1 = arith.constant 0 : i32
    return %c0_i32, %c0_i32_0 : i32, i32
  }
  func.func @transform_5(%arg0: i32) -> (i32, i32) {
    %c0_i32 = arith.constant 0 : i32
    %c0_i32_0 = arith.constant 0 : i32
    return %arg0, %c0_i32 : i32, i32
  }
  func.func @transform_6(%arg0: i32) -> (i32, i32) {
    %c0_i32 = arith.constant 0 : i32
    %c0_i32_0 = arith.constant 0 : i32
    return %arg0, %c0_i32 : i32, i32
  }
  func.func @transform_7(%arg0: i32) -> (i32, i32, i32) {
    %c0_i32 = arith.constant 0 : i32
    %c0_i32_0 = arith.constant 0 : i32
    %c0_i32_1 = arith.constant 0 : i32
    return %arg0, %c0_i32, %c0_i32_0 : i32, i32, i32
  }
}

module attributes {stable_mosaic.version = 11 : i64} {
  func.func @kernel(%arg0: i32, %arg1: memref<1x16x16x128xbf16, #tpu.memory_space<vmem>>, %arg2: memref<1x128xf32, #tpu.memory_space<vmem>>, %arg3: memref<1x128xf32, #tpu.memory_space<vmem>>, %arg4: memref<9x128x128xbf16, #tpu.memory_space<vmem>>, %arg5: memref<1x16x16x128xbf16, #tpu.memory_space<vmem>>, %arg6: memref<1x8x128xf32, #tpu.memory_space<vmem>>, %arg7: memref<18x18x128xf32, #tpu.memory_space<vmem>>, %arg8: memref<256x128xf32, #tpu.memory_space<vmem>>) attributes {dimension_semantics = [#tpu.dimension_semantics<parallel>], iteration_bounds = array<i64: 2>, scalar_prefetch = 0 : i64, scratch_operands = 2 : i64, tpu.core_type = #tpu.core_type<tc>, window_params = [{transform_indices = @transform_0, window_bounds = array<i64: 1, 16, 16, 128>}, {pipeline_mode = #tpu.pipeline_mode<synchronous>, transform_indices = @transform_1, window_bounds = array<i64: 1, 128>}, {pipeline_mode = #tpu.pipeline_mode<synchronous>, transform_indices = @transform_2, window_bounds = array<i64: 1, 128>}, {pipeline_mode = #tpu.pipeline_mode<synchronous>, transform_indices = @transform_3, window_bounds = array<i64: 9, 128, 128>}, {transform_indices = @transform_4, window_bounds = array<i64: 1, 16, 16, 128>}, {transform_indices = @transform_5, window_bounds = array<i64: 1, 8, 128>}]} {
    %cst = arith.constant 0.000000e+00 : f32
    %0 = vector.broadcast %cst : f32 to vector<1x18x128xf32>
    %cst_0 = arith.constant 0.000000e+00 : f32
    %1 = vector.broadcast %cst_0 : f32 to vector<18x1x128xf32>
    %c0 = arith.constant 0 : index
    %c0_1 = arith.constant 0 : index
    %c0_2 = arith.constant 0 : index
    %2 = vector.load %arg7[%c0, %c0_1, %c0_2] : memref<18x18x128xf32, #tpu.memory_space<vmem>>, vector<1x18x128xf32>
    tpu.vector_store %arg7[%c0, %c0_1, %c0_2], %0 {strides = array<i32>} : memref<18x18x128xf32, #tpu.memory_space<vmem>>, vector<1x18x128xf32>,
    %c17 = arith.constant 17 : index
    %c0_3 = arith.constant 0 : index
    %c0_4 = arith.constant 0 : index
    %3 = vector.load %arg7[%c17, %c0_3, %c0_4] : memref<18x18x128xf32, #tpu.memory_space<vmem>>, vector<1x18x128xf32>
    tpu.vector_store %arg7[%c17, %c0_3, %c0_4], %0 {strides = array<i32>} : memref<18x18x128xf32, #tpu.memory_space<vmem>>, vector<1x18x128xf32>,
    %c0_5 = arith.constant 0 : index
    %c0_6 = arith.constant 0 : index
    %c0_7 = arith.constant 0 : index
    %4 = vector.load %arg7[%c0_5, %c0_6, %c0_7] : memref<18x18x128xf32, #tpu.memory_space<vmem>>, vector<18x1x128xf32>
    tpu.vector_store %arg7[%c0_5, %c0_6, %c0_7], %1 {strides = array<i32>} : memref<18x18x128xf32, #tpu.memory_space<vmem>>, vector<18x1x128xf32>,
    %c0_8 = arith.constant 0 : index
    %c17_9 = arith.constant 17 : index
    %c0_10 = arith.constant 0 : index
    %5 = vector.load %arg7[%c0_8, %c17_9, %c0_10] : memref<18x18x128xf32, #tpu.memory_space<vmem>>, vector<18x1x128xf32>
    tpu.vector_store %arg7[%c0_8, %c17_9, %c0_10], %1 {strides = array<i32>} : memref<18x18x128xf32, #tpu.memory_space<vmem>>, vector<18x1x128xf32>,
    %c0_11 = arith.constant 0 : index
    %c0_12 = arith.constant 0 : index
    %c0_13 = arith.constant 0 : index
    %c0_14 = arith.constant 0 : index
    %6 = vector.load %arg1[%c0_11, %c0_12, %c0_13, %c0_14] : memref<1x16x16x128xbf16, #tpu.memory_space<vmem>>, vector<1x16x16x128xbf16>
    %7 = vector.shape_cast %6 : vector<1x16x16x128xbf16> to vector<16x16x128xbf16>
    %8 = arith.extf %7 : vector<16x16x128xbf16> to vector<16x16x128xf32>
    %c0_15 = arith.constant 0 : index
    %c0_16 = arith.constant 0 : index
    %9 = vector.load %arg2[%c0_15, %c0_16] : memref<1x128xf32, #tpu.memory_space<vmem>>, vector<1x128xf32>
    %10 = vector.shape_cast %9 : vector<1x128xf32> to vector<1x1x128xf32>
    %11 = vector.broadcast %10 : vector<1x1x128xf32> to vector<16x16x128xf32>
    %12 = arith.mulf %8, %11 : vector<16x16x128xf32>
    %c0_17 = arith.constant 0 : index
    %c0_18 = arith.constant 0 : index
    %13 = vector.load %arg3[%c0_17, %c0_18] : memref<1x128xf32, #tpu.memory_space<vmem>>, vector<1x128xf32>
    %14 = vector.shape_cast %13 : vector<1x128xf32> to vector<1x1x128xf32>
    %15 = vector.broadcast %14 : vector<1x1x128xf32> to vector<16x16x128xf32>
    %16 = arith.addf %12, %15 : vector<16x16x128xf32>
    %cst_19 = arith.constant 0.000000e+00 : f32
    %17 = vector.broadcast %cst_19 : f32 to vector<16x16x128xf32>
    %18 = arith.maximumf %16, %17 : vector<16x16x128xf32>
    %c1 = arith.constant 1 : index
    %c1_20 = arith.constant 1 : index
    %c0_21 = arith.constant 0 : index
    %19 = vector.load %arg7[%c1, %c1_20, %c0_21] : memref<18x18x128xf32, #tpu.memory_space<vmem>>, vector<16x16x128xf32>
    tpu.vector_store %arg7[%c1, %c1_20, %c0_21], %18 {strides = array<i32>} : memref<18x18x128xf32, #tpu.memory_space<vmem>>, vector<16x16x128xf32>,
    %c0_22 = arith.constant 0 : index
    %c0_23 = arith.constant 0 : index
    %c0_24 = arith.constant 0 : index
    %20 = vector.load %arg7[%c0_22, %c0_23, %c0_24] : memref<18x18x128xf32, #tpu.memory_space<vmem>>, vector<16x16x128xf32>
    %21 = vector.shape_cast %20 : vector<16x16x128xf32> to vector<256x128xf32>
    %22 = arith.truncf %21 : vector<256x128xf32> to vector<256x128xbf16>
    %c0_25 = arith.constant 0 : index
    %c0_26 = arith.constant 0 : index
    %c0_27 = arith.constant 0 : index
    %23 = vector.load %arg4[%c0_25, %c0_26, %c0_27] : memref<9x128x128xbf16, #tpu.memory_space<vmem>>, vector<1x128x128xbf16>
    %24 = vector.shape_cast %23 : vector<1x128x128xbf16> to vector<128x128xbf16>
    %cst_28 = arith.constant dense<0.000000e+00> : vector<256x128xf32>
    %25 = tpu.matmul %22, %24, %cst_28 {dimension_numbers = #tpu.dot_dimension_numbers<[1], [0], [0], [1], [0, 0, 1, 1], [], []>} : vector<256x128xbf16>, vector<128x128xbf16>, vector<256x128xf32> -> vector<256x128xf32>
    %c0_29 = arith.constant 0 : index
    %c0_30 = arith.constant 0 : index
    %26 = vector.load %arg8[%c0_29, %c0_30] : memref<256x128xf32, #tpu.memory_space<vmem>>, vector<256x128xf32>
    tpu.vector_store %arg8[%c0_29, %c0_30], %25 {strides = array<i32>} : memref<256x128xf32, #tpu.memory_space<vmem>>, vector<256x128xf32>,
    %c0_31 = arith.constant 0 : index
    %c1_32 = arith.constant 1 : index
    %c0_33 = arith.constant 0 : index
    %27 = vector.load %arg7[%c0_31, %c1_32, %c0_33] : memref<18x18x128xf32, #tpu.memory_space<vmem>>, vector<16x16x128xf32>
    %28 = vector.shape_cast %27 : vector<16x16x128xf32> to vector<256x128xf32>
    %29 = arith.truncf %28 : vector<256x128xf32> to vector<256x128xbf16>
    %c1_34 = arith.constant 1 : index
    %c0_35 = arith.constant 0 : index
    %c0_36 = arith.constant 0 : index
    %30 = vector.load %arg4[%c1_34, %c0_35, %c0_36] : memref<9x128x128xbf16, #tpu.memory_space<vmem>>, vector<1x128x128xbf16>
    %31 = vector.shape_cast %30 : vector<1x128x128xbf16> to vector<128x128xbf16>
    %cst_37 = arith.constant dense<0.000000e+00> : vector<256x128xf32>
    %32 = tpu.matmul %29, %31, %cst_37 {dimension_numbers = #tpu.dot_dimension_numbers<[1], [0], [0], [1], [0, 0, 1, 1], [], []>} : vector<256x128xbf16>, vector<128x128xbf16>, vector<256x128xf32> -> vector<256x128xf32>
    %c0_38 = arith.constant 0 : index
    %c0_39 = arith.constant 0 : index
    %33 = vector.load %arg8[%c0_38, %c0_39] : memref<256x128xf32, #tpu.memory_space<vmem>>, vector<256x128xf32>
    %34 = arith.addf %33, %32 : vector<256x128xf32>
    %c0_40 = arith.constant 0 : index
    %c0_41 = arith.constant 0 : index
    %35 = vector.load %arg8[%c0_40, %c0_41] : memref<256x128xf32, #tpu.memory_space<vmem>>, vector<256x128xf32>
    tpu.vector_store %arg8[%c0_40, %c0_41], %34 {strides = array<i32>} : memref<256x128xf32, #tpu.memory_space<vmem>>, vector<256x128xf32>,
    %c0_42 = arith.constant 0 : index
    %c2 = arith.constant 2 : index
    %c0_43 = arith.constant 0 : index
    %36 = vector.load %arg7[%c0_42, %c2, %c0_43] : memref<18x18x128xf32, #tpu.memory_space<vmem>>, vector<16x16x128xf32>
    %37 = vector.shape_cast %36 : vector<16x16x128xf32> to vector<256x128xf32>
    %38 = arith.truncf %37 : vector<256x128xf32> to vector<256x128xbf16>
    %c2_44 = arith.constant 2 : index
    %c0_45 = arith.constant 0 : index
    %c0_46 = arith.constant 0 : index
    %39 = vector.load %arg4[%c2_44, %c0_45, %c0_46] : memref<9x128x128xbf16, #tpu.memory_space<vmem>>, vector<1x128x128xbf16>
    %40 = vector.shape_cast %39 : vector<1x128x128xbf16> to vector<128x128xbf16>
    %cst_47 = arith.constant dense<0.000000e+00> : vector<256x128xf32>
    %41 = tpu.matmul %38, %40, %cst_47 {dimension_numbers = #tpu.dot_dimension_numbers<[1], [0], [0], [1], [0, 0, 1, 1], [], []>} : vector<256x128xbf16>, vector<128x128xbf16>, vector<256x128xf32> -> vector<256x128xf32>
    %c0_48 = arith.constant 0 : index
    %c0_49 = arith.constant 0 : index
    %42 = vector.load %arg8[%c0_48, %c0_49] : memref<256x128xf32, #tpu.memory_space<vmem>>, vector<256x128xf32>
    %43 = arith.addf %42, %41 : vector<256x128xf32>
    %c0_50 = arith.constant 0 : index
    %c0_51 = arith.constant 0 : index
    %44 = vector.load %arg8[%c0_50, %c0_51] : memref<256x128xf32, #tpu.memory_space<vmem>>, vector<256x128xf32>
    tpu.vector_store %arg8[%c0_50, %c0_51], %43 {strides = array<i32>} : memref<256x128xf32, #tpu.memory_space<vmem>>, vector<256x128xf32>,
    %c1_52 = arith.constant 1 : index
    %c0_53 = arith.constant 0 : index
    %c0_54 = arith.constant 0 : index
    %45 = vector.load %arg7[%c1_52, %c0_53, %c0_54] : memref<18x18x128xf32, #tpu.memory_space<vmem>>, vector<16x16x128xf32>
    %46 = vector.shape_cast %45 : vector<16x16x128xf32> to vector<256x128xf32>
    %47 = arith.truncf %46 : vector<256x128xf32> to vector<256x128xbf16>
    %c3 = arith.constant 3 : index
    %c0_55 = arith.constant 0 : index
    %c0_56 = arith.constant 0 : index
    %48 = vector.load %arg4[%c3, %c0_55, %c0_56] : memref<9x128x128xbf16, #tpu.memory_space<vmem>>, vector<1x128x128xbf16>
    %49 = vector.shape_cast %48 : vector<1x128x128xbf16> to vector<128x128xbf16>
    %cst_57 = arith.constant dense<0.000000e+00> : vector<256x128xf32>
    %50 = tpu.matmul %47, %49, %cst_57 {dimension_numbers = #tpu.dot_dimension_numbers<[1], [0], [0], [1], [0, 0, 1, 1], [], []>} : vector<256x128xbf16>, vector<128x128xbf16>, vector<256x128xf32> -> vector<256x128xf32>
    %c0_58 = arith.constant 0 : index
    %c0_59 = arith.constant 0 : index
    %51 = vector.load %arg8[%c0_58, %c0_59] : memref<256x128xf32, #tpu.memory_space<vmem>>, vector<256x128xf32>
    %52 = arith.addf %51, %50 : vector<256x128xf32>
    %c0_60 = arith.constant 0 : index
    %c0_61 = arith.constant 0 : index
    %53 = vector.load %arg8[%c0_60, %c0_61] : memref<256x128xf32, #tpu.memory_space<vmem>>, vector<256x128xf32>
    tpu.vector_store %arg8[%c0_60, %c0_61], %52 {strides = array<i32>} : memref<256x128xf32, #tpu.memory_space<vmem>>, vector<256x128xf32>,
    %c1_62 = arith.constant 1 : index
    %c1_63 = arith.constant 1 : index
    %c0_64 = arith.constant 0 : index
    %54 = vector.load %arg7[%c1_62, %c1_63, %c0_64] : memref<18x18x128xf32, #tpu.memory_space<vmem>>, vector<16x16x128xf32>
    %55 = vector.shape_cast %54 : vector<16x16x128xf32> to vector<256x128xf32>
    %56 = arith.truncf %55 : vector<256x128xf32> to vector<256x128xbf16>
    %c4 = arith.constant 4 : index
    %c0_65 = arith.constant 0 : index
    %c0_66 = arith.constant 0 : index
    %57 = vector.load %arg4[%c4, %c0_65, %c0_66] : memref<9x128x128xbf16, #tpu.memory_space<vmem>>, vector<1x128x128xbf16>
    %58 = vector.shape_cast %57 : vector<1x128x128xbf16> to vector<128x128xbf16>
    %cst_67 = arith.constant dense<0.000000e+00> : vector<256x128xf32>
    %59 = tpu.matmul %56, %58, %cst_67 {dimension_numbers = #tpu.dot_dimension_numbers<[1], [0], [0], [1], [0, 0, 1, 1], [], []>} : vector<256x128xbf16>, vector<128x128xbf16>, vector<256x128xf32> -> vector<256x128xf32>
    %c0_68 = arith.constant 0 : index
    %c0_69 = arith.constant 0 : index
    %60 = vector.load %arg8[%c0_68, %c0_69] : memref<256x128xf32, #tpu.memory_space<vmem>>, vector<256x128xf32>
    %61 = arith.addf %60, %59 : vector<256x128xf32>
    %c0_70 = arith.constant 0 : index
    %c0_71 = arith.constant 0 : index
    %62 = vector.load %arg8[%c0_70, %c0_71] : memref<256x128xf32, #tpu.memory_space<vmem>>, vector<256x128xf32>
    tpu.vector_store %arg8[%c0_70, %c0_71], %61 {strides = array<i32>} : memref<256x128xf32, #tpu.memory_space<vmem>>, vector<256x128xf32>,
    %c1_72 = arith.constant 1 : index
    %c2_73 = arith.constant 2 : index
    %c0_74 = arith.constant 0 : index
    %63 = vector.load %arg7[%c1_72, %c2_73, %c0_74] : memref<18x18x128xf32, #tpu.memory_space<vmem>>, vector<16x16x128xf32>
    %64 = vector.shape_cast %63 : vector<16x16x128xf32> to vector<256x128xf32>
    %65 = arith.truncf %64 : vector<256x128xf32> to vector<256x128xbf16>
    %c5 = arith.constant 5 : index
    %c0_75 = arith.constant 0 : index
    %c0_76 = arith.constant 0 : index
    %66 = vector.load %arg4[%c5, %c0_75, %c0_76] : memref<9x128x128xbf16, #tpu.memory_space<vmem>>, vector<1x128x128xbf16>
    %67 = vector.shape_cast %66 : vector<1x128x128xbf16> to vector<128x128xbf16>
    %cst_77 = arith.constant dense<0.000000e+00> : vector<256x128xf32>
    %68 = tpu.matmul %65, %67, %cst_77 {dimension_numbers = #tpu.dot_dimension_numbers<[1], [0], [0], [1], [0, 0, 1, 1], [], []>} : vector<256x128xbf16>, vector<128x128xbf16>, vector<256x128xf32> -> vector<256x128xf32>
    %c0_78 = arith.constant 0 : index
    %c0_79 = arith.constant 0 : index
    %69 = vector.load %arg8[%c0_78, %c0_79] : memref<256x128xf32, #tpu.memory_space<vmem>>, vector<256x128xf32>
    %70 = arith.addf %69, %68 : vector<256x128xf32>
    %c0_80 = arith.constant 0 : index
    %c0_81 = arith.constant 0 : index
    %71 = vector.load %arg8[%c0_80, %c0_81] : memref<256x128xf32, #tpu.memory_space<vmem>>, vector<256x128xf32>
    tpu.vector_store %arg8[%c0_80, %c0_81], %70 {strides = array<i32>} : memref<256x128xf32, #tpu.memory_space<vmem>>, vector<256x128xf32>,
    %c2_82 = arith.constant 2 : index
    %c0_83 = arith.constant 0 : index
    %c0_84 = arith.constant 0 : index
    %72 = vector.load %arg7[%c2_82, %c0_83, %c0_84] : memref<18x18x128xf32, #tpu.memory_space<vmem>>, vector<16x16x128xf32>
    %73 = vector.shape_cast %72 : vector<16x16x128xf32> to vector<256x128xf32>
    %74 = arith.truncf %73 : vector<256x128xf32> to vector<256x128xbf16>
    %c6 = arith.constant 6 : index
    %c0_85 = arith.constant 0 : index
    %c0_86 = arith.constant 0 : index
    %75 = vector.load %arg4[%c6, %c0_85, %c0_86] : memref<9x128x128xbf16, #tpu.memory_space<vmem>>, vector<1x128x128xbf16>
    %76 = vector.shape_cast %75 : vector<1x128x128xbf16> to vector<128x128xbf16>
    %cst_87 = arith.constant dense<0.000000e+00> : vector<256x128xf32>
    %77 = tpu.matmul %74, %76, %cst_87 {dimension_numbers = #tpu.dot_dimension_numbers<[1], [0], [0], [1], [0, 0, 1, 1], [], []>} : vector<256x128xbf16>, vector<128x128xbf16>, vector<256x128xf32> -> vector<256x128xf32>
    %c0_88 = arith.constant 0 : index
    %c0_89 = arith.constant 0 : index
    %78 = vector.load %arg8[%c0_88, %c0_89] : memref<256x128xf32, #tpu.memory_space<vmem>>, vector<256x128xf32>
    %79 = arith.addf %78, %77 : vector<256x128xf32>
    %c0_90 = arith.constant 0 : index
    %c0_91 = arith.constant 0 : index
    %80 = vector.load %arg8[%c0_90, %c0_91] : memref<256x128xf32, #tpu.memory_space<vmem>>, vector<256x128xf32>
    tpu.vector_store %arg8[%c0_90, %c0_91], %79 {strides = array<i32>} : memref<256x128xf32, #tpu.memory_space<vmem>>, vector<256x128xf32>,
    %c2_92 = arith.constant 2 : index
    %c1_93 = arith.constant 1 : index
    %c0_94 = arith.constant 0 : index
    %81 = vector.load %arg7[%c2_92, %c1_93, %c0_94] : memref<18x18x128xf32, #tpu.memory_space<vmem>>, vector<16x16x128xf32>
    %82 = vector.shape_cast %81 : vector<16x16x128xf32> to vector<256x128xf32>
    %83 = arith.truncf %82 : vector<256x128xf32> to vector<256x128xbf16>
    %c7 = arith.constant 7 : index
    %c0_95 = arith.constant 0 : index
    %c0_96 = arith.constant 0 : index
    %84 = vector.load %arg4[%c7, %c0_95, %c0_96] : memref<9x128x128xbf16, #tpu.memory_space<vmem>>, vector<1x128x128xbf16>
    %85 = vector.shape_cast %84 : vector<1x128x128xbf16> to vector<128x128xbf16>
    %cst_97 = arith.constant dense<0.000000e+00> : vector<256x128xf32>
    %86 = tpu.matmul %83, %85, %cst_97 {dimension_numbers = #tpu.dot_dimension_numbers<[1], [0], [0], [1], [0, 0, 1, 1], [], []>} : vector<256x128xbf16>, vector<128x128xbf16>, vector<256x128xf32> -> vector<256x128xf32>
    %c0_98 = arith.constant 0 : index
    %c0_99 = arith.constant 0 : index
    %87 = vector.load %arg8[%c0_98, %c0_99] : memref<256x128xf32, #tpu.memory_space<vmem>>, vector<256x128xf32>
    %88 = arith.addf %87, %86 : vector<256x128xf32>
    %c0_100 = arith.constant 0 : index
    %c0_101 = arith.constant 0 : index
    %89 = vector.load %arg8[%c0_100, %c0_101] : memref<256x128xf32, #tpu.memory_space<vmem>>, vector<256x128xf32>
    tpu.vector_store %arg8[%c0_100, %c0_101], %88 {strides = array<i32>} : memref<256x128xf32, #tpu.memory_space<vmem>>, vector<256x128xf32>,
    %c2_102 = arith.constant 2 : index
    %c2_103 = arith.constant 2 : index
    %c0_104 = arith.constant 0 : index
    %90 = vector.load %arg7[%c2_102, %c2_103, %c0_104] : memref<18x18x128xf32, #tpu.memory_space<vmem>>, vector<16x16x128xf32>
    %91 = vector.shape_cast %90 : vector<16x16x128xf32> to vector<256x128xf32>
    %92 = arith.truncf %91 : vector<256x128xf32> to vector<256x128xbf16>
    %c8 = arith.constant 8 : index
    %c0_105 = arith.constant 0 : index
    %c0_106 = arith.constant 0 : index
    %93 = vector.load %arg4[%c8, %c0_105, %c0_106] : memref<9x128x128xbf16, #tpu.memory_space<vmem>>, vector<1x128x128xbf16>
    %94 = vector.shape_cast %93 : vector<1x128x128xbf16> to vector<128x128xbf16>
    %cst_107 = arith.constant dense<0.000000e+00> : vector<256x128xf32>
    %95 = tpu.matmul %92, %94, %cst_107 {dimension_numbers = #tpu.dot_dimension_numbers<[1], [0], [0], [1], [0, 0, 1, 1], [], []>} : vector<256x128xbf16>, vector<128x128xbf16>, vector<256x128xf32> -> vector<256x128xf32>
    %c0_108 = arith.constant 0 : index
    %c0_109 = arith.constant 0 : index
    %96 = vector.load %arg8[%c0_108, %c0_109] : memref<256x128xf32, #tpu.memory_space<vmem>>, vector<256x128xf32>
    %97 = arith.addf %96, %95 : vector<256x128xf32>
    %c0_110 = arith.constant 0 : index
    %c0_111 = arith.constant 0 : index
    %98 = vector.load %arg8[%c0_110, %c0_111] : memref<256x128xf32, #tpu.memory_space<vmem>>, vector<256x128xf32>
    tpu.vector_store %arg8[%c0_110, %c0_111], %97 {strides = array<i32>} : memref<256x128xf32, #tpu.memory_space<vmem>>, vector<256x128xf32>,
    %c0_112 = arith.constant 0 : index
    %c0_113 = arith.constant 0 : index
    %99 = vector.load %arg8[%c0_112, %c0_113] : memref<256x128xf32, #tpu.memory_space<vmem>>, vector<256x128xf32>
    %100 = vector.shape_cast %99 : vector<256x128xf32> to vector<1x16x16x128xf32>
    %101 = arith.truncf %100 : vector<1x16x16x128xf32> to vector<1x16x16x128xbf16>
    %c0_114 = arith.constant 0 : index
    %c0_115 = arith.constant 0 : index
    %c0_116 = arith.constant 0 : index
    %c0_117 = arith.constant 0 : index
    %102 = vector.load %arg5[%c0_114, %c0_115, %c0_116, %c0_117] : memref<1x16x16x128xbf16, #tpu.memory_space<vmem>>, vector<1x16x16x128xbf16>
    tpu.vector_store %arg5[%c0_114, %c0_115, %c0_116, %c0_117], %101 {strides = array<i32>} : memref<1x16x16x128xbf16, #tpu.memory_space<vmem>>, vector<1x16x16x128xbf16>,
    %cst_118 = arith.constant dense<0.000000e+00> : vector<128xf32>
    %103 = vector.multi_reduction <add>, %99, %cst_118 [0] : vector<256x128xf32> to vector<128xf32>
    %104 = arith.mulf %99, %99 : vector<256x128xf32>
    %cst_119 = arith.constant dense<0.000000e+00> : vector<128xf32>
    %105 = vector.multi_reduction <add>, %104, %cst_119 [0] : vector<256x128xf32> to vector<128xf32>
    %106 = tpu.iota {dimensions = array<i32: 0>} : vector<8x128xi32>
    %c0_i32 = arith.constant 0 : i32
    %107 = vector.broadcast %c0_i32 : i32 to vector<8x128xi32>
    %108 = arith.cmpi eq, %106, %107 : vector<8x128xi32>
    %109 = vector.shape_cast %103 : vector<128xf32> to vector<1x128xf32>
    %cst_120 = arith.constant 0.000000e+00 : f32
    %110 = vector.shape_cast %109 : vector<1x128xf32> to vector<1x128xf32>
    %111 = vector.broadcast %110 : vector<1x128xf32> to vector<8x128xf32>
    %112 = vector.broadcast %cst_120 : f32 to vector<8x128xf32>
    %113 = arith.select %108, %111, %112 : vector<8x128xi1>, vector<8x128xf32>
    %c1_i32 = arith.constant 1 : i32
    %114 = vector.broadcast %c1_i32 : i32 to vector<8x128xi32>
    %115 = arith.cmpi eq, %106, %114 : vector<8x128xi32>
    %116 = vector.shape_cast %105 : vector<128xf32> to vector<1x128xf32>
    %cst_121 = arith.constant 0.000000e+00 : f32
    %117 = vector.shape_cast %116 : vector<1x128xf32> to vector<1x128xf32>
    %118 = vector.broadcast %117 : vector<1x128xf32> to vector<8x128xf32>
    %119 = vector.broadcast %cst_121 : f32 to vector<8x128xf32>
    %120 = arith.select %115, %118, %119 : vector<8x128xi1>, vector<8x128xf32>
    %121 = arith.addf %113, %120 : vector<8x128xf32>
    %122 = vector.shape_cast %121 : vector<8x128xf32> to vector<1x8x128xf32>
    %c0_122 = arith.constant 0 : index
    %c0_123 = arith.constant 0 : index
    %c0_124 = arith.constant 0 : index
    %123 = vector.load %arg6[%c0_122, %c0_123, %c0_124] : memref<1x8x128xf32, #tpu.memory_space<vmem>>, vector<1x8x128xf32>
    tpu.vector_store %arg6[%c0_122, %c0_123, %c0_124], %122 {strides = array<i32>} : memref<1x8x128xf32, #tpu.memory_space<vmem>>, vector<1x8x128xf32>,
    return
  }
  func.func @transform_0(%arg0: i32) -> (i32, i32, i32, i32) {
    %c0_i32 = arith.constant 0 : i32
    %c0_i32_0 = arith.constant 0 : i32
    %c0_i32_1 = arith.constant 0 : i32
    %c0_i32_2 = arith.constant 0 : i32
    return %arg0, %c0_i32, %c0_i32_0, %c0_i32_1 : i32, i32, i32, i32
  }
  func.func @transform_1(%arg0: i32) -> (i32, i32) {
    %c0_i32 = arith.constant 0 : i32
    %c0_i32_0 = arith.constant 0 : i32
    %c0_i32_1 = arith.constant 0 : i32
    return %c0_i32, %c0_i32_0 : i32, i32
  }
  func.func @transform_2(%arg0: i32) -> (i32, i32) {
    %c0_i32 = arith.constant 0 : i32
    %c0_i32_0 = arith.constant 0 : i32
    %c0_i32_1 = arith.constant 0 : i32
    return %c0_i32, %c0_i32_0 : i32, i32
  }
  func.func @transform_3(%arg0: i32) -> (i32, i32, i32) {
    %c0_i32 = arith.constant 0 : i32
    %c0_i32_0 = arith.constant 0 : i32
    %c0_i32_1 = arith.constant 0 : i32
    %c0_i32_2 = arith.constant 0 : i32
    return %c0_i32, %c0_i32_0, %c0_i32_1 : i32, i32, i32
  }
  func.func @transform_4(%arg0: i32) -> (i32, i32, i32, i32) {
    %c0_i32 = arith.constant 0 : i32
    %c0_i32_0 = arith.constant 0 : i32
    %c0_i32_1 = arith.constant 0 : i32
    %c0_i32_2 = arith.constant 0 : i32
    return %arg0, %c0_i32, %c0_i32_0, %c0_i32_1 : i32, i32, i32, i32
  }
  func.func @transform_5(%arg0: i32) -> (i32, i32, i32) {
    %c0_i32 = arith.constant 0 : i32
    %c0_i32_0 = arith.constant 0 : i32
    %c0_i32_1 = arith.constant 0 : i32
    return %arg0, %c0_i32, %c0_i32_0 : i32, i32, i32
  }
}

module attributes {stable_mosaic.version = 11 : i64} {
  func.func @kernel(%arg0: i32, %arg1: memref<512x128xbf16, #tpu.memory_space<vmem>>, %arg2: memref<1x128xf32, #tpu.memory_space<vmem>>, %arg3: memref<1x128xf32, #tpu.memory_space<vmem>>, %arg4: memref<128x128xbf16, #tpu.memory_space<vmem>>, %arg5: memref<512x128xbf16, #tpu.memory_space<vmem>>, %arg6: memref<512x128xf32, #tpu.memory_space<vmem>>) attributes {dimension_semantics = [#tpu.dimension_semantics<parallel>], iteration_bounds = array<i64: 1>, scalar_prefetch = 0 : i64, scratch_operands = 0 : i64, tpu.core_type = #tpu.core_type<tc>, window_params = [{transform_indices = @transform_0, window_bounds = array<i64: 512, 128>}, {pipeline_mode = #tpu.pipeline_mode<synchronous>, transform_indices = @transform_1, window_bounds = array<i64: 1, 128>}, {pipeline_mode = #tpu.pipeline_mode<synchronous>, transform_indices = @transform_2, window_bounds = array<i64: 1, 128>}, {pipeline_mode = #tpu.pipeline_mode<synchronous>, transform_indices = @transform_3, window_bounds = array<i64: 128, 128>}, {transform_indices = @transform_4, window_bounds = array<i64: 512, 128>}, {transform_indices = @transform_5, window_bounds = array<i64: 512, 128>}]} {
    %c0 = arith.constant 0 : index
    %c0_0 = arith.constant 0 : index
    %0 = vector.load %arg1[%c0, %c0_0] : memref<512x128xbf16, #tpu.memory_space<vmem>>, vector<512x128xbf16>
    %1 = arith.extf %0 : vector<512x128xbf16> to vector<512x128xf32>
    %c0_1 = arith.constant 0 : index
    %c0_2 = arith.constant 0 : index
    %2 = vector.load %arg2[%c0_1, %c0_2] : memref<1x128xf32, #tpu.memory_space<vmem>>, vector<1x128xf32>
    %3 = vector.broadcast %2 : vector<1x128xf32> to vector<512x128xf32>
    %4 = arith.mulf %1, %3 : vector<512x128xf32>
    %c0_3 = arith.constant 0 : index
    %c0_4 = arith.constant 0 : index
    %5 = vector.load %arg3[%c0_3, %c0_4] : memref<1x128xf32, #tpu.memory_space<vmem>>, vector<1x128xf32>
    %6 = vector.broadcast %5 : vector<1x128xf32> to vector<512x128xf32>
    %7 = arith.addf %4, %6 : vector<512x128xf32>
    %cst = arith.constant 0.000000e+00 : f32
    %8 = vector.broadcast %cst : f32 to vector<512x128xf32>
    %9 = arith.maximumf %7, %8 : vector<512x128xf32>
    %10 = arith.truncf %9 : vector<512x128xf32> to vector<512x128xbf16>
    %c0_5 = arith.constant 0 : index
    %c0_6 = arith.constant 0 : index
    %11 = vector.load %arg4[%c0_5, %c0_6] : memref<128x128xbf16, #tpu.memory_space<vmem>>, vector<128x128xbf16>
    %cst_7 = arith.constant dense<0.000000e+00> : vector<512x128xf32>
    %12 = tpu.matmul %10, %11, %cst_7 {dimension_numbers = #tpu.dot_dimension_numbers<[1], [0], [0], [1], [0, 0, 1, 1], [], []>} : vector<512x128xbf16>, vector<128x128xbf16>, vector<512x128xf32> -> vector<512x128xf32>
    %c0_8 = arith.constant 0 : index
    %c0_9 = arith.constant 0 : index
    %13 = vector.load %arg5[%c0_8, %c0_9] : memref<512x128xbf16, #tpu.memory_space<vmem>>, vector<512x128xbf16>
    %14 = arith.extf %13 : vector<512x128xbf16> to vector<512x128xf32>
    %15 = arith.addf %12, %14 : vector<512x128xf32>
    %c0_10 = arith.constant 0 : index
    %c0_11 = arith.constant 0 : index
    %16 = vector.load %arg6[%c0_10, %c0_11] : memref<512x128xf32, #tpu.memory_space<vmem>>, vector<512x128xf32>
    tpu.vector_store %arg6[%c0_10, %c0_11], %15 {strides = array<i32>} : memref<512x128xf32, #tpu.memory_space<vmem>>, vector<512x128xf32>,
    return
  }
  func.func @transform_0(%arg0: i32) -> (i32, i32) {
    %c0_i32 = arith.constant 0 : i32
    %c0_i32_0 = arith.constant 0 : i32
    return %arg0, %c0_i32 : i32, i32
  }
  func.func @transform_1(%arg0: i32) -> (i32, i32) {
    %c0_i32 = arith.constant 0 : i32
    %c0_i32_0 = arith.constant 0 : i32
    %c0_i32_1 = arith.constant 0 : i32
    return %c0_i32, %c0_i32_0 : i32, i32
  }
  func.func @transform_2(%arg0: i32) -> (i32, i32) {
    %c0_i32 = arith.constant 0 : i32
    %c0_i32_0 = arith.constant 0 : i32
    %c0_i32_1 = arith.constant 0 : i32
    return %c0_i32, %c0_i32_0 : i32, i32
  }
  func.func @transform_3(%arg0: i32) -> (i32, i32) {
    %c0_i32 = arith.constant 0 : i32
    %c0_i32_0 = arith.constant 0 : i32
    %c0_i32_1 = arith.constant 0 : i32
    return %c0_i32, %c0_i32_0 : i32, i32
  }
  func.func @transform_4(%arg0: i32) -> (i32, i32) {
    %c0_i32 = arith.constant 0 : i32
    %c0_i32_0 = arith.constant 0 : i32
    return %arg0, %c0_i32 : i32, i32
  }
  func.func @transform_5(%arg0: i32) -> (i32, i32) {
    %c0_i32 = arith.constant 0 : i32
    %c0_i32_0 = arith.constant 0 : i32
    return %arg0, %c0_i32 : i32, i32
  }
}

</mosaic_0001>

<llo_original>
// kernel: residual_block_forward.4
$region0: #{residual_block_forward.4}
  #allocation0 [shape = 'u32[]', space=smem, size = 0x4, offset = 0x4, fixed_abs, tag = 'smem constant byte address 0x4 - core index']
  #allocation1 [shape = 'u32[144,128]{1,0:T(1,128)}', space=vmem, size = 0x12000, scoped, tag = 'internal scratch']
  %s0 = inlined_call_operand.vmem [shape: f32[512,128], index: 0, kind: input, shape index: {}]
  %s1 = inlined_call_operand.vmem [shape: f32[1,8,128], index: 1, kind: output, shape index: {}]
  %s2 = sld [smem:[#allocation0]]
  $region14: #{residual_block_forward.4} parent=0
    _
  %s4 = ssub.s32 1, %s2
  %s5 = scalar_select 0, %s4, %s2
  // Predicated region
  $region2: #{residual_block_forward.4} parent=0 // pred_check
    _
  $region3: #{residual_block_forward.4} parent=0 // pred_check_branch
    %7 = sbr.rel (0) target = $region5
  $region4: #{residual_block_forward.4} parent=0 // pred_region
    _
  $region5: #{residual_block_forward.4} parent=0 // pred_fallthru
    _
  %v8 = vld [vmem:[%s0] sm:$0xff]
  %v9 = vld [vmem:[%s0 + $0x8] sm:$0xff]
  %v10 = vld [vmem:[%s0 + $0x10] sm:$0xff]
  %v11 = vld [vmem:[%s0 + $0x18] sm:$0xff]
  %v12 = vld [vmem:[%s0 + $0x20] sm:$0xff]
  %v13 = vld [vmem:[%s0 + $0x28] sm:$0xff]
  %v14 = vld [vmem:[%s0 + $0x30] sm:$0xff]
  %v15 = vld [vmem:[%s0 + $0x38] sm:$0xff]
  %v16 = vld [vmem:[%s0 + $0x40] sm:$0xff]
  %v17 = vld [vmem:[%s0 + $0x48] sm:$0xff]
  %v18 = vld [vmem:[%s0 + $0x50] sm:$0xff]
  %v19 = vld [vmem:[%s0 + $0x58] sm:$0xff]
  %v20 = vld [vmem:[%s0 + $0x60] sm:$0xff]
  %v21 = vld [vmem:[%s0 + $0x68] sm:$0xff]
  %v22 = vld [vmem:[%s0 + $0x70] sm:$0xff]
  %v23 = vld [vmem:[%s0 + $0x78] sm:$0xff]
  %v24 = vld [vmem:[%s0 + $0x80] sm:$0xff]
  %v25 = vld [vmem:[%s0 + $0x88] sm:$0xff]
  %v26 = vld [vmem:[%s0 + $0x90] sm:$0xff]
  %v27 = vld [vmem:[%s0 + $0x98] sm:$0xff]
  %v28 = vld [vmem:[%s0 + $0xa0] sm:$0xff]
  %v29 = vld [vmem:[%s0 + $0xa8] sm:$0xff]
  %v30 = vld [vmem:[%s0 + $0xb0] sm:$0xff]
  %v31 = vld [vmem:[%s0 + $0xb8] sm:$0xff]
  %v32 = vld [vmem:[%s0 + $0xc0] sm:$0xff]
  %v33 = vld [vmem:[%s0 + $0xc8] sm:$0xff]
  %v34 = vld [vmem:[%s0 + $0xd0] sm:$0xff]
  %v35 = vld [vmem:[%s0 + $0xd8] sm:$0xff]
  %v36 = vld [vmem:[%s0 + $0xe0] sm:$0xff]
  %v37 = vld [vmem:[%s0 + $0xe8] sm:$0xff]
  %v38 = vld [vmem:[%s0 + $0xf0] sm:$0xff]
  %v39 = vld [vmem:[%s0 + $0xf8] sm:$0xff]
  %v40 = vld [vmem:[%s0 + $0x100] sm:$0xff]
  %v41 = vld [vmem:[%s0 + $0x108] sm:$0xff]
  %v42 = vld [vmem:[%s0 + $0x110] sm:$0xff]
  %v43 = vld [vmem:[%s0 + $0x118] sm:$0xff]
  %v44 = vld [vmem:[%s0 + $0x120] sm:$0xff]
  %v45 = vld [vmem:[%s0 + $0x128] sm:$0xff]
  %v46 = vld [vmem:[%s0 + $0x130] sm:$0xff]
  %v47 = vld [vmem:[%s0 + $0x138] sm:$0xff]
  %v48 = vld [vmem:[%s0 + $0x140] sm:$0xff]
  %v49 = vld [vmem:[%s0 + $0x148] sm:$0xff]
  %v50 = vld [vmem:[%s0 + $0x150] sm:$0xff]
  %v51 = vld [vmem:[%s0 + $0x158] sm:$0xff]
  %v52 = vld [vmem:[%s0 + $0x160] sm:$0xff]
  %v53 = vld [vmem:[%s0 + $0x168] sm:$0xff]
  %v54 = vld [vmem:[%s0 + $0x170] sm:$0xff]
  %v55 = vld [vmem:[%s0 + $0x178] sm:$0xff]
  %v56 = vld [vmem:[%s0 + $0x180] sm:$0xff]
  %v57 = vld [vmem:[%s0 + $0x188] sm:$0xff]
  %v58 = vld [vmem:[%s0 + $0x190] sm:$0xff]
  %v59 = vld [vmem:[%s0 + $0x198] sm:$0xff]
  %v60 = vld [vmem:[%s0 + $0x1a0] sm:$0xff]
  %v61 = vld [vmem:[%s0 + $0x1a8] sm:$0xff]
  %v62 = vld [vmem:[%s0 + $0x1b0] sm:$0xff]
  %v63 = vld [vmem:[%s0 + $0x1b8] sm:$0xff]
  %v64 = vld [vmem:[%s0 + $0x1c0] sm:$0xff]
  %v65 = vld [vmem:[%s0 + $0x1c8] sm:$0xff]
  %v66 = vld [vmem:[%s0 + $0x1d0] sm:$0xff]
  %v67 = vld [vmem:[%s0 + $0x1d8] sm:$0xff]
  %v68 = vld [vmem:[%s0 + $0x1e0] sm:$0xff]
  %v69 = vld [vmem:[%s0 + $0x1e8] sm:$0xff]
  %v70 = vld [vmem:[%s0 + $0x1f0] sm:$0xff]
  %v71 = vld [vmem:[%s0 + $0x1f8] sm:$0xff]
  %v72 = vlaneseq
  %v73 = vshrl.u32 %v72, 7
  %v74 = vadd.s32 %v73, 8
  %v75 = vadd.s32 %v73, 16
  %v76 = vadd.s32 %v73, 24
  %v77 = vadd.s32 %v73, 32
  %v78 = vadd.s32 %v73, 40
  %v79 = vadd.s32 %v73, 48
  %v80 = vadd.s32 %v73, 56
  %v81 = vadd.s32 %v73, 64
  %v82 = vadd.s32 %v73, 72
  %v83 = vadd.s32 %v73, 80
  %v84 = vadd.s32 %v73, 88
  %v85 = vadd.s32 %v73, 96
  %v86 = vadd.s32 %v73, 104
  %v87 = vadd.s32 %v73, 112
  %v88 = vadd.s32 %v73, 120
  %v89 = vadd.s32 %v73, 128
  %v90 = vadd.s32 %v73, 136
  %v91 = vadd.s32 %v73, 144
  %v92 = vadd.s32 %v73, 152
  %v93 = vadd.s32 %v73, 160
  %v94 = vadd.s32 %v73, 168
  %v95 = vadd.s32 %v73, 176
  %v96 = vadd.s32 %v73, 184
  %v97 = vadd.s32 %v73, 192
  %v98 = vadd.s32 %v73, 200
  %v99 = vadd.s32 %v73, 208
  %v100 = vadd.s32 %v73, 216
  %v101 = vadd.s32 %v73, 224
  %v102 = vadd.s32 %v73, 232
  %v103 = vadd.s32 %v73, 240
  %v104 = vadd.s32 %v73, 248
  %v105 = vadd.s32 %v73, 256
  %v106 = vadd.s32 %v73, 264
  %v107 = vadd.s32 %v73, 272
  %v108 = vadd.s32 %v73, 280
  %v109 = vadd.s32 %v73, 288
  %v110 = vadd.s32 %v73, 296
  %v111 = vadd.s32 %v73, 304
  %v112 = vadd.s32 %v73, 312
  %v113 = vadd.s32 %v73, 320
  %v114 = vadd.s32 %v73, 328
  %v115 = vadd.s32 %v73, 336
  %v116 = vadd.s32 %v73, 344
  %v117 = vadd.s32 %v73, 352
  %v118 = vadd.s32 %v73, 360
  %v119 = vadd.s32 %v73, 368
  %v120 = vadd.s32 %v73, 376
  %v121 = vadd.s32 %v73, 384
  %v122 = vadd.s32 %v73, 392
  %v123 = vadd.s32 %v73, 400
  %v124 = vadd.s32 %v73, 408
  %v125 = vadd.s32 %v73, 416
  %v126 = vadd.s32 %v73, 424
  %v127 = vadd.s32 %v73, 432
  %v128 = vadd.s32 %v73, 440
  %v129 = vadd.s32 %v73, 448
  %v130 = vadd.s32 %v73, 456
  %v131 = vadd.s32 %v73, 464
  %v132 = vadd.s32 %v73, 472
  %v133 = vadd.s32 %v73, 480
  %v134 = vadd.s32 %v73, 488
  %v135 = vadd.s32 %v73, 496
  %v136 = vadd.s32 %v73, 504
  %s137 = smul.u32 0, 512
  %s138 = ssub.s32 512, %s137
  %v139 = vstv %s138
  %vm140 = vcmp.lt.s32.totalorder %v73, %v139
  %vm141 = vcmp.lt.s32.totalorder %v74, %v139
  %vm142 = vcmp.lt.s32.totalorder %v75, %v139
  %vm143 = vcmp.lt.s32.totalorder %v76, %v139
  %vm144 = vcmp.lt.s32.totalorder %v77, %v139
  %vm145 = vcmp.lt.s32.totalorder %v78, %v139
  %vm146 = vcmp.lt.s32.totalorder %v79, %v139
  %vm147 = vcmp.lt.s32.totalorder %v80, %v139
  %vm148 = vcmp.lt.s32.totalorder %v81, %v139
  %vm149 = vcmp.lt.s32.totalorder %v82, %v139
  %vm150 = vcmp.lt.s32.totalorder %v83, %v139
  %vm151 = vcmp.lt.s32.totalorder %v84, %v139
  %vm152 = vcmp.lt.s32.totalorder %v85, %v139
  %vm153 = vcmp.lt.s32.totalorder %v86, %v139
  %vm154 = vcmp.lt.s32.totalorder %v87, %v139
  %vm155 = vcmp.lt.s32.totalorder %v88, %v139
  %vm156 = vcmp.lt.s32.totalorder %v89, %v139
  %vm157 = vcmp.lt.s32.totalorder %v90, %v139
  %vm158 = vcmp.lt.s32.totalorder %v91, %v139
  %vm159 = vcmp.lt.s32.totalorder %v92, %v139
  %vm160 = vcmp.lt.s32.totalorder %v93, %v139
  %vm161 = vcmp.lt.s32.totalorder %v94, %v139
  %vm162 = vcmp.lt.s32.totalorder %v95, %v139
  %vm163 = vcmp.lt.s32.totalorder %v96, %v139
  %vm164 = vcmp.lt.s32.totalorder %v97, %v139
  %vm165 = vcmp.lt.s32.totalorder %v98, %v139
  %vm166 = vcmp.lt.s32.totalorder %v99, %v139
  %vm167 = vcmp.lt.s32.totalorder %v100, %v139
  %vm168 = vcmp.lt.s32.totalorder %v101, %v139
  %vm169 = vcmp.lt.s32.totalorder %v102, %v139
  %vm170 = vcmp.lt.s32.totalorder %v103, %v139
  %vm171 = vcmp.lt.s32.totalorder %v104, %v139
  %vm172 = vcmp.lt.s32.totalorder %v105, %v139
  %vm173 = vcmp.lt.s32.totalorder %v106, %v139
  %vm174 = vcmp.lt.s32.totalorder %v107, %v139
  %vm175 = vcmp.lt.s32.totalorder %v108, %v139
  %vm176 = vcmp.lt.s32.totalorder %v109, %v139
  %vm177 = vcmp.lt.s32.totalorder %v110, %v139
  %vm178 = vcmp.lt.s32.totalorder %v111, %v139
  %vm179 = vcmp.lt.s32.totalorder %v112, %v139
  %vm180 = vcmp.lt.s32.totalorder %v113, %v139
  %vm181 = vcmp.lt.s32.totalorder %v114, %v139
  %vm182 = vcmp.lt.s32.totalorder %v115, %v139
  %vm183 = vcmp.lt.s32.totalorder %v116, %v139
  %vm184 = vcmp.lt.s32.totalorder %v117, %v139
  %vm185 = vcmp.lt.s32.totalorder %v118, %v139
  %vm186 = vcmp.lt.s32.totalorder %v119, %v139
  %vm187 = vcmp.lt.s32.totalorder %v120, %v139
  %vm188 = vcmp.lt.s32.totalorder %v121, %v139
  %vm189 = vcmp.lt.s32.totalorder %v122, %v139
  %vm190 = vcmp.lt.s32.totalorder %v123, %v139
  %vm191 = vcmp.lt.s32.totalorder %v124, %v139
  %vm192 = vcmp.lt.s32.totalorder %v125, %v139
  %vm193 = vcmp.lt.s32.totalorder %v126, %v139
  %vm194 = vcmp.lt.s32.totalorder %v127, %v139
  %vm195 = vcmp.lt.s32.totalorder %v128, %v139
  %vm196 = vcmp.lt.s32.totalorder %v129, %v139
  %vm197 = vcmp.lt.s32.totalorder %v130, %v139
  %vm198 = vcmp.lt.s32.totalorder %v131, %v139
  %vm199 = vcmp.lt.s32.totalorder %v132, %v139
  %vm200 = vcmp.lt.s32.totalorder %v133, %v139
  %vm201 = vcmp.lt.s32.totalorder %v134, %v139
  %vm202 = vcmp.lt.s32.totalorder %v135, %v139
  %vm203 = vcmp.lt.s32.totalorder %v136, %v139
  %v204 = vsel %vm140, %v8, 0.0
  %v205 = vsel %vm141, %v9, 0.0
  %v206 = vsel %vm142, %v10, 0.0
  %v207 = vsel %vm143, %v11, 0.0
  %v208 = vsel %vm144, %v12, 0.0
  %v209 = vsel %vm145, %v13, 0.0
  %v210 = vsel %vm146, %v14, 0.0
  %v211 = vsel %vm147, %v15, 0.0
  %v212 = vsel %vm148, %v16, 0.0
  %v213 = vsel %vm149, %v17, 0.0
  %v214 = vsel %vm150, %v18, 0.0
  %v215 = vsel %vm151, %v19, 0.0
  %v216 = vsel %vm152, %v20, 0.0
  %v217 = vsel %vm153, %v21, 0.0
  %v218 = vsel %vm154, %v22, 0.0
  %v219 = vsel %vm155, %v23, 0.0
  %v220 = vsel %vm156, %v24, 0.0
  %v221 = vsel %vm157, %v25, 0.0
  %v222 = vsel %vm158, %v26, 0.0
  %v223 = vsel %vm159, %v27, 0.0
  %v224 = vsel %vm160, %v28, 0.0
  %v225 = vsel %vm161, %v29, 0.0
  %v226 = vsel %vm162, %v30, 0.0
  %v227 = vsel %vm163, %v31, 0.0
  %v228 = vsel %vm164, %v32, 0.0
  %v229 = vsel %vm165, %v33, 0.0
  %v230 = vsel %vm166, %v34, 0.0
  %v231 = vsel %vm167, %v35, 0.0
  %v232 = vsel %vm168, %v36, 0.0
  %v233 = vsel %vm169, %v37, 0.0
  %v234 = vsel %vm170, %v38, 0.0
  %v235 = vsel %vm171, %v39, 0.0
  %v236 = vsel %vm172, %v40, 0.0
  %v237 = vsel %vm173, %v41, 0.0
  %v238 = vsel %vm174, %v42, 0.0
  %v239 = vsel %vm175, %v43, 0.0
  %v240 = vsel %vm176, %v44, 0.0
  %v241 = vsel %vm177, %v45, 0.0
  %v242 = vsel %vm178, %v46, 0.0
  %v243 = vsel %vm179, %v47, 0.0
  %v244 = vsel %vm180, %v48, 0.0
  %v245 = vsel %vm181, %v49, 0.0
  %v246 = vsel %vm182, %v50, 0.0
  %v247 = vsel %vm183, %v51, 0.0
  %v248 = vsel %vm184, %v52, 0.0
  %v249 = vsel %vm185, %v53, 0.0
  %v250 = vsel %vm186, %v54, 0.0
  %v251 = vsel %vm187, %v55, 0.0
  %v252 = vsel %vm188, %v56, 0.0
  %v253 = vsel %vm189, %v57, 0.0
  %v254 = vsel %vm190, %v58, 0.0
  %v255 = vsel %vm191, %v59, 0.0
  %v256 = vsel %vm192, %v60, 0.0
  %v257 = vsel %vm193, %v61, 0.0
  %v258 = vsel %vm194, %v62, 0.0
  %v259 = vsel %vm195, %v63, 0.0
  %v260 = vsel %vm196, %v64, 0.0
  %v261 = vsel %vm197, %v65, 0.0
  %v262 = vsel %vm198, %v66, 0.0
  %v263 = vsel %vm199, %v67, 0.0
  %v264 = vsel %vm200, %v68, 0.0
  %v265 = vsel %vm201, %v69, 0.0
  %v266 = vsel %vm202, %v70, 0.0
  %v267 = vsel %vm203, %v71, 0.0
  %v268 = vadd.f32 %v204, %v205
  %v269 = vadd.f32 %v268, %v206
  %v270 = vadd.f32 %v269, %v207
  %v271 = vadd.f32 %v270, %v208
  %v272 = vadd.f32 %v271, %v209
  %v273 = vadd.f32 %v272, %v210
  %v274 = vadd.f32 %v273, %v211
  %v275 = vadd.f32 %v274, %v212
  %v276 = vadd.f32 %v275, %v213
  %v277 = vadd.f32 %v276, %v214
  %v278 = vadd.f32 %v277, %v215
  %v279 = vadd.f32 %v278, %v216
  %v280 = vadd.f32 %v279, %v217
  %v281 = vadd.f32 %v280, %v218
  %v282 = vadd.f32 %v281, %v219
  %v283 = vadd.f32 %v282, %v220
  %v284 = vadd.f32 %v283, %v221
  %v285 = vadd.f32 %v284, %v222
  %v286 = vadd.f32 %v285, %v223
  %v287 = vadd.f32 %v286, %v224
  %v288 = vadd.f32 %v287, %v225
  %v289 = vadd.f32 %v288, %v226
  %v290 = vadd.f32 %v289, %v227
  %v291 = vadd.f32 %v290, %v228
  %v292 = vadd.f32 %v291, %v229
  %v293 = vadd.f32 %v292, %v230
  %v294 = vadd.f32 %v293, %v231
  %v295 = vadd.f32 %v294, %v232
  %v296 = vadd.f32 %v295, %v233
  %v297 = vadd.f32 %v296, %v234
  %v298 = vadd.f32 %v297, %v235
  %v299 = vadd.f32 %v298, %v236
  %v300 = vadd.f32 %v299, %v237
  %v301 = vadd.f32 %v300, %v238
  %v302 = vadd.f32 %v301, %v239
  %v303 = vadd.f32 %v302, %v240
  %v304 = vadd.f32 %v303, %v241
  %v305 = vadd.f32 %v304, %v242
  %v306 = vadd.f32 %v305, %v243
  %v307 = vadd.f32 %v306, %v244
  %v308 = vadd.f32 %v307, %v245
  %v309 = vadd.f32 %v308, %v246
  %v310 = vadd.f32 %v309, %v247
  %v311 = vadd.f32 %v310, %v248
  %v312 = vadd.f32 %v311, %v249
  %v313 = vadd.f32 %v312, %v250
  %v314 = vadd.f32 %v313, %v251
  %v315 = vadd.f32 %v314, %v252
  %v316 = vadd.f32 %v315, %v253
  %v317 = vadd.f32 %v316, %v254
  %v318 = vadd.f32 %v317, %v255
  %v319 = vadd.f32 %v318, %v256
  %v320 = vadd.f32 %v319, %v257
  %v321 = vadd.f32 %v320, %v258
  %v322 = vadd.f32 %v321, %v259
  %v323 = vadd.f32 %v322, %v260
  %v324 = vadd.f32 %v323, %v261
  %v325 = vadd.f32 %v324, %v262
  %v326 = vadd.f32 %v325, %v263
  %v327 = vadd.f32 %v326, %v264
  %v328 = vadd.f32 %v327, %v265
  %v329 = vadd.f32 %v328, %v266
  %v330 = vadd.f32 %v329, %v267
  %v331 = vrot.slane %v330, 4
  %v332 = vadd.f32 %v330, %v331
  %v333 = vrot.slane %v332, 2
  %v334 = vadd.f32 %v332, %v333
  %v335 = vrot.slane %v334, 1
  %v336 = vadd.f32 %v334, %v335
  %v337 = vmul.f32 %v204, %v204
  %v338 = vmul.f32 %v205, %v205
  %v339 = vmul.f32 %v206, %v206
  %v340 = vmul.f32 %v207, %v207
  %v341 = vmul.f32 %v208, %v208
  %v342 = vmul.f32 %v209, %v209
  %v343 = vmul.f32 %v210, %v210
  %v344 = vmul.f32 %v211, %v211
  %v345 = vmul.f32 %v212, %v212
  %v346 = vmul.f32 %v213, %v213
  %v347 = vmul.f32 %v214, %v214
  %v348 = vmul.f32 %v215, %v215
  %v349 = vmul.f32 %v216, %v216
  %v350 = vmul.f32 %v217, %v217
  %v351 = vmul.f32 %v218, %v218
  %v352 = vmul.f32 %v219, %v219
  %v353 = vmul.f32 %v220, %v220
  %v354 = vmul.f32 %v221, %v221
  %v355 = vmul.f32 %v222, %v222
  %v356 = vmul.f32 %v223, %v223
  %v357 = vmul.f32 %v224, %v224
  %v358 = vmul.f32 %v225, %v225
  %v359 = vmul.f32 %v226, %v226
  %v360 = vmul.f32 %v227, %v227
  %v361 = vmul.f32 %v228, %v228
  %v362 = vmul.f32 %v229, %v229
  %v363 = vmul.f32 %v230, %v230
  %v364 = vmul.f32 %v231, %v231
  %v365 = vmul.f32 %v232, %v232
  %v366 = vmul.f32 %v233, %v233
  %v367 = vmul.f32 %v234, %v234
  %v368 = vmul.f32 %v235, %v235
  %v369 = vmul.f32 %v236, %v236
  %v370 = vmul.f32 %v237, %v237
  %v371 = vmul.f32 %v238, %v238
  %v372 = vmul.f32 %v239, %v239
  %v373 = vmul.f32 %v240, %v240
  %v374 = vmul.f32 %v241, %v241
  %v375 = vmul.f32 %v242, %v242
  %v376 = vmul.f32 %v243, %v243
  %v377 = vmul.f32 %v244, %v244
  %v378 = vmul.f32 %v245, %v245
  %v379 = vmul.f32 %v246, %v246
  %v380 = vmul.f32 %v247, %v247
  %v381 = vmul.f32 %v248, %v248
  %v382 = vmul.f32 %v249, %v249
  %v383 = vmul.f32 %v250, %v250
  %v384 = vmul.f32 %v251, %v251
  %v385 = vmul.f32 %v252, %v252
  %v386 = vmul.f32 %v253, %v253
  %v387 = vmul.f32 %v254, %v254
  %v388 = vmul.f32 %v255, %v255
  %v389 = vmul.f32 %v256, %v256
  %v390 = vmul.f32 %v257, %v257
  %v391 = vmul.f32 %v258, %v258
  %v392 = vmul.f32 %v259, %v259
  %v393 = vmul.f32 %v260, %v260
  %v394 = vmul.f32 %v261, %v261
  %v395 = vmul.f32 %v262, %v262
  %v396 = vmul.f32 %v263, %v263
  %v397 = vmul.f32 %v264, %v264
  %v398 = vmul.f32 %v265, %v265
  %v399 = vmul.f32 %v266, %v266
  %v400 = vmul.f32 %v267, %v267
  %v401 = vadd.f32 %v337, %v338
  %v402 = vadd.f32 %v401, %v339
  %v403 = vadd.f32 %v402, %v340
  %v404 = vadd.f32 %v403, %v341
  %v405 = vadd.f32 %v404, %v342
  %v406 = vadd.f32 %v405, %v343
  %v407 = vadd.f32 %v406, %v344
  %v408 = vadd.f32 %v407, %v345
  %v409 = vadd.f32 %v408, %v346
  %v410 = vadd.f32 %v409, %v347
  %v411 = vadd.f32 %v410, %v348
  %v412 = vadd.f32 %v411, %v349
  %v413 = vadd.f32 %v412, %v350
  %v414 = vadd.f32 %v413, %v351
  %v415 = vadd.f32 %v414, %v352
  %v416 = vadd.f32 %v415, %v353
  %v417 = vadd.f32 %v416, %v354
  %v418 = vadd.f32 %v417, %v355
  %v419 = vadd.f32 %v418, %v356
  %v420 = vadd.f32 %v419, %v357
  %v421 = vadd.f32 %v420, %v358
  %v422 = vadd.f32 %v421, %v359
  %v423 = vadd.f32 %v422, %v360
  %v424 = vadd.f32 %v423, %v361
  %v425 = vadd.f32 %v424, %v362
  %v426 = vadd.f32 %v425, %v363
  %v427 = vadd.f32 %v426, %v364
  %v428 = vadd.f32 %v427, %v365
  %v429 = vadd.f32 %v428, %v366
  %v430 = vadd.f32 %v429, %v367
  %v431 = vadd.f32 %v430, %v368
  %v432 = vadd.f32 %v431, %v369
  %v433 = vadd.f32 %v432, %v370
  %v434 = vadd.f32 %v433, %v371
  %v435 = vadd.f32 %v434, %v372
  %v436 = vadd.f32 %v435, %v373
  %v437 = vadd.f32 %v436, %v374
  %v438 = vadd.f32 %v437, %v375
  %v439 = vadd.f32 %v438, %v376
  %v440 = vadd.f32 %v439, %v377
  %v441 = vadd.f32 %v440, %v378
  %v442 = vadd.f32 %v441, %v379
  %v443 = vadd.f32 %v442, %v380
  %v444 = vadd.f32 %v443, %v381
  %v445 = vadd.f32 %v444, %v382
  %v446 = vadd.f32 %v445, %v383
  %v447 = vadd.f32 %v446, %v384
  %v448 = vadd.f32 %v447, %v385
  %v449 = vadd.f32 %v448, %v386
  %v450 = vadd.f32 %v449, %v387
  %v451 = vadd.f32 %v450, %v388
  %v452 = vadd.f32 %v451, %v389
  %v453 = vadd.f32 %v452, %v390
  %v454 = vadd.f32 %v453, %v391
  %v455 = vadd.f32 %v454, %v392
  %v456 = vadd.f32 %v455, %v393
  %v457 = vadd.f32 %v456, %v394
  %v458 = vadd.f32 %v457, %v395
  %v459 = vadd.f32 %v458, %v396
  %v460 = vadd.f32 %v459, %v397
  %v461 = vadd.f32 %v460, %v398
  %v462 = vadd.f32 %v461, %v399
  %v463 = vadd.f32 %v462, %v400
  %v464 = vrot.slane %v463, 4
  %v465 = vadd.f32 %v463, %v464
  %v466 = vrot.slane %v465, 2
  %v467 = vadd.f32 %v465, %v466
  %v468 = vrot.slane %v467, 1
  %v469 = vadd.f32 %v467, %v468
  %vm470 = vcmp.eq.s32.totalorder %v73, 0
  %v471 = vsel %vm470, %v336, 0.0
  %vm472 = vcmp.eq.s32.totalorder %v73, 1
  %v473 = vsel %vm472, %v469, 0.0
  %v474 = vadd.f32 %v471, %v473
  %475 = vst [vmem:[%s1] sm:$0xff] %v474
  // Predicated region
  $region6: #{residual_block_forward.4} parent=0 // pred_check
    _
  $region7: #{residual_block_forward.4} parent=0 // pred_check_branch
    %477 = sbr.rel (0) target = $region9
  $region8: #{residual_block_forward.4} parent=0 // pred_region
    _
  $region9: #{residual_block_forward.4} parent=0 // pred_fallthru
    _
  // Predicated region
  $region10: #{residual_block_forward.4} parent=0 // pred_check
    _
  $region11: #{residual_block_forward.4} parent=0 // pred_check_branch
    %479 = sbr.rel (0) target = $region13
  $region12: #{residual_block_forward.4} parent=0 // pred_region
    _
  $region13: #{residual_block_forward.4} parent=0 // pred_fallthru
    _

// kernel: residual_block_forward.7
$region0: #{residual_block_forward.7}
  #allocation0 [shape = 'u32[]', space=smem, size = 0x4, offset = 0x4, fixed_abs, tag = 'smem constant byte address 0x4 - core index']
  #allocation1 [shape = 'u32[144,128]{1,0:T(1,128)}', space=vmem, size = 0x12000, scoped, tag = 'internal scratch']
  %s0 = inlined_call_operand.vmem [shape: bf16[512,128], index: 0, kind: input, shape index: {}]
  %s1 = inlined_call_operand.vmem [shape: f32[1,128], index: 1, kind: input, shape index: {}]
  %s2 = inlined_call_operand.vmem [shape: f32[1,128], index: 2, kind: input, shape index: {}]
  %s3 = inlined_call_operand.vmem [shape: bf16[128,128], index: 3, kind: input, shape index: {}]
  %s4 = inlined_call_operand.vmem [shape: bf16[512,128], index: 4, kind: input, shape index: {}]
  %s5 = inlined_call_operand.vmem [shape: f32[512,128], index: 5, kind: output, shape index: {}]
  %s6 = sld [smem:[#allocation0]]
  $region30: #{residual_block_forward.7} parent=0
    _
  %s8 = ssub.s32 1, %s6
  %s9 = scalar_select 0, %s8, %s6
  // Predicated region
  $region2: #{residual_block_forward.7} parent=0 // pred_check
    _
  $region3: #{residual_block_forward.7} parent=0 // pred_check_branch
    %11 = sbr.rel (0) target = $region5
  $region4: #{residual_block_forward.7} parent=0 // pred_region
    _
  $region5: #{residual_block_forward.7} parent=0 // pred_fallthru
    _
  // Predicated region
  $region6: #{residual_block_forward.7} parent=0 // pred_check
    _
  $region7: #{residual_block_forward.7} parent=0 // pred_check_branch
    %13 = sbr.rel (0) target = $region9
  $region8: #{residual_block_forward.7} parent=0 // pred_region
    _
  $region9: #{residual_block_forward.7} parent=0 // pred_fallthru
    _
  // Predicated region
  $region10: #{residual_block_forward.7} parent=0 // pred_check
    _
  $region11: #{residual_block_forward.7} parent=0 // pred_check_branch
    %15 = sbr.rel (0) target = $region13
  $region12: #{residual_block_forward.7} parent=0 // pred_region
    _
  $region13: #{residual_block_forward.7} parent=0 // pred_fallthru
    _
  // Predicated region
  $region14: #{residual_block_forward.7} parent=0 // pred_check
    _
  $region15: #{residual_block_forward.7} parent=0 // pred_check_branch
    %17 = sbr.rel (0) target = $region17
  $region16: #{residual_block_forward.7} parent=0 // pred_region
    _
  $region17: #{residual_block_forward.7} parent=0 // pred_fallthru
    _
  // Predicated region
  $region18: #{residual_block_forward.7} parent=0 // pred_check
    _
  $region19: #{residual_block_forward.7} parent=0 // pred_check_branch
    %19 = sbr.rel (0) target = $region21
  $region20: #{residual_block_forward.7} parent=0 // pred_region
    _
  $region21: #{residual_block_forward.7} parent=0 // pred_fallthru
    _
  %v21 = vld [vmem:[%s0] sm:$0xf]
  %v22 = vld [vmem:[%s0 + $0x4] sm:$0xf]
  %v23 = vld [vmem:[%s0 + $0x8] sm:$0xf]
  %v24 = vld [vmem:[%s0 + $0xc] sm:$0xf]
  %v25 = vld [vmem:[%s0 + $0x10] sm:$0xf]
  %v26 = vld [vmem:[%s0 + $0x14] sm:$0xf]
  %v27 = vld [vmem:[%s0 + $0x18] sm:$0xf]
  %v28 = vld [vmem:[%s0 + $0x1c] sm:$0xf]
  %v29 = vld [vmem:[%s0 + $0x20] sm:$0xf]
  %v30 = vld [vmem:[%s0 + $0x24] sm:$0xf]
  %v31 = vld [vmem:[%s0 + $0x28] sm:$0xf]
  %v32 = vld [vmem:[%s0 + $0x2c] sm:$0xf]
  %v33 = vld [vmem:[%s0 + $0x30] sm:$0xf]
  %v34 = vld [vmem:[%s0 + $0x34] sm:$0xf]
  %v35 = vld [vmem:[%s0 + $0x38] sm:$0xf]
  %v36 = vld [vmem:[%s0 + $0x3c] sm:$0xf]
  %v37 = vld [vmem:[%s0 + $0x40] sm:$0xf]
  %v38 = vld [vmem:[%s0 + $0x44] sm:$0xf]
  %v39 = vld [vmem:[%s0 + $0x48] sm:$0xf]
  %v40 = vld [vmem:[%s0 + $0x4c] sm:$0xf]
  %v41 = vld [vmem:[%s0 + $0x50] sm:$0xf]
  %v42 = vld [vmem:[%s0 + $0x54] sm:$0xf]
  %v43 = vld [vmem:[%s0 + $0x58] sm:$0xf]
  %v44 = vld [vmem:[%s0 + $0x5c] sm:$0xf]
  %v45 = vld [vmem:[%s0 + $0x60] sm:$0xf]
  %v46 = vld [vmem:[%s0 + $0x64] sm:$0xf]
  %v47 = vld [vmem:[%s0 + $0x68] sm:$0xf]
  %v48 = vld [vmem:[%s0 + $0x6c] sm:$0xf]
  %v49 = vld [vmem:[%s0 + $0x70] sm:$0xf]
  %v50 = vld [vmem:[%s0 + $0x74] sm:$0xf]
  %v51 = vld [vmem:[%s0 + $0x78] sm:$0xf]
  %v52 = vld [vmem:[%s0 + $0x7c] sm:$0xf]
  %v53 = vld [vmem:[%s0 + $0x80] sm:$0xf]
  %v54 = vld [vmem:[%s0 + $0x84] sm:$0xf]
  %v55 = vld [vmem:[%s0 + $0x88] sm:$0xf]
  %v56 = vld [vmem:[%s0 + $0x8c] sm:$0xf]
  %v57 = vld [vmem:[%s0 + $0x90] sm:$0xf]
  %v58 = vld [vmem:[%s0 + $0x94] sm:$0xf]
  %v59 = vld [vmem:[%s0 + $0x98] sm:$0xf]
  %v60 = vld [vmem:[%s0 + $0x9c] sm:$0xf]
  %v61 = vld [vmem:[%s0 + $0xa0] sm:$0xf]
  %v62 = vld [vmem:[%s0 + $0xa4] sm:$0xf]
  %v63 = vld [vmem:[%s0 + $0xa8] sm:$0xf]
  %v64 = vld [vmem:[%s0 + $0xac] sm:$0xf]
  %v65 = vld [vmem:[%s0 + $0xb0] sm:$0xf]
  %v66 = vld [vmem:[%s0 + $0xb4] sm:$0xf]
  %v67 = vld [vmem:[%s0 + $0xb8] sm:$0xf]
  %v68 = vld [vmem:[%s0 + $0xbc] sm:$0xf]
  %v69 = vld [vmem:[%s0 + $0xc0] sm:$0xf]
  %v70 = vld [vmem:[%s0 + $0xc4] sm:$0xf]
  %v71 = vld [vmem:[%s0 + $0xc8] sm:$0xf]
  %v72 = vld [vmem:[%s0 + $0xcc] sm:$0xf]
  %v73 = vld [vmem:[%s0 + $0xd0] sm:$0xf]
  %v74 = vld [vmem:[%s0 + $0xd4] sm:$0xf]
  %v75 = vld [vmem:[%s0 + $0xd8] sm:$0xf]
  %v76 = vld [vmem:[%s0 + $0xdc] sm:$0xf]
  %v77 = vld [vmem:[%s0 + $0xe0] sm:$0xf]
  %v78 = vld [vmem:[%s0 + $0xe4] sm:$0xf]
  %v79 = vld [vmem:[%s0 + $0xe8] sm:$0xf]
  %v80 = vld [vmem:[%s0 + $0xec] sm:$0xf]
  %v81 = vld [vmem:[%s0 + $0xf0] sm:$0xf]
  %v82 = vld [vmem:[%s0 + $0xf4] sm:$0xf]
  %v83 = vld [vmem:[%s0 + $0xf8] sm:$0xf]
  %v84 = vld [vmem:[%s0 + $0xfc] sm:$0xf]
  %v85 = vunpack.c.l.bf16 %v21
  %v86 = vunpack.c.l.bf16 %v22
  %v87 = vunpack.c.l.bf16 %v23
  %v88 = vunpack.c.l.bf16 %v24
  %v89 = vunpack.c.l.bf16 %v25
  %v90 = vunpack.c.l.bf16 %v26
  %v91 = vunpack.c.l.bf16 %v27
  %v92 = vunpack.c.l.bf16 %v28
  %v93 = vunpack.c.l.bf16 %v29
  %v94 = vunpack.c.l.bf16 %v30
  %v95 = vunpack.c.l.bf16 %v31
  %v96 = vunpack.c.l.bf16 %v32
  %v97 = vunpack.c.l.bf16 %v33
  %v98 = vunpack.c.l.bf16 %v34
  %v99 = vunpack.c.l.bf16 %v35
  %v100 = vunpack.c.l.bf16 %v36
  %v101 = vunpack.c.l.bf16 %v37
  %v102 = vunpack.c.l.bf16 %v38
  %v103 = vunpack.c.l.bf16 %v39
  %v104 = vunpack.c.l.bf16 %v40
  %v105 = vunpack.c.l.bf16 %v41
  %v106 = vunpack.c.l.bf16 %v42
  %v107 = vunpack.c.l.bf16 %v43
  %v108 = vunpack.c.l.bf16 %v44
  %v109 = vunpack.c.l.bf16 %v45
  %v110 = vunpack.c.l.bf16 %v46
  %v111 = vunpack.c.l.bf16 %v47
  %v112 = vunpack.c.l.bf16 %v48
  %v113 = vunpack.c.l.bf16 %v49
  %v114 = vunpack.c.l.bf16 %v50
  %v115 = vunpack.c.l.bf16 %v51
  %v116 = vunpack.c.l.bf16 %v52
  %v117 = vunpack.c.l.bf16 %v53
  %v118 = vunpack.c.l.bf16 %v54
  %v119 = vunpack.c.l.bf16 %v55
  %v120 = vunpack.c.l.bf16 %v56
  %v121 = vunpack.c.l.bf16 %v57
  %v122 = vunpack.c.l.bf16 %v58
  %v123 = vunpack.c.l.bf16 %v59
  %v124 = vunpack.c.l.bf16 %v60
  %v125 = vunpack.c.l.bf16 %v61
  %v126 = vunpack.c.l.bf16 %v62
  %v127 = vunpack.c.l.bf16 %v63
  %v128 = vunpack.c.l.bf16 %v64
  %v129 = vunpack.c.l.bf16 %v65
  %v130 = vunpack.c.l.bf16 %v66
  %v131 = vunpack.c.l.bf16 %v67
  %v132 = vunpack.c.l.bf16 %v68
  %v133 = vunpack.c.l.bf16 %v69
  %v134 = vunpack.c.l.bf16 %v70
  %v135 = vunpack.c.l.bf16 %v71
  %v136 = vunpack.c.l.bf16 %v72
  %v137 = vunpack.c.l.bf16 %v73
  %v138 = vunpack.c.l.bf16 %v74
  %v139 = vunpack.c.l.bf16 %v75
  %v140 = vunpack.c.l.bf16 %v76
  %v141 = vunpack.c.l.bf16 %v77
  %v142 = vunpack.c.l.bf16 %v78
  %v143 = vunpack.c.l.bf16 %v79
  %v144 = vunpack.c.l.bf16 %v80
  %v145 = vunpack.c.l.bf16 %v81
  %v146 = vunpack.c.l.bf16 %v82
  %v147 = vunpack.c.l.bf16 %v83
  %v148 = vunpack.c.l.bf16 %v84
  %v149 = vld [vmem:[%s1] sm:$0x1]
  %v151 = vlaneseq
  %v152 = vshrl.u32 %v151, 7
  %v153 = vsub.s32 0, %v152
  %v154 = vrot.slane %v149, %v153
  %v156 = vmul.f32 %v85, %v154
  %v157 = vmul.f32 %v86, %v154
  %v158 = vmul.f32 %v87, %v154
  %v159 = vmul.f32 %v88, %v154
  %v160 = vmul.f32 %v89, %v154
  %v161 = vmul.f32 %v90, %v154
  %v162 = vmul.f32 %v91, %v154
  %v163 = vmul.f32 %v92, %v154
  %v164 = vmul.f32 %v93, %v154
  %v165 = vmul.f32 %v94, %v154
  %v166 = vmul.f32 %v95, %v154
  %v167 = vmul.f32 %v96, %v154
  %v168 = vmul.f32 %v97, %v154
  %v169 = vmul.f32 %v98, %v154
  %v170 = vmul.f32 %v99, %v154
  %v171 = vmul.f32 %v100, %v154
  %v172 = vmul.f32 %v101, %v154
  %v173 = vmul.f32 %v102, %v154
  %v174 = vmul.f32 %v103, %v154
  %v175 = vmul.f32 %v104, %v154
  %v176 = vmul.f32 %v105, %v154
  %v177 = vmul.f32 %v106, %v154
  %v178 = vmul.f32 %v107, %v154
  %v179 = vmul.f32 %v108, %v154
  %v180 = vmul.f32 %v109, %v154
  %v181 = vmul.f32 %v110, %v154
  %v182 = vmul.f32 %v111, %v154
  %v183 = vmul.f32 %v112, %v154
  %v184 = vmul.f32 %v113, %v154
  %v185 = vmul.f32 %v114, %v154
  %v186 = vmul.f32 %v115, %v154
  %v187 = vmul.f32 %v116, %v154
  %v188 = vmul.f32 %v117, %v154
  %v189 = vmul.f32 %v118, %v154
  %v190 = vmul.f32 %v119, %v154
  %v191 = vmul.f32 %v120, %v154
  %v192 = vmul.f32 %v121, %v154
  %v193 = vmul.f32 %v122, %v154
  %v194 = vmul.f32 %v123, %v154
  %v195 = vmul.f32 %v124, %v154
  %v196 = vmul.f32 %v125, %v154
  %v197 = vmul.f32 %v126, %v154
  %v198 = vmul.f32 %v127, %v154
  %v199 = vmul.f32 %v128, %v154
  %v200 = vmul.f32 %v129, %v154
  %v201 = vmul.f32 %v130, %v154
  %v202 = vmul.f32 %v131, %v154
  %v203 = vmul.f32 %v132, %v154
  %v204 = vmul.f32 %v133, %v154
  %v205 = vmul.f32 %v134, %v154
  %v206 = vmul.f32 %v135, %v154
  %v207 = vmul.f32 %v136, %v154
  %v208 = vmul.f32 %v137, %v154
  %v209 = vmul.f32 %v138, %v154
  %v210 = vmul.f32 %v139, %v154
  %v211 = vmul.f32 %v140, %v154
  %v212 = vmul.f32 %v141, %v154
  %v213 = vmul.f32 %v142, %v154
  %v214 = vmul.f32 %v143, %v154
  %v215 = vmul.f32 %v144, %v154
  %v216 = vmul.f32 %v145, %v154
  %v217 = vmul.f32 %v146, %v154
  %v218 = vmul.f32 %v147, %v154
  %v219 = vmul.f32 %v148, %v154
  %v220 = vld [vmem:[%s2] sm:$0x1]
  %v222 = vlaneseq
  %v223 = vshrl.u32 %v222, 7
  %v224 = vsub.s32 0, %v223
  %v225 = vrot.slane %v220, %v224
  %v227 = vadd.f32 %v156, %v225
  %v228 = vadd.f32 %v157, %v225
  %v229 = vadd.f32 %v158, %v225
  %v230 = vadd.f32 %v159, %v225
  %v231 = vadd.f32 %v160, %v225
  %v232 = vadd.f32 %v161, %v225
  %v233 = vadd.f32 %v162, %v225
  %v234 = vadd.f32 %v163, %v225
  %v235 = vadd.f32 %v164, %v225
  %v236 = vadd.f32 %v165, %v225
  %v237 = vadd.f32 %v166, %v225
  %v238 = vadd.f32 %v167, %v225
  %v239 = vadd.f32 %v168, %v225
  %v240 = vadd.f32 %v169, %v225
  %v241 = vadd.f32 %v170, %v225
  %v242 = vadd.f32 %v171, %v225
  %v243 = vadd.f32 %v172, %v225
  %v244 = vadd.f32 %v173, %v225
  %v245 = vadd.f32 %v174, %v225
  %v246 = vadd.f32 %v175, %v225
  %v247 = vadd.f32 %v176, %v225
  %v248 = vadd.f32 %v177, %v225
  %v249 = vadd.f32 %v178, %v225
  %v250 = vadd.f32 %v179, %v225
  %v251 = vadd.f32 %v180, %v225
  %v252 = vadd.f32 %v181, %v225
  %v253 = vadd.f32 %v182, %v225
  %v254 = vadd.f32 %v183, %v225
  %v255 = vadd.f32 %v184, %v225
  %v256 = vadd.f32 %v185, %v225
  %v257 = vadd.f32 %v186, %v225
  %v258 = vadd.f32 %v187, %v225
  %v259 = vadd.f32 %v188, %v225
  %v260 = vadd.f32 %v189, %v225
  %v261 = vadd.f32 %v190, %v225
  %v262 = vadd.f32 %v191, %v225
  %v263 = vadd.f32 %v192, %v225
  %v264 = vadd.f32 %v193, %v225
  %v265 = vadd.f32 %v194, %v225
  %v266 = vadd.f32 %v195, %v225
  %v267 = vadd.f32 %v196, %v225
  %v268 = vadd.f32 %v197, %v225
  %v269 = vadd.f32 %v198, %v225
  %v270 = vadd.f32 %v199, %v225
  %v271 = vadd.f32 %v200, %v225
  %v272 = vadd.f32 %v201, %v225
  %v273 = vadd.f32 %v202, %v225
  %v274 = vadd.f32 %v203, %v225
  %v275 = vadd.f32 %v204, %v225
  %v276 = vadd.f32 %v205, %v225
  %v277 = vadd.f32 %v206, %v225
  %v278 = vadd.f32 %v207, %v225
  %v279 = vadd.f32 %v208, %v225
  %v280 = vadd.f32 %v209, %v225
  %v281 = vadd.f32 %v210, %v225
  %v282 = vadd.f32 %v211, %v225
  %v283 = vadd.f32 %v212, %v225
  %v284 = vadd.f32 %v213, %v225
  %v285 = vadd.f32 %v214, %v225
  %v286 = vadd.f32 %v215, %v225
  %v287 = vadd.f32 %v216, %v225
  %v288 = vadd.f32 %v217, %v225
  %v289 = vadd.f32 %v218, %v225
  %v290 = vadd.f32 %v219, %v225
  %v291 = vmax.f32 %v227, 0.0
  %v292 = vmax.f32 %v228, 0.0
  %v293 = vmax.f32 %v229, 0.0
  %v294 = vmax.f32 %v230, 0.0
  %v295 = vmax.f32 %v231, 0.0
  %v296 = vmax.f32 %v232, 0.0
  %v297 = vmax.f32 %v233, 0.0
  %v298 = vmax.f32 %v234, 0.0
  %v299 = vmax.f32 %v235, 0.0
  %v300 = vmax.f32 %v236, 0.0
  %v301 = vmax.f32 %v237, 0.0
  %v302 = vmax.f32 %v238, 0.0
  %v303 = vmax.f32 %v239, 0.0
  %v304 = vmax.f32 %v240, 0.0
  %v305 = vmax.f32 %v241, 0.0
  %v306 = vmax.f32 %v242, 0.0
  %v307 = vmax.f32 %v243, 0.0
  %v308 = vmax.f32 %v244, 0.0
  %v309 = vmax.f32 %v245, 0.0
  %v310 = vmax.f32 %v246, 0.0
  %v311 = vmax.f32 %v247, 0.0
  %v312 = vmax.f32 %v248, 0.0
  %v313 = vmax.f32 %v249, 0.0
  %v314 = vmax.f32 %v250, 0.0
  %v315 = vmax.f32 %v251, 0.0
  %v316 = vmax.f32 %v252, 0.0
  %v317 = vmax.f32 %v253, 0.0
  %v318 = vmax.f32 %v254, 0.0
  %v319 = vmax.f32 %v255, 0.0
  %v320 = vmax.f32 %v256, 0.0
  %v321 = vmax.f32 %v257, 0.0
  %v322 = vmax.f32 %v258, 0.0
  %v323 = vmax.f32 %v259, 0.0
  %v324 = vmax.f32 %v260, 0.0
  %v325 = vmax.f32 %v261, 0.0
  %v326 = vmax.f32 %v262, 0.0
  %v327 = vmax.f32 %v263, 0.0
  %v328 = vmax.f32 %v264, 0.0
  %v329 = vmax.f32 %v265, 0.0
  %v330 = vmax.f32 %v266, 0.0
  %v331 = vmax.f32 %v267, 0.0
  %v332 = vmax.f32 %v268, 0.0
  %v333 = vmax.f32 %v269, 0.0
  %v334 = vmax.f32 %v270, 0.0
  %v335 = vmax.f32 %v271, 0.0
  %v336 = vmax.f32 %v272, 0.0
  %v337 = vmax.f32 %v273, 0.0
  %v338 = vmax.f32 %v274, 0.0
  %v339 = vmax.f32 %v275, 0.0
  %v340 = vmax.f32 %v276, 0.0
  %v341 = vmax.f32 %v277, 0.0
  %v342 = vmax.f32 %v278, 0.0
  %v343 = vmax.f32 %v279, 0.0
  %v344 = vmax.f32 %v280, 0.0
  %v345 = vmax.f32 %v281, 0.0
  %v346 = vmax.f32 %v282, 0.0
  %v347 = vmax.f32 %v283, 0.0
  %v348 = vmax.f32 %v284, 0.0
  %v349 = vmax.f32 %v285, 0.0
  %v350 = vmax.f32 %v286, 0.0
  %v351 = vmax.f32 %v287, 0.0
  %v352 = vmax.f32 %v288, 0.0
  %v353 = vmax.f32 %v289, 0.0
  %v354 = vmax.f32 %v290, 0.0
  %v355 = vpack.c.bf16 %v292, %v291
  %v356 = vpack.c.bf16 %v294, %v293
  %v357 = vpack.c.bf16 %v296, %v295
  %v358 = vpack.c.bf16 %v298, %v297
  %v359 = vpack.c.bf16 %v300, %v299
  %v360 = vpack.c.bf16 %v302, %v301
  %v361 = vpack.c.bf16 %v304, %v303
  %v362 = vpack.c.bf16 %v306, %v305
  %v363 = vpack.c.bf16 %v308, %v307
  %v364 = vpack.c.bf16 %v310, %v309
  %v365 = vpack.c.bf16 %v312, %v311
  %v366 = vpack.c.bf16 %v314, %v313
  %v367 = vpack.c.bf16 %v316, %v315
  %v368 = vpack.c.bf16 %v318, %v317
  %v369 = vpack.c.bf16 %v320, %v319
  %v370 = vpack.c.bf16 %v322, %v321
  %v371 = vpack.c.bf16 %v324, %v323
  %v372 = vpack.c.bf16 %v326, %v325
  %v373 = vpack.c.bf16 %v328, %v327
  %v374 = vpack.c.bf16 %v330, %v329
  %v375 = vpack.c.bf16 %v332, %v331
  %v376 = vpack.c.bf16 %v334, %v333
  %v377 = vpack.c.bf16 %v336, %v335
  %v378 = vpack.c.bf16 %v338, %v337
  %v379 = vpack.c.bf16 %v340, %v339
  %v380 = vpack.c.bf16 %v342, %v341
  %v381 = vpack.c.bf16 %v344, %v343
  %v382 = vpack.c.bf16 %v346, %v345
  %v383 = vpack.c.bf16 %v348, %v347
  %v384 = vpack.c.bf16 %v350, %v349
  %v385 = vpack.c.bf16 %v352, %v351
  %v386 = vpack.c.bf16 %v354, %v353
  %v387 = vld [vmem:[%s3] sm:$0xf]
  %v388 = vld [vmem:[%s3 + $0x4] sm:$0xf]
  %v389 = vld [vmem:[%s3 + $0x8] sm:$0xf]
  %v390 = vld [vmem:[%s3 + $0xc] sm:$0xf]
  %v391 = vld [vmem:[%s3 + $0x10] sm:$0xf]
  %v392 = vld [vmem:[%s3 + $0x14] sm:$0xf]
  %v393 = vld [vmem:[%s3 + $0x18] sm:$0xf]
  %v394 = vld [vmem:[%s3 + $0x1c] sm:$0xf]
  %v395 = vld [vmem:[%s3 + $0x20] sm:$0xf]
  %v396 = vld [vmem:[%s3 + $0x24] sm:$0xf]
  %v397 = vld [vmem:[%s3 + $0x28] sm:$0xf]
  %v398 = vld [vmem:[%s3 + $0x2c] sm:$0xf]
  %v399 = vld [vmem:[%s3 + $0x30] sm:$0xf]
  %v400 = vld [vmem:[%s3 + $0x34] sm:$0xf]
  %v401 = vld [vmem:[%s3 + $0x38] sm:$0xf]
  %v402 = vld [vmem:[%s3 + $0x3c] sm:$0xf]
  %v403 = vld [vmem:[%s4] sm:$0xf]
  %v404 = vld [vmem:[%s4 + $0x4] sm:$0xf]
  %v405 = vld [vmem:[%s4 + $0x8] sm:$0xf]
  %v406 = vld [vmem:[%s4 + $0xc] sm:$0xf]
  %v407 = vld [vmem:[%s4 + $0x10] sm:$0xf]
  %v408 = vld [vmem:[%s4 + $0x14] sm:$0xf]
  %v409 = vld [vmem:[%s4 + $0x18] sm:$0xf]
  %v410 = vld [vmem:[%s4 + $0x1c] sm:$0xf]
  %v411 = vld [vmem:[%s4 + $0x20] sm:$0xf]
  %v412 = vld [vmem:[%s4 + $0x24] sm:$0xf]
  %v413 = vld [vmem:[%s4 + $0x28] sm:$0xf]
  %v414 = vld [vmem:[%s4 + $0x2c] sm:$0xf]
  %v415 = vld [vmem:[%s4 + $0x30] sm:$0xf]
  %v416 = vld [vmem:[%s4 + $0x34] sm:$0xf]
  %v417 = vld [vmem:[%s4 + $0x38] sm:$0xf]
  %v418 = vld [vmem:[%s4 + $0x3c] sm:$0xf]
  %v419 = vld [vmem:[%s4 + $0x40] sm:$0xf]
  %v420 = vld [vmem:[%s4 + $0x44] sm:$0xf]
  %v421 = vld [vmem:[%s4 + $0x48] sm:$0xf]
  %v422 = vld [vmem:[%s4 + $0x4c] sm:$0xf]
  %v423 = vld [vmem:[%s4 + $0x50] sm:$0xf]
  %v424 = vld [vmem:[%s4 + $0x54] sm:$0xf]
  %v425 = vld [vmem:[%s4 + $0x58] sm:$0xf]
  %v426 = vld [vmem:[%s4 + $0x5c] sm:$0xf]
  %v427 = vld [vmem:[%s4 + $0x60] sm:$0xf]
  %v428 = vld [vmem:[%s4 + $0x64] sm:$0xf]
  %v429 = vld [vmem:[%s4 + $0x68] sm:$0xf]
  %v430 = vld [vmem:[%s4 + $0x6c] sm:$0xf]
  %v431 = vld [vmem:[%s4 + $0x70] sm:$0xf]
  %v432 = vld [vmem:[%s4 + $0x74] sm:$0xf]
  %v433 = vld [vmem:[%s4 + $0x78] sm:$0xf]
  %v434 = vld [vmem:[%s4 + $0x7c] sm:$0xf]
  %v435 = vld [vmem:[%s4 + $0x80] sm:$0xf]
  %v436 = vld [vmem:[%s4 + $0x84] sm:$0xf]
  %v437 = vld [vmem:[%s4 + $0x88] sm:$0xf]
  %v438 = vld [vmem:[%s4 + $0x8c] sm:$0xf]
  %v439 = vld [vmem:[%s4 + $0x90] sm:$0xf]
  %v440 = vld [vmem:[%s4 + $0x94] sm:$0xf]
  %v441 = vld [vmem:[%s4 + $0x98] sm:$0xf]
  %v442 = vld [vmem:[%s4 + $0x9c] sm:$0xf]
  %v443 = vld [vmem:[%s4 + $0xa0] sm:$0xf]
  %v444 = vld [vmem:[%s4 + $0xa4] sm:$0xf]
  %v445 = vld [vmem:[%s4 + $0xa8] sm:$0xf]
  %v446 = vld [vmem:[%s4 + $0xac] sm:$0xf]
  %v447 = vld [vmem:[%s4 + $0xb0] sm:$0xf]
  %v448 = vld [vmem:[%s4 + $0xb4] sm:$0xf]
  %v449 = vld [vmem:[%s4 + $0xb8] sm:$0xf]
  %v450 = vld [vmem:[%s4 + $0xbc] sm:$0xf]
  %v451 = vld [vmem:[%s4 + $0xc0] sm:$0xf]
  %v452 = vld [vmem:[%s4 + $0xc4] sm:$0xf]
  %v453 = vld [vmem:[%s4 + $0xc8] sm:$0xf]
  %v454 = vld [vmem:[%s4 + $0xcc] sm:$0xf]
  %v455 = vld [vmem:[%s4 + $0xd0] sm:$0xf]
  %v456 = vld [vmem:[%s4 + $0xd4] sm:$0xf]
  %v457 = vld [vmem:[%s4 + $0xd8] sm:$0xf]
  %v458 = vld [vmem:[%s4 + $0xdc] sm:$0xf]
  %v459 = vld [vmem:[%s4 + $0xe0] sm:$0xf]
  %v460 = vld [vmem:[%s4 + $0xe4] sm:$0xf]
  %v461 = vld [vmem:[%s4 + $0xe8] sm:$0xf]
  %v462 = vld [vmem:[%s4 + $0xec] sm:$0xf]
  %v463 = vld [vmem:[%s4 + $0xf0] sm:$0xf]
  %v464 = vld [vmem:[%s4 + $0xf4] sm:$0xf]
  %v465 = vld [vmem:[%s4 + $0xf8] sm:$0xf]
  %v466 = vld [vmem:[%s4 + $0xfc] sm:$0xf]
  %v467 = vunpack.c.l.bf16 %v403
  %v468 = vunpack.c.l.bf16 %v404
  %v469 = vunpack.c.l.bf16 %v405
  %v470 = vunpack.c.l.bf16 %v406
  %v471 = vunpack.c.l.bf16 %v407
  %v472 = vunpack.c.l.bf16 %v408
  %v473 = vunpack.c.l.bf16 %v409
  %v474 = vunpack.c.l.bf16 %v410
  %v475 = vunpack.c.l.bf16 %v411
  %v476 = vunpack.c.l.bf16 %v412
  %v477 = vunpack.c.l.bf16 %v413
  %v478 = vunpack.c.l.bf16 %v414
  %v479 = vunpack.c.l.bf16 %v415
  %v480 = vunpack.c.l.bf16 %v416
  %v481 = vunpack.c.l.bf16 %v417
  %v482 = vunpack.c.l.bf16 %v418
  %v483 = vunpack.c.l.bf16 %v419
  %v484 = vunpack.c.l.bf16 %v420
  %v485 = vunpack.c.l.bf16 %v421
  %v486 = vunpack.c.l.bf16 %v422
  %v487 = vunpack.c.l.bf16 %v423
  %v488 = vunpack.c.l.bf16 %v424
  %v489 = vunpack.c.l.bf16 %v425
  %v490 = vunpack.c.l.bf16 %v426
  %v491 = vunpack.c.l.bf16 %v427
  %v492 = vunpack.c.l.bf16 %v428
  %v493 = vunpack.c.l.bf16 %v429
  %v494 = vunpack.c.l.bf16 %v430
  %v495 = vunpack.c.l.bf16 %v431
  %v496 = vunpack.c.l.bf16 %v432
  %v497 = vunpack.c.l.bf16 %v433
  %v498 = vunpack.c.l.bf16 %v434
  %v499 = vunpack.c.l.bf16 %v435
  %v500 = vunpack.c.l.bf16 %v436
  %v501 = vunpack.c.l.bf16 %v437
  %v502 = vunpack.c.l.bf16 %v438
  %v503 = vunpack.c.l.bf16 %v439
  %v504 = vunpack.c.l.bf16 %v440
  %v505 = vunpack.c.l.bf16 %v441
  %v506 = vunpack.c.l.bf16 %v442
  %v507 = vunpack.c.l.bf16 %v443
  %v508 = vunpack.c.l.bf16 %v444
  %v509 = vunpack.c.l.bf16 %v445
  %v510 = vunpack.c.l.bf16 %v446
  %v511 = vunpack.c.l.bf16 %v447
  %v512 = vunpack.c.l.bf16 %v448
  %v513 = vunpack.c.l.bf16 %v449
  %v514 = vunpack.c.l.bf16 %v450
  %v515 = vunpack.c.l.bf16 %v451
  %v516 = vunpack.c.l.bf16 %v452
  %v517 = vunpack.c.l.bf16 %v453
  %v518 = vunpack.c.l.bf16 %v454
  %v519 = vunpack.c.l.bf16 %v455
  %v520 = vunpack.c.l.bf16 %v456
  %v521 = vunpack.c.l.bf16 %v457
  %v522 = vunpack.c.l.bf16 %v458
  %v523 = vunpack.c.l.bf16 %v459
  %v524 = vunpack.c.l.bf16 %v460
  %v525 = vunpack.c.l.bf16 %v461
  %v526 = vunpack.c.l.bf16 %v462
  %v527 = vunpack.c.l.bf16 %v463
  %v528 = vunpack.c.l.bf16 %v464
  %v529 = vunpack.c.l.bf16 %v465
  %v530 = vunpack.c.l.bf16 %v466
  %v547 = vunpack.c.l.b16 %v387
  %v548 = vunpack.c.l.b16 %v388
  %v549 = vunpack.c.l.b16 %v389
  %v550 = vunpack.c.l.b16 %v390
  %v551 = vunpack.c.l.b16 %v391
  %v552 = vunpack.c.l.b16 %v392
  %v553 = vunpack.c.l.b16 %v393
  %v554 = vunpack.c.l.b16 %v394
  %v555 = vunpack.c.l.b16 %v395
  %v556 = vunpack.c.l.b16 %v396
  %v557 = vunpack.c.l.b16 %v397
  %v558 = vunpack.c.l.b16 %v398
  %v559 = vunpack.c.l.b16 %v399
  %v560 = vunpack.c.l.b16 %v400
  %v561 = vunpack.c.l.b16 %v401
  %v562 = vunpack.c.l.b16 %v402
  %v563 = vpack.c.b16 %v548, %v547
  %v564 = vpack.c.b16 %v550, %v549
  %v565 = vpack.c.b16 %v552, %v551
  %v566 = vpack.c.b16 %v554, %v553
  %v567 = vpack.c.b16 %v556, %v555
  %v568 = vpack.c.b16 %v558, %v557
  %v569 = vpack.c.b16 %v560, %v559
  %v570 = vpack.c.b16 %v562, %v561
  %579 = vmatprep.subr.bf16.mxu0 0
  %580 = vmatpush1.bf16.msra.mxu0 %v563
  %581 = vmatprep.subr.bf16.mxu0 0
  %582 = vmatpush1.bf16.msra.mxu0 %v564
  %583 = vmatprep.subr.bf16.mxu0 0
  %584 = vmatpush1.bf16.msra.mxu0 %v565
  %585 = vmatprep.subr.bf16.mxu0 0
  %586 = vmatpush1.bf16.msra.mxu0 %v566
  %587 = vmatprep.subr.bf16.mxu0 0
  %588 = vmatpush1.bf16.msra.mxu0 %v567
  %589 = vmatprep.subr.bf16.mxu0 0
  %590 = vmatpush1.bf16.msra.mxu0 %v568
  %591 = vmatprep.subr.bf16.mxu0 0
  %592 = vmatpush1.bf16.msra.mxu0 %v569
  %593 = vmatprep.subr.bf16.mxu0 0
  %594 = vmatpush1.bf16.msra.mxu0 %v570
  %595 = vmatprep.subr.bf16.mxu0 0
  %596 = vmatpush1.bf16.msra.mxu0 0
  %597 = vmatprep.subr.bf16.mxu0 0
  %598 = vmatpush1.bf16.msra.mxu0 0
  %599 = vmatprep.subr.bf16.mxu0 0
  %600 = vmatpush1.bf16.msra.mxu0 0
  %601 = vmatprep.subr.bf16.mxu0 0
  %602 = vmatpush1.bf16.msra.mxu0 0
  %603 = vmatprep.subr.bf16.mxu0 0
  %604 = vmatpush1.bf16.msra.mxu0 0
  %605 = vmatprep.subr.bf16.mxu0 0
  %606 = vmatpush1.bf16.msra.mxu0 0
  %607 = vmatprep.subr.bf16.mxu0 0
  %608 = vmatpush1.bf16.msra.mxu0 0
  %609 = vmatprep.subr.bf16.mxu0 0
  %610 = vmatpush1.bf16.msra.mxu0 0
  %611 = vmatprep.mubr.bf16.mxu0 0
  %612 = vmatmul.mubr.bf16.gmra.mrb[0].mxu0 %v355
  %v613 = vpop.f32.mrb[0].mxu0
  %v614 = vadd.f32 %v467, %v613
  %v615 = vpop.f32.mrb[0].mxu0
  %v616 = vpop.f32.mrb[0].mxu0
  %v617 = vadd.f32 %v468, %v616
  %v618 = vpop.f32.mrb[0].mxu0
  %619 = vmatprep.mubr.bf16.mxu0 0
  %620 = vmatmul.mubr.bf16.gmra.mrb[0].mxu0 %v356
  %v621 = vpop.f32.mrb[0].mxu0
  %v622 = vadd.f32 %v469, %v621
  %v623 = vpop.f32.mrb[0].mxu0
  %v624 = vpop.f32.mrb[0].mxu0
  %v625 = vadd.f32 %v470, %v624
  %v626 = vpop.f32.mrb[0].mxu0
  %627 = vmatprep.mubr.bf16.mxu0 0
  %628 = vmatmul.mubr.bf16.gmra.mrb[0].mxu0 %v357
  %v629 = vpop.f32.mrb[0].mxu0
  %v630 = vadd.f32 %v471, %v629
  %v631 = vpop.f32.mrb[0].mxu0
  %v632 = vpop.f32.mrb[0].mxu0
  %v633 = vadd.f32 %v472, %v632
  %v634 = vpop.f32.mrb[0].mxu0
  %635 = vmatprep.mubr.bf16.mxu0 0
  %636 = vmatmul.mubr.bf16.gmra.mrb[0].mxu0 %v358
  %v637 = vpop.f32.mrb[0].mxu0
  %v638 = vadd.f32 %v473, %v637
  %v639 = vpop.f32.mrb[0].mxu0
  %v640 = vpop.f32.mrb[0].mxu0
  %v641 = vadd.f32 %v474, %v640
  %v642 = vpop.f32.mrb[0].mxu0
  %643 = vmatprep.mubr.bf16.mxu0 0
  %644 = vmatmul.mubr.bf16.gmra.mrb[0].mxu0 %v359
  %v645 = vpop.f32.mrb[0].mxu0
  %v646 = vadd.f32 %v475, %v645
  %v647 = vpop.f32.mrb[0].mxu0
  %v648 = vpop.f32.mrb[0].mxu0
  %v649 = vadd.f32 %v476, %v648
  %v650 = vpop.f32.mrb[0].mxu0
  %651 = vmatprep.mubr.bf16.mxu0 0
  %652 = vmatmul.mubr.bf16.gmra.mrb[0].mxu0 %v360
  %v653 = vpop.f32.mrb[0].mxu0
  %v654 = vadd.f32 %v477, %v653
  %v655 = vpop.f32.mrb[0].mxu0
  %v656 = vpop.f32.mrb[0].mxu0
  %v657 = vadd.f32 %v478, %v656
  %v658 = vpop.f32.mrb[0].mxu0
  %659 = vmatprep.mubr.bf16.mxu0 0
  %660 = vmatmul.mubr.bf16.gmra.mrb[0].mxu0 %v361
  %v661 = vpop.f32.mrb[0].mxu0
  %v662 = vadd.f32 %v479, %v661
  %v663 = vpop.f32.mrb[0].mxu0
  %v664 = vpop.f32.mrb[0].mxu0
  %v665 = vadd.f32 %v480, %v664
  %v666 = vpop.f32.mrb[0].mxu0
  %667 = vmatprep.mubr.bf16.mxu0 0
  %668 = vmatmul.mubr.bf16.gmra.mrb[0].mxu0 %v362
  %v669 = vpop.f32.mrb[0].mxu0
  %v670 = vadd.f32 %v481, %v669
  %v671 = vpop.f32.mrb[0].mxu0
  %v672 = vpop.f32.mrb[0].mxu0
  %v673 = vadd.f32 %v482, %v672
  %v674 = vpop.f32.mrb[0].mxu0
  %675 = vmatprep.mubr.bf16.mxu0 0
  %676 = vmatmul.mubr.bf16.gmra.mrb[0].mxu0 %v363
  %v677 = vpop.f32.mrb[0].mxu0
  %v678 = vadd.f32 %v483, %v677
  %v679 = vpop.f32.mrb[0].mxu0
  %v680 = vpop.f32.mrb[0].mxu0
  %v681 = vadd.f32 %v484, %v680
  %v682 = vpop.f32.mrb[0].mxu0
  %683 = vmatprep.mubr.bf16.mxu0 0
  %684 = vmatmul.mubr.bf16.gmra.mrb[0].mxu0 %v364
  %v685 = vpop.f32.mrb[0].mxu0
  %v686 = vadd.f32 %v485, %v685
  %v687 = vpop.f32.mrb[0].mxu0
  %v688 = vpop.f32.mrb[0].mxu0
  %v689 = vadd.f32 %v486, %v688
  %v690 = vpop.f32.mrb[0].mxu0
  %691 = vmatprep.mubr.bf16.mxu0 0
  %692 = vmatmul.mubr.bf16.gmra.mrb[0].mxu0 %v365
  %v693 = vpop.f32.mrb[0].mxu0
  %v694 = vadd.f32 %v487, %v693
  %v695 = vpop.f32.mrb[0].mxu0
  %v696 = vpop.f32.mrb[0].mxu0
  %v697 = vadd.f32 %v488, %v696
  %v698 = vpop.f32.mrb[0].mxu0
  %699 = vmatprep.mubr.bf16.mxu0 0
  %700 = vmatmul.mubr.bf16.gmra.mrb[0].mxu0 %v366
  %v701 = vpop.f32.mrb[0].mxu0
  %v702 = vadd.f32 %v489, %v701
  %v703 = vpop.f32.mrb[0].mxu0
  %v704 = vpop.f32.mrb[0].mxu0
  %v705 = vadd.f32 %v490, %v704
  %v706 = vpop.f32.mrb[0].mxu0
  %707 = vmatprep.mubr.bf16.mxu0 0
  %708 = vmatmul.mubr.bf16.gmra.mrb[0].mxu0 %v367
  %v709 = vpop.f32.mrb[0].mxu0
  %v710 = vadd.f32 %v491, %v709
  %v711 = vpop.f32.mrb[0].mxu0
  %v712 = vpop.f32.mrb[0].mxu0
  %v713 = vadd.f32 %v492, %v712
  %v714 = vpop.f32.mrb[0].mxu0
  %715 = vmatprep.mubr.bf16.mxu0 0
  %716 = vmatmul.mubr.bf16.gmra.mrb[0].mxu0 %v368
  %v717 = vpop.f32.mrb[0].mxu0
  %v718 = vadd.f32 %v493, %v717
  %v719 = vpop.f32.mrb[0].mxu0
  %v720 = vpop.f32.mrb[0].mxu0
  %v721 = vadd.f32 %v494, %v720
  %v722 = vpop.f32.mrb[0].mxu0
  %723 = vmatprep.mubr.bf16.mxu0 0
  %724 = vmatmul.mubr.bf16.gmra.mrb[0].mxu0 %v369
  %v725 = vpop.f32.mrb[0].mxu0
  %v726 = vadd.f32 %v495, %v725
  %v727 = vpop.f32.mrb[0].mxu0
  %v728 = vpop.f32.mrb[0].mxu0
  %v729 = vadd.f32 %v496, %v728
  %v730 = vpop.f32.mrb[0].mxu0
  %731 = vmatprep.mubr.bf16.mxu0 0
  %732 = vmatmul.mubr.bf16.gmra.mrb[0].mxu0 %v370
  %v733 = vpop.f32.mrb[0].mxu0
  %v734 = vadd.f32 %v497, %v733
  %v735 = vpop.f32.mrb[0].mxu0
  %v736 = vpop.f32.mrb[0].mxu0
  %v737 = vadd.f32 %v498, %v736
  %v738 = vpop.f32.mrb[0].mxu0
  %739 = vmatprep.mubr.bf16.mxu0 0
  %740 = vmatmul.mubr.bf16.gmra.mrb[0].mxu0 %v371
  %v741 = vpop.f32.mrb[0].mxu0
  %v742 = vadd.f32 %v499, %v741
  %v743 = vpop.f32.mrb[0].mxu0
  %v744 = vpop.f32.mrb[0].mxu0
  %v745 = vadd.f32 %v500, %v744
  %v746 = vpop.f32.mrb[0].mxu0
  %747 = vmatprep.mubr.bf16.mxu0 0
  %748 = vmatmul.mubr.bf16.gmra.mrb[0].mxu0 %v372
  %v749 = vpop.f32.mrb[0].mxu0
  %v750 = vadd.f32 %v501, %v749
  %v751 = vpop.f32.mrb[0].mxu0
  %v752 = vpop.f32.mrb[0].mxu0
  %v753 = vadd.f32 %v502, %v752
  %v754 = vpop.f32.mrb[0].mxu0
  %755 = vmatprep.mubr.bf16.mxu0 0
  %756 = vmatmul.mubr.bf16.gmra.mrb[0].mxu0 %v373
  %v757 = vpop.f32.mrb[0].mxu0
  %v758 = vadd.f32 %v503, %v757
  %v759 = vpop.f32.mrb[0].mxu0
  %v760 = vpop.f32.mrb[0].mxu0
  %v761 = vadd.f32 %v504, %v760
  %v762 = vpop.f32.mrb[0].mxu0
  %763 = vmatprep.mubr.bf16.mxu0 0
  %764 = vmatmul.mubr.bf16.gmra.mrb[0].mxu0 %v374
  %v765 = vpop.f32.mrb[0].mxu0
  %v766 = vadd.f32 %v505, %v765
  %v767 = vpop.f32.mrb[0].mxu0
  %v768 = vpop.f32.mrb[0].mxu0
  %v769 = vadd.f32 %v506, %v768
  %v770 = vpop.f32.mrb[0].mxu0
  %771 = vmatprep.mubr.bf16.mxu0 0
  %772 = vmatmul.mubr.bf16.gmra.mrb[0].mxu0 %v375
  %v773 = vpop.f32.mrb[0].mxu0
  %v774 = vadd.f32 %v507, %v773
  %v775 = vpop.f32.mrb[0].mxu0
  %v776 = vpop.f32.mrb[0].mxu0
  %v777 = vadd.f32 %v508, %v776
  %v778 = vpop.f32.mrb[0].mxu0
  %779 = vmatprep.mubr.bf16.mxu0 0
  %780 = vmatmul.mubr.bf16.gmra.mrb[0].mxu0 %v376
  %v781 = vpop.f32.mrb[0].mxu0
  %v782 = vadd.f32 %v509, %v781
  %v783 = vpop.f32.mrb[0].mxu0
  %v784 = vpop.f32.mrb[0].mxu0
  %v785 = vadd.f32 %v510, %v784
  %v786 = vpop.f32.mrb[0].mxu0
  %787 = vmatprep.mubr.bf16.mxu0 0
  %788 = vmatmul.mubr.bf16.gmra.mrb[0].mxu0 %v377
  %v789 = vpop.f32.mrb[0].mxu0
  %v790 = vadd.f32 %v511, %v789
  %v791 = vpop.f32.mrb[0].mxu0
  %v792 = vpop.f32.mrb[0].mxu0
  %v793 = vadd.f32 %v512, %v792
  %v794 = vpop.f32.mrb[0].mxu0
  %795 = vmatprep.mubr.bf16.mxu0 0
  %796 = vmatmul.mubr.bf16.gmra.mrb[0].mxu0 %v378
  %v797 = vpop.f32.mrb[0].mxu0
  %v798 = vadd.f32 %v513, %v797
  %v799 = vpop.f32.mrb[0].mxu0
  %v800 = vpop.f32.mrb[0].mxu0
  %v801 = vadd.f32 %v514, %v800
  %v802 = vpop.f32.mrb[0].mxu0
  %803 = vmatprep.mubr.bf16.mxu0 0
  %804 = vmatmul.mubr.bf16.gmra.mrb[0].mxu0 %v379
  %v805 = vpop.f32.mrb[0].mxu0
  %v806 = vadd.f32 %v515, %v805
  %v807 = vpop.f32.mrb[0].mxu0
  %v808 = vpop.f32.mrb[0].mxu0
  %v809 = vadd.f32 %v516, %v808
  %v810 = vpop.f32.mrb[0].mxu0
  %811 = vmatprep.mubr.bf16.mxu0 0
  %812 = vmatmul.mubr.bf16.gmra.mrb[0].mxu0 %v380
  %v813 = vpop.f32.mrb[0].mxu0
  %v814 = vadd.f32 %v517, %v813
  %v815 = vpop.f32.mrb[0].mxu0
  %v816 = vpop.f32.mrb[0].mxu0
  %v817 = vadd.f32 %v518, %v816
  %v818 = vpop.f32.mrb[0].mxu0
  %819 = vmatprep.mubr.bf16.mxu0 0
  %820 = vmatmul.mubr.bf16.gmra.mrb[0].mxu0 %v381
  %v821 = vpop.f32.mrb[0].mxu0
  %v822 = vadd.f32 %v519, %v821
  %v823 = vpop.f32.mrb[0].mxu0
  %v824 = vpop.f32.mrb[0].mxu0
  %v825 = vadd.f32 %v520, %v824
  %v826 = vpop.f32.mrb[0].mxu0
  %827 = vmatprep.mubr.bf16.mxu0 0
  %828 = vmatmul.mubr.bf16.gmra.mrb[0].mxu0 %v382
  %v829 = vpop.f32.mrb[0].mxu0
  %v830 = vadd.f32 %v521, %v829
  %v831 = vpop.f32.mrb[0].mxu0
  %v832 = vpop.f32.mrb[0].mxu0
  %v833 = vadd.f32 %v522, %v832
  %v834 = vpop.f32.mrb[0].mxu0
  %835 = vmatprep.mubr.bf16.mxu0 0
  %836 = vmatmul.mubr.bf16.gmra.mrb[0].mxu0 %v383
  %v837 = vpop.f32.mrb[0].mxu0
  %v838 = vadd.f32 %v523, %v837
  %v839 = vpop.f32.mrb[0].mxu0
  %v840 = vpop.f32.mrb[0].mxu0
  %v841 = vadd.f32 %v524, %v840
  %v842 = vpop.f32.mrb[0].mxu0
  %843 = vmatprep.mubr.bf16.mxu0 0
  %844 = vmatmul.mubr.bf16.gmra.mrb[0].mxu0 %v384
  %v845 = vpop.f32.mrb[0].mxu0
  %v846 = vadd.f32 %v525, %v845
  %v847 = vpop.f32.mrb[0].mxu0
  %v848 = vpop.f32.mrb[0].mxu0
  %v849 = vadd.f32 %v526, %v848
  %v850 = vpop.f32.mrb[0].mxu0
  %851 = vmatprep.mubr.bf16.mxu0 0
  %852 = vmatmul.mubr.bf16.gmra.mrb[0].mxu0 %v385
  %v853 = vpop.f32.mrb[0].mxu0
  %v854 = vadd.f32 %v527, %v853
  %v855 = vpop.f32.mrb[0].mxu0
  %v856 = vpop.f32.mrb[0].mxu0
  %v857 = vadd.f32 %v528, %v856
  %v858 = vpop.f32.mrb[0].mxu0
  %859 = vmatprep.mubr.bf16.mxu0 0
  %860 = vmatmul.mubr.bf16.gmra.mrb[0].mxu0 %v386
  %v861 = vpop.f32.mrb[0].mxu0
  %v862 = vadd.f32 %v529, %v861
  %v863 = vpop.f32.mrb[0].mxu0
  %v864 = vpop.f32.mrb[0].mxu0
  %v865 = vadd.f32 %v530, %v864
  %v866 = vpop.f32.mrb[0].mxu0
  %867 = vdwg.mxu0
  %868 = vst [vmem:[%s5] sm:$0xff] %v614
  %869 = vst [vmem:[%s5 + $0x8] sm:$0xff] %v617
  %870 = vst [vmem:[%s5 + $0x10] sm:$0xff] %v622
  %871 = vst [vmem:[%s5 + $0x18] sm:$0xff] %v625
  %872 = vst [vmem:[%s5 + $0x20] sm:$0xff] %v630
  %873 = vst [vmem:[%s5 + $0x28] sm:$0xff] %v633
  %874 = vst [vmem:[%s5 + $0x30] sm:$0xff] %v638
  %875 = vst [vmem:[%s5 + $0x38] sm:$0xff] %v641
  %876 = vst [vmem:[%s5 + $0x40] sm:$0xff] %v646
  %877 = vst [vmem:[%s5 + $0x48] sm:$0xff] %v649
  %878 = vst [vmem:[%s5 + $0x50] sm:$0xff] %v654
  %879 = vst [vmem:[%s5 + $0x58] sm:$0xff] %v657
  %880 = vst [vmem:[%s5 + $0x60] sm:$0xff] %v662
  %881 = vst [vmem:[%s5 + $0x68] sm:$0xff] %v665
  %882 = vst [vmem:[%s5 + $0x70] sm:$0xff] %v670
  %883 = vst [vmem:[%s5 + $0x78] sm:$0xff] %v673
  %884 = vst [vmem:[%s5 + $0x80] sm:$0xff] %v678
  %885 = vst [vmem:[%s5 + $0x88] sm:$0xff] %v681
  %886 = vst [vmem:[%s5 + $0x90] sm:$0xff] %v686
  %887 = vst [vmem:[%s5 + $0x98] sm:$0xff] %v689
  %888 = vst [vmem:[%s5 + $0xa0] sm:$0xff] %v694
  %889 = vst [vmem:[%s5 + $0xa8] sm:$0xff] %v697
  %890 = vst [vmem:[%s5 + $0xb0] sm:$0xff] %v702
  %891 = vst [vmem:[%s5 + $0xb8] sm:$0xff] %v705
  %892 = vst [vmem:[%s5 + $0xc0] sm:$0xff] %v710
  %893 = vst [vmem:[%s5 + $0xc8] sm:$0xff] %v713
  %894 = vst [vmem:[%s5 + $0xd0] sm:$0xff] %v718
  %895 = vst [vmem:[%s5 + $0xd8] sm:$0xff] %v721
  %896 = vst [vmem:[%s5 + $0xe0] sm:$0xff] %v726
  %897 = vst [vmem:[%s5 + $0xe8] sm:$0xff] %v729
  %898 = vst [vmem:[%s5 + $0xf0] sm:$0xff] %v734
  %899 = vst [vmem:[%s5 + $0xf8] sm:$0xff] %v737
  %900 = vst [vmem:[%s5 + $0x100] sm:$0xff] %v742
  %901 = vst [vmem:[%s5 + $0x108] sm:$0xff] %v745
  %902 = vst [vmem:[%s5 + $0x110] sm:$0xff] %v750
  %903 = vst [vmem:[%s5 + $0x118] sm:$0xff] %v753
  %904 = vst [vmem:[%s5 + $0x120] sm:$0xff] %v758
  %905 = vst [vmem:[%s5 + $0x128] sm:$0xff] %v761
  %906 = vst [vmem:[%s5 + $0x130] sm:$0xff] %v766
  %907 = vst [vmem:[%s5 + $0x138] sm:$0xff] %v769
  %908 = vst [vmem:[%s5 + $0x140] sm:$0xff] %v774
  %909 = vst [vmem:[%s5 + $0x148] sm:$0xff] %v777
  %910 = vst [vmem:[%s5 + $0x150] sm:$0xff] %v782
  %911 = vst [vmem:[%s5 + $0x158] sm:$0xff] %v785
  %912 = vst [vmem:[%s5 + $0x160] sm:$0xff] %v790
  %913 = vst [vmem:[%s5 + $0x168] sm:$0xff] %v793
  %914 = vst [vmem:[%s5 + $0x170] sm:$0xff] %v798
  %915 = vst [vmem:[%s5 + $0x178] sm:$0xff] %v801
  %916 = vst [vmem:[%s5 + $0x180] sm:$0xff] %v806
  %917 = vst [vmem:[%s5 + $0x188] sm:$0xff] %v809
  %918 = vst [vmem:[%s5 + $0x190] sm:$0xff] %v814
  %919 = vst [vmem:[%s5 + $0x198] sm:$0xff] %v817
  %920 = vst [vmem:[%s5 + $0x1a0] sm:$0xff] %v822
  %921 = vst [vmem:[%s5 + $0x1a8] sm:$0xff] %v825
  %922 = vst [vmem:[%s5 + $0x1b0] sm:$0xff] %v830
  %923 = vst [vmem:[%s5 + $0x1b8] sm:$0xff] %v833
  %924 = vst [vmem:[%s5 + $0x1c0] sm:$0xff] %v838
  %925 = vst [vmem:[%s5 + $0x1c8] sm:$0xff] %v841
  %926 = vst [vmem:[%s5 + $0x1d0] sm:$0xff] %v846
  %927 = vst [vmem:[%s5 + $0x1d8] sm:$0xff] %v849
  %928 = vst [vmem:[%s5 + $0x1e0] sm:$0xff] %v854
  %929 = vst [vmem:[%s5 + $0x1e8] sm:$0xff] %v857
  %930 = vst [vmem:[%s5 + $0x1f0] sm:$0xff] %v862
  %931 = vst [vmem:[%s5 + $0x1f8] sm:$0xff] %v865
  // Predicated region
  $region22: #{residual_block_forward.7} parent=0 // pred_check
    _
  $region23: #{residual_block_forward.7} parent=0 // pred_check_branch
    %933 = sbr.rel (0) target = $region25
  $region24: #{residual_block_forward.7} parent=0 // pred_region
    _
  $region25: #{residual_block_forward.7} parent=0 // pred_fallthru
    _
  // Predicated region
  $region26: #{residual_block_forward.7} parent=0 // pred_check
    _
  $region27: #{residual_block_forward.7} parent=0 // pred_check_branch
    %935 = sbr.rel (0) target = $region29
  $region28: #{residual_block_forward.7} parent=0 // pred_region
    _
  $region29: #{residual_block_forward.7} parent=0 // pred_fallthru
    _

// kernel: residual_block_forward.5
$region0: #{residual_block_forward.5}
  #allocation0 [shape = 'u32[]', space=smem, size = 0x4, offset = 0x4, fixed_abs, tag = 'smem constant byte address 0x4 - core index']
  #allocation1 [shape = 'u32[144,128]{1,0:T(1,128)}', space=vmem, size = 0x12000, scoped, tag = 'internal scratch']
  %s0 = inlined_call_operand.vmem [shape: f32[512,128], index: 0, kind: input, shape index: {}]
  %s1 = inlined_call_operand.vmem [shape: f32[1,128], index: 1, kind: input, shape index: {}]
  %s2 = inlined_call_operand.vmem [shape: f32[1,128], index: 2, kind: input, shape index: {}]
  %s3 = inlined_call_operand.vmem [shape: bf16[128,128], index: 3, kind: input, shape index: {}]
  %s4 = inlined_call_operand.vmem [shape: bf16[128,128], index: 4, kind: input, shape index: {}]
  %s5 = inlined_call_operand.vmem [shape: bf16[512,128], index: 5, kind: output, shape index: {0}]
  %s6 = inlined_call_operand.vmem [shape: bf16[512,128], index: 6, kind: output, shape index: {1}]
  %s7 = inlined_call_operand.vmem [shape: f32[1,8,128], index: 7, kind: output, shape index: {2}]
  %8 = xla_tuple %s5, %s6, %s7
  %s9 = sld [smem:[#allocation0]]
  $region46: #{residual_block_forward.5} parent=0
    _
  %s11 = ssub.s32 1, %s9
  %s12 = scalar_select 0, %s11, %s9
  // Predicated region
  $region2: #{residual_block_forward.5} parent=0 // pred_check
    _
  $region3: #{residual_block_forward.5} parent=0 // pred_check_branch
    %14 = sbr.rel (0) target = $region5
  $region4: #{residual_block_forward.5} parent=0 // pred_region
    _
  $region5: #{residual_block_forward.5} parent=0 // pred_fallthru
    _
  // Predicated region
  $region6: #{residual_block_forward.5} parent=0 // pred_check
    _
  $region7: #{residual_block_forward.5} parent=0 // pred_check_branch
    %16 = sbr.rel (0) target = $region9
  $region8: #{residual_block_forward.5} parent=0 // pred_region
    _
  $region9: #{residual_block_forward.5} parent=0 // pred_fallthru
    _
  // Predicated region
  $region10: #{residual_block_forward.5} parent=0 // pred_check
    _
  $region11: #{residual_block_forward.5} parent=0 // pred_check_branch
    %18 = sbr.rel (0) target = $region13
  $region12: #{residual_block_forward.5} parent=0 // pred_region
    _
  $region13: #{residual_block_forward.5} parent=0 // pred_fallthru
    _
  // Predicated region
  $region14: #{residual_block_forward.5} parent=0 // pred_check
    _
  $region15: #{residual_block_forward.5} parent=0 // pred_check_branch
    %20 = sbr.rel (0) target = $region17
  $region16: #{residual_block_forward.5} parent=0 // pred_region
    _
  $region17: #{residual_block_forward.5} parent=0 // pred_fallthru
    _
  // Predicated region
  $region18: #{residual_block_forward.5} parent=0 // pred_check
    _
  $region19: #{residual_block_forward.5} parent=0 // pred_check_branch
    %22 = sbr.rel (0) target = $region21
  $region20: #{residual_block_forward.5} parent=0 // pred_region
    _
  $region21: #{residual_block_forward.5} parent=0 // pred_fallthru
    _
  %v24 = vld [vmem:[%s0] sm:$0xff]
  %v25 = vld [vmem:[%s0 + $0x8] sm:$0xff]
  %v26 = vld [vmem:[%s0 + $0x10] sm:$0xff]
  %v27 = vld [vmem:[%s0 + $0x18] sm:$0xff]
  %v28 = vld [vmem:[%s0 + $0x20] sm:$0xff]
  %v29 = vld [vmem:[%s0 + $0x28] sm:$0xff]
  %v30 = vld [vmem:[%s0 + $0x30] sm:$0xff]
  %v31 = vld [vmem:[%s0 + $0x38] sm:$0xff]
  %v32 = vld [vmem:[%s0 + $0x40] sm:$0xff]
  %v33 = vld [vmem:[%s0 + $0x48] sm:$0xff]
  %v34 = vld [vmem:[%s0 + $0x50] sm:$0xff]
  %v35 = vld [vmem:[%s0 + $0x58] sm:$0xff]
  %v36 = vld [vmem:[%s0 + $0x60] sm:$0xff]
  %v37 = vld [vmem:[%s0 + $0x68] sm:$0xff]
  %v38 = vld [vmem:[%s0 + $0x70] sm:$0xff]
  %v39 = vld [vmem:[%s0 + $0x78] sm:$0xff]
  %v40 = vld [vmem:[%s0 + $0x80] sm:$0xff]
  %v41 = vld [vmem:[%s0 + $0x88] sm:$0xff]
  %v42 = vld [vmem:[%s0 + $0x90] sm:$0xff]
  %v43 = vld [vmem:[%s0 + $0x98] sm:$0xff]
  %v44 = vld [vmem:[%s0 + $0xa0] sm:$0xff]
  %v45 = vld [vmem:[%s0 + $0xa8] sm:$0xff]
  %v46 = vld [vmem:[%s0 + $0xb0] sm:$0xff]
  %v47 = vld [vmem:[%s0 + $0xb8] sm:$0xff]
  %v48 = vld [vmem:[%s0 + $0xc0] sm:$0xff]
  %v49 = vld [vmem:[%s0 + $0xc8] sm:$0xff]
  %v50 = vld [vmem:[%s0 + $0xd0] sm:$0xff]
  %v51 = vld [vmem:[%s0 + $0xd8] sm:$0xff]
  %v52 = vld [vmem:[%s0 + $0xe0] sm:$0xff]
  %v53 = vld [vmem:[%s0 + $0xe8] sm:$0xff]
  %v54 = vld [vmem:[%s0 + $0xf0] sm:$0xff]
  %v55 = vld [vmem:[%s0 + $0xf8] sm:$0xff]
  %v56 = vld [vmem:[%s0 + $0x100] sm:$0xff]
  %v57 = vld [vmem:[%s0 + $0x108] sm:$0xff]
  %v58 = vld [vmem:[%s0 + $0x110] sm:$0xff]
  %v59 = vld [vmem:[%s0 + $0x118] sm:$0xff]
  %v60 = vld [vmem:[%s0 + $0x120] sm:$0xff]
  %v61 = vld [vmem:[%s0 + $0x128] sm:$0xff]
  %v62 = vld [vmem:[%s0 + $0x130] sm:$0xff]
  %v63 = vld [vmem:[%s0 + $0x138] sm:$0xff]
  %v64 = vld [vmem:[%s0 + $0x140] sm:$0xff]
  %v65 = vld [vmem:[%s0 + $0x148] sm:$0xff]
  %v66 = vld [vmem:[%s0 + $0x150] sm:$0xff]
  %v67 = vld [vmem:[%s0 + $0x158] sm:$0xff]
  %v68 = vld [vmem:[%s0 + $0x160] sm:$0xff]
  %v69 = vld [vmem:[%s0 + $0x168] sm:$0xff]
  %v70 = vld [vmem:[%s0 + $0x170] sm:$0xff]
  %v71 = vld [vmem:[%s0 + $0x178] sm:$0xff]
  %v72 = vld [vmem:[%s0 + $0x180] sm:$0xff]
  %v73 = vld [vmem:[%s0 + $0x188] sm:$0xff]
  %v74 = vld [vmem:[%s0 + $0x190] sm:$0xff]
  %v75 = vld [vmem:[%s0 + $0x198] sm:$0xff]
  %v76 = vld [vmem:[%s0 + $0x1a0] sm:$0xff]
  %v77 = vld [vmem:[%s0 + $0x1a8] sm:$0xff]
  %v78 = vld [vmem:[%s0 + $0x1b0] sm:$0xff]
  %v79 = vld [vmem:[%s0 + $0x1b8] sm:$0xff]
  %v80 = vld [vmem:[%s0 + $0x1c0] sm:$0xff]
  %v81 = vld [vmem:[%s0 + $0x1c8] sm:$0xff]
  %v82 = vld [vmem:[%s0 + $0x1d0] sm:$0xff]
  %v83 = vld [vmem:[%s0 + $0x1d8] sm:$0xff]
  %v84 = vld [vmem:[%s0 + $0x1e0] sm:$0xff]
  %v85 = vld [vmem:[%s0 + $0x1e8] sm:$0xff]
  %v86 = vld [vmem:[%s0 + $0x1f0] sm:$0xff]
  %v87 = vld [vmem:[%s0 + $0x1f8] sm:$0xff]
  %v88 = vld [vmem:[%s1] sm:$0x1]
  %v90 = vlaneseq
  %v91 = vshrl.u32 %v90, 7
  %v92 = vsub.s32 0, %v91
  %v93 = vrot.slane %v88, %v92
  %v95 = vmul.f32 %v24, %v93
  %v96 = vmul.f32 %v25, %v93
  %v97 = vmul.f32 %v26, %v93
  %v98 = vmul.f32 %v27, %v93
  %v99 = vmul.f32 %v28, %v93
  %v100 = vmul.f32 %v29, %v93
  %v101 = vmul.f32 %v30, %v93
  %v102 = vmul.f32 %v31, %v93
  %v103 = vmul.f32 %v32, %v93
  %v104 = vmul.f32 %v33, %v93
  %v105 = vmul.f32 %v34, %v93
  %v106 = vmul.f32 %v35, %v93
  %v107 = vmul.f32 %v36, %v93
  %v108 = vmul.f32 %v37, %v93
  %v109 = vmul.f32 %v38, %v93
  %v110 = vmul.f32 %v39, %v93
  %v111 = vmul.f32 %v40, %v93
  %v112 = vmul.f32 %v41, %v93
  %v113 = vmul.f32 %v42, %v93
  %v114 = vmul.f32 %v43, %v93
  %v115 = vmul.f32 %v44, %v93
  %v116 = vmul.f32 %v45, %v93
  %v117 = vmul.f32 %v46, %v93
  %v118 = vmul.f32 %v47, %v93
  %v119 = vmul.f32 %v48, %v93
  %v120 = vmul.f32 %v49, %v93
  %v121 = vmul.f32 %v50, %v93
  %v122 = vmul.f32 %v51, %v93
  %v123 = vmul.f32 %v52, %v93
  %v124 = vmul.f32 %v53, %v93
  %v125 = vmul.f32 %v54, %v93
  %v126 = vmul.f32 %v55, %v93
  %v127 = vmul.f32 %v56, %v93
  %v128 = vmul.f32 %v57, %v93
  %v129 = vmul.f32 %v58, %v93
  %v130 = vmul.f32 %v59, %v93
  %v131 = vmul.f32 %v60, %v93
  %v132 = vmul.f32 %v61, %v93
  %v133 = vmul.f32 %v62, %v93
  %v134 = vmul.f32 %v63, %v93
  %v135 = vmul.f32 %v64, %v93
  %v136 = vmul.f32 %v65, %v93
  %v137 = vmul.f32 %v66, %v93
  %v138 = vmul.f32 %v67, %v93
  %v139 = vmul.f32 %v68, %v93
  %v140 = vmul.f32 %v69, %v93
  %v141 = vmul.f32 %v70, %v93
  %v142 = vmul.f32 %v71, %v93
  %v143 = vmul.f32 %v72, %v93
  %v144 = vmul.f32 %v73, %v93
  %v145 = vmul.f32 %v74, %v93
  %v146 = vmul.f32 %v75, %v93
  %v147 = vmul.f32 %v76, %v93
  %v148 = vmul.f32 %v77, %v93
  %v149 = vmul.f32 %v78, %v93
  %v150 = vmul.f32 %v79, %v93
  %v151 = vmul.f32 %v80, %v93
  %v152 = vmul.f32 %v81, %v93
  %v153 = vmul.f32 %v82, %v93
  %v154 = vmul.f32 %v83, %v93
  %v155 = vmul.f32 %v84, %v93
  %v156 = vmul.f32 %v85, %v93
  %v157 = vmul.f32 %v86, %v93
  %v158 = vmul.f32 %v87, %v93
  %v159 = vld [vmem:[%s2] sm:$0x1]
  %v161 = vlaneseq
  %v162 = vshrl.u32 %v161, 7
  %v163 = vsub.s32 0, %v162
  %v164 = vrot.slane %v159, %v163
  %v166 = vadd.f32 %v95, %v164
  %v167 = vadd.f32 %v96, %v164
  %v168 = vadd.f32 %v97, %v164
  %v169 = vadd.f32 %v98, %v164
  %v170 = vadd.f32 %v99, %v164
  %v171 = vadd.f32 %v100, %v164
  %v172 = vadd.f32 %v101, %v164
  %v173 = vadd.f32 %v102, %v164
  %v174 = vadd.f32 %v103, %v164
  %v175 = vadd.f32 %v104, %v164
  %v176 = vadd.f32 %v105, %v164
  %v177 = vadd.f32 %v106, %v164
  %v178 = vadd.f32 %v107, %v164
  %v179 = vadd.f32 %v108, %v164
  %v180 = vadd.f32 %v109, %v164
  %v181 = vadd.f32 %v110, %v164
  %v182 = vadd.f32 %v111, %v164
  %v183 = vadd.f32 %v112, %v164
  %v184 = vadd.f32 %v113, %v164
  %v185 = vadd.f32 %v114, %v164
  %v186 = vadd.f32 %v115, %v164
  %v187 = vadd.f32 %v116, %v164
  %v188 = vadd.f32 %v117, %v164
  %v189 = vadd.f32 %v118, %v164
  %v190 = vadd.f32 %v119, %v164
  %v191 = vadd.f32 %v120, %v164
  %v192 = vadd.f32 %v121, %v164
  %v193 = vadd.f32 %v122, %v164
  %v194 = vadd.f32 %v123, %v164
  %v195 = vadd.f32 %v124, %v164
  %v196 = vadd.f32 %v125, %v164
  %v197 = vadd.f32 %v126, %v164
  %v198 = vadd.f32 %v127, %v164
  %v199 = vadd.f32 %v128, %v164
  %v200 = vadd.f32 %v129, %v164
  %v201 = vadd.f32 %v130, %v164
  %v202 = vadd.f32 %v131, %v164
  %v203 = vadd.f32 %v132, %v164
  %v204 = vadd.f32 %v133, %v164
  %v205 = vadd.f32 %v134, %v164
  %v206 = vadd.f32 %v135, %v164
  %v207 = vadd.f32 %v136, %v164
  %v208 = vadd.f32 %v137, %v164
  %v209 = vadd.f32 %v138, %v164
  %v210 = vadd.f32 %v139, %v164
  %v211 = vadd.f32 %v140, %v164
  %v212 = vadd.f32 %v141, %v164
  %v213 = vadd.f32 %v142, %v164
  %v214 = vadd.f32 %v143, %v164
  %v215 = vadd.f32 %v144, %v164
  %v216 = vadd.f32 %v145, %v164
  %v217 = vadd.f32 %v146, %v164
  %v218 = vadd.f32 %v147, %v164
  %v219 = vadd.f32 %v148, %v164
  %v220 = vadd.f32 %v149, %v164
  %v221 = vadd.f32 %v150, %v164
  %v222 = vadd.f32 %v151, %v164
  %v223 = vadd.f32 %v152, %v164
  %v224 = vadd.f32 %v153, %v164
  %v225 = vadd.f32 %v154, %v164
  %v226 = vadd.f32 %v155, %v164
  %v227 = vadd.f32 %v156, %v164
  %v228 = vadd.f32 %v157, %v164
  %v229 = vadd.f32 %v158, %v164
  %v230 = vmax.f32 %v166, 0.0
  %v231 = vmax.f32 %v167, 0.0
  %v232 = vmax.f32 %v168, 0.0
  %v233 = vmax.f32 %v169, 0.0
  %v234 = vmax.f32 %v170, 0.0
  %v235 = vmax.f32 %v171, 0.0
  %v236 = vmax.f32 %v172, 0.0
  %v237 = vmax.f32 %v173, 0.0
  %v238 = vmax.f32 %v174, 0.0
  %v239 = vmax.f32 %v175, 0.0
  %v240 = vmax.f32 %v176, 0.0
  %v241 = vmax.f32 %v177, 0.0
  %v242 = vmax.f32 %v178, 0.0
  %v243 = vmax.f32 %v179, 0.0
  %v244 = vmax.f32 %v180, 0.0
  %v245 = vmax.f32 %v181, 0.0
  %v246 = vmax.f32 %v182, 0.0
  %v247 = vmax.f32 %v183, 0.0
  %v248 = vmax.f32 %v184, 0.0
  %v249 = vmax.f32 %v185, 0.0
  %v250 = vmax.f32 %v186, 0.0
  %v251 = vmax.f32 %v187, 0.0
  %v252 = vmax.f32 %v188, 0.0
  %v253 = vmax.f32 %v189, 0.0
  %v254 = vmax.f32 %v190, 0.0
  %v255 = vmax.f32 %v191, 0.0
  %v256 = vmax.f32 %v192, 0.0
  %v257 = vmax.f32 %v193, 0.0
  %v258 = vmax.f32 %v194, 0.0
  %v259 = vmax.f32 %v195, 0.0
  %v260 = vmax.f32 %v196, 0.0
  %v261 = vmax.f32 %v197, 0.0
  %v262 = vmax.f32 %v198, 0.0
  %v263 = vmax.f32 %v199, 0.0
  %v264 = vmax.f32 %v200, 0.0
  %v265 = vmax.f32 %v201, 0.0
  %v266 = vmax.f32 %v202, 0.0
  %v267 = vmax.f32 %v203, 0.0
  %v268 = vmax.f32 %v204, 0.0
  %v269 = vmax.f32 %v205, 0.0
  %v270 = vmax.f32 %v206, 0.0
  %v271 = vmax.f32 %v207, 0.0
  %v272 = vmax.f32 %v208, 0.0
  %v273 = vmax.f32 %v209, 0.0
  %v274 = vmax.f32 %v210, 0.0
  %v275 = vmax.f32 %v211, 0.0
  %v276 = vmax.f32 %v212, 0.0
  %v277 = vmax.f32 %v213, 0.0
  %v278 = vmax.f32 %v214, 0.0
  %v279 = vmax.f32 %v215, 0.0
  %v280 = vmax.f32 %v216, 0.0
  %v281 = vmax.f32 %v217, 0.0
  %v282 = vmax.f32 %v218, 0.0
  %v283 = vmax.f32 %v219, 0.0
  %v284 = vmax.f32 %v220, 0.0
  %v285 = vmax.f32 %v221, 0.0
  %v286 = vmax.f32 %v222, 0.0
  %v287 = vmax.f32 %v223, 0.0
  %v288 = vmax.f32 %v224, 0.0
  %v289 = vmax.f32 %v225, 0.0
  %v290 = vmax.f32 %v226, 0.0
  %v291 = vmax.f32 %v227, 0.0
  %v292 = vmax.f32 %v228, 0.0
  %v293 = vmax.f32 %v229, 0.0
  %v294 = vpack.c.bf16 %v231, %v230
  %v295 = vpack.c.bf16 %v233, %v232
  %v296 = vpack.c.bf16 %v235, %v234
  %v297 = vpack.c.bf16 %v237, %v236
  %v298 = vpack.c.bf16 %v239, %v238
  %v299 = vpack.c.bf16 %v241, %v240
  %v300 = vpack.c.bf16 %v243, %v242
  %v301 = vpack.c.bf16 %v245, %v244
  %v302 = vpack.c.bf16 %v247, %v246
  %v303 = vpack.c.bf16 %v249, %v248
  %v304 = vpack.c.bf16 %v251, %v250
  %v305 = vpack.c.bf16 %v253, %v252
  %v306 = vpack.c.bf16 %v255, %v254
  %v307 = vpack.c.bf16 %v257, %v256
  %v308 = vpack.c.bf16 %v259, %v258
  %v309 = vpack.c.bf16 %v261, %v260
  %v310 = vpack.c.bf16 %v263, %v262
  %v311 = vpack.c.bf16 %v265, %v264
  %v312 = vpack.c.bf16 %v267, %v266
  %v313 = vpack.c.bf16 %v269, %v268
  %v314 = vpack.c.bf16 %v271, %v270
  %v315 = vpack.c.bf16 %v273, %v272
  %v316 = vpack.c.bf16 %v275, %v274
  %v317 = vpack.c.bf16 %v277, %v276
  %v318 = vpack.c.bf16 %v279, %v278
  %v319 = vpack.c.bf16 %v281, %v280
  %v320 = vpack.c.bf16 %v283, %v282
  %v321 = vpack.c.bf16 %v285, %v284
  %v322 = vpack.c.bf16 %v287, %v286
  %v323 = vpack.c.bf16 %v289, %v288
  %v324 = vpack.c.bf16 %v291, %v290
  %v325 = vpack.c.bf16 %v293, %v292
  %v326 = vld [vmem:[%s3] sm:$0xf]
  %v327 = vld [vmem:[%s3 + $0x4] sm:$0xf]
  %v328 = vld [vmem:[%s3 + $0x8] sm:$0xf]
  %v329 = vld [vmem:[%s3 + $0xc] sm:$0xf]
  %v330 = vld [vmem:[%s3 + $0x10] sm:$0xf]
  %v331 = vld [vmem:[%s3 + $0x14] sm:$0xf]
  %v332 = vld [vmem:[%s3 + $0x18] sm:$0xf]
  %v333 = vld [vmem:[%s3 + $0x1c] sm:$0xf]
  %v334 = vld [vmem:[%s3 + $0x20] sm:$0xf]
  %v335 = vld [vmem:[%s3 + $0x24] sm:$0xf]
  %v336 = vld [vmem:[%s3 + $0x28] sm:$0xf]
  %v337 = vld [vmem:[%s3 + $0x2c] sm:$0xf]
  %v338 = vld [vmem:[%s3 + $0x30] sm:$0xf]
  %v339 = vld [vmem:[%s3 + $0x34] sm:$0xf]
  %v340 = vld [vmem:[%s3 + $0x38] sm:$0xf]
  %v341 = vld [vmem:[%s3 + $0x3c] sm:$0xf]
  %v358 = vunpack.c.l.b16 %v326
  %v359 = vunpack.c.l.b16 %v327
  %v360 = vunpack.c.l.b16 %v328
  %v361 = vunpack.c.l.b16 %v329
  %v362 = vunpack.c.l.b16 %v330
  %v363 = vunpack.c.l.b16 %v331
  %v364 = vunpack.c.l.b16 %v332
  %v365 = vunpack.c.l.b16 %v333
  %v366 = vunpack.c.l.b16 %v334
  %v367 = vunpack.c.l.b16 %v335
  %v368 = vunpack.c.l.b16 %v336
  %v369 = vunpack.c.l.b16 %v337
  %v370 = vunpack.c.l.b16 %v338
  %v371 = vunpack.c.l.b16 %v339
  %v372 = vunpack.c.l.b16 %v340
  %v373 = vunpack.c.l.b16 %v341
  %v374 = vpack.c.b16 %v359, %v358
  %v375 = vpack.c.b16 %v361, %v360
  %v376 = vpack.c.b16 %v363, %v362
  %v377 = vpack.c.b16 %v365, %v364
  %v378 = vpack.c.b16 %v367, %v366
  %v379 = vpack.c.b16 %v369, %v368
  %v380 = vpack.c.b16 %v371, %v370
  %v381 = vpack.c.b16 %v373, %v372
  %390 = vmatprep.subr.bf16.mxu0 0
  %391 = vmatpush1.bf16.msra.mxu0 %v374
  %392 = vmatprep.subr.bf16.mxu0 0
  %393 = vmatpush1.bf16.msra.mxu0 %v375
  %394 = vmatprep.subr.bf16.mxu0 0
  %395 = vmatpush1.bf16.msra.mxu0 %v376
  %396 = vmatprep.subr.bf16.mxu0 0
  %397 = vmatpush1.bf16.msra.mxu0 %v377
  %398 = vmatprep.subr.bf16.mxu0 0
  %399 = vmatpush1.bf16.msra.mxu0 %v378
  %400 = vmatprep.subr.bf16.mxu0 0
  %401 = vmatpush1.bf16.msra.mxu0 %v379
  %402 = vmatprep.subr.bf16.mxu0 0
  %403 = vmatpush1.bf16.msra.mxu0 %v380
  %404 = vmatprep.subr.bf16.mxu0 0
  %405 = vmatpush1.bf16.msra.mxu0 %v381
  %406 = vmatprep.subr.bf16.mxu0 0
  %407 = vmatpush1.bf16.msra.mxu0 0
  %408 = vmatprep.subr.bf16.mxu0 0
  %409 = vmatpush1.bf16.msra.mxu0 0
  %410 = vmatprep.subr.bf16.mxu0 0
  %411 = vmatpush1.bf16.msra.mxu0 0
  %412 = vmatprep.subr.bf16.mxu0 0
  %413 = vmatpush1.bf16.msra.mxu0 0
  %414 = vmatprep.subr.bf16.mxu0 0
  %415 = vmatpush1.bf16.msra.mxu0 0
  %416 = vmatprep.subr.bf16.mxu0 0
  %417 = vmatpush1.bf16.msra.mxu0 0
  %418 = vmatprep.subr.bf16.mxu0 0
  %419 = vmatpush1.bf16.msra.mxu0 0
  %420 = vmatprep.subr.bf16.mxu0 0
  %421 = vmatpush1.bf16.msra.mxu0 0
  %422 = vmatprep.mubr.bf16.mxu0 0
  %423 = vmatmul.mubr.bf16.gmra.mrb[0].mxu0 %v294
  %v424 = vpop.f32.mrb[0].mxu0
  %v425 = vadd.f32 0.0, %v424
  %v426 = vpop.f32.mrb[0].mxu0
  %v427 = vpop.f32.mrb[0].mxu0
  %v428 = vadd.f32 0.0, %v427
  %v429 = vpop.f32.mrb[0].mxu0
  %430 = vmatprep.mubr.bf16.mxu0 0
  %431 = vmatmul.mubr.bf16.gmra.mrb[0].mxu0 %v295
  %v432 = vpop.f32.mrb[0].mxu0
  %v433 = vadd.f32 0.0, %v432
  %v434 = vpop.f32.mrb[0].mxu0
  %v435 = vpop.f32.mrb[0].mxu0
  %v436 = vadd.f32 0.0, %v435
  %v437 = vpop.f32.mrb[0].mxu0
  %438 = vmatprep.mubr.bf16.mxu0 0
  %439 = vmatmul.mubr.bf16.gmra.mrb[0].mxu0 %v296
  %v440 = vpop.f32.mrb[0].mxu0
  %v441 = vadd.f32 0.0, %v440
  %v442 = vpop.f32.mrb[0].mxu0
  %v443 = vpop.f32.mrb[0].mxu0
  %v444 = vadd.f32 0.0, %v443
  %v445 = vpop.f32.mrb[0].mxu0
  %446 = vmatprep.mubr.bf16.mxu0 0
  %447 = vmatmul.mubr.bf16.gmra.mrb[0].mxu0 %v297
  %v448 = vpop.f32.mrb[0].mxu0
  %v449 = vadd.f32 0.0, %v448
  %v450 = vpop.f32.mrb[0].mxu0
  %v451 = vpop.f32.mrb[0].mxu0
  %v452 = vadd.f32 0.0, %v451
  %v453 = vpop.f32.mrb[0].mxu0
  %454 = vmatprep.mubr.bf16.mxu0 0
  %455 = vmatmul.mubr.bf16.gmra.mrb[0].mxu0 %v298
  %v456 = vpop.f32.mrb[0].mxu0
  %v457 = vadd.f32 0.0, %v456
  %v458 = vpop.f32.mrb[0].mxu0
  %v459 = vpop.f32.mrb[0].mxu0
  %v460 = vadd.f32 0.0, %v459
  %v461 = vpop.f32.mrb[0].mxu0
  %462 = vmatprep.mubr.bf16.mxu0 0
  %463 = vmatmul.mubr.bf16.gmra.mrb[0].mxu0 %v299
  %v464 = vpop.f32.mrb[0].mxu0
  %v465 = vadd.f32 0.0, %v464
  %v466 = vpop.f32.mrb[0].mxu0
  %v467 = vpop.f32.mrb[0].mxu0
  %v468 = vadd.f32 0.0, %v467
  %v469 = vpop.f32.mrb[0].mxu0
  %470 = vmatprep.mubr.bf16.mxu0 0
  %471 = vmatmul.mubr.bf16.gmra.mrb[0].mxu0 %v300
  %v472 = vpop.f32.mrb[0].mxu0
  %v473 = vadd.f32 0.0, %v472
  %v474 = vpop.f32.mrb[0].mxu0
  %v475 = vpop.f32.mrb[0].mxu0
  %v476 = vadd.f32 0.0, %v475
  %v477 = vpop.f32.mrb[0].mxu0
  %478 = vmatprep.mubr.bf16.mxu0 0
  %479 = vmatmul.mubr.bf16.gmra.mrb[0].mxu0 %v301
  %v480 = vpop.f32.mrb[0].mxu0
  %v481 = vadd.f32 0.0, %v480
  %v482 = vpop.f32.mrb[0].mxu0
  %v483 = vpop.f32.mrb[0].mxu0
  %v484 = vadd.f32 0.0, %v483
  %v485 = vpop.f32.mrb[0].mxu0
  %486 = vmatprep.mubr.bf16.mxu0 0
  %487 = vmatmul.mubr.bf16.gmra.mrb[0].mxu0 %v302
  %v488 = vpop.f32.mrb[0].mxu0
  %v489 = vadd.f32 0.0, %v488
  %v490 = vpop.f32.mrb[0].mxu0
  %v491 = vpop.f32.mrb[0].mxu0
  %v492 = vadd.f32 0.0, %v491
  %v493 = vpop.f32.mrb[0].mxu0
  %494 = vmatprep.mubr.bf16.mxu0 0
  %495 = vmatmul.mubr.bf16.gmra.mrb[0].mxu0 %v303
  %v496 = vpop.f32.mrb[0].mxu0
  %v497 = vadd.f32 0.0, %v496
  %v498 = vpop.f32.mrb[0].mxu0
  %v499 = vpop.f32.mrb[0].mxu0
  %v500 = vadd.f32 0.0, %v499
  %v501 = vpop.f32.mrb[0].mxu0
  %502 = vmatprep.mubr.bf16.mxu0 0
  %503 = vmatmul.mubr.bf16.gmra.mrb[0].mxu0 %v304
  %v504 = vpop.f32.mrb[0].mxu0
  %v505 = vadd.f32 0.0, %v504
  %v506 = vpop.f32.mrb[0].mxu0
  %v507 = vpop.f32.mrb[0].mxu0
  %v508 = vadd.f32 0.0, %v507
  %v509 = vpop.f32.mrb[0].mxu0
  %510 = vmatprep.mubr.bf16.mxu0 0
  %511 = vmatmul.mubr.bf16.gmra.mrb[0].mxu0 %v305
  %v512 = vpop.f32.mrb[0].mxu0
  %v513 = vadd.f32 0.0, %v512
  %v514 = vpop.f32.mrb[0].mxu0
  %v515 = vpop.f32.mrb[0].mxu0
  %v516 = vadd.f32 0.0, %v515
  %v517 = vpop.f32.mrb[0].mxu0
  %518 = vmatprep.mubr.bf16.mxu0 0
  %519 = vmatmul.mubr.bf16.gmra.mrb[0].mxu0 %v306
  %v520 = vpop.f32.mrb[0].mxu0
  %v521 = vadd.f32 0.0, %v520
  %v522 = vpop.f32.mrb[0].mxu0
  %v523 = vpop.f32.mrb[0].mxu0
  %v524 = vadd.f32 0.0, %v523
  %v525 = vpop.f32.mrb[0].mxu0
  %526 = vmatprep.mubr.bf16.mxu0 0
  %527 = vmatmul.mubr.bf16.gmra.mrb[0].mxu0 %v307
  %v528 = vpop.f32.mrb[0].mxu0
  %v529 = vadd.f32 0.0, %v528
  %v530 = vpop.f32.mrb[0].mxu0
  %v531 = vpop.f32.mrb[0].mxu0
  %v532 = vadd.f32 0.0, %v531
  %v533 = vpop.f32.mrb[0].mxu0
  %534 = vmatprep.mubr.bf16.mxu0 0
  %535 = vmatmul.mubr.bf16.gmra.mrb[0].mxu0 %v308
  %v536 = vpop.f32.mrb[0].mxu0
  %v537 = vadd.f32 0.0, %v536
  %v538 = vpop.f32.mrb[0].mxu0
  %v539 = vpop.f32.mrb[0].mxu0
  %v540 = vadd.f32 0.0, %v539
  %v541 = vpop.f32.mrb[0].mxu0
  %542 = vmatprep.mubr.bf16.mxu0 0
  %543 = vmatmul.mubr.bf16.gmra.mrb[0].mxu0 %v309
  %v544 = vpop.f32.mrb[0].mxu0
  %v545 = vadd.f32 0.0, %v544
  %v546 = vpop.f32.mrb[0].mxu0
  %v547 = vpop.f32.mrb[0].mxu0
  %v548 = vadd.f32 0.0, %v547
  %v549 = vpop.f32.mrb[0].mxu0
  %550 = vmatprep.mubr.bf16.mxu0 0
  %551 = vmatmul.mubr.bf16.gmra.mrb[0].mxu0 %v310
  %v552 = vpop.f32.mrb[0].mxu0
  %v553 = vadd.f32 0.0, %v552
  %v554 = vpop.f32.mrb[0].mxu0
  %v555 = vpop.f32.mrb[0].mxu0
  %v556 = vadd.f32 0.0, %v555
  %v557 = vpop.f32.mrb[0].mxu0
  %558 = vmatprep.mubr.bf16.mxu0 0
  %559 = vmatmul.mubr.bf16.gmra.mrb[0].mxu0 %v311
  %v560 = vpop.f32.mrb[0].mxu0
  %v561 = vadd.f32 0.0, %v560
  %v562 = vpop.f32.mrb[0].mxu0
  %v563 = vpop.f32.mrb[0].mxu0
  %v564 = vadd.f32 0.0, %v563
  %v565 = vpop.f32.mrb[0].mxu0
  %566 = vmatprep.mubr.bf16.mxu0 0
  %567 = vmatmul.mubr.bf16.gmra.mrb[0].mxu0 %v312
  %v568 = vpop.f32.mrb[0].mxu0
  %v569 = vadd.f32 0.0, %v568
  %v570 = vpop.f32.mrb[0].mxu0
  %v571 = vpop.f32.mrb[0].mxu0
  %v572 = vadd.f32 0.0, %v571
  %v573 = vpop.f32.mrb[0].mxu0
  %574 = vmatprep.mubr.bf16.mxu0 0
  %575 = vmatmul.mubr.bf16.gmra.mrb[0].mxu0 %v313
  %v576 = vpop.f32.mrb[0].mxu0
  %v577 = vadd.f32 0.0, %v576
  %v578 = vpop.f32.mrb[0].mxu0
  %v579 = vpop.f32.mrb[0].mxu0
  %v580 = vadd.f32 0.0, %v579
  %v581 = vpop.f32.mrb[0].mxu0
  %582 = vmatprep.mubr.bf16.mxu0 0
  %583 = vmatmul.mubr.bf16.gmra.mrb[0].mxu0 %v314
  %v584 = vpop.f32.mrb[0].mxu0
  %v585 = vadd.f32 0.0, %v584
  %v586 = vpop.f32.mrb[0].mxu0
  %v587 = vpop.f32.mrb[0].mxu0
  %v588 = vadd.f32 0.0, %v587
  %v589 = vpop.f32.mrb[0].mxu0
  %590 = vmatprep.mubr.bf16.mxu0 0
  %591 = vmatmul.mubr.bf16.gmra.mrb[0].mxu0 %v315
  %v592 = vpop.f32.mrb[0].mxu0
  %v593 = vadd.f32 0.0, %v592
  %v594 = vpop.f32.mrb[0].mxu0
  %v595 = vpop.f32.mrb[0].mxu0
  %v596 = vadd.f32 0.0, %v595
  %v597 = vpop.f32.mrb[0].mxu0
  %598 = vmatprep.mubr.bf16.mxu0 0
  %599 = vmatmul.mubr.bf16.gmra.mrb[0].mxu0 %v316
  %v600 = vpop.f32.mrb[0].mxu0
  %v601 = vadd.f32 0.0, %v600
  %v602 = vpop.f32.mrb[0].mxu0
  %v603 = vpop.f32.mrb[0].mxu0
  %v604 = vadd.f32 0.0, %v603
  %v605 = vpop.f32.mrb[0].mxu0
  %606 = vmatprep.mubr.bf16.mxu0 0
  %607 = vmatmul.mubr.bf16.gmra.mrb[0].mxu0 %v317
  %v608 = vpop.f32.mrb[0].mxu0
  %v609 = vadd.f32 0.0, %v608
  %v610 = vpop.f32.mrb[0].mxu0
  %v611 = vpop.f32.mrb[0].mxu0
  %v612 = vadd.f32 0.0, %v611
  %v613 = vpop.f32.mrb[0].mxu0
  %614 = vmatprep.mubr.bf16.mxu0 0
  %615 = vmatmul.mubr.bf16.gmra.mrb[0].mxu0 %v318
  %v616 = vpop.f32.mrb[0].mxu0
  %v617 = vadd.f32 0.0, %v616
  %v618 = vpop.f32.mrb[0].mxu0
  %v619 = vpop.f32.mrb[0].mxu0
  %v620 = vadd.f32 0.0, %v619
  %v621 = vpop.f32.mrb[0].mxu0
  %622 = vmatprep.mubr.bf16.mxu0 0
  %623 = vmatmul.mubr.bf16.gmra.mrb[0].mxu0 %v319
  %v624 = vpop.f32.mrb[0].mxu0
  %v625 = vadd.f32 0.0, %v624
  %v626 = vpop.f32.mrb[0].mxu0
  %v627 = vpop.f32.mrb[0].mxu0
  %v628 = vadd.f32 0.0, %v627
  %v629 = vpop.f32.mrb[0].mxu0
  %630 = vmatprep.mubr.bf16.mxu0 0
  %631 = vmatmul.mubr.bf16.gmra.mrb[0].mxu0 %v320
  %v632 = vpop.f32.mrb[0].mxu0
  %v633 = vadd.f32 0.0, %v632
  %v634 = vpop.f32.mrb[0].mxu0
  %v635 = vpop.f32.mrb[0].mxu0
  %v636 = vadd.f32 0.0, %v635
  %v637 = vpop.f32.mrb[0].mxu0
  %638 = vmatprep.mubr.bf16.mxu0 0
  %639 = vmatmul.mubr.bf16.gmra.mrb[0].mxu0 %v321
  %v640 = vpop.f32.mrb[0].mxu0
  %v641 = vadd.f32 0.0, %v640
  %v642 = vpop.f32.mrb[0].mxu0
  %v643 = vpop.f32.mrb[0].mxu0
  %v644 = vadd.f32 0.0, %v643
  %v645 = vpop.f32.mrb[0].mxu0
  %646 = vmatprep.mubr.bf16.mxu0 0
  %647 = vmatmul.mubr.bf16.gmra.mrb[0].mxu0 %v322
  %v648 = vpop.f32.mrb[0].mxu0
  %v649 = vadd.f32 0.0, %v648
  %v650 = vpop.f32.mrb[0].mxu0
  %v651 = vpop.f32.mrb[0].mxu0
  %v652 = vadd.f32 0.0, %v651
  %v653 = vpop.f32.mrb[0].mxu0
  %654 = vmatprep.mubr.bf16.mxu0 0
  %655 = vmatmul.mubr.bf16.gmra.mrb[0].mxu0 %v323
  %v656 = vpop.f32.mrb[0].mxu0
  %v657 = vadd.f32 0.0, %v656
  %v658 = vpop.f32.mrb[0].mxu0
  %v659 = vpop.f32.mrb[0].mxu0
  %v660 = vadd.f32 0.0, %v659
  %v661 = vpop.f32.mrb[0].mxu0
  %662 = vmatprep.mubr.bf16.mxu0 0
  %663 = vmatmul.mubr.bf16.gmra.mrb[0].mxu0 %v324
  %v664 = vpop.f32.mrb[0].mxu0
  %v665 = vadd.f32 0.0, %v664
  %v666 = vpop.f32.mrb[0].mxu0
  %v667 = vpop.f32.mrb[0].mxu0
  %v668 = vadd.f32 0.0, %v667
  %v669 = vpop.f32.mrb[0].mxu0
  %670 = vmatprep.mubr.bf16.mxu0 0
  %671 = vmatmul.mubr.bf16.gmra.mrb[0].mxu0 %v325
  %v672 = vpop.f32.mrb[0].mxu0
  %v673 = vadd.f32 0.0, %v672
  %v674 = vpop.f32.mrb[0].mxu0
  %v675 = vpop.f32.mrb[0].mxu0
  %v676 = vadd.f32 0.0, %v675
  %v677 = vpop.f32.mrb[0].mxu0
  %678 = vdwg.mxu0
  %v679 = vlaneseq
  %v680 = vshrl.u32 %v679, 7
  %v681 = vadd.s32 %v680, 8
  %v682 = vadd.s32 %v680, 16
  %v683 = vadd.s32 %v680, 24
  %v684 = vadd.s32 %v680, 32
  %v685 = vadd.s32 %v680, 40
  %v686 = vadd.s32 %v680, 48
  %v687 = vadd.s32 %v680, 56
  %v688 = vadd.s32 %v680, 64
  %v689 = vadd.s32 %v680, 72
  %v690 = vadd.s32 %v680, 80
  %v691 = vadd.s32 %v680, 88
  %v692 = vadd.s32 %v680, 96
  %v693 = vadd.s32 %v680, 104
  %v694 = vadd.s32 %v680, 112
  %v695 = vadd.s32 %v680, 120
  %v696 = vadd.s32 %v680, 128
  %v697 = vadd.s32 %v680, 136
  %v698 = vadd.s32 %v680, 144
  %v699 = vadd.s32 %v680, 152
  %v700 = vadd.s32 %v680, 160
  %v701 = vadd.s32 %v680, 168
  %v702 = vadd.s32 %v680, 176
  %v703 = vadd.s32 %v680, 184
  %v704 = vadd.s32 %v680, 192
  %v705 = vadd.s32 %v680, 200
  %v706 = vadd.s32 %v680, 208
  %v707 = vadd.s32 %v680, 216
  %v708 = vadd.s32 %v680, 224
  %v709 = vadd.s32 %v680, 232
  %v710 = vadd.s32 %v680, 240
  %v711 = vadd.s32 %v680, 248
  %v712 = vadd.s32 %v680, 256
  %v713 = vadd.s32 %v680, 264
  %v714 = vadd.s32 %v680, 272
  %v715 = vadd.s32 %v680, 280
  %v716 = vadd.s32 %v680, 288
  %v717 = vadd.s32 %v680, 296
  %v718 = vadd.s32 %v680, 304
  %v719 = vadd.s32 %v680, 312
  %v720 = vadd.s32 %v680, 320
  %v721 = vadd.s32 %v680, 328
  %v722 = vadd.s32 %v680, 336
  %v723 = vadd.s32 %v680, 344
  %v724 = vadd.s32 %v680, 352
  %v725 = vadd.s32 %v680, 360
  %v726 = vadd.s32 %v680, 368
  %v727 = vadd.s32 %v680, 376
  %v728 = vadd.s32 %v680, 384
  %v729 = vadd.s32 %v680, 392
  %v730 = vadd.s32 %v680, 400
  %v731 = vadd.s32 %v680, 408
  %v732 = vadd.s32 %v680, 416
  %v733 = vadd.s32 %v680, 424
  %v734 = vadd.s32 %v680, 432
  %v735 = vadd.s32 %v680, 440
  %v736 = vadd.s32 %v680, 448
  %v737 = vadd.s32 %v680, 456
  %v738 = vadd.s32 %v680, 464
  %v739 = vadd.s32 %v680, 472
  %v740 = vadd.s32 %v680, 480
  %v741 = vadd.s32 %v680, 488
  %v742 = vadd.s32 %v680, 496
  %v743 = vadd.s32 %v680, 504
  %s744 = smul.u32 0, 512
  %s745 = ssub.s32 512, %s744
  %v746 = vstv %s745
  %vm747 = vcmp.lt.s32.totalorder %v680, %v746
  %vm748 = vcmp.lt.s32.totalorder %v681, %v746
  %vm749 = vcmp.lt.s32.totalorder %v682, %v746
  %vm750 = vcmp.lt.s32.totalorder %v683, %v746
  %vm751 = vcmp.lt.s32.totalorder %v684, %v746
  %vm752 = vcmp.lt.s32.totalorder %v685, %v746
  %vm753 = vcmp.lt.s32.totalorder %v686, %v746
  %vm754 = vcmp.lt.s32.totalorder %v687, %v746
  %vm755 = vcmp.lt.s32.totalorder %v688, %v746
  %vm756 = vcmp.lt.s32.totalorder %v689, %v746
  %vm757 = vcmp.lt.s32.totalorder %v690, %v746
  %vm758 = vcmp.lt.s32.totalorder %v691, %v746
  %vm759 = vcmp.lt.s32.totalorder %v692, %v746
  %vm760 = vcmp.lt.s32.totalorder %v693, %v746
  %vm761 = vcmp.lt.s32.totalorder %v694, %v746
  %vm762 = vcmp.lt.s32.totalorder %v695, %v746
  %vm763 = vcmp.lt.s32.totalorder %v696, %v746
  %vm764 = vcmp.lt.s32.totalorder %v697, %v746
  %vm765 = vcmp.lt.s32.totalorder %v698, %v746
  %vm766 = vcmp.lt.s32.totalorder %v699, %v746
  %vm767 = vcmp.lt.s32.totalorder %v700, %v746
  %vm768 = vcmp.lt.s32.totalorder %v701, %v746
  %vm769 = vcmp.lt.s32.totalorder %v702, %v746
  %vm770 = vcmp.lt.s32.totalorder %v703, %v746
  %vm771 = vcmp.lt.s32.totalorder %v704, %v746
  %vm772 = vcmp.lt.s32.totalorder %v705, %v746
  %vm773 = vcmp.lt.s32.totalorder %v706, %v746
  %vm774 = vcmp.lt.s32.totalorder %v707, %v746
  %vm775 = vcmp.lt.s32.totalorder %v708, %v746
  %vm776 = vcmp.lt.s32.totalorder %v709, %v746
  %vm777 = vcmp.lt.s32.totalorder %v710, %v746
  %vm778 = vcmp.lt.s32.totalorder %v711, %v746
  %vm779 = vcmp.lt.s32.totalorder %v712, %v746
  %vm780 = vcmp.lt.s32.totalorder %v713, %v746
  %vm781 = vcmp.lt.s32.totalorder %v714, %v746
  %vm782 = vcmp.lt.s32.totalorder %v715, %v746
  %vm783 = vcmp.lt.s32.totalorder %v716, %v746
  %vm784 = vcmp.lt.s32.totalorder %v717, %v746
  %vm785 = vcmp.lt.s32.totalorder %v718, %v746
  %vm786 = vcmp.lt.s32.totalorder %v719, %v746
  %vm787 = vcmp.lt.s32.totalorder %v720, %v746
  %vm788 = vcmp.lt.s32.totalorder %v721, %v746
  %vm789 = vcmp.lt.s32.totalorder %v722, %v746
  %vm790 = vcmp.lt.s32.totalorder %v723, %v746
  %vm791 = vcmp.lt.s32.totalorder %v724, %v746
  %vm792 = vcmp.lt.s32.totalorder %v725, %v746
  %vm793 = vcmp.lt.s32.totalorder %v726, %v746
  %vm794 = vcmp.lt.s32.totalorder %v727, %v746
  %vm795 = vcmp.lt.s32.totalorder %v728, %v746
  %vm796 = vcmp.lt.s32.totalorder %v729, %v746
  %vm797 = vcmp.lt.s32.totalorder %v730, %v746
  %vm798 = vcmp.lt.s32.totalorder %v731, %v746
  %vm799 = vcmp.lt.s32.totalorder %v732, %v746
  %vm800 = vcmp.lt.s32.totalorder %v733, %v746
  %vm801 = vcmp.lt.s32.totalorder %v734, %v746
  %vm802 = vcmp.lt.s32.totalorder %v735, %v746
  %vm803 = vcmp.lt.s32.totalorder %v736, %v746
  %vm804 = vcmp.lt.s32.totalorder %v737, %v746
  %vm805 = vcmp.lt.s32.totalorder %v738, %v746
  %vm806 = vcmp.lt.s32.totalorder %v739, %v746
  %vm807 = vcmp.lt.s32.totalorder %v740, %v746
  %vm808 = vcmp.lt.s32.totalorder %v741, %v746
  %vm809 = vcmp.lt.s32.totalorder %v742, %v746
  %vm810 = vcmp.lt.s32.totalorder %v743, %v746
  %v811 = vsel %vm747, %v425, 0.0
  %v812 = vsel %vm748, %v428, 0.0
  %v813 = vsel %vm749, %v433, 0.0
  %v814 = vsel %vm750, %v436, 0.0
  %v815 = vsel %vm751, %v441, 0.0
  %v816 = vsel %vm752, %v444, 0.0
  %v817 = vsel %vm753, %v449, 0.0
  %v818 = vsel %vm754, %v452, 0.0
  %v819 = vsel %vm755, %v457, 0.0
  %v820 = vsel %vm756, %v460, 0.0
  %v821 = vsel %vm757, %v465, 0.0
  %v822 = vsel %vm758, %v468, 0.0
  %v823 = vsel %vm759, %v473, 0.0
  %v824 = vsel %vm760, %v476, 0.0
  %v825 = vsel %vm761, %v481, 0.0
  %v826 = vsel %vm762, %v484, 0.0
  %v827 = vsel %vm763, %v489, 0.0
  %v828 = vsel %vm764, %v492, 0.0
  %v829 = vsel %vm765, %v497, 0.0
  %v830 = vsel %vm766, %v500, 0.0
  %v831 = vsel %vm767, %v505, 0.0
  %v832 = vsel %vm768, %v508, 0.0
  %v833 = vsel %vm769, %v513, 0.0
  %v834 = vsel %vm770, %v516, 0.0
  %v835 = vsel %vm771, %v521, 0.0
  %v836 = vsel %vm772, %v524, 0.0
  %v837 = vsel %vm773, %v529, 0.0
  %v838 = vsel %vm774, %v532, 0.0
  %v839 = vsel %vm775, %v537, 0.0
  %v840 = vsel %vm776, %v540, 0.0
  %v841 = vsel %vm777, %v545, 0.0
  %v842 = vsel %vm778, %v548, 0.0
  %v843 = vsel %vm779, %v553, 0.0
  %v844 = vsel %vm780, %v556, 0.0
  %v845 = vsel %vm781, %v561, 0.0
  %v846 = vsel %vm782, %v564, 0.0
  %v847 = vsel %vm783, %v569, 0.0
  %v848 = vsel %vm784, %v572, 0.0
  %v849 = vsel %vm785, %v577, 0.0
  %v850 = vsel %vm786, %v580, 0.0
  %v851 = vsel %vm787, %v585, 0.0
  %v852 = vsel %vm788, %v588, 0.0
  %v853 = vsel %vm789, %v593, 0.0
  %v854 = vsel %vm790, %v596, 0.0
  %v855 = vsel %vm791, %v601, 0.0
  %v856 = vsel %vm792, %v604, 0.0
  %v857 = vsel %vm793, %v609, 0.0
  %v858 = vsel %vm794, %v612, 0.0
  %v859 = vsel %vm795, %v617, 0.0
  %v860 = vsel %vm796, %v620, 0.0
  %v861 = vsel %vm797, %v625, 0.0
  %v862 = vsel %vm798, %v628, 0.0
  %v863 = vsel %vm799, %v633, 0.0
  %v864 = vsel %vm800, %v636, 0.0
  %v865 = vsel %vm801, %v641, 0.0
  %v866 = vsel %vm802, %v644, 0.0
  %v867 = vsel %vm803, %v649, 0.0
  %v868 = vsel %vm804, %v652, 0.0
  %v869 = vsel %vm805, %v657, 0.0
  %v870 = vsel %vm806, %v660, 0.0
  %v871 = vsel %vm807, %v665, 0.0
  %v872 = vsel %vm808, %v668, 0.0
  %v873 = vsel %vm809, %v673, 0.0
  %v874 = vsel %vm810, %v676, 0.0
  %v875 = vpack.c.bf16 %v812, %v811
  %v876 = vpack.c.bf16 %v814, %v813
  %v877 = vpack.c.bf16 %v816, %v815
  %v878 = vpack.c.bf16 %v818, %v817
  %v879 = vpack.c.bf16 %v820, %v819
  %v880 = vpack.c.bf16 %v822, %v821
  %v881 = vpack.c.bf16 %v824, %v823
  %v882 = vpack.c.bf16 %v826, %v825
  %v883 = vpack.c.bf16 %v828, %v827
  %v884 = vpack.c.bf16 %v830, %v829
  %v885 = vpack.c.bf16 %v832, %v831
  %v886 = vpack.c.bf16 %v834, %v833
  %v887 = vpack.c.bf16 %v836, %v835
  %v888 = vpack.c.bf16 %v838, %v837
  %v889 = vpack.c.bf16 %v840, %v839
  %v890 = vpack.c.bf16 %v842, %v841
  %v891 = vpack.c.bf16 %v844, %v843
  %v892 = vpack.c.bf16 %v846, %v845
  %v893 = vpack.c.bf16 %v848, %v847
  %v894 = vpack.c.bf16 %v850, %v849
  %v895 = vpack.c.bf16 %v852, %v851
  %v896 = vpack.c.bf16 %v854, %v853
  %v897 = vpack.c.bf16 %v856, %v855
  %v898 = vpack.c.bf16 %v858, %v857
  %v899 = vpack.c.bf16 %v860, %v859
  %v900 = vpack.c.bf16 %v862, %v861
  %v901 = vpack.c.bf16 %v864, %v863
  %v902 = vpack.c.bf16 %v866, %v865
  %v903 = vpack.c.bf16 %v868, %v867
  %v904 = vpack.c.bf16 %v870, %v869
  %v905 = vpack.c.bf16 %v872, %v871
  %v906 = vpack.c.bf16 %v874, %v873
  %v939 = vunpack.c.l.b16 %v875
  %v940 = vunpack.c.h.b16 %v875
  %v941 = vunpack.c.l.b16 %v876
  %v942 = vunpack.c.h.b16 %v876
  %v943 = vunpack.c.l.b16 %v877
  %v944 = vunpack.c.h.b16 %v877
  %v945 = vunpack.c.l.b16 %v878
  %v946 = vunpack.c.h.b16 %v878
  %v947 = vunpack.c.l.b16 %v879
  %v948 = vunpack.c.h.b16 %v879
  %v949 = vunpack.c.l.b16 %v880
  %v950 = vunpack.c.h.b16 %v880
  %v951 = vunpack.c.l.b16 %v881
  %v952 = vunpack.c.h.b16 %v881
  %v953 = vunpack.c.l.b16 %v882
  %v954 = vunpack.c.h.b16 %v882
  %v955 = vunpack.c.l.b16 %v883
  %v956 = vunpack.c.h.b16 %v883
  %v957 = vunpack.c.l.b16 %v884
  %v958 = vunpack.c.h.b16 %v884
  %v959 = vunpack.c.l.b16 %v885
  %v960 = vunpack.c.h.b16 %v885
  %v961 = vunpack.c.l.b16 %v886
  %v962 = vunpack.c.h.b16 %v886
  %v963 = vunpack.c.l.b16 %v887
  %v964 = vunpack.c.h.b16 %v887
  %v965 = vunpack.c.l.b16 %v888
  %v966 = vunpack.c.h.b16 %v888
  %v967 = vunpack.c.l.b16 %v889
  %v968 = vunpack.c.h.b16 %v889
  %v969 = vunpack.c.l.b16 %v890
  %v970 = vunpack.c.h.b16 %v890
  %v971 = vunpack.c.l.b16 %v891
  %v972 = vunpack.c.h.b16 %v891
  %v973 = vunpack.c.l.b16 %v892
  %v974 = vunpack.c.h.b16 %v892
  %v975 = vunpack.c.l.b16 %v893
  %v976 = vunpack.c.h.b16 %v893
  %v977 = vunpack.c.l.b16 %v894
  %v978 = vunpack.c.h.b16 %v894
  %v979 = vunpack.c.l.b16 %v895
  %v980 = vunpack.c.h.b16 %v895
  %v981 = vunpack.c.l.b16 %v896
  %v982 = vunpack.c.h.b16 %v896
  %v983 = vunpack.c.l.b16 %v897
  %v984 = vunpack.c.h.b16 %v897
  %v985 = vunpack.c.l.b16 %v898
  %v986 = vunpack.c.h.b16 %v898
  %v987 = vunpack.c.l.b16 %v899
  %v988 = vunpack.c.h.b16 %v899
  %v989 = vunpack.c.l.b16 %v900
  %v990 = vunpack.c.h.b16 %v900
  %v991 = vunpack.c.l.b16 %v901
  %v992 = vunpack.c.h.b16 %v901
  %v993 = vunpack.c.l.b16 %v902
  %v994 = vunpack.c.h.b16 %v902
  %v995 = vunpack.c.l.b16 %v903
  %v996 = vunpack.c.h.b16 %v903
  %v997 = vunpack.c.l.b16 %v904
  %v998 = vunpack.c.h.b16 %v904
  %v999 = vunpack.c.l.b16 %v905
  %v1000 = vunpack.c.h.b16 %v905
  %v1001 = vunpack.c.l.b16 %v906
  %v1002 = vunpack.c.h.b16 %v906
  %v1003 = vpack.c.b16 %v939, %v939
  %v1004 = vpack.c.b16 %v940, %v940
  %v1005 = vpack.c.b16 %v941, %v941
  %v1006 = vpack.c.b16 %v942, %v942
  %v1007 = vpack.c.b16 %v943, %v943
  %v1008 = vpack.c.b16 %v944, %v944
  %v1009 = vpack.c.b16 %v945, %v945
  %v1010 = vpack.c.b16 %v946, %v946
  %v1011 = vpack.c.b16 %v947, %v947
  %v1012 = vpack.c.b16 %v948, %v948
  %v1013 = vpack.c.b16 %v949, %v949
  %v1014 = vpack.c.b16 %v950, %v950
  %v1015 = vpack.c.b16 %v951, %v951
  %v1016 = vpack.c.b16 %v952, %v952
  %v1017 = vpack.c.b16 %v953, %v953
  %v1018 = vpack.c.b16 %v954, %v954
  %v1019 = vpack.c.b16 %v955, %v955
  %v1020 = vpack.c.b16 %v956, %v956
  %v1021 = vpack.c.b16 %v957, %v957
  %v1022 = vpack.c.b16 %v958, %v958
  %v1023 = vpack.c.b16 %v959, %v959
  %v1024 = vpack.c.b16 %v960, %v960
  %v1025 = vpack.c.b16 %v961, %v961
  %v1026 = vpack.c.b16 %v962, %v962
  %v1027 = vpack.c.b16 %v963, %v963
  %v1028 = vpack.c.b16 %v964, %v964
  %v1029 = vpack.c.b16 %v965, %v965
  %v1030 = vpack.c.b16 %v966, %v966
  %v1031 = vpack.c.b16 %v967, %v967
  %v1032 = vpack.c.b16 %v968, %v968
  %v1033 = vpack.c.b16 %v969, %v969
  %v1034 = vpack.c.b16 %v970, %v970
  %v1035 = vpack.c.b16 %v971, %v971
  %v1036 = vpack.c.b16 %v972, %v972
  %v1037 = vpack.c.b16 %v973, %v973
  %v1038 = vpack.c.b16 %v974, %v974
  %v1039 = vpack.c.b16 %v975, %v975
  %v1040 = vpack.c.b16 %v976, %v976
  %v1041 = vpack.c.b16 %v977, %v977
  %v1042 = vpack.c.b16 %v978, %v978
  %v1043 = vpack.c.b16 %v979, %v979
  %v1044 = vpack.c.b16 %v980, %v980
  %v1045 = vpack.c.b16 %v981, %v981
  %v1046 = vpack.c.b16 %v982, %v982
  %v1047 = vpack.c.b16 %v983, %v983
  %v1048 = vpack.c.b16 %v984, %v984
  %v1049 = vpack.c.b16 %v985, %v985
  %v1050 = vpack.c.b16 %v986, %v986
  %v1051 = vpack.c.b16 %v987, %v987
  %v1052 = vpack.c.b16 %v988, %v988
  %v1053 = vpack.c.b16 %v989, %v989
  %v1054 = vpack.c.b16 %v990, %v990
  %v1055 = vpack.c.b16 %v991, %v991
  %v1056 = vpack.c.b16 %v992, %v992
  %v1057 = vpack.c.b16 %v993, %v993
  %v1058 = vpack.c.b16 %v994, %v994
  %v1059 = vpack.c.b16 %v995, %v995
  %v1060 = vpack.c.b16 %v996, %v996
  %v1061 = vpack.c.b16 %v997, %v997
  %v1062 = vpack.c.b16 %v998, %v998
  %v1063 = vpack.c.b16 %v999, %v999
  %v1064 = vpack.c.b16 %v1000, %v1000
  %v1065 = vpack.c.b16 %v1001, %v1001
  %v1066 = vpack.c.b16 %v1002, %v1002
  %1131 = vst [vmem:[%s5] sm:$0xf] %v1003
  %1132 = vst [vmem:[%s5 + $0x4] sm:$0xf] %v1004
  %1133 = vst [vmem:[%s5 + $0x8] sm:$0xf] %v1005
  %1134 = vst [vmem:[%s5 + $0xc] sm:$0xf] %v1006
  %1135 = vst [vmem:[%s5 + $0x10] sm:$0xf] %v1007
  %1136 = vst [vmem:[%s5 + $0x14] sm:$0xf] %v1008
  %1137 = vst [vmem:[%s5 + $0x18] sm:$0xf] %v1009
  %1138 = vst [vmem:[%s5 + $0x1c] sm:$0xf] %v1010
  %1139 = vst [vmem:[%s5 + $0x20] sm:$0xf] %v1011
  %1140 = vst [vmem:[%s5 + $0x24] sm:$0xf] %v1012
  %1141 = vst [vmem:[%s5 + $0x28] sm:$0xf] %v1013
  %1142 = vst [vmem:[%s5 + $0x2c] sm:$0xf] %v1014
  %1143 = vst [vmem:[%s5 + $0x30] sm:$0xf] %v1015
  %1144 = vst [vmem:[%s5 + $0x34] sm:$0xf] %v1016
  %1145 = vst [vmem:[%s5 + $0x38] sm:$0xf] %v1017
  %1146 = vst [vmem:[%s5 + $0x3c] sm:$0xf] %v1018
  %1147 = vst [vmem:[%s5 + $0x40] sm:$0xf] %v1019
  %1148 = vst [vmem:[%s5 + $0x44] sm:$0xf] %v1020
  %1149 = vst [vmem:[%s5 + $0x48] sm:$0xf] %v1021
  %1150 = vst [vmem:[%s5 + $0x4c] sm:$0xf] %v1022
  %1151 = vst [vmem:[%s5 + $0x50] sm:$0xf] %v1023
  %1152 = vst [vmem:[%s5 + $0x54] sm:$0xf] %v1024
  %1153 = vst [vmem:[%s5 + $0x58] sm:$0xf] %v1025
  %1154 = vst [vmem:[%s5 + $0x5c] sm:$0xf] %v1026
  %1155 = vst [vmem:[%s5 + $0x60] sm:$0xf] %v1027
  %1156 = vst [vmem:[%s5 + $0x64] sm:$0xf] %v1028
  %1157 = vst [vmem:[%s5 + $0x68] sm:$0xf] %v1029
  %1158 = vst [vmem:[%s5 + $0x6c] sm:$0xf] %v1030
  %1159 = vst [vmem:[%s5 + $0x70] sm:$0xf] %v1031
  %1160 = vst [vmem:[%s5 + $0x74] sm:$0xf] %v1032
  %1161 = vst [vmem:[%s5 + $0x78] sm:$0xf] %v1033
  %1162 = vst [vmem:[%s5 + $0x7c] sm:$0xf] %v1034
  %1163 = vst [vmem:[%s5 + $0x80] sm:$0xf] %v1035
  %1164 = vst [vmem:[%s5 + $0x84] sm:$0xf] %v1036
  %1165 = vst [vmem:[%s5 + $0x88] sm:$0xf] %v1037
  %1166 = vst [vmem:[%s5 + $0x8c] sm:$0xf] %v1038
  %1167 = vst [vmem:[%s5 + $0x90] sm:$0xf] %v1039
  %1168 = vst [vmem:[%s5 + $0x94] sm:$0xf] %v1040
  %1169 = vst [vmem:[%s5 + $0x98] sm:$0xf] %v1041
  %1170 = vst [vmem:[%s5 + $0x9c] sm:$0xf] %v1042
  %1171 = vst [vmem:[%s5 + $0xa0] sm:$0xf] %v1043
  %1172 = vst [vmem:[%s5 + $0xa4] sm:$0xf] %v1044
  %1173 = vst [vmem:[%s5 + $0xa8] sm:$0xf] %v1045
  %1174 = vst [vmem:[%s5 + $0xac] sm:$0xf] %v1046
  %1175 = vst [vmem:[%s5 + $0xb0] sm:$0xf] %v1047
  %1176 = vst [vmem:[%s5 + $0xb4] sm:$0xf] %v1048
  %1177 = vst [vmem:[%s5 + $0xb8] sm:$0xf] %v1049
  %1178 = vst [vmem:[%s5 + $0xbc] sm:$0xf] %v1050
  %1179 = vst [vmem:[%s5 + $0xc0] sm:$0xf] %v1051
  %1180 = vst [vmem:[%s5 + $0xc4] sm:$0xf] %v1052
  %1181 = vst [vmem:[%s5 + $0xc8] sm:$0xf] %v1053
  %1182 = vst [vmem:[%s5 + $0xcc] sm:$0xf] %v1054
  %1183 = vst [vmem:[%s5 + $0xd0] sm:$0xf] %v1055
  %1184 = vst [vmem:[%s5 + $0xd4] sm:$0xf] %v1056
  %1185 = vst [vmem:[%s5 + $0xd8] sm:$0xf] %v1057
  %1186 = vst [vmem:[%s5 + $0xdc] sm:$0xf] %v1058
  %1187 = vst [vmem:[%s5 + $0xe0] sm:$0xf] %v1059
  %1188 = vst [vmem:[%s5 + $0xe4] sm:$0xf] %v1060
  %1189 = vst [vmem:[%s5 + $0xe8] sm:$0xf] %v1061
  %1190 = vst [vmem:[%s5 + $0xec] sm:$0xf] %v1062
  %1191 = vst [vmem:[%s5 + $0xf0] sm:$0xf] %v1063
  %1192 = vst [vmem:[%s5 + $0xf4] sm:$0xf] %v1064
  %1193 = vst [vmem:[%s5 + $0xf8] sm:$0xf] %v1065
  %1194 = vst [vmem:[%s5 + $0xfc] sm:$0xf] %v1066
  %v1195 = vld [vmem:[%s4] sm:$0xf]
  %v1196 = vld [vmem:[%s4 + $0x4] sm:$0xf]
  %v1197 = vld [vmem:[%s4 + $0x8] sm:$0xf]
  %v1198 = vld [vmem:[%s4 + $0xc] sm:$0xf]
  %v1199 = vld [vmem:[%s4 + $0x10] sm:$0xf]
  %v1200 = vld [vmem:[%s4 + $0x14] sm:$0xf]
  %v1201 = vld [vmem:[%s4 + $0x18] sm:$0xf]
  %v1202 = vld [vmem:[%s4 + $0x1c] sm:$0xf]
  %v1203 = vld [vmem:[%s4 + $0x20] sm:$0xf]
  %v1204 = vld [vmem:[%s4 + $0x24] sm:$0xf]
  %v1205 = vld [vmem:[%s4 + $0x28] sm:$0xf]
  %v1206 = vld [vmem:[%s4 + $0x2c] sm:$0xf]
  %v1207 = vld [vmem:[%s4 + $0x30] sm:$0xf]
  %v1208 = vld [vmem:[%s4 + $0x34] sm:$0xf]
  %v1209 = vld [vmem:[%s4 + $0x38] sm:$0xf]
  %v1210 = vld [vmem:[%s4 + $0x3c] sm:$0xf]
  %v1227 = vunpack.c.l.b16 %v1195
  %v1228 = vunpack.c.l.b16 %v1196
  %v1229 = vunpack.c.l.b16 %v1197
  %v1230 = vunpack.c.l.b16 %v1198
  %v1231 = vunpack.c.l.b16 %v1199
  %v1232 = vunpack.c.l.b16 %v1200
  %v1233 = vunpack.c.l.b16 %v1201
  %v1234 = vunpack.c.l.b16 %v1202
  %v1235 = vunpack.c.l.b16 %v1203
  %v1236 = vunpack.c.l.b16 %v1204
  %v1237 = vunpack.c.l.b16 %v1205
  %v1238 = vunpack.c.l.b16 %v1206
  %v1239 = vunpack.c.l.b16 %v1207
  %v1240 = vunpack.c.l.b16 %v1208
  %v1241 = vunpack.c.l.b16 %v1209
  %v1242 = vunpack.c.l.b16 %v1210
  %v1243 = vpack.c.b16 %v1228, %v1227
  %v1244 = vpack.c.b16 %v1230, %v1229
  %v1245 = vpack.c.b16 %v1232, %v1231
  %v1246 = vpack.c.b16 %v1234, %v1233
  %v1247 = vpack.c.b16 %v1236, %v1235
  %v1248 = vpack.c.b16 %v1238, %v1237
  %v1249 = vpack.c.b16 %v1240, %v1239
  %v1250 = vpack.c.b16 %v1242, %v1241
  %1259 = vmatprep.subr.bf16.mxu0 0
  %1260 = vmatpush1.bf16.msra.mxu0 %v1243
  %1261 = vmatprep.subr.bf16.mxu0 0
  %1262 = vmatpush1.bf16.msra.mxu0 %v1244
  %1263 = vmatprep.subr.bf16.mxu0 0
  %1264 = vmatpush1.bf16.msra.mxu0 %v1245
  %1265 = vmatprep.subr.bf16.mxu0 0
  %1266 = vmatpush1.bf16.msra.mxu0 %v1246
  %1267 = vmatprep.subr.bf16.mxu0 0
  %1268 = vmatpush1.bf16.msra.mxu0 %v1247
  %1269 = vmatprep.subr.bf16.mxu0 0
  %1270 = vmatpush1.bf16.msra.mxu0 %v1248
  %1271 = vmatprep.subr.bf16.mxu0 0
  %1272 = vmatpush1.bf16.msra.mxu0 %v1249
  %1273 = vmatprep.subr.bf16.mxu0 0
  %1274 = vmatpush1.bf16.msra.mxu0 %v1250
  %1275 = vmatprep.subr.bf16.mxu0 0
  %1276 = vmatpush1.bf16.msra.mxu0 0
  %1277 = vmatprep.subr.bf16.mxu0 0
  %1278 = vmatpush1.bf16.msra.mxu0 0
  %1279 = vmatprep.subr.bf16.mxu0 0
  %1280 = vmatpush1.bf16.msra.mxu0 0
  %1281 = vmatprep.subr.bf16.mxu0 0
  %1282 = vmatpush1.bf16.msra.mxu0 0
  %1283 = vmatprep.subr.bf16.mxu0 0
  %1284 = vmatpush1.bf16.msra.mxu0 0
  %1285 = vmatprep.subr.bf16.mxu0 0
  %1286 = vmatpush1.bf16.msra.mxu0 0
  %1287 = vmatprep.subr.bf16.mxu0 0
  %1288 = vmatpush1.bf16.msra.mxu0 0
  %1289 = vmatprep.subr.bf16.mxu0 0
  %1290 = vmatpush1.bf16.msra.mxu0 0
  %1291 = vmatprep.mubr.bf16.mxu0 0
  %1292 = vmatmul.mubr.bf16.gmra.mrb[0].mxu0 %v294
  %v1293 = vpop.f32.mrb[0].mxu0
  %v1294 = vadd.f32 0.0, %v1293
  %v1295 = vpop.f32.mrb[0].mxu0
  %v1296 = vpop.f32.mrb[0].mxu0
  %v1297 = vadd.f32 0.0, %v1296
  %v1298 = vpop.f32.mrb[0].mxu0
  %1299 = vmatprep.mubr.bf16.mxu0 0
  %1300 = vmatmul.mubr.bf16.gmra.mrb[0].mxu0 %v295
  %v1301 = vpop.f32.mrb[0].mxu0
  %v1302 = vadd.f32 0.0, %v1301
  %v1303 = vpop.f32.mrb[0].mxu0
  %v1304 = vpop.f32.mrb[0].mxu0
  %v1305 = vadd.f32 0.0, %v1304
  %v1306 = vpop.f32.mrb[0].mxu0
  %1307 = vmatprep.mubr.bf16.mxu0 0
  %1308 = vmatmul.mubr.bf16.gmra.mrb[0].mxu0 %v296
  %v1309 = vpop.f32.mrb[0].mxu0
  %v1310 = vadd.f32 0.0, %v1309
  %v1311 = vpop.f32.mrb[0].mxu0
  %v1312 = vpop.f32.mrb[0].mxu0
  %v1313 = vadd.f32 0.0, %v1312
  %v1314 = vpop.f32.mrb[0].mxu0
  %1315 = vmatprep.mubr.bf16.mxu0 0
  %1316 = vmatmul.mubr.bf16.gmra.mrb[0].mxu0 %v297
  %v1317 = vpop.f32.mrb[0].mxu0
  %v1318 = vadd.f32 0.0, %v1317
  %v1319 = vpop.f32.mrb[0].mxu0
  %v1320 = vpop.f32.mrb[0].mxu0
  %v1321 = vadd.f32 0.0, %v1320
  %v1322 = vpop.f32.mrb[0].mxu0
  %1323 = vmatprep.mubr.bf16.mxu0 0
  %1324 = vmatmul.mubr.bf16.gmra.mrb[0].mxu0 %v298
  %v1325 = vpop.f32.mrb[0].mxu0
  %v1326 = vadd.f32 0.0, %v1325
  %v1327 = vpop.f32.mrb[0].mxu0
  %v1328 = vpop.f32.mrb[0].mxu0
  %v1329 = vadd.f32 0.0, %v1328
  %v1330 = vpop.f32.mrb[0].mxu0
  %1331 = vmatprep.mubr.bf16.mxu0 0
  %1332 = vmatmul.mubr.bf16.gmra.mrb[0].mxu0 %v299
  %v1333 = vpop.f32.mrb[0].mxu0
  %v1334 = vadd.f32 0.0, %v1333
  %v1335 = vpop.f32.mrb[0].mxu0
  %v1336 = vpop.f32.mrb[0].mxu0
  %v1337 = vadd.f32 0.0, %v1336
  %v1338 = vpop.f32.mrb[0].mxu0
  %1339 = vmatprep.mubr.bf16.mxu0 0
  %1340 = vmatmul.mubr.bf16.gmra.mrb[0].mxu0 %v300
  %v1341 = vpop.f32.mrb[0].mxu0
  %v1342 = vadd.f32 0.0, %v1341
  %v1343 = vpop.f32.mrb[0].mxu0
  %v1344 = vpop.f32.mrb[0].mxu0
  %v1345 = vadd.f32 0.0, %v1344
  %v1346 = vpop.f32.mrb[0].mxu0
  %1347 = vmatprep.mubr.bf16.mxu0 0
  %1348 = vmatmul.mubr.bf16.gmra.mrb[0].mxu0 %v301
  %v1349 = vpop.f32.mrb[0].mxu0
  %v1350 = vadd.f32 0.0, %v1349
  %v1351 = vpop.f32.mrb[0].mxu0
  %v1352 = vpop.f32.mrb[0].mxu0
  %v1353 = vadd.f32 0.0, %v1352
  %v1354 = vpop.f32.mrb[0].mxu0
  %1355 = vmatprep.mubr.bf16.mxu0 0
  %1356 = vmatmul.mubr.bf16.gmra.mrb[0].mxu0 %v302
  %v1357 = vpop.f32.mrb[0].mxu0
  %v1358 = vadd.f32 0.0, %v1357
  %v1359 = vpop.f32.mrb[0].mxu0
  %v1360 = vpop.f32.mrb[0].mxu0
  %v1361 = vadd.f32 0.0, %v1360
  %v1362 = vpop.f32.mrb[0].mxu0
  %1363 = vmatprep.mubr.bf16.mxu0 0
  %1364 = vmatmul.mubr.bf16.gmra.mrb[0].mxu0 %v303
  %v1365 = vpop.f32.mrb[0].mxu0
  %v1366 = vadd.f32 0.0, %v1365
  %v1367 = vpop.f32.mrb[0].mxu0
  %v1368 = vpop.f32.mrb[0].mxu0
  %v1369 = vadd.f32 0.0, %v1368
  %v1370 = vpop.f32.mrb[0].mxu0
  %1371 = vmatprep.mubr.bf16.mxu0 0
  %1372 = vmatmul.mubr.bf16.gmra.mrb[0].mxu0 %v304
  %v1373 = vpop.f32.mrb[0].mxu0
  %v1374 = vadd.f32 0.0, %v1373
  %v1375 = vpop.f32.mrb[0].mxu0
  %v1376 = vpop.f32.mrb[0].mxu0
  %v1377 = vadd.f32 0.0, %v1376
  %v1378 = vpop.f32.mrb[0].mxu0
  %1379 = vmatprep.mubr.bf16.mxu0 0
  %1380 = vmatmul.mubr.bf16.gmra.mrb[0].mxu0 %v305
  %v1381 = vpop.f32.mrb[0].mxu0
  %v1382 = vadd.f32 0.0, %v1381
  %v1383 = vpop.f32.mrb[0].mxu0
  %v1384 = vpop.f32.mrb[0].mxu0
  %v1385 = vadd.f32 0.0, %v1384
  %v1386 = vpop.f32.mrb[0].mxu0
  %1387 = vmatprep.mubr.bf16.mxu0 0
  %1388 = vmatmul.mubr.bf16.gmra.mrb[0].mxu0 %v306
  %v1389 = vpop.f32.mrb[0].mxu0
  %v1390 = vadd.f32 0.0, %v1389
  %v1391 = vpop.f32.mrb[0].mxu0
  %v1392 = vpop.f32.mrb[0].mxu0
  %v1393 = vadd.f32 0.0, %v1392
  %v1394 = vpop.f32.mrb[0].mxu0
  %1395 = vmatprep.mubr.bf16.mxu0 0
  %1396 = vmatmul.mubr.bf16.gmra.mrb[0].mxu0 %v307
  %v1397 = vpop.f32.mrb[0].mxu0
  %v1398 = vadd.f32 0.0, %v1397
  %v1399 = vpop.f32.mrb[0].mxu0
  %v1400 = vpop.f32.mrb[0].mxu0
  %v1401 = vadd.f32 0.0, %v1400
  %v1402 = vpop.f32.mrb[0].mxu0
  %1403 = vmatprep.mubr.bf16.mxu0 0
  %1404 = vmatmul.mubr.bf16.gmra.mrb[0].mxu0 %v308
  %v1405 = vpop.f32.mrb[0].mxu0
  %v1406 = vadd.f32 0.0, %v1405
  %v1407 = vpop.f32.mrb[0].mxu0
  %v1408 = vpop.f32.mrb[0].mxu0
  %v1409 = vadd.f32 0.0, %v1408
  %v1410 = vpop.f32.mrb[0].mxu0
  %1411 = vmatprep.mubr.bf16.mxu0 0
  %1412 = vmatmul.mubr.bf16.gmra.mrb[0].mxu0 %v309
  %v1413 = vpop.f32.mrb[0].mxu0
  %v1414 = vadd.f32 0.0, %v1413
  %v1415 = vpop.f32.mrb[0].mxu0
  %v1416 = vpop.f32.mrb[0].mxu0
  %v1417 = vadd.f32 0.0, %v1416
  %v1418 = vpop.f32.mrb[0].mxu0
  %1419 = vmatprep.mubr.bf16.mxu0 0
  %1420 = vmatmul.mubr.bf16.gmra.mrb[0].mxu0 %v310
  %v1421 = vpop.f32.mrb[0].mxu0
  %v1422 = vadd.f32 0.0, %v1421
  %v1423 = vpop.f32.mrb[0].mxu0
  %v1424 = vpop.f32.mrb[0].mxu0
  %v1425 = vadd.f32 0.0, %v1424
  %v1426 = vpop.f32.mrb[0].mxu0
  %1427 = vmatprep.mubr.bf16.mxu0 0
  %1428 = vmatmul.mubr.bf16.gmra.mrb[0].mxu0 %v311
  %v1429 = vpop.f32.mrb[0].mxu0
  %v1430 = vadd.f32 0.0, %v1429
  %v1431 = vpop.f32.mrb[0].mxu0
  %v1432 = vpop.f32.mrb[0].mxu0
  %v1433 = vadd.f32 0.0, %v1432
  %v1434 = vpop.f32.mrb[0].mxu0
  %1435 = vmatprep.mubr.bf16.mxu0 0
  %1436 = vmatmul.mubr.bf16.gmra.mrb[0].mxu0 %v312
  %v1437 = vpop.f32.mrb[0].mxu0
  %v1438 = vadd.f32 0.0, %v1437
  %v1439 = vpop.f32.mrb[0].mxu0
  %v1440 = vpop.f32.mrb[0].mxu0
  %v1441 = vadd.f32 0.0, %v1440
  %v1442 = vpop.f32.mrb[0].mxu0
  %1443 = vmatprep.mubr.bf16.mxu0 0
  %1444 = vmatmul.mubr.bf16.gmra.mrb[0].mxu0 %v313
  %v1445 = vpop.f32.mrb[0].mxu0
  %v1446 = vadd.f32 0.0, %v1445
  %v1447 = vpop.f32.mrb[0].mxu0
  %v1448 = vpop.f32.mrb[0].mxu0
  %v1449 = vadd.f32 0.0, %v1448
  %v1450 = vpop.f32.mrb[0].mxu0
  %1451 = vmatprep.mubr.bf16.mxu0 0
  %1452 = vmatmul.mubr.bf16.gmra.mrb[0].mxu0 %v314
  %v1453 = vpop.f32.mrb[0].mxu0
  %v1454 = vadd.f32 0.0, %v1453
  %v1455 = vpop.f32.mrb[0].mxu0
  %v1456 = vpop.f32.mrb[0].mxu0
  %v1457 = vadd.f32 0.0, %v1456
  %v1458 = vpop.f32.mrb[0].mxu0
  %1459 = vmatprep.mubr.bf16.mxu0 0
  %1460 = vmatmul.mubr.bf16.gmra.mrb[0].mxu0 %v315
  %v1461 = vpop.f32.mrb[0].mxu0
  %v1462 = vadd.f32 0.0, %v1461
  %v1463 = vpop.f32.mrb[0].mxu0
  %v1464 = vpop.f32.mrb[0].mxu0
  %v1465 = vadd.f32 0.0, %v1464
  %v1466 = vpop.f32.mrb[0].mxu0
  %1467 = vmatprep.mubr.bf16.mxu0 0
  %1468 = vmatmul.mubr.bf16.gmra.mrb[0].mxu0 %v316
  %v1469 = vpop.f32.mrb[0].mxu0
  %v1470 = vadd.f32 0.0, %v1469
  %v1471 = vpop.f32.mrb[0].mxu0
  %v1472 = vpop.f32.mrb[0].mxu0
  %v1473 = vadd.f32 0.0, %v1472
  %v1474 = vpop.f32.mrb[0].mxu0
  %1475 = vmatprep.mubr.bf16.mxu0 0
  %1476 = vmatmul.mubr.bf16.gmra.mrb[0].mxu0 %v317
  %v1477 = vpop.f32.mrb[0].mxu0
  %v1478 = vadd.f32 0.0, %v1477
  %v1479 = vpop.f32.mrb[0].mxu0
  %v1480 = vpop.f32.mrb[0].mxu0
  %v1481 = vadd.f32 0.0, %v1480
  %v1482 = vpop.f32.mrb[0].mxu0
  %1483 = vmatprep.mubr.bf16.mxu0 0
  %1484 = vmatmul.mubr.bf16.gmra.mrb[0].mxu0 %v318
  %v1485 = vpop.f32.mrb[0].mxu0
  %v1486 = vadd.f32 0.0, %v1485
  %v1487 = vpop.f32.mrb[0].mxu0
  %v1488 = vpop.f32.mrb[0].mxu0
  %v1489 = vadd.f32 0.0, %v1488
  %v1490 = vpop.f32.mrb[0].mxu0
  %1491 = vmatprep.mubr.bf16.mxu0 0
  %1492 = vmatmul.mubr.bf16.gmra.mrb[0].mxu0 %v319
  %v1493 = vpop.f32.mrb[0].mxu0
  %v1494 = vadd.f32 0.0, %v1493
  %v1495 = vpop.f32.mrb[0].mxu0
  %v1496 = vpop.f32.mrb[0].mxu0
  %v1497 = vadd.f32 0.0, %v1496
  %v1498 = vpop.f32.mrb[0].mxu0
  %1499 = vmatprep.mubr.bf16.mxu0 0
  %1500 = vmatmul.mubr.bf16.gmra.mrb[0].mxu0 %v320
  %v1501 = vpop.f32.mrb[0].mxu0
  %v1502 = vadd.f32 0.0, %v1501
  %v1503 = vpop.f32.mrb[0].mxu0
  %v1504 = vpop.f32.mrb[0].mxu0
  %v1505 = vadd.f32 0.0, %v1504
  %v1506 = vpop.f32.mrb[0].mxu0
  %1507 = vmatprep.mubr.bf16.mxu0 0
  %1508 = vmatmul.mubr.bf16.gmra.mrb[0].mxu0 %v321
  %v1509 = vpop.f32.mrb[0].mxu0
  %v1510 = vadd.f32 0.0, %v1509
  %v1511 = vpop.f32.mrb[0].mxu0
  %v1512 = vpop.f32.mrb[0].mxu0
  %v1513 = vadd.f32 0.0, %v1512
  %v1514 = vpop.f32.mrb[0].mxu0
  %1515 = vmatprep.mubr.bf16.mxu0 0
  %1516 = vmatmul.mubr.bf16.gmra.mrb[0].mxu0 %v322
  %v1517 = vpop.f32.mrb[0].mxu0
  %v1518 = vadd.f32 0.0, %v1517
  %v1519 = vpop.f32.mrb[0].mxu0
  %v1520 = vpop.f32.mrb[0].mxu0
  %v1521 = vadd.f32 0.0, %v1520
  %v1522 = vpop.f32.mrb[0].mxu0
  %1523 = vmatprep.mubr.bf16.mxu0 0
  %1524 = vmatmul.mubr.bf16.gmra.mrb[0].mxu0 %v323
  %v1525 = vpop.f32.mrb[0].mxu0
  %v1526 = vadd.f32 0.0, %v1525
  %v1527 = vpop.f32.mrb[0].mxu0
  %v1528 = vpop.f32.mrb[0].mxu0
  %v1529 = vadd.f32 0.0, %v1528
  %v1530 = vpop.f32.mrb[0].mxu0
  %1531 = vmatprep.mubr.bf16.mxu0 0
  %1532 = vmatmul.mubr.bf16.gmra.mrb[0].mxu0 %v324
  %v1533 = vpop.f32.mrb[0].mxu0
  %v1534 = vadd.f32 0.0, %v1533
  %v1535 = vpop.f32.mrb[0].mxu0
  %v1536 = vpop.f32.mrb[0].mxu0
  %v1537 = vadd.f32 0.0, %v1536
  %v1538 = vpop.f32.mrb[0].mxu0
  %1539 = vmatprep.mubr.bf16.mxu0 0
  %1540 = vmatmul.mubr.bf16.gmra.mrb[0].mxu0 %v325
  %v1541 = vpop.f32.mrb[0].mxu0
  %v1542 = vadd.f32 0.0, %v1541
  %v1543 = vpop.f32.mrb[0].mxu0
  %v1544 = vpop.f32.mrb[0].mxu0
  %v1545 = vadd.f32 0.0, %v1544
  %v1546 = vpop.f32.mrb[0].mxu0
  %1547 = vdwg.mxu0
  %v1548 = vpack.c.bf16 %v1297, %v1294
  %v1549 = vpack.c.bf16 %v1305, %v1302
  %v1550 = vpack.c.bf16 %v1313, %v1310
  %v1551 = vpack.c.bf16 %v1321, %v1318
  %v1552 = vpack.c.bf16 %v1329, %v1326
  %v1553 = vpack.c.bf16 %v1337, %v1334
  %v1554 = vpack.c.bf16 %v1345, %v1342
  %v1555 = vpack.c.bf16 %v1353, %v1350
  %v1556 = vpack.c.bf16 %v1361, %v1358
  %v1557 = vpack.c.bf16 %v1369, %v1366
  %v1558 = vpack.c.bf16 %v1377, %v1374
  %v1559 = vpack.c.bf16 %v1385, %v1382
  %v1560 = vpack.c.bf16 %v1393, %v1390
  %v1561 = vpack.c.bf16 %v1401, %v1398
  %v1562 = vpack.c.bf16 %v1409, %v1406
  %v1563 = vpack.c.bf16 %v1417, %v1414
  %v1564 = vpack.c.bf16 %v1425, %v1422
  %v1565 = vpack.c.bf16 %v1433, %v1430
  %v1566 = vpack.c.bf16 %v1441, %v1438
  %v1567 = vpack.c.bf16 %v1449, %v1446
  %v1568 = vpack.c.bf16 %v1457, %v1454
  %v1569 = vpack.c.bf16 %v1465, %v1462
  %v1570 = vpack.c.bf16 %v1473, %v1470
  %v1571 = vpack.c.bf16 %v1481, %v1478
  %v1572 = vpack.c.bf16 %v1489, %v1486
  %v1573 = vpack.c.bf16 %v1497, %v1494
  %v1574 = vpack.c.bf16 %v1505, %v1502
  %v1575 = vpack.c.bf16 %v1513, %v1510
  %v1576 = vpack.c.bf16 %v1521, %v1518
  %v1577 = vpack.c.bf16 %v1529, %v1526
  %v1578 = vpack.c.bf16 %v1537, %v1534
  %v1579 = vpack.c.bf16 %v1545, %v1542
  %v1612 = vunpack.c.l.b16 %v1548
  %v1613 = vunpack.c.h.b16 %v1548
  %v1614 = vunpack.c.l.b16 %v1549
  %v1615 = vunpack.c.h.b16 %v1549
  %v1616 = vunpack.c.l.b16 %v1550
  %v1617 = vunpack.c.h.b16 %v1550
  %v1618 = vunpack.c.l.b16 %v1551
  %v1619 = vunpack.c.h.b16 %v1551
  %v1620 = vunpack.c.l.b16 %v1552
  %v1621 = vunpack.c.h.b16 %v1552
  %v1622 = vunpack.c.l.b16 %v1553
  %v1623 = vunpack.c.h.b16 %v1553
  %v1624 = vunpack.c.l.b16 %v1554
  %v1625 = vunpack.c.h.b16 %v1554
  %v1626 = vunpack.c.l.b16 %v1555
  %v1627 = vunpack.c.h.b16 %v1555
  %v1628 = vunpack.c.l.b16 %v1556
  %v1629 = vunpack.c.h.b16 %v1556
  %v1630 = vunpack.c.l.b16 %v1557
  %v1631 = vunpack.c.h.b16 %v1557
  %v1632 = vunpack.c.l.b16 %v1558
  %v1633 = vunpack.c.h.b16 %v1558
  %v1634 = vunpack.c.l.b16 %v1559
  %v1635 = vunpack.c.h.b16 %v1559
  %v1636 = vunpack.c.l.b16 %v1560
  %v1637 = vunpack.c.h.b16 %v1560
  %v1638 = vunpack.c.l.b16 %v1561
  %v1639 = vunpack.c.h.b16 %v1561
  %v1640 = vunpack.c.l.b16 %v1562
  %v1641 = vunpack.c.h.b16 %v1562
  %v1642 = vunpack.c.l.b16 %v1563
  %v1643 = vunpack.c.h.b16 %v1563
  %v1644 = vunpack.c.l.b16 %v1564
  %v1645 = vunpack.c.h.b16 %v1564
  %v1646 = vunpack.c.l.b16 %v1565
  %v1647 = vunpack.c.h.b16 %v1565
  %v1648 = vunpack.c.l.b16 %v1566
  %v1649 = vunpack.c.h.b16 %v1566
  %v1650 = vunpack.c.l.b16 %v1567
  %v1651 = vunpack.c.h.b16 %v1567
  %v1652 = vunpack.c.l.b16 %v1568
  %v1653 = vunpack.c.h.b16 %v1568
  %v1654 = vunpack.c.l.b16 %v1569
  %v1655 = vunpack.c.h.b16 %v1569
  %v1656 = vunpack.c.l.b16 %v1570
  %v1657 = vunpack.c.h.b16 %v1570
  %v1658 = vunpack.c.l.b16 %v1571
  %v1659 = vunpack.c.h.b16 %v1571
  %v1660 = vunpack.c.l.b16 %v1572
  %v1661 = vunpack.c.h.b16 %v1572
  %v1662 = vunpack.c.l.b16 %v1573
  %v1663 = vunpack.c.h.b16 %v1573
  %v1664 = vunpack.c.l.b16 %v1574
  %v1665 = vunpack.c.h.b16 %v1574
  %v1666 = vunpack.c.l.b16 %v1575
  %v1667 = vunpack.c.h.b16 %v1575
  %v1668 = vunpack.c.l.b16 %v1576
  %v1669 = vunpack.c.h.b16 %v1576
  %v1670 = vunpack.c.l.b16 %v1577
  %v1671 = vunpack.c.h.b16 %v1577
  %v1672 = vunpack.c.l.b16 %v1578
  %v1673 = vunpack.c.h.b16 %v1578
  %v1674 = vunpack.c.l.b16 %v1579
  %v1675 = vunpack.c.h.b16 %v1579
  %v1676 = vpack.c.b16 %v1612, %v1612
  %v1677 = vpack.c.b16 %v1613, %v1613
  %v1678 = vpack.c.b16 %v1614, %v1614
  %v1679 = vpack.c.b16 %v1615, %v1615
  %v1680 = vpack.c.b16 %v1616, %v1616
  %v1681 = vpack.c.b16 %v1617, %v1617
  %v1682 = vpack.c.b16 %v1618, %v1618
  %v1683 = vpack.c.b16 %v1619, %v1619
  %v1684 = vpack.c.b16 %v1620, %v1620
  %v1685 = vpack.c.b16 %v1621, %v1621
  %v1686 = vpack.c.b16 %v1622, %v1622
  %v1687 = vpack.c.b16 %v1623, %v1623
  %v1688 = vpack.c.b16 %v1624, %v1624
  %v1689 = vpack.c.b16 %v1625, %v1625
  %v1690 = vpack.c.b16 %v1626, %v1626
  %v1691 = vpack.c.b16 %v1627, %v1627
  %v1692 = vpack.c.b16 %v1628, %v1628
  %v1693 = vpack.c.b16 %v1629, %v1629
  %v1694 = vpack.c.b16 %v1630, %v1630
  %v1695 = vpack.c.b16 %v1631, %v1631
  %v1696 = vpack.c.b16 %v1632, %v1632
  %v1697 = vpack.c.b16 %v1633, %v1633
  %v1698 = vpack.c.b16 %v1634, %v1634
  %v1699 = vpack.c.b16 %v1635, %v1635
  %v1700 = vpack.c.b16 %v1636, %v1636
  %v1701 = vpack.c.b16 %v1637, %v1637
  %v1702 = vpack.c.b16 %v1638, %v1638
  %v1703 = vpack.c.b16 %v1639, %v1639
  %v1704 = vpack.c.b16 %v1640, %v1640
  %v1705 = vpack.c.b16 %v1641, %v1641
  %v1706 = vpack.c.b16 %v1642, %v1642
  %v1707 = vpack.c.b16 %v1643, %v1643
  %v1708 = vpack.c.b16 %v1644, %v1644
  %v1709 = vpack.c.b16 %v1645, %v1645
  %v1710 = vpack.c.b16 %v1646, %v1646
  %v1711 = vpack.c.b16 %v1647, %v1647
  %v1712 = vpack.c.b16 %v1648, %v1648
  %v1713 = vpack.c.b16 %v1649, %v1649
  %v1714 = vpack.c.b16 %v1650, %v1650
  %v1715 = vpack.c.b16 %v1651, %v1651
  %v1716 = vpack.c.b16 %v1652, %v1652
  %v1717 = vpack.c.b16 %v1653, %v1653
  %v1718 = vpack.c.b16 %v1654, %v1654
  %v1719 = vpack.c.b16 %v1655, %v1655
  %v1720 = vpack.c.b16 %v1656, %v1656
  %v1721 = vpack.c.b16 %v1657, %v1657
  %v1722 = vpack.c.b16 %v1658, %v1658
  %v1723 = vpack.c.b16 %v1659, %v1659
  %v1724 = vpack.c.b16 %v1660, %v1660
  %v1725 = vpack.c.b16 %v1661, %v1661
  %v1726 = vpack.c.b16 %v1662, %v1662
  %v1727 = vpack.c.b16 %v1663, %v1663
  %v1728 = vpack.c.b16 %v1664, %v1664
  %v1729 = vpack.c.b16 %v1665, %v1665
  %v1730 = vpack.c.b16 %v1666, %v1666
  %v1731 = vpack.c.b16 %v1667, %v1667
  %v1732 = vpack.c.b16 %v1668, %v1668
  %v1733 = vpack.c.b16 %v1669, %v1669
  %v1734 = vpack.c.b16 %v1670, %v1670
  %v1735 = vpack.c.b16 %v1671, %v1671
  %v1736 = vpack.c.b16 %v1672, %v1672
  %v1737 = vpack.c.b16 %v1673, %v1673
  %v1738 = vpack.c.b16 %v1674, %v1674
  %v1739 = vpack.c.b16 %v1675, %v1675
  %1804 = vst [vmem:[%s6] sm:$0xf] %v1676
  %1805 = vst [vmem:[%s6 + $0x4] sm:$0xf] %v1677
  %1806 = vst [vmem:[%s6 + $0x8] sm:$0xf] %v1678
  %1807 = vst [vmem:[%s6 + $0xc] sm:$0xf] %v1679
  %1808 = vst [vmem:[%s6 + $0x10] sm:$0xf] %v1680
  %1809 = vst [vmem:[%s6 + $0x14] sm:$0xf] %v1681
  %1810 = vst [vmem:[%s6 + $0x18] sm:$0xf] %v1682
  %1811 = vst [vmem:[%s6 + $0x1c] sm:$0xf] %v1683
  %1812 = vst [vmem:[%s6 + $0x20] sm:$0xf] %v1684
  %1813 = vst [vmem:[%s6 + $0x24] sm:$0xf] %v1685
  %1814 = vst [vmem:[%s6 + $0x28] sm:$0xf] %v1686
  %1815 = vst [vmem:[%s6 + $0x2c] sm:$0xf] %v1687
  %1816 = vst [vmem:[%s6 + $0x30] sm:$0xf] %v1688
  %1817 = vst [vmem:[%s6 + $0x34] sm:$0xf] %v1689
  %1818 = vst [vmem:[%s6 + $0x38] sm:$0xf] %v1690
  %1819 = vst [vmem:[%s6 + $0x3c] sm:$0xf] %v1691
  %1820 = vst [vmem:[%s6 + $0x40] sm:$0xf] %v1692
  %1821 = vst [vmem:[%s6 + $0x44] sm:$0xf] %v1693
  %1822 = vst [vmem:[%s6 + $0x48] sm:$0xf] %v1694
  %1823 = vst [vmem:[%s6 + $0x4c] sm:$0xf] %v1695
  %1824 = vst [vmem:[%s6 + $0x50] sm:$0xf] %v1696
  %1825 = vst [vmem:[%s6 + $0x54] sm:$0xf] %v1697
  %1826 = vst [vmem:[%s6 + $0x58] sm:$0xf] %v1698
  %1827 = vst [vmem:[%s6 + $0x5c] sm:$0xf] %v1699
  %1828 = vst [vmem:[%s6 + $0x60] sm:$0xf] %v1700
  %1829 = vst [vmem:[%s6 + $0x64] sm:$0xf] %v1701
  %1830 = vst [vmem:[%s6 + $0x68] sm:$0xf] %v1702
  %1831 = vst [vmem:[%s6 + $0x6c] sm:$0xf] %v1703
  %1832 = vst [vmem:[%s6 + $0x70] sm:$0xf] %v1704
  %1833 = vst [vmem:[%s6 + $0x74] sm:$0xf] %v1705
  %1834 = vst [vmem:[%s6 + $0x78] sm:$0xf] %v1706
  %1835 = vst [vmem:[%s6 + $0x7c] sm:$0xf] %v1707
  %1836 = vst [vmem:[%s6 + $0x80] sm:$0xf] %v1708
  %1837 = vst [vmem:[%s6 + $0x84] sm:$0xf] %v1709
  %1838 = vst [vmem:[%s6 + $0x88] sm:$0xf] %v1710
  %1839 = vst [vmem:[%s6 + $0x8c] sm:$0xf] %v1711
  %1840 = vst [vmem:[%s6 + $0x90] sm:$0xf] %v1712
  %1841 = vst [vmem:[%s6 + $0x94] sm:$0xf] %v1713
  %1842 = vst [vmem:[%s6 + $0x98] sm:$0xf] %v1714
  %1843 = vst [vmem:[%s6 + $0x9c] sm:$0xf] %v1715
  %1844 = vst [vmem:[%s6 + $0xa0] sm:$0xf] %v1716
  %1845 = vst [vmem:[%s6 + $0xa4] sm:$0xf] %v1717
  %1846 = vst [vmem:[%s6 + $0xa8] sm:$0xf] %v1718
  %1847 = vst [vmem:[%s6 + $0xac] sm:$0xf] %v1719
  %1848 = vst [vmem:[%s6 + $0xb0] sm:$0xf] %v1720
  %1849 = vst [vmem:[%s6 + $0xb4] sm:$0xf] %v1721
  %1850 = vst [vmem:[%s6 + $0xb8] sm:$0xf] %v1722
  %1851 = vst [vmem:[%s6 + $0xbc] sm:$0xf] %v1723
  %1852 = vst [vmem:[%s6 + $0xc0] sm:$0xf] %v1724
  %1853 = vst [vmem:[%s6 + $0xc4] sm:$0xf] %v1725
  %1854 = vst [vmem:[%s6 + $0xc8] sm:$0xf] %v1726
  %1855 = vst [vmem:[%s6 + $0xcc] sm:$0xf] %v1727
  %1856 = vst [vmem:[%s6 + $0xd0] sm:$0xf] %v1728
  %1857 = vst [vmem:[%s6 + $0xd4] sm:$0xf] %v1729
  %1858 = vst [vmem:[%s6 + $0xd8] sm:$0xf] %v1730
  %1859 = vst [vmem:[%s6 + $0xdc] sm:$0xf] %v1731
  %1860 = vst [vmem:[%s6 + $0xe0] sm:$0xf] %v1732
  %1861 = vst [vmem:[%s6 + $0xe4] sm:$0xf] %v1733
  %1862 = vst [vmem:[%s6 + $0xe8] sm:$0xf] %v1734
  %1863 = vst [vmem:[%s6 + $0xec] sm:$0xf] %v1735
  %1864 = vst [vmem:[%s6 + $0xf0] sm:$0xf] %v1736
  %1865 = vst [vmem:[%s6 + $0xf4] sm:$0xf] %v1737
  %1866 = vst [vmem:[%s6 + $0xf8] sm:$0xf] %v1738
  %1867 = vst [vmem:[%s6 + $0xfc] sm:$0xf] %v1739
  %v1868 = vadd.f32 %v811, %v812
  %v1869 = vadd.f32 %v1868, %v813
  %v1870 = vadd.f32 %v1869, %v814
  %v1871 = vadd.f32 %v1870, %v815
  %v1872 = vadd.f32 %v1871, %v816
  %v1873 = vadd.f32 %v1872, %v817
  %v1874 = vadd.f32 %v1873, %v818
  %v1875 = vadd.f32 %v1874, %v819
  %v1876 = vadd.f32 %v1875, %v820
  %v1877 = vadd.f32 %v1876, %v821
  %v1878 = vadd.f32 %v1877, %v822
  %v1879 = vadd.f32 %v1878, %v823
  %v1880 = vadd.f32 %v1879, %v824
  %v1881 = vadd.f32 %v1880, %v825
  %v1882 = vadd.f32 %v1881, %v826
  %v1883 = vadd.f32 %v1882, %v827
  %v1884 = vadd.f32 %v1883, %v828
  %v1885 = vadd.f32 %v1884, %v829
  %v1886 = vadd.f32 %v1885, %v830
  %v1887 = vadd.f32 %v1886, %v831
  %v1888 = vadd.f32 %v1887, %v832
  %v1889 = vadd.f32 %v1888, %v833
  %v1890 = vadd.f32 %v1889, %v834
  %v1891 = vadd.f32 %v1890, %v835
  %v1892 = vadd.f32 %v1891, %v836
  %v1893 = vadd.f32 %v1892, %v837
  %v1894 = vadd.f32 %v1893, %v838
  %v1895 = vadd.f32 %v1894, %v839
  %v1896 = vadd.f32 %v1895, %v840
  %v1897 = vadd.f32 %v1896, %v841
  %v1898 = vadd.f32 %v1897, %v842
  %v1899 = vadd.f32 %v1898, %v843
  %v1900 = vadd.f32 %v1899, %v844
  %v1901 = vadd.f32 %v1900, %v845
  %v1902 = vadd.f32 %v1901, %v846
  %v1903 = vadd.f32 %v1902, %v847
  %v1904 = vadd.f32 %v1903, %v848
  %v1905 = vadd.f32 %v1904, %v849
  %v1906 = vadd.f32 %v1905, %v850
  %v1907 = vadd.f32 %v1906, %v851
  %v1908 = vadd.f32 %v1907, %v852
  %v1909 = vadd.f32 %v1908, %v853
  %v1910 = vadd.f32 %v1909, %v854
  %v1911 = vadd.f32 %v1910, %v855
  %v1912 = vadd.f32 %v1911, %v856
  %v1913 = vadd.f32 %v1912, %v857
  %v1914 = vadd.f32 %v1913, %v858
  %v1915 = vadd.f32 %v1914, %v859
  %v1916 = vadd.f32 %v1915, %v860
  %v1917 = vadd.f32 %v1916, %v861
  %v1918 = vadd.f32 %v1917, %v862
  %v1919 = vadd.f32 %v1918, %v863
  %v1920 = vadd.f32 %v1919, %v864
  %v1921 = vadd.f32 %v1920, %v865
  %v1922 = vadd.f32 %v1921, %v866
  %v1923 = vadd.f32 %v1922, %v867
  %v1924 = vadd.f32 %v1923, %v868
  %v1925 = vadd.f32 %v1924, %v869
  %v1926 = vadd.f32 %v1925, %v870
  %v1927 = vadd.f32 %v1926, %v871
  %v1928 = vadd.f32 %v1927, %v872
  %v1929 = vadd.f32 %v1928, %v873
  %v1930 = vadd.f32 %v1929, %v874
  %v1931 = vrot.slane %v1930, 4
  %v1932 = vadd.f32 %v1930, %v1931
  %v1933 = vrot.slane %v1932, 2
  %v1934 = vadd.f32 %v1932, %v1933
  %v1935 = vrot.slane %v1934, 1
  %v1936 = vadd.f32 %v1934, %v1935
  %v1937 = vmul.f32 %v811, %v811
  %v1938 = vmul.f32 %v812, %v812
  %v1939 = vmul.f32 %v813, %v813
  %v1940 = vmul.f32 %v814, %v814
  %v1941 = vmul.f32 %v815, %v815
  %v1942 = vmul.f32 %v816, %v816
  %v1943 = vmul.f32 %v817, %v817
  %v1944 = vmul.f32 %v818, %v818
  %v1945 = vmul.f32 %v819, %v819
  %v1946 = vmul.f32 %v820, %v820
  %v1947 = vmul.f32 %v821, %v821
  %v1948 = vmul.f32 %v822, %v822
  %v1949 = vmul.f32 %v823, %v823
  %v1950 = vmul.f32 %v824, %v824
  %v1951 = vmul.f32 %v825, %v825
  %v1952 = vmul.f32 %v826, %v826
  %v1953 = vmul.f32 %v827, %v827
  %v1954 = vmul.f32 %v828, %v828
  %v1955 = vmul.f32 %v829, %v829
  %v1956 = vmul.f32 %v830, %v830
  %v1957 = vmul.f32 %v831, %v831
  %v1958 = vmul.f32 %v832, %v832
  %v1959 = vmul.f32 %v833, %v833
  %v1960 = vmul.f32 %v834, %v834
  %v1961 = vmul.f32 %v835, %v835
  %v1962 = vmul.f32 %v836, %v836
  %v1963 = vmul.f32 %v837, %v837
  %v1964 = vmul.f32 %v838, %v838
  %v1965 = vmul.f32 %v839, %v839
  %v1966 = vmul.f32 %v840, %v840
  %v1967 = vmul.f32 %v841, %v841
  %v1968 = vmul.f32 %v842, %v842
  %v1969 = vmul.f32 %v843, %v843
  %v1970 = vmul.f32 %v844, %v844
  %v1971 = vmul.f32 %v845, %v845
  %v1972 = vmul.f32 %v846, %v846
  %v1973 = vmul.f32 %v847, %v847
  %v1974 = vmul.f32 %v848, %v848
  %v1975 = vmul.f32 %v849, %v849
  %v1976 = vmul.f32 %v850, %v850
  %v1977 = vmul.f32 %v851, %v851
  %v1978 = vmul.f32 %v852, %v852
  %v1979 = vmul.f32 %v853, %v853
  %v1980 = vmul.f32 %v854, %v854
  %v1981 = vmul.f32 %v855, %v855
  %v1982 = vmul.f32 %v856, %v856
  %v1983 = vmul.f32 %v857, %v857
  %v1984 = vmul.f32 %v858, %v858
  %v1985 = vmul.f32 %v859, %v859
  %v1986 = vmul.f32 %v860, %v860
  %v1987 = vmul.f32 %v861, %v861
  %v1988 = vmul.f32 %v862, %v862
  %v1989 = vmul.f32 %v863, %v863
  %v1990 = vmul.f32 %v864, %v864
  %v1991 = vmul.f32 %v865, %v865
  %v1992 = vmul.f32 %v866, %v866
  %v1993 = vmul.f32 %v867, %v867
  %v1994 = vmul.f32 %v868, %v868
  %v1995 = vmul.f32 %v869, %v869
  %v1996 = vmul.f32 %v870, %v870
  %v1997 = vmul.f32 %v871, %v871
  %v1998 = vmul.f32 %v872, %v872
  %v1999 = vmul.f32 %v873, %v873
  %v2000 = vmul.f32 %v874, %v874
  %v2001 = vadd.f32 %v1937, %v1938
  %v2002 = vadd.f32 %v2001, %v1939
  %v2003 = vadd.f32 %v2002, %v1940
  %v2004 = vadd.f32 %v2003, %v1941
  %v2005 = vadd.f32 %v2004, %v1942
  %v2006 = vadd.f32 %v2005, %v1943
  %v2007 = vadd.f32 %v2006, %v1944
  %v2008 = vadd.f32 %v2007, %v1945
  %v2009 = vadd.f32 %v2008, %v1946
  %v2010 = vadd.f32 %v2009, %v1947
  %v2011 = vadd.f32 %v2010, %v1948
  %v2012 = vadd.f32 %v2011, %v1949
  %v2013 = vadd.f32 %v2012, %v1950
  %v2014 = vadd.f32 %v2013, %v1951
  %v2015 = vadd.f32 %v2014, %v1952
  %v2016 = vadd.f32 %v2015, %v1953
  %v2017 = vadd.f32 %v2016, %v1954
  %v2018 = vadd.f32 %v2017, %v1955
  %v2019 = vadd.f32 %v2018, %v1956
  %v2020 = vadd.f32 %v2019, %v1957
  %v2021 = vadd.f32 %v2020, %v1958
  %v2022 = vadd.f32 %v2021, %v1959
  %v2023 = vadd.f32 %v2022, %v1960
  %v2024 = vadd.f32 %v2023, %v1961
  %v2025 = vadd.f32 %v2024, %v1962
  %v2026 = vadd.f32 %v2025, %v1963
  %v2027 = vadd.f32 %v2026, %v1964
  %v2028 = vadd.f32 %v2027, %v1965
  %v2029 = vadd.f32 %v2028, %v1966
  %v2030 = vadd.f32 %v2029, %v1967
  %v2031 = vadd.f32 %v2030, %v1968
  %v2032 = vadd.f32 %v2031, %v1969
  %v2033 = vadd.f32 %v2032, %v1970
  %v2034 = vadd.f32 %v2033, %v1971
  %v2035 = vadd.f32 %v2034, %v1972
  %v2036 = vadd.f32 %v2035, %v1973
  %v2037 = vadd.f32 %v2036, %v1974
  %v2038 = vadd.f32 %v2037, %v1975
  %v2039 = vadd.f32 %v2038, %v1976
  %v2040 = vadd.f32 %v2039, %v1977
  %v2041 = vadd.f32 %v2040, %v1978
  %v2042 = vadd.f32 %v2041, %v1979
  %v2043 = vadd.f32 %v2042, %v1980
  %v2044 = vadd.f32 %v2043, %v1981
  %v2045 = vadd.f32 %v2044, %v1982
  %v2046 = vadd.f32 %v2045, %v1983
  %v2047 = vadd.f32 %v2046, %v1984
  %v2048 = vadd.f32 %v2047, %v1985
  %v2049 = vadd.f32 %v2048, %v1986
  %v2050 = vadd.f32 %v2049, %v1987
  %v2051 = vadd.f32 %v2050, %v1988
  %v2052 = vadd.f32 %v2051, %v1989
  %v2053 = vadd.f32 %v2052, %v1990
  %v2054 = vadd.f32 %v2053, %v1991
  %v2055 = vadd.f32 %v2054, %v1992
  %v2056 = vadd.f32 %v2055, %v1993
  %v2057 = vadd.f32 %v2056, %v1994
  %v2058 = vadd.f32 %v2057, %v1995
  %v2059 = vadd.f32 %v2058, %v1996
  %v2060 = vadd.f32 %v2059, %v1997
  %v2061 = vadd.f32 %v2060, %v1998
  %v2062 = vadd.f32 %v2061, %v1999
  %v2063 = vadd.f32 %v2062, %v2000
  %v2064 = vrot.slane %v2063, 4
  %v2065 = vadd.f32 %v2063, %v2064
  %v2066 = vrot.slane %v2065, 2
  %v2067 = vadd.f32 %v2065, %v2066
  %v2068 = vrot.slane %v2067, 1
  %v2069 = vadd.f32 %v2067, %v2068
  %vm2070 = vcmp.eq.s32.totalorder %v680, 0
  %v2071 = vsel %vm2070, %v1936, 0.0
  %vm2072 = vcmp.eq.s32.totalorder %v680, 1
  %v2073 = vsel %vm2072, %v2069, 0.0
  %v2074 = vadd.f32 %v2071, %v2073
  %2075 = vst [vmem:[%s7] sm:$0xff] %v2074
  // Predicated region
  $region22: #{residual_block_forward.5} parent=0 // pred_check
    _
  $region23: #{residual_block_forward.5} parent=0 // pred_check_branch
    %2077 = sbr.rel (0) target = $region25
  $region24: #{residual_block_forward.5} parent=0 // pred_region
    _
  $region25: #{residual_block_forward.5} parent=0 // pred_fallthru
    _
  // Predicated region
  $region26: #{residual_block_forward.5} parent=0 // pred_check
    _
  $region27: #{residual_block_forward.5} parent=0 // pred_check_branch
    %2079 = sbr.rel (0) target = $region29
  $region28: #{residual_block_forward.5} parent=0 // pred_region
    _
  $region29: #{residual_block_forward.5} parent=0 // pred_fallthru
    _
  // Predicated region
  $region30: #{residual_block_forward.5} parent=0 // pred_check
    _
  $region31: #{residual_block_forward.5} parent=0 // pred_check_branch
    %2081 = sbr.rel (0) target = $region33
  $region32: #{residual_block_forward.5} parent=0 // pred_region
    _
  $region33: #{residual_block_forward.5} parent=0 // pred_fallthru
    _
  // Predicated region
  $region34: #{residual_block_forward.5} parent=0 // pred_check
    _
  $region35: #{residual_block_forward.5} parent=0 // pred_check_branch
    %2083 = sbr.rel (0) target = $region37
  $region36: #{residual_block_forward.5} parent=0 // pred_region
    _
  $region37: #{residual_block_forward.5} parent=0 // pred_fallthru
    _
  // Predicated region
  $region38: #{residual_block_forward.5} parent=0 // pred_check
    _
  $region39: #{residual_block_forward.5} parent=0 // pred_check_branch
    %2085 = sbr.rel (0) target = $region41
  $region40: #{residual_block_forward.5} parent=0 // pred_region
    _
  $region41: #{residual_block_forward.5} parent=0 // pred_fallthru
    _
  // Predicated region
  $region42: #{residual_block_forward.5} parent=0 // pred_check
    _
  $region43: #{residual_block_forward.5} parent=0 // pred_check_branch
    %2087 = sbr.rel (0) target = $region45
  $region44: #{residual_block_forward.5} parent=0 // pred_region
    _
  $region45: #{residual_block_forward.5} parent=0 // pred_fallthru
    _

// kernel: residual_block_forward.6
$region0: #{residual_block_forward.6}
  #allocation0 [shape = 'u32[]', space=smem, size = 0x4, offset = 0x4, fixed_abs, tag = 'smem constant byte address 0x4 - core index']
  #allocation1 [shape = 'u32[144,128]{1,0:T(1,128)}', space=vmem, size = 0x12000, scoped, tag = 'internal scratch']
  #allocation2 [shape = 'f32[18,18,128]{2,1,0:T(8,128)}', space=vmem, size = 0x36000, scoped, tag = 'scratch operand']
  #allocation3 [shape = 'f32[256,128]{1,0:T(8,128)}', space=vmem, size = 0x20000, scoped, tag = 'scratch operand']
  %s0 = inlined_call_operand.vmem [shape: bf16[2,16,16,128], index: 0, kind: input, shape index: {}]
  %s1 = inlined_call_operand.vmem [shape: f32[1,128], index: 1, kind: input, shape index: {}]
  %s2 = inlined_call_operand.vmem [shape: f32[1,128], index: 2, kind: input, shape index: {}]
  %s3 = inlined_call_operand.vmem [shape: bf16[9,128,128], index: 3, kind: input, shape index: {}]
  %s4 = inlined_call_operand.vmem [shape: bf16[2,16,16,128], index: 4, kind: output, shape index: {0}]
  %s5 = inlined_call_operand.vmem [shape: f32[2,8,128], index: 5, kind: output, shape index: {1}]
  %6 = xla_tuple %s4, %s5
  %s7 = sld [smem:[#allocation0]]
  $region57: #{residual_block_forward.6} parent=0
    _
  %s9 = ssub.s32 1, %s7
  %s10 = scalar_select 0, %s9, %s7
  loop: start=0, step=1, limit=4
  $region2: #{residual_block_forward.6} parent=0 // loop_pre_header
    _
  $region3: #{residual_block_forward.6} parent=0 // loop_header
    %s12 = sphi 0, %s16
    %p13 = scmp.ge.s32.totalorder %s12, 4
    %s22 = sphi 0, %s24
    %s25 = sphi 0, %s22
    %s26 = sphi 0, %s25
    %s42 = sphi 0, %s26
    %s46 = sphi 0, %s46
    %s48 = sphi 0, %s46
    %s49 = sphi 0, %s48
    %s63 = sphi 0, %s49
    %s67 = sphi 0, %s67
    %s69 = sphi 0, %s67
    %s70 = sphi 0, %s69
    %s84 = sphi 0, %s70
    %s88 = sphi 0, %s88
    %s90 = sphi 0, %s88
    %s91 = sphi 0, %s90
    %s105 = sphi 0, %s91
    %s111 = sphi 0, %s113
    %s114 = sphi 0, %s111
    %s115 = sphi 0, %s114
    %s131 = sphi 0, %s115
    %s137 = sphi 0, %s139
    %s140 = sphi 0, %s137
    %s141 = sphi 0, %s140
    %s157 = sphi 0, %s141
  $region4: #{residual_block_forward.6} parent=0 // loop_header_branch
    %15 = sbr.rel (%p13) target = $region8
  $region5: #{residual_block_forward.6} parent=0 // loop_body
    %s17 = ssub.s32 %s12, 1
    %s18 = ssub.s32 %s12, 2
    %s19 = sadd.s32 %s12, 1
    %s20 = ssub.s32 %s12, %s19
    %p21 = scmp.eq.s32.totalorder %s20, 0
    %s23 = sadd.s32 %s22, 1
    %s24 = scalar_select %p21, %s22, %s23
    %p27 = pneg %p21
    %p28 = scmp.eq.s32.totalorder %s12, 1
    %p29 = por %p27, %p28
    %p30 = scmp.ne.s32.totalorder %s22, %s25
    %p31 = scmp.eq.s32.totalorder %s12, 0
    %p32 = por %p30, %p31
    %p33 = scmp.ne.s32.totalorder %s22, %s25
    %p34 = scmp.eq.s32.totalorder %s17, 1
    %p35 = por %p33, %p34
    %p36 = scmp.ne.s32.totalorder %s25, %s26
    %p37 = scmp.eq.s32.totalorder %s17, 0
    %p38 = por %p36, %p37
    %p39 = scmp.ne.s32.totalorder %s25, %s26
    %p40 = scmp.eq.s32.totalorder %s18, 1
    %p41 = por %p39, %p40
    %p43 = scmp.ne.s32.totalorder %s26, %s42
    %p44 = scmp.eq.s32.totalorder %s18, 0
    %p45 = por %p43, %p44
    %s47 = sadd.s32 %s46, 1
    %p50 = scmp.eq.s32.totalorder %s12, 1
    %p51 = scmp.ne.s32.totalorder %s46, %s48
    %p52 = scmp.eq.s32.totalorder %s12, 0
    %p53 = por %p51, %p52
    %p54 = scmp.ne.s32.totalorder %s46, %s48
    %p55 = scmp.eq.s32.totalorder %s17, 1
    %p56 = por %p54, %p55
    %p57 = scmp.ne.s32.totalorder %s48, %s49
    %p58 = scmp.eq.s32.totalorder %s17, 0
    %p59 = por %p57, %p58
    %p60 = scmp.ne.s32.totalorder %s48, %s49
    %p61 = scmp.eq.s32.totalorder %s18, 1
    %p62 = por %p60, %p61
    %p64 = scmp.ne.s32.totalorder %s49, %s63
    %p65 = scmp.eq.s32.totalorder %s18, 0
    %p66 = por %p64, %p65
    %s68 = sadd.s32 %s67, 1
    %p71 = scmp.eq.s32.totalorder %s12, 1
    %p72 = scmp.ne.s32.totalorder %s67, %s69
    %p73 = scmp.eq.s32.totalorder %s12, 0
    %p74 = por %p72, %p73
    %p75 = scmp.ne.s32.totalorder %s67, %s69
    %p76 = scmp.eq.s32.totalorder %s17, 1
    %p77 = por %p75, %p76
    %p78 = scmp.ne.s32.totalorder %s69, %s70
    %p79 = scmp.eq.s32.totalorder %s17, 0
    %p80 = por %p78, %p79
    %p81 = scmp.ne.s32.totalorder %s69, %s70
    %p82 = scmp.eq.s32.totalorder %s18, 1
    %p83 = por %p81, %p82
    %p85 = scmp.ne.s32.totalorder %s70, %s84
    %p86 = scmp.eq.s32.totalorder %s18, 0
    %p87 = por %p85, %p86
    %s89 = sadd.s32 %s88, 1
    %p92 = scmp.eq.s32.totalorder %s12, 1
    %p93 = scmp.ne.s32.totalorder %s88, %s90
    %p94 = scmp.eq.s32.totalorder %s12, 0
    %p95 = por %p93, %p94
    %p96 = scmp.ne.s32.totalorder %s88, %s90
    %p97 = scmp.eq.s32.totalorder %s17, 1
    %p98 = por %p96, %p97
    %p99 = scmp.ne.s32.totalorder %s90, %s91
    %p100 = scmp.eq.s32.totalorder %s17, 0
    %p101 = por %p99, %p100
    %p102 = scmp.ne.s32.totalorder %s90, %s91
    %p103 = scmp.eq.s32.totalorder %s18, 1
    %p104 = por %p102, %p103
    %p106 = scmp.ne.s32.totalorder %s91, %s105
    %p107 = scmp.eq.s32.totalorder %s18, 0
    %p108 = por %p106, %p107
    %s109 = ssub.s32 %s12, %s19
    %p110 = scmp.eq.s32.totalorder %s109, 0
    %s112 = sadd.s32 %s111, 1
    %s113 = scalar_select %p110, %s111, %s112
    %p116 = pneg %p110
    %p117 = scmp.eq.s32.totalorder %s12, 1
    %p118 = por %p116, %p117
    %p119 = scmp.ne.s32.totalorder %s111, %s114
    %p120 = scmp.eq.s32.totalorder %s12, 0
    %p121 = por %p119, %p120
    %p122 = scmp.ne.s32.totalorder %s111, %s114
    %p123 = scmp.eq.s32.totalorder %s17, 1
    %p124 = por %p122, %p123
    %p125 = scmp.ne.s32.totalorder %s114, %s115
    %p126 = scmp.eq.s32.totalorder %s17, 0
    %p127 = por %p125, %p126
    %p128 = scmp.ne.s32.totalorder %s114, %s115
    %p129 = scmp.eq.s32.totalorder %s18, 1
    %p130 = por %p128, %p129
    %p132 = scmp.ne.s32.totalorder %s115, %s131
    %p133 = scmp.eq.s32.totalorder %s18, 0
    %p134 = por %p132, %p133
    %s135 = ssub.s32 %s12, %s19
    %p136 = scmp.eq.s32.totalorder %s135, 0
    %s138 = sadd.s32 %s137, 1
    %s139 = scalar_select %p136, %s137, %s138
    %p142 = pneg %p136
    %p143 = scmp.eq.s32.totalorder %s12, 1
    %p144 = por %p142, %p143
    %p145 = scmp.ne.s32.totalorder %s137, %s140
    %p146 = scmp.eq.s32.totalorder %s12, 0
    %p147 = por %p145, %p146
    %p148 = scmp.ne.s32.totalorder %s137, %s140
    %p149 = scmp.eq.s32.totalorder %s17, 1
    %p150 = por %p148, %p149
    %p151 = scmp.ne.s32.totalorder %s140, %s141
    %p152 = scmp.eq.s32.totalorder %s17, 0
    %p153 = por %p151, %p152
    %p154 = scmp.ne.s32.totalorder %s140, %s141
    %p155 = scmp.eq.s32.totalorder %s18, 1
    %p156 = por %p154, %p155
    %p158 = scmp.ne.s32.totalorder %s141, %s157
    %p159 = scmp.eq.s32.totalorder %s18, 0
    %p160 = por %p158, %p159
    %p161 = scmp.le.s32.totalorder 1, %s12
    %p162 = scmp.lt.s32.totalorder %s12, 3
    %p163 = pnand %p161, %p162
    %p164 = pneg %p163
    // Predicated region
    $region9: #{residual_block_forward.6} parent=5 // pred_check
      _
    $region10: #{residual_block_forward.6} parent=5 // pred_check_branch
      %166 = sbr.rel (%p163) target = $region12
    $region11: #{residual_block_forward.6} parent=5 // pred_region
      %s167 = ssub.s32 %s12, 1
      // Predicated region
      $region13: #{residual_block_forward.6} parent=11 // pred_check
        %p168 = pneg %p59
      $region14: #{residual_block_forward.6} parent=11 // pred_check_branch
        %170 = sbr.rel (%p168) target = $region16
      $region15: #{residual_block_forward.6} parent=11 // pred_region
        _
      $region16: #{residual_block_forward.6} parent=11 // pred_fallthru
        _
      // Predicated region
      $region17: #{residual_block_forward.6} parent=11 // pred_check
        %p171 = pneg %p80
      $region18: #{residual_block_forward.6} parent=11 // pred_check_branch
        %173 = sbr.rel (%p171) target = $region20
      $region19: #{residual_block_forward.6} parent=11 // pred_region
        _
      $region20: #{residual_block_forward.6} parent=11 // pred_fallthru
        _
      // Predicated region
      $region21: #{residual_block_forward.6} parent=11 // pred_check
        %p174 = pneg %p101
      $region22: #{residual_block_forward.6} parent=11 // pred_check_branch
        %176 = sbr.rel (%p174) target = $region24
      $region23: #{residual_block_forward.6} parent=11 // pred_region
        _
      $region24: #{residual_block_forward.6} parent=11 // pred_fallthru
        _
    $region12: #{residual_block_forward.6} parent=5 // pred_fallthru
      _
    %p177 = scmp.lt.s32.totalorder %s12, 2
    // Predicated region
    $region25: #{residual_block_forward.6} parent=5 // pred_check
      %p178 = pneg %p177
    $region26: #{residual_block_forward.6} parent=5 // pred_check_branch
      %180 = sbr.rel (%p178) target = $region28
    $region27: #{residual_block_forward.6} parent=5 // pred_region
      // Predicated region
      $region29: #{residual_block_forward.6} parent=27 // pred_check
        %p181 = pneg %p32
      $region30: #{residual_block_forward.6} parent=27 // pred_check_branch
        %183 = sbr.rel (%p181) target = $region32
      $region31: #{residual_block_forward.6} parent=27 // pred_region
        %p184 = scmp.lt.s32.totalorder %s12, 1
        %s185 = scalar_select %p184, %s12, 1
        %s186 = smul.addr %s185, 32
        %s187 = smul.addr %s186, 4
        %s188 = scalar_lea.vmem %s0, %s187
      $region32: #{residual_block_forward.6} parent=27 // pred_fallthru
        _
    $region28: #{residual_block_forward.6} parent=5 // pred_fallthru
      _
    %p189 = scmp.le.s32.totalorder 1, %s12
    %p190 = scmp.lt.s32.totalorder %s12, 3
    %p191 = pnand %p189, %p190
    %p192 = pneg %p191
    // Predicated region
    $region33: #{residual_block_forward.6} parent=5 // pred_check
      _
    $region34: #{residual_block_forward.6} parent=5 // pred_check_branch
      %194 = sbr.rel (%p191) target = $region36
    $region35: #{residual_block_forward.6} parent=5 // pred_region
      %s195 = ssub.s32 %s12, 1
      %p196 = scmp.lt.s32.totalorder %s17, 1
      %s197 = scalar_select %p196, %s17, 1
      %s198 = smul.addr %s197, 32
      %s199 = smul.addr %s198, 4
      %s200 = scalar_lea.vmem %s0, %s199
      %p201 = pneg %p38
      %p202 = pneg %p35
      %p203 = pneg %p59
      %p204 = pneg %p56
      %p205 = pneg %p80
      %p206 = pneg %p77
      %p207 = pneg %p101
      %p208 = pneg %p98
      %p209 = pneg %p127
      %p210 = pneg %p124
      %p211 = scmp.lt.s32.totalorder %s17, 1
      %s212 = scalar_select %p211, %s17, 1
      %s213 = smul.addr %s212, 32
      %s214 = smul.addr %s213, 4
      %s215 = scalar_lea.vmem %s4, %s214
      %p216 = pneg %p153
      %p217 = pneg %p150
      %p218 = scmp.lt.s32.totalorder %s17, 1
      %s219 = scalar_select %p218, %s17, 1
      %s220 = smul.addr %s219, 8
      %s221 = scalar_lea.vmem %s5, %s220
      %p222 = scmp.lt.s32.totalorder %s17, 1
      %s223 = scalar_select %p222, %s17, 1
      %s224 = smul.addr %s223, 32
      %s225 = smul.addr %s224, 4
      %s226 = scalar_lea.vmem %s0, %s225
      %p227 = scmp.lt.s32.totalorder %s17, 1
      %s228 = scalar_select %p227, %s17, 1
      %s229 = smul.addr %s228, 32
      %s230 = smul.addr %s229, 4
      %s231 = scalar_lea.vmem %s4, %s230
      %p232 = scmp.lt.s32.totalorder %s17, 1
      %s233 = scalar_select %p232, %s17, 1
      %s234 = smul.addr %s233, 8
      %s235 = scalar_lea.vmem %s5, %s234
      %237 = vst [vmem:[#allocation2] sm:$0xff] 0.0
      %238 = vst [vmem:[#allocation2 + $0x8] sm:$0xff] 0.0
      %239 = vst [vmem:[#allocation2 + $0x10] sm:$0x3] 0.0
      %s240 = scalar_lea.vmem [#allocation2], 408
      %241 = vst [vmem:[%s240] sm:$0xff] 0.0
      %242 = vst [vmem:[%s240 + $0x8] sm:$0xff] 0.0
      %243 = vst [vmem:[%s240 + $0x10] sm:$0x3] 0.0
      %244 = vst [vmem:[#allocation2] sm:$0x1] 0.0
      %245 = vst [vmem:[#allocation2 + $0x18] sm:$0x1] 0.0
      %246 = vst [vmem:[#allocation2 + $0x30] sm:$0x1] 0.0
      %247 = vst [vmem:[#allocation2 + $0x48] sm:$0x1] 0.0
      %248 = vst [vmem:[#allocation2 + $0x60] sm:$0x1] 0.0
      %249 = vst [vmem:[#allocation2 + $0x78] sm:$0x1] 0.0
      %250 = vst [vmem:[#allocation2 + $0x90] sm:$0x1] 0.0
      %251 = vst [vmem:[#allocation2 + $0xa8] sm:$0x1] 0.0
      %252 = vst [vmem:[#allocation2 + $0xc0] sm:$0x1] 0.0
      %253 = vst [vmem:[#allocation2 + $0xd8] sm:$0x1] 0.0
      %254 = vst [vmem:[#allocation2 + $0xf0] sm:$0x1] 0.0
      %255 = vst [vmem:[#allocation2 + $0x108] sm:$0x1] 0.0
      %256 = vst [vmem:[#allocation2 + $0x120] sm:$0x1] 0.0
      %257 = vst [vmem:[#allocation2 + $0x138] sm:$0x1] 0.0
      %258 = vst [vmem:[#allocation2 + $0x150] sm:$0x1] 0.0
      %259 = vst [vmem:[#allocation2 + $0x168] sm:$0x1] 0.0
      %260 = vst [vmem:[#allocation2 + $0x180] sm:$0x1] 0.0
      %261 = vst [vmem:[#allocation2 + $0x198] sm:$0x1] 0.0
      %262 = vst [vmem:[#allocation2 + $0x11] sm:$0x1] 0.0
      %263 = vst [vmem:[#allocation2 + $0x29] sm:$0x1] 0.0
      %264 = vst [vmem:[#allocation2 + $0x41] sm:$0x1] 0.0
      %265 = vst [vmem:[#allocation2 + $0x59] sm:$0x1] 0.0
      %266 = vst [vmem:[#allocation2 + $0x71] sm:$0x1] 0.0
      %267 = vst [vmem:[#allocation2 + $0x89] sm:$0x1] 0.0
      %268 = vst [vmem:[#allocation2 + $0xa1] sm:$0x1] 0.0
      %269 = vst [vmem:[#allocation2 + $0xb9] sm:$0x1] 0.0
      %270 = vst [vmem:[#allocation2 + $0xd1] sm:$0x1] 0.0
      %271 = vst [vmem:[#allocation2 + $0xe9] sm:$0x1] 0.0
      %272 = vst [vmem:[#allocation2 + $0x101] sm:$0x1] 0.0
      %273 = vst [vmem:[#allocation2 + $0x119] sm:$0x1] 0.0
      %274 = vst [vmem:[#allocation2 + $0x131] sm:$0x1] 0.0
      %275 = vst [vmem:[#allocation2 + $0x149] sm:$0x1] 0.0
      %276 = vst [vmem:[#allocation2 + $0x161] sm:$0x1] 0.0
      %277 = vst [vmem:[#allocation2 + $0x179] sm:$0x1] 0.0
      %278 = vst [vmem:[#allocation2 + $0x191] sm:$0x1] 0.0
      %279 = vst [vmem:[#allocation2 + $0x1a9] sm:$0x1] 0.0
      %v280 = vld [vmem:[%s226] sm:$0xf]
      %v281 = vld [vmem:[%s226 + $0x4] sm:$0xf]
      %v282 = vld [vmem:[%s226 + $0x8] sm:$0xf]
      %v283 = vld [vmem:[%s226 + $0xc] sm:$0xf]
      %v284 = vld [vmem:[%s226 + $0x10] sm:$0xf]
      %v285 = vld [vmem:[%s226 + $0x14] sm:$0xf]
      %v286 = vld [vmem:[%s226 + $0x18] sm:$0xf]
      %v287 = vld [vmem:[%s226 + $0x1c] sm:$0xf]
      %v288 = vld [vmem:[%s226 + $0x20] sm:$0xf]
      %v289 = vld [vmem:[%s226 + $0x24] sm:$0xf]
      %v290 = vld [vmem:[%s226 + $0x28] sm:$0xf]
      %v291 = vld [vmem:[%s226 + $0x2c] sm:$0xf]
      %v292 = vld [vmem:[%s226 + $0x30] sm:$0xf]
      %v293 = vld [vmem:[%s226 + $0x34] sm:$0xf]
      %v294 = vld [vmem:[%s226 + $0x38] sm:$0xf]
      %v295 = vld [vmem:[%s226 + $0x3c] sm:$0xf]
      %v296 = vld [vmem:[%s226 + $0x40] sm:$0xf]
      %v297 = vld [vmem:[%s226 + $0x44] sm:$0xf]
      %v298 = vld [vmem:[%s226 + $0x48] sm:$0xf]
      %v299 = vld [vmem:[%s226 + $0x4c] sm:$0xf]
      %v300 = vld [vmem:[%s226 + $0x50] sm:$0xf]
      %v301 = vld [vmem:[%s226 + $0x54] sm:$0xf]
      %v302 = vld [vmem:[%s226 + $0x58] sm:$0xf]
      %v303 = vld [vmem:[%s226 + $0x5c] sm:$0xf]
      %v304 = vld [vmem:[%s226 + $0x60] sm:$0xf]
      %v305 = vld [vmem:[%s226 + $0x64] sm:$0xf]
      %v306 = vld [vmem:[%s226 + $0x68] sm:$0xf]
      %v307 = vld [vmem:[%s226 + $0x6c] sm:$0xf]
      %v308 = vld [vmem:[%s226 + $0x70] sm:$0xf]
      %v309 = vld [vmem:[%s226 + $0x74] sm:$0xf]
      %v310 = vld [vmem:[%s226 + $0x78] sm:$0xf]
      %v311 = vld [vmem:[%s226 + $0x7c] sm:$0xf]
      %v312 = vunpack.c.l.bf16 %v280
      %v313 = vunpack.c.l.bf16 %v281
      %v314 = vunpack.c.l.bf16 %v282
      %v315 = vunpack.c.l.bf16 %v283
      %v316 = vunpack.c.l.bf16 %v284
      %v317 = vunpack.c.l.bf16 %v285
      %v318 = vunpack.c.l.bf16 %v286
      %v319 = vunpack.c.l.bf16 %v287
      %v320 = vunpack.c.l.bf16 %v288
      %v321 = vunpack.c.l.bf16 %v289
      %v322 = vunpack.c.l.bf16 %v290
      %v323 = vunpack.c.l.bf16 %v291
      %v324 = vunpack.c.l.bf16 %v292
      %v325 = vunpack.c.l.bf16 %v293
      %v326 = vunpack.c.l.bf16 %v294
      %v327 = vunpack.c.l.bf16 %v295
      %v328 = vunpack.c.l.bf16 %v296
      %v329 = vunpack.c.l.bf16 %v297
      %v330 = vunpack.c.l.bf16 %v298
      %v331 = vunpack.c.l.bf16 %v299
      %v332 = vunpack.c.l.bf16 %v300
      %v333 = vunpack.c.l.bf16 %v301
      %v334 = vunpack.c.l.bf16 %v302
      %v335 = vunpack.c.l.bf16 %v303
      %v336 = vunpack.c.l.bf16 %v304
      %v337 = vunpack.c.l.bf16 %v305
      %v338 = vunpack.c.l.bf16 %v306
      %v339 = vunpack.c.l.bf16 %v307
      %v340 = vunpack.c.l.bf16 %v308
      %v341 = vunpack.c.l.bf16 %v309
      %v342 = vunpack.c.l.bf16 %v310
      %v343 = vunpack.c.l.bf16 %v311
      %v344 = vld [vmem:[%s1] sm:$0x1]
      %v346 = vlaneseq
      %v347 = vshrl.u32 %v346, 7
      %v348 = vsub.s32 0, %v347
      %v349 = vrot.slane %v344, %v348
      %v351 = vmul.f32 %v312, %v349
      %v352 = vmul.f32 %v313, %v349
      %v353 = vmul.f32 %v314, %v349
      %v354 = vmul.f32 %v315, %v349
      %v355 = vmul.f32 %v316, %v349
      %v356 = vmul.f32 %v317, %v349
      %v357 = vmul.f32 %v318, %v349
      %v358 = vmul.f32 %v319, %v349
      %v359 = vmul.f32 %v320, %v349
      %v360 = vmul.f32 %v321, %v349
      %v361 = vmul.f32 %v322, %v349
      %v362 = vmul.f32 %v323, %v349
      %v363 = vmul.f32 %v324, %v349
      %v364 = vmul.f32 %v325, %v349
      %v365 = vmul.f32 %v326, %v349
      %v366 = vmul.f32 %v327, %v349
      %v367 = vmul.f32 %v328, %v349
      %v368 = vmul.f32 %v329, %v349
      %v369 = vmul.f32 %v330, %v349
      %v370 = vmul.f32 %v331, %v349
      %v371 = vmul.f32 %v332, %v349
      %v372 = vmul.f32 %v333, %v349
      %v373 = vmul.f32 %v334, %v349
      %v374 = vmul.f32 %v335, %v349
      %v375 = vmul.f32 %v336, %v349
      %v376 = vmul.f32 %v337, %v349
      %v377 = vmul.f32 %v338, %v349
      %v378 = vmul.f32 %v339, %v349
      %v379 = vmul.f32 %v340, %v349
      %v380 = vmul.f32 %v341, %v349
      %v381 = vmul.f32 %v342, %v349
      %v382 = vmul.f32 %v343, %v349
      %v383 = vld [vmem:[%s2] sm:$0x1]
      %v385 = vlaneseq
      %v386 = vshrl.u32 %v385, 7
      %v387 = vsub.s32 0, %v386
      %v388 = vrot.slane %v383, %v387
      %v390 = vadd.f32 %v351, %v388
      %v391 = vadd.f32 %v352, %v388
      %v392 = vadd.f32 %v353, %v388
      %v393 = vadd.f32 %v354, %v388
      %v394 = vadd.f32 %v355, %v388
      %v395 = vadd.f32 %v356, %v388
      %v396 = vadd.f32 %v357, %v388
      %v397 = vadd.f32 %v358, %v388
      %v398 = vadd.f32 %v359, %v388
      %v399 = vadd.f32 %v360, %v388
      %v400 = vadd.f32 %v361, %v388
      %v401 = vadd.f32 %v362, %v388
      %v402 = vadd.f32 %v363, %v388
      %v403 = vadd.f32 %v364, %v388
      %v404 = vadd.f32 %v365, %v388
      %v405 = vadd.f32 %v366, %v388
      %v406 = vadd.f32 %v367, %v388
      %v407 = vadd.f32 %v368, %v388
      %v408 = vadd.f32 %v369, %v388
      %v409 = vadd.f32 %v370, %v388
      %v410 = vadd.f32 %v371, %v388
      %v411 = vadd.f32 %v372, %v388
      %v412 = vadd.f32 %v373, %v388
      %v413 = vadd.f32 %v374, %v388
      %v414 = vadd.f32 %v375, %v388
      %v415 = vadd.f32 %v376, %v388
      %v416 = vadd.f32 %v377, %v388
      %v417 = vadd.f32 %v378, %v388
      %v418 = vadd.f32 %v379, %v388
      %v419 = vadd.f32 %v380, %v388
      %v420 = vadd.f32 %v381, %v388
      %v421 = vadd.f32 %v382, %v388
      %v422 = vmax.f32 %v390, 0.0
      %v423 = vmax.f32 %v391, 0.0
      %v424 = vmax.f32 %v392, 0.0
      %v425 = vmax.f32 %v393, 0.0
      %v426 = vmax.f32 %v394, 0.0
      %v427 = vmax.f32 %v395, 0.0
      %v428 = vmax.f32 %v396, 0.0
      %v429 = vmax.f32 %v397, 0.0
      %v430 = vmax.f32 %v398, 0.0
      %v431 = vmax.f32 %v399, 0.0
      %v432 = vmax.f32 %v400, 0.0
      %v433 = vmax.f32 %v401, 0.0
      %v434 = vmax.f32 %v402, 0.0
      %v435 = vmax.f32 %v403, 0.0
      %v436 = vmax.f32 %v404, 0.0
      %v437 = vmax.f32 %v405, 0.0
      %v438 = vmax.f32 %v406, 0.0
      %v439 = vmax.f32 %v407, 0.0
      %v440 = vmax.f32 %v408, 0.0
      %v441 = vmax.f32 %v409, 0.0
      %v442 = vmax.f32 %v410, 0.0
      %v443 = vmax.f32 %v411, 0.0
      %v444 = vmax.f32 %v412, 0.0
      %v445 = vmax.f32 %v413, 0.0
      %v446 = vmax.f32 %v414, 0.0
      %v447 = vmax.f32 %v415, 0.0
      %v448 = vmax.f32 %v416, 0.0
      %v449 = vmax.f32 %v417, 0.0
      %v450 = vmax.f32 %v418, 0.0
      %v451 = vmax.f32 %v419, 0.0
      %v452 = vmax.f32 %v420, 0.0
      %v453 = vmax.f32 %v421, 0.0
      %s454 = scalar_lea.vmem [#allocation2], 24
      %455 = vst [vmem:[%s454 + $0x1] sm:$0xff] %v422
      %456 = vst [vmem:[%s454 + $0x9] sm:$0xff] %v423
      %457 = vst [vmem:[%s454 + $0x19] sm:$0xff] %v424
      %458 = vst [vmem:[%s454 + $0x21] sm:$0xff] %v425
      %459 = vst [vmem:[%s454 + $0x31] sm:$0xff] %v426
      %460 = vst [vmem:[%s454 + $0x39] sm:$0xff] %v427
      %461 = vst [vmem:[%s454 + $0x49] sm:$0xff] %v428
      %462 = vst [vmem:[%s454 + $0x51] sm:$0xff] %v429
      %463 = vst [vmem:[%s454 + $0x61] sm:$0xff] %v430
      %464 = vst [vmem:[%s454 + $0x69] sm:$0xff] %v431
      %465 = vst [vmem:[%s454 + $0x79] sm:$0xff] %v432
      %466 = vst [vmem:[%s454 + $0x81] sm:$0xff] %v433
      %467 = vst [vmem:[%s454 + $0x91] sm:$0xff] %v434
      %468 = vst [vmem:[%s454 + $0x99] sm:$0xff] %v435
      %469 = vst [vmem:[%s454 + $0xa9] sm:$0xff] %v436
      %470 = vst [vmem:[%s454 + $0xb1] sm:$0xff] %v437
      %471 = vst [vmem:[%s454 + $0xc1] sm:$0xff] %v438
      %472 = vst [vmem:[%s454 + $0xc9] sm:$0xff] %v439
      %473 = vst [vmem:[%s454 + $0xd9] sm:$0xff] %v440
      %474 = vst [vmem:[%s454 + $0xe1] sm:$0xff] %v441
      %475 = vst [vmem:[%s454 + $0xf1] sm:$0xff] %v442
      %476 = vst [vmem:[%s454 + $0xf9] sm:$0xff] %v443
      %477 = vst [vmem:[%s454 + $0x109] sm:$0xff] %v444
      %478 = vst [vmem:[%s454 + $0x111] sm:$0xff] %v445
      %479 = vst [vmem:[%s454 + $0x121] sm:$0xff] %v446
      %480 = vst [vmem:[%s454 + $0x129] sm:$0xff] %v447
      %481 = vst [vmem:[%s454 + $0x139] sm:$0xff] %v448
      %482 = vst [vmem:[%s454 + $0x141] sm:$0xff] %v449
      %483 = vst [vmem:[%s454 + $0x151] sm:$0xff] %v450
      %484 = vst [vmem:[%s454 + $0x159] sm:$0xff] %v451
      %485 = vst [vmem:[%s454 + $0x169] sm:$0xff] %v452
      %486 = vst [vmem:[%s454 + $0x171] sm:$0xff] %v453
      %v487 = vld [vmem:[#allocation2] sm:$0xff]
      %v488 = vld [vmem:[#allocation2 + $0x8] sm:$0xff]
      %v489 = vld [vmem:[#allocation2 + $0x18] sm:$0xff]
      %v490 = vld [vmem:[#allocation2 + $0x20] sm:$0xff]
      %v491 = vld [vmem:[#allocation2 + $0x30] sm:$0xff]
      %v492 = vld [vmem:[#allocation2 + $0x38] sm:$0xff]
      %v493 = vld [vmem:[#allocation2 + $0x48] sm:$0xff]
      %v494 = vld [vmem:[#allocation2 + $0x50] sm:$0xff]
      %v495 = vld [vmem:[#allocation2 + $0x60] sm:$0xff]
      %v496 = vld [vmem:[#allocation2 + $0x68] sm:$0xff]
      %v497 = vld [vmem:[#allocation2 + $0x78] sm:$0xff]
      %v498 = vld [vmem:[#allocation2 + $0x80] sm:$0xff]
      %v499 = vld [vmem:[#allocation2 + $0x90] sm:$0xff]
      %v500 = vld [vmem:[#allocation2 + $0x98] sm:$0xff]
      %v501 = vld [vmem:[#allocation2 + $0xa8] sm:$0xff]
      %v502 = vld [vmem:[#allocation2 + $0xb0] sm:$0xff]
      %v503 = vld [vmem:[#allocation2 + $0xc0] sm:$0xff]
      %v504 = vld [vmem:[#allocation2 + $0xc8] sm:$0xff]
      %v505 = vld [vmem:[#allocation2 + $0xd8] sm:$0xff]
      %v506 = vld [vmem:[#allocation2 + $0xe0] sm:$0xff]
      %v507 = vld [vmem:[#allocation2 + $0xf0] sm:$0xff]
      %v508 = vld [vmem:[#allocation2 + $0xf8] sm:$0xff]
      %v509 = vld [vmem:[#allocation2 + $0x108] sm:$0xff]
      %v510 = vld [vmem:[#allocation2 + $0x110] sm:$0xff]
      %v511 = vld [vmem:[#allocation2 + $0x120] sm:$0xff]
      %v512 = vld [vmem:[#allocation2 + $0x128] sm:$0xff]
      %v513 = vld [vmem:[#allocation2 + $0x138] sm:$0xff]
      %v514 = vld [vmem:[#allocation2 + $0x140] sm:$0xff]
      %v515 = vld [vmem:[#allocation2 + $0x150] sm:$0xff]
      %v516 = vld [vmem:[#allocation2 + $0x158] sm:$0xff]
      %v517 = vld [vmem:[#allocation2 + $0x168] sm:$0xff]
      %v518 = vld [vmem:[#allocation2 + $0x170] sm:$0xff]
      %v519 = vpack.c.bf16 %v488, %v487
      %v520 = vpack.c.bf16 %v490, %v489
      %v521 = vpack.c.bf16 %v492, %v491
      %v522 = vpack.c.bf16 %v494, %v493
      %v523 = vpack.c.bf16 %v496, %v495
      %v524 = vpack.c.bf16 %v498, %v497
      %v525 = vpack.c.bf16 %v500, %v499
      %v526 = vpack.c.bf16 %v502, %v501
      %v527 = vpack.c.bf16 %v504, %v503
      %v528 = vpack.c.bf16 %v506, %v505
      %v529 = vpack.c.bf16 %v508, %v507
      %v530 = vpack.c.bf16 %v510, %v509
      %v531 = vpack.c.bf16 %v512, %v511
      %v532 = vpack.c.bf16 %v514, %v513
      %v533 = vpack.c.bf16 %v516, %v515
      %v534 = vpack.c.bf16 %v518, %v517
      %v535 = vld [vmem:[%s3] sm:$0xf]
      %v536 = vld [vmem:[%s3 + $0x4] sm:$0xf]
      %v537 = vld [vmem:[%s3 + $0x8] sm:$0xf]
      %v538 = vld [vmem:[%s3 + $0xc] sm:$0xf]
      %v539 = vld [vmem:[%s3 + $0x10] sm:$0xf]
      %v540 = vld [vmem:[%s3 + $0x14] sm:$0xf]
      %v541 = vld [vmem:[%s3 + $0x18] sm:$0xf]
      %v542 = vld [vmem:[%s3 + $0x1c] sm:$0xf]
      %v543 = vld [vmem:[%s3 + $0x20] sm:$0xf]
      %v544 = vld [vmem:[%s3 + $0x24] sm:$0xf]
      %v545 = vld [vmem:[%s3 + $0x28] sm:$0xf]
      %v546 = vld [vmem:[%s3 + $0x2c] sm:$0xf]
      %v547 = vld [vmem:[%s3 + $0x30] sm:$0xf]
      %v548 = vld [vmem:[%s3 + $0x34] sm:$0xf]
      %v549 = vld [vmem:[%s3 + $0x38] sm:$0xf]
      %v550 = vld [vmem:[%s3 + $0x3c] sm:$0xf]
      %v567 = vunpack.c.l.b16 %v535
      %v568 = vunpack.c.l.b16 %v536
      %v569 = vunpack.c.l.b16 %v537
      %v570 = vunpack.c.l.b16 %v538
      %v571 = vunpack.c.l.b16 %v539
      %v572 = vunpack.c.l.b16 %v540
      %v573 = vunpack.c.l.b16 %v541
      %v574 = vunpack.c.l.b16 %v542
      %v575 = vunpack.c.l.b16 %v543
      %v576 = vunpack.c.l.b16 %v544
      %v577 = vunpack.c.l.b16 %v545
      %v578 = vunpack.c.l.b16 %v546
      %v579 = vunpack.c.l.b16 %v547
      %v580 = vunpack.c.l.b16 %v548
      %v581 = vunpack.c.l.b16 %v549
      %v582 = vunpack.c.l.b16 %v550
      %v583 = vpack.c.b16 %v568, %v567
      %v584 = vpack.c.b16 %v570, %v569
      %v585 = vpack.c.b16 %v572, %v571
      %v586 = vpack.c.b16 %v574, %v573
      %v587 = vpack.c.b16 %v576, %v575
      %v588 = vpack.c.b16 %v578, %v577
      %v589 = vpack.c.b16 %v580, %v579
      %v590 = vpack.c.b16 %v582, %v581
      %599 = vmatprep.subr.bf16.mxu0 0
      %600 = vmatpush1.bf16.msra.mxu0 %v583
      %601 = vmatprep.subr.bf16.mxu0 0
      %602 = vmatpush1.bf16.msra.mxu0 %v584
      %603 = vmatprep.subr.bf16.mxu0 0
      %604 = vmatpush1.bf16.msra.mxu0 %v585
      %605 = vmatprep.subr.bf16.mxu0 0
      %606 = vmatpush1.bf16.msra.mxu0 %v586
      %607 = vmatprep.subr.bf16.mxu0 0
      %608 = vmatpush1.bf16.msra.mxu0 %v587
      %609 = vmatprep.subr.bf16.mxu0 0
      %610 = vmatpush1.bf16.msra.mxu0 %v588
      %611 = vmatprep.subr.bf16.mxu0 0
      %612 = vmatpush1.bf16.msra.mxu0 %v589
      %613 = vmatprep.subr.bf16.mxu0 0
      %614 = vmatpush1.bf16.msra.mxu0 %v590
      %615 = vmatprep.subr.bf16.mxu0 0
      %616 = vmatpush1.bf16.msra.mxu0 0
      %617 = vmatprep.subr.bf16.mxu0 0
      %618 = vmatpush1.bf16.msra.mxu0 0
      %619 = vmatprep.subr.bf16.mxu0 0
      %620 = vmatpush1.bf16.msra.mxu0 0
      %621 = vmatprep.subr.bf16.mxu0 0
      %622 = vmatpush1.bf16.msra.mxu0 0
      %623 = vmatprep.subr.bf16.mxu0 0
      %624 = vmatpush1.bf16.msra.mxu0 0
      %625 = vmatprep.subr.bf16.mxu0 0
      %626 = vmatpush1.bf16.msra.mxu0 0
      %627 = vmatprep.subr.bf16.mxu0 0
      %628 = vmatpush1.bf16.msra.mxu0 0
      %629 = vmatprep.subr.bf16.mxu0 0
      %630 = vmatpush1.bf16.msra.mxu0 0
      %631 = vmatprep.mubr.bf16.mxu0 0
      %632 = vmatmul.mubr.bf16.gmra.mrb[0].mxu0 %v519
      %v633 = vpop.f32.mrb[0].mxu0
      %v634 = vadd.f32 0.0, %v633
      %v635 = vpop.f32.mrb[0].mxu0
      %v636 = vpop.f32.mrb[0].mxu0
      %v637 = vadd.f32 0.0, %v636
      %v638 = vpop.f32.mrb[0].mxu0
      %639 = vmatprep.mubr.bf16.mxu0 0
      %640 = vmatmul.mubr.bf16.gmra.mrb[0].mxu0 %v520
      %v641 = vpop.f32.mrb[0].mxu0
      %v642 = vadd.f32 0.0, %v641
      %v643 = vpop.f32.mrb[0].mxu0
      %v644 = vpop.f32.mrb[0].mxu0
      %v645 = vadd.f32 0.0, %v644
      %v646 = vpop.f32.mrb[0].mxu0
      %647 = vmatprep.mubr.bf16.mxu0 0
      %648 = vmatmul.mubr.bf16.gmra.mrb[0].mxu0 %v521
      %v649 = vpop.f32.mrb[0].mxu0
      %v650 = vadd.f32 0.0, %v649
      %v651 = vpop.f32.mrb[0].mxu0
      %v652 = vpop.f32.mrb[0].mxu0
      %v653 = vadd.f32 0.0, %v652
      %v654 = vpop.f32.mrb[0].mxu0
      %655 = vmatprep.mubr.bf16.mxu0 0
      %656 = vmatmul.mubr.bf16.gmra.mrb[0].mxu0 %v522
      %v657 = vpop.f32.mrb[0].mxu0
      %v658 = vadd.f32 0.0, %v657
      %v659 = vpop.f32.mrb[0].mxu0
      %v660 = vpop.f32.mrb[0].mxu0
      %v661 = vadd.f32 0.0, %v660
      %v662 = vpop.f32.mrb[0].mxu0
      %663 = vmatprep.mubr.bf16.mxu0 0
      %664 = vmatmul.mubr.bf16.gmra.mrb[0].mxu0 %v523
      %v665 = vpop.f32.mrb[0].mxu0
      %v666 = vadd.f32 0.0, %v665
      %v667 = vpop.f32.mrb[0].mxu0
      %v668 = vpop.f32.mrb[0].mxu0
      %v669 = vadd.f32 0.0, %v668
      %v670 = vpop.f32.mrb[0].mxu0
      %671 = vmatprep.mubr.bf16.mxu0 0
      %672 = vmatmul.mubr.bf16.gmra.mrb[0].mxu0 %v524
      %v673 = vpop.f32.mrb[0].mxu0
      %v674 = vadd.f32 0.0, %v673
      %v675 = vpop.f32.mrb[0].mxu0
      %v676 = vpop.f32.mrb[0].mxu0
      %v677 = vadd.f32 0.0, %v676
      %v678 = vpop.f32.mrb[0].mxu0
      %679 = vmatprep.mubr.bf16.mxu0 0
      %680 = vmatmul.mubr.bf16.gmra.mrb[0].mxu0 %v525
      %v681 = vpop.f32.mrb[0].mxu0
      %v682 = vadd.f32 0.0, %v681
      %v683 = vpop.f32.mrb[0].mxu0
      %v684 = vpop.f32.mrb[0].mxu0
      %v685 = vadd.f32 0.0, %v684
      %v686 = vpop.f32.mrb[0].mxu0
      %687 = vmatprep.mubr.bf16.mxu0 0
      %688 = vmatmul.mubr.bf16.gmra.mrb[0].mxu0 %v526
      %v689 = vpop.f32.mrb[0].mxu0
      %v690 = vadd.f32 0.0, %v689
      %v691 = vpop.f32.mrb[0].mxu0
      %v692 = vpop.f32.mrb[0].mxu0
      %v693 = vadd.f32 0.0, %v692
      %v694 = vpop.f32.mrb[0].mxu0
      %695 = vmatprep.mubr.bf16.mxu0 0
      %696 = vmatmul.mubr.bf16.gmra.mrb[0].mxu0 %v527
      %v697 = vpop.f32.mrb[0].mxu0
      %v698 = vadd.f32 0.0, %v697
      %v699 = vpop.f32.mrb[0].mxu0
      %v700 = vpop.f32.mrb[0].mxu0
      %v701 = vadd.f32 0.0, %v700
      %v702 = vpop.f32.mrb[0].mxu0
      %703 = vmatprep.mubr.bf16.mxu0 0
      %704 = vmatmul.mubr.bf16.gmra.mrb[0].mxu0 %v528
      %v705 = vpop.f32.mrb[0].mxu0
      %v706 = vadd.f32 0.0, %v705
      %v707 = vpop.f32.mrb[0].mxu0
      %v708 = vpop.f32.mrb[0].mxu0
      %v709 = vadd.f32 0.0, %v708
      %v710 = vpop.f32.mrb[0].mxu0
      %711 = vmatprep.mubr.bf16.mxu0 0
      %712 = vmatmul.mubr.bf16.gmra.mrb[0].mxu0 %v529
      %v713 = vpop.f32.mrb[0].mxu0
      %v714 = vadd.f32 0.0, %v713
      %v715 = vpop.f32.mrb[0].mxu0
      %v716 = vpop.f32.mrb[0].mxu0
      %v717 = vadd.f32 0.0, %v716
      %v718 = vpop.f32.mrb[0].mxu0
      %719 = vmatprep.mubr.bf16.mxu0 0
      %720 = vmatmul.mubr.bf16.gmra.mrb[0].mxu0 %v530
      %v721 = vpop.f32.mrb[0].mxu0
      %v722 = vadd.f32 0.0, %v721
      %v723 = vpop.f32.mrb[0].mxu0
      %v724 = vpop.f32.mrb[0].mxu0
      %v725 = vadd.f32 0.0, %v724
      %v726 = vpop.f32.mrb[0].mxu0
      %727 = vmatprep.mubr.bf16.mxu0 0
      %728 = vmatmul.mubr.bf16.gmra.mrb[0].mxu0 %v531
      %v729 = vpop.f32.mrb[0].mxu0
      %v730 = vadd.f32 0.0, %v729
      %v731 = vpop.f32.mrb[0].mxu0
      %v732 = vpop.f32.mrb[0].mxu0
      %v733 = vadd.f32 0.0, %v732
      %v734 = vpop.f32.mrb[0].mxu0
      %735 = vmatprep.mubr.bf16.mxu0 0
      %736 = vmatmul.mubr.bf16.gmra.mrb[0].mxu0 %v532
      %v737 = vpop.f32.mrb[0].mxu0
      %v738 = vadd.f32 0.0, %v737
      %v739 = vpop.f32.mrb[0].mxu0
      %v740 = vpop.f32.mrb[0].mxu0
      %v741 = vadd.f32 0.0, %v740
      %v742 = vpop.f32.mrb[0].mxu0
      %743 = vmatprep.mubr.bf16.mxu0 0
      %744 = vmatmul.mubr.bf16.gmra.mrb[0].mxu0 %v533
      %v745 = vpop.f32.mrb[0].mxu0
      %v746 = vadd.f32 0.0, %v745
      %v747 = vpop.f32.mrb[0].mxu0
      %v748 = vpop.f32.mrb[0].mxu0
      %v749 = vadd.f32 0.0, %v748
      %v750 = vpop.f32.mrb[0].mxu0
      %751 = vmatprep.mubr.bf16.mxu0 0
      %752 = vmatmul.mubr.bf16.gmra.mrb[0].mxu0 %v534
      %v753 = vpop.f32.mrb[0].mxu0
      %v754 = vadd.f32 0.0, %v753
      %v755 = vpop.f32.mrb[0].mxu0
      %v756 = vpop.f32.mrb[0].mxu0
      %v757 = vadd.f32 0.0, %v756
      %v758 = vpop.f32.mrb[0].mxu0
      %759 = vdwg.mxu0
      %760 = vst [vmem:[#allocation3] sm:$0xff] %v634
      %761 = vst [vmem:[#allocation3 + $0x8] sm:$0xff] %v637
      %762 = vst [vmem:[#allocation3 + $0x10] sm:$0xff] %v642
      %763 = vst [vmem:[#allocation3 + $0x18] sm:$0xff] %v645
      %764 = vst [vmem:[#allocation3 + $0x20] sm:$0xff] %v650
      %765 = vst [vmem:[#allocation3 + $0x28] sm:$0xff] %v653
      %766 = vst [vmem:[#allocation3 + $0x30] sm:$0xff] %v658
      %767 = vst [vmem:[#allocation3 + $0x38] sm:$0xff] %v661
      %768 = vst [vmem:[#allocation3 + $0x40] sm:$0xff] %v666
      %769 = vst [vmem:[#allocation3 + $0x48] sm:$0xff] %v669
      %770 = vst [vmem:[#allocation3 + $0x50] sm:$0xff] %v674
      %771 = vst [vmem:[#allocation3 + $0x58] sm:$0xff] %v677
      %772 = vst [vmem:[#allocation3 + $0x60] sm:$0xff] %v682
      %773 = vst [vmem:[#allocation3 + $0x68] sm:$0xff] %v685
      %774 = vst [vmem:[#allocation3 + $0x70] sm:$0xff] %v690
      %775 = vst [vmem:[#allocation3 + $0x78] sm:$0xff] %v693
      %776 = vst [vmem:[#allocation3 + $0x80] sm:$0xff] %v698
      %777 = vst [vmem:[#allocation3 + $0x88] sm:$0xff] %v701
      %778 = vst [vmem:[#allocation3 + $0x90] sm:$0xff] %v706
      %779 = vst [vmem:[#allocation3 + $0x98] sm:$0xff] %v709
      %780 = vst [vmem:[#allocation3 + $0xa0] sm:$0xff] %v714
      %781 = vst [vmem:[#allocation3 + $0xa8] sm:$0xff] %v717
      %782 = vst [vmem:[#allocation3 + $0xb0] sm:$0xff] %v722
      %783 = vst [vmem:[#allocation3 + $0xb8] sm:$0xff] %v725
      %784 = vst [vmem:[#allocation3 + $0xc0] sm:$0xff] %v730
      %785 = vst [vmem:[#allocation3 + $0xc8] sm:$0xff] %v733
      %786 = vst [vmem:[#allocation3 + $0xd0] sm:$0xff] %v738
      %787 = vst [vmem:[#allocation3 + $0xd8] sm:$0xff] %v741
      %788 = vst [vmem:[#allocation3 + $0xe0] sm:$0xff] %v746
      %789 = vst [vmem:[#allocation3 + $0xe8] sm:$0xff] %v749
      %790 = vst [vmem:[#allocation3 + $0xf0] sm:$0xff] %v754
      %791 = vst [vmem:[#allocation3 + $0xf8] sm:$0xff] %v757
      %v792 = vld [vmem:[#allocation2 + $0x1] sm:$0xff]
      %v793 = vld [vmem:[#allocation2 + $0x9] sm:$0xff]
      %v794 = vld [vmem:[#allocation2 + $0x19] sm:$0xff]
      %v795 = vld [vmem:[#allocation2 + $0x21] sm:$0xff]
      %v796 = vld [vmem:[#allocation2 + $0x31] sm:$0xff]
      %v797 = vld [vmem:[#allocation2 + $0x39] sm:$0xff]
      %v798 = vld [vmem:[#allocation2 + $0x49] sm:$0xff]
      %v799 = vld [vmem:[#allocation2 + $0x51] sm:$0xff]
      %v800 = vld [vmem:[#allocation2 + $0x61] sm:$0xff]
      %v801 = vld [vmem:[#allocation2 + $0x69] sm:$0xff]
      %v802 = vld [vmem:[#allocation2 + $0x79] sm:$0xff]
      %v803 = vld [vmem:[#allocation2 + $0x81] sm:$0xff]
      %v804 = vld [vmem:[#allocation2 + $0x91] sm:$0xff]
      %v805 = vld [vmem:[#allocation2 + $0x99] sm:$0xff]
      %v806 = vld [vmem:[#allocation2 + $0xa9] sm:$0xff]
      %v807 = vld [vmem:[#allocation2 + $0xb1] sm:$0xff]
      %v808 = vld [vmem:[#allocation2 + $0xc1] sm:$0xff]
      %v809 = vld [vmem:[#allocation2 + $0xc9] sm:$0xff]
      %v810 = vld [vmem:[#allocation2 + $0xd9] sm:$0xff]
      %v811 = vld [vmem:[#allocation2 + $0xe1] sm:$0xff]
      %v812 = vld [vmem:[#allocation2 + $0xf1] sm:$0xff]
      %v813 = vld [vmem:[#allocation2 + $0xf9] sm:$0xff]
      %v814 = vld [vmem:[#allocation2 + $0x109] sm:$0xff]
      %v815 = vld [vmem:[#allocation2 + $0x111] sm:$0xff]
      %v816 = vld [vmem:[#allocation2 + $0x121] sm:$0xff]
      %v817 = vld [vmem:[#allocation2 + $0x129] sm:$0xff]
      %v818 = vld [vmem:[#allocation2 + $0x139] sm:$0xff]
      %v819 = vld [vmem:[#allocation2 + $0x141] sm:$0xff]
      %v820 = vld [vmem:[#allocation2 + $0x151] sm:$0xff]
      %v821 = vld [vmem:[#allocation2 + $0x159] sm:$0xff]
      %v822 = vld [vmem:[#allocation2 + $0x169] sm:$0xff]
      %v823 = vld [vmem:[#allocation2 + $0x171] sm:$0xff]
      %v824 = vpack.c.bf16 %v793, %v792
      %v825 = vpack.c.bf16 %v795, %v794
      %v826 = vpack.c.bf16 %v797, %v796
      %v827 = vpack.c.bf16 %v799, %v798
      %v828 = vpack.c.bf16 %v801, %v800
      %v829 = vpack.c.bf16 %v803, %v802
      %v830 = vpack.c.bf16 %v805, %v804
      %v831 = vpack.c.bf16 %v807, %v806
      %v832 = vpack.c.bf16 %v809, %v808
      %v833 = vpack.c.bf16 %v811, %v810
      %v834 = vpack.c.bf16 %v813, %v812
      %v835 = vpack.c.bf16 %v815, %v814
      %v836 = vpack.c.bf16 %v817, %v816
      %v837 = vpack.c.bf16 %v819, %v818
      %v838 = vpack.c.bf16 %v821, %v820
      %v839 = vpack.c.bf16 %v823, %v822
      %s840 = scalar_lea.vmem %s3, 64
      %v841 = vld [vmem:[%s840] sm:$0xf]
      %v842 = vld [vmem:[%s840 + $0x4] sm:$0xf]
      %v843 = vld [vmem:[%s840 + $0x8] sm:$0xf]
      %v844 = vld [vmem:[%s840 + $0xc] sm:$0xf]
      %v845 = vld [vmem:[%s840 + $0x10] sm:$0xf]
      %v846 = vld [vmem:[%s840 + $0x14] sm:$0xf]
      %v847 = vld [vmem:[%s840 + $0x18] sm:$0xf]
      %v848 = vld [vmem:[%s840 + $0x1c] sm:$0xf]
      %v849 = vld [vmem:[%s840 + $0x20] sm:$0xf]
      %v850 = vld [vmem:[%s840 + $0x24] sm:$0xf]
      %v851 = vld [vmem:[%s840 + $0x28] sm:$0xf]
      %v852 = vld [vmem:[%s840 + $0x2c] sm:$0xf]
      %v853 = vld [vmem:[%s840 + $0x30] sm:$0xf]
      %v854 = vld [vmem:[%s840 + $0x34] sm:$0xf]
      %v855 = vld [vmem:[%s840 + $0x38] sm:$0xf]
      %v856 = vld [vmem:[%s840 + $0x3c] sm:$0xf]
      %v873 = vunpack.c.l.b16 %v841
      %v874 = vunpack.c.l.b16 %v842
      %v875 = vunpack.c.l.b16 %v843
      %v876 = vunpack.c.l.b16 %v844
      %v877 = vunpack.c.l.b16 %v845
      %v878 = vunpack.c.l.b16 %v846
      %v879 = vunpack.c.l.b16 %v847
      %v880 = vunpack.c.l.b16 %v848
      %v881 = vunpack.c.l.b16 %v849
      %v882 = vunpack.c.l.b16 %v850
      %v883 = vunpack.c.l.b16 %v851
      %v884 = vunpack.c.l.b16 %v852
      %v885 = vunpack.c.l.b16 %v853
      %v886 = vunpack.c.l.b16 %v854
      %v887 = vunpack.c.l.b16 %v855
      %v888 = vunpack.c.l.b16 %v856
      %v889 = vpack.c.b16 %v874, %v873
      %v890 = vpack.c.b16 %v876, %v875
      %v891 = vpack.c.b16 %v878, %v877
      %v892 = vpack.c.b16 %v880, %v879
      %v893 = vpack.c.b16 %v882, %v881
      %v894 = vpack.c.b16 %v884, %v883
      %v895 = vpack.c.b16 %v886, %v885
      %v896 = vpack.c.b16 %v888, %v887
      %905 = vmatprep.subr.bf16.mxu0 0
      %906 = vmatpush1.bf16.msra.mxu0 %v889
      %907 = vmatprep.subr.bf16.mxu0 0
      %908 = vmatpush1.bf16.msra.mxu0 %v890
      %909 = vmatprep.subr.bf16.mxu0 0
      %910 = vmatpush1.bf16.msra.mxu0 %v891
      %911 = vmatprep.subr.bf16.mxu0 0
      %912 = vmatpush1.bf16.msra.mxu0 %v892
      %913 = vmatprep.subr.bf16.mxu0 0
      %914 = vmatpush1.bf16.msra.mxu0 %v893
      %915 = vmatprep.subr.bf16.mxu0 0
      %916 = vmatpush1.bf16.msra.mxu0 %v894
      %917 = vmatprep.subr.bf16.mxu0 0
      %918 = vmatpush1.bf16.msra.mxu0 %v895
      %919 = vmatprep.subr.bf16.mxu0 0
      %920 = vmatpush1.bf16.msra.mxu0 %v896
      %921 = vmatprep.subr.bf16.mxu0 0
      %922 = vmatpush1.bf16.msra.mxu0 0
      %923 = vmatprep.subr.bf16.mxu0 0
      %924 = vmatpush1.bf16.msra.mxu0 0
      %925 = vmatprep.subr.bf16.mxu0 0
      %926 = vmatpush1.bf16.msra.mxu0 0
      %927 = vmatprep.subr.bf16.mxu0 0
      %928 = vmatpush1.bf16.msra.mxu0 0
      %929 = vmatprep.subr.bf16.mxu0 0
      %930 = vmatpush1.bf16.msra.mxu0 0
      %931 = vmatprep.subr.bf16.mxu0 0
      %932 = vmatpush1.bf16.msra.mxu0 0
      %933 = vmatprep.subr.bf16.mxu0 0
      %934 = vmatpush1.bf16.msra.mxu0 0
      %935 = vmatprep.subr.bf16.mxu0 0
      %936 = vmatpush1.bf16.msra.mxu0 0
      %937 = vmatprep.mubr.bf16.mxu0 0
      %938 = vmatmul.mubr.bf16.gmra.mrb[0].mxu0 %v824
      %v939 = vpop.f32.mrb[0].mxu0
      %v940 = vadd.f32 0.0, %v939
      %v941 = vpop.f32.mrb[0].mxu0
      %v942 = vpop.f32.mrb[0].mxu0
      %v943 = vadd.f32 0.0, %v942
      %v944 = vpop.f32.mrb[0].mxu0
      %945 = vmatprep.mubr.bf16.mxu0 0
      %946 = vmatmul.mubr.bf16.gmra.mrb[0].mxu0 %v825
      %v947 = vpop.f32.mrb[0].mxu0
      %v948 = vadd.f32 0.0, %v947
      %v949 = vpop.f32.mrb[0].mxu0
      %v950 = vpop.f32.mrb[0].mxu0
      %v951 = vadd.f32 0.0, %v950
      %v952 = vpop.f32.mrb[0].mxu0
      %953 = vmatprep.mubr.bf16.mxu0 0
      %954 = vmatmul.mubr.bf16.gmra.mrb[0].mxu0 %v826
      %v955 = vpop.f32.mrb[0].mxu0
      %v956 = vadd.f32 0.0, %v955
      %v957 = vpop.f32.mrb[0].mxu0
      %v958 = vpop.f32.mrb[0].mxu0
      %v959 = vadd.f32 0.0, %v958
      %v960 = vpop.f32.mrb[0].mxu0
      %961 = vmatprep.mubr.bf16.mxu0 0
      %962 = vmatmul.mubr.bf16.gmra.mrb[0].mxu0 %v827
      %v963 = vpop.f32.mrb[0].mxu0
      %v964 = vadd.f32 0.0, %v963
      %v965 = vpop.f32.mrb[0].mxu0
      %v966 = vpop.f32.mrb[0].mxu0
      %v967 = vadd.f32 0.0, %v966
      %v968 = vpop.f32.mrb[0].mxu0
      %969 = vmatprep.mubr.bf16.mxu0 0
      %970 = vmatmul.mubr.bf16.gmra.mrb[0].mxu0 %v828
      %v971 = vpop.f32.mrb[0].mxu0
      %v972 = vadd.f32 0.0, %v971
      %v973 = vpop.f32.mrb[0].mxu0
      %v974 = vpop.f32.mrb[0].mxu0
      %v975 = vadd.f32 0.0, %v974
      %v976 = vpop.f32.mrb[0].mxu0
      %977 = vmatprep.mubr.bf16.mxu0 0
      %978 = vmatmul.mubr.bf16.gmra.mrb[0].mxu0 %v829
      %v979 = vpop.f32.mrb[0].mxu0
      %v980 = vadd.f32 0.0, %v979
      %v981 = vpop.f32.mrb[0].mxu0
      %v982 = vpop.f32.mrb[0].mxu0
      %v983 = vadd.f32 0.0, %v982
      %v984 = vpop.f32.mrb[0].mxu0
      %985 = vmatprep.mubr.bf16.mxu0 0
      %986 = vmatmul.mubr.bf16.gmra.mrb[0].mxu0 %v830
      %v987 = vpop.f32.mrb[0].mxu0
      %v988 = vadd.f32 0.0, %v987
      %v989 = vpop.f32.mrb[0].mxu0
      %v990 = vpop.f32.mrb[0].mxu0
      %v991 = vadd.f32 0.0, %v990
      %v992 = vpop.f32.mrb[0].mxu0
      %993 = vmatprep.mubr.bf16.mxu0 0
      %994 = vmatmul.mubr.bf16.gmra.mrb[0].mxu0 %v831
      %v995 = vpop.f32.mrb[0].mxu0
      %v996 = vadd.f32 0.0, %v995
      %v997 = vpop.f32.mrb[0].mxu0
      %v998 = vpop.f32.mrb[0].mxu0
      %v999 = vadd.f32 0.0, %v998
      %v1000 = vpop.f32.mrb[0].mxu0
      %1001 = vmatprep.mubr.bf16.mxu0 0
      %1002 = vmatmul.mubr.bf16.gmra.mrb[0].mxu0 %v832
      %v1003 = vpop.f32.mrb[0].mxu0
      %v1004 = vadd.f32 0.0, %v1003
      %v1005 = vpop.f32.mrb[0].mxu0
      %v1006 = vpop.f32.mrb[0].mxu0
      %v1007 = vadd.f32 0.0, %v1006
      %v1008 = vpop.f32.mrb[0].mxu0
      %1009 = vmatprep.mubr.bf16.mxu0 0
      %1010 = vmatmul.mubr.bf16.gmra.mrb[0].mxu0 %v833
      %v1011 = vpop.f32.mrb[0].mxu0
      %v1012 = vadd.f32 0.0, %v1011
      %v1013 = vpop.f32.mrb[0].mxu0
      %v1014 = vpop.f32.mrb[0].mxu0
      %v1015 = vadd.f32 0.0, %v1014
      %v1016 = vpop.f32.mrb[0].mxu0
      %1017 = vmatprep.mubr.bf16.mxu0 0
      %1018 = vmatmul.mubr.bf16.gmra.mrb[0].mxu0 %v834
      %v1019 = vpop.f32.mrb[0].mxu0
      %v1020 = vadd.f32 0.0, %v1019
      %v1021 = vpop.f32.mrb[0].mxu0
      %v1022 = vpop.f32.mrb[0].mxu0
      %v1023 = vadd.f32 0.0, %v1022
      %v1024 = vpop.f32.mrb[0].mxu0
      %1025 = vmatprep.mubr.bf16.mxu0 0
      %1026 = vmatmul.mubr.bf16.gmra.mrb[0].mxu0 %v835
      %v1027 = vpop.f32.mrb[0].mxu0
      %v1028 = vadd.f32 0.0, %v1027
      %v1029 = vpop.f32.mrb[0].mxu0
      %v1030 = vpop.f32.mrb[0].mxu0
      %v1031 = vadd.f32 0.0, %v1030
      %v1032 = vpop.f32.mrb[0].mxu0
      %1033 = vmatprep.mubr.bf16.mxu0 0
      %1034 = vmatmul.mubr.bf16.gmra.mrb[0].mxu0 %v836
      %v1035 = vpop.f32.mrb[0].mxu0
      %v1036 = vadd.f32 0.0, %v1035
      %v1037 = vpop.f32.mrb[0].mxu0
      %v1038 = vpop.f32.mrb[0].mxu0
      %v1039 = vadd.f32 0.0, %v1038
      %v1040 = vpop.f32.mrb[0].mxu0
      %1041 = vmatprep.mubr.bf16.mxu0 0
      %1042 = vmatmul.mubr.bf16.gmra.mrb[0].mxu0 %v837
      %v1043 = vpop.f32.mrb[0].mxu0
      %v1044 = vadd.f32 0.0, %v1043
      %v1045 = vpop.f32.mrb[0].mxu0
      %v1046 = vpop.f32.mrb[0].mxu0
      %v1047 = vadd.f32 0.0, %v1046
      %v1048 = vpop.f32.mrb[0].mxu0
      %1049 = vmatprep.mubr.bf16.mxu0 0
      %1050 = vmatmul.mubr.bf16.gmra.mrb[0].mxu0 %v838
      %v1051 = vpop.f32.mrb[0].mxu0
      %v1052 = vadd.f32 0.0, %v1051
      %v1053 = vpop.f32.mrb[0].mxu0
      %v1054 = vpop.f32.mrb[0].mxu0
      %v1055 = vadd.f32 0.0, %v1054
      %v1056 = vpop.f32.mrb[0].mxu0
      %1057 = vmatprep.mubr.bf16.mxu0 0
      %1058 = vmatmul.mubr.bf16.gmra.mrb[0].mxu0 %v839
      %v1059 = vpop.f32.mrb[0].mxu0
      %v1060 = vadd.f32 0.0, %v1059
      %v1061 = vpop.f32.mrb[0].mxu0
      %v1062 = vpop.f32.mrb[0].mxu0
      %v1063 = vadd.f32 0.0, %v1062
      %v1064 = vpop.f32.mrb[0].mxu0
      %1065 = vdwg.mxu0
      %v1066 = vld [vmem:[#allocation3] sm:$0xff]
      %v1067 = vld [vmem:[#allocation3 + $0x8] sm:$0xff]
      %v1068 = vld [vmem:[#allocation3 + $0x10] sm:$0xff]
      %v1069 = vld [vmem:[#allocation3 + $0x18] sm:$0xff]
      %v1070 = vld [vmem:[#allocation3 + $0x20] sm:$0xff]
      %v1071 = vld [vmem:[#allocation3 + $0x28] sm:$0xff]
      %v1072 = vld [vmem:[#allocation3 + $0x30] sm:$0xff]
      %v1073 = vld [vmem:[#allocation3 + $0x38] sm:$0xff]
      %v1074 = vld [vmem:[#allocation3 + $0x40] sm:$0xff]
      %v1075 = vld [vmem:[#allocation3 + $0x48] sm:$0xff]
      %v1076 = vld [vmem:[#allocation3 + $0x50] sm:$0xff]
      %v1077 = vld [vmem:[#allocation3 + $0x58] sm:$0xff]
      %v1078 = vld [vmem:[#allocation3 + $0x60] sm:$0xff]
      %v1079 = vld [vmem:[#allocation3 + $0x68] sm:$0xff]
      %v1080 = vld [vmem:[#allocation3 + $0x70] sm:$0xff]
      %v1081 = vld [vmem:[#allocation3 + $0x78] sm:$0xff]
      %v1082 = vld [vmem:[#allocation3 + $0x80] sm:$0xff]
      %v1083 = vld [vmem:[#allocation3 + $0x88] sm:$0xff]
      %v1084 = vld [vmem:[#allocation3 + $0x90] sm:$0xff]
      %v1085 = vld [vmem:[#allocation3 + $0x98] sm:$0xff]
      %v1086 = vld [vmem:[#allocation3 + $0xa0] sm:$0xff]
      %v1087 = vld [vmem:[#allocation3 + $0xa8] sm:$0xff]
      %v1088 = vld [vmem:[#allocation3 + $0xb0] sm:$0xff]
      %v1089 = vld [vmem:[#allocation3 + $0xb8] sm:$0xff]
      %v1090 = vld [vmem:[#allocation3 + $0xc0] sm:$0xff]
      %v1091 = vld [vmem:[#allocation3 + $0xc8] sm:$0xff]
      %v1092 = vld [vmem:[#allocation3 + $0xd0] sm:$0xff]
      %v1093 = vld [vmem:[#allocation3 + $0xd8] sm:$0xff]
      %v1094 = vld [vmem:[#allocation3 + $0xe0] sm:$0xff]
      %v1095 = vld [vmem:[#allocation3 + $0xe8] sm:$0xff]
      %v1096 = vld [vmem:[#allocation3 + $0xf0] sm:$0xff]
      %v1097 = vld [vmem:[#allocation3 + $0xf8] sm:$0xff]
      %v1098 = vadd.f32 %v1066, %v940
      %v1099 = vadd.f32 %v1067, %v943
      %v1100 = vadd.f32 %v1068, %v948
      %v1101 = vadd.f32 %v1069, %v951
      %v1102 = vadd.f32 %v1070, %v956
      %v1103 = vadd.f32 %v1071, %v959
      %v1104 = vadd.f32 %v1072, %v964
      %v1105 = vadd.f32 %v1073, %v967
      %v1106 = vadd.f32 %v1074, %v972
      %v1107 = vadd.f32 %v1075, %v975
      %v1108 = vadd.f32 %v1076, %v980
      %v1109 = vadd.f32 %v1077, %v983
      %v1110 = vadd.f32 %v1078, %v988
      %v1111 = vadd.f32 %v1079, %v991
      %v1112 = vadd.f32 %v1080, %v996
      %v1113 = vadd.f32 %v1081, %v999
      %v1114 = vadd.f32 %v1082, %v1004
      %v1115 = vadd.f32 %v1083, %v1007
      %v1116 = vadd.f32 %v1084, %v1012
      %v1117 = vadd.f32 %v1085, %v1015
      %v1118 = vadd.f32 %v1086, %v1020
      %v1119 = vadd.f32 %v1087, %v1023
      %v1120 = vadd.f32 %v1088, %v1028
      %v1121 = vadd.f32 %v1089, %v1031
      %v1122 = vadd.f32 %v1090, %v1036
      %v1123 = vadd.f32 %v1091, %v1039
      %v1124 = vadd.f32 %v1092, %v1044
      %v1125 = vadd.f32 %v1093, %v1047
      %v1126 = vadd.f32 %v1094, %v1052
      %v1127 = vadd.f32 %v1095, %v1055
      %v1128 = vadd.f32 %v1096, %v1060
      %v1129 = vadd.f32 %v1097, %v1063
      %1130 = vst [vmem:[#allocation3] sm:$0xff] %v1098
      %1131 = vst [vmem:[#allocation3 + $0x8] sm:$0xff] %v1099
      %1132 = vst [vmem:[#allocation3 + $0x10] sm:$0xff] %v1100
      %1133 = vst [vmem:[#allocation3 + $0x18] sm:$0xff] %v1101
      %1134 = vst [vmem:[#allocation3 + $0x20] sm:$0xff] %v1102
      %1135 = vst [vmem:[#allocation3 + $0x28] sm:$0xff] %v1103
      %1136 = vst [vmem:[#allocation3 + $0x30] sm:$0xff] %v1104
      %1137 = vst [vmem:[#allocation3 + $0x38] sm:$0xff] %v1105
      %1138 = vst [vmem:[#allocation3 + $0x40] sm:$0xff] %v1106
      %1139 = vst [vmem:[#allocation3 + $0x48] sm:$0xff] %v1107
      %1140 = vst [vmem:[#allocation3 + $0x50] sm:$0xff] %v1108
      %1141 = vst [vmem:[#allocation3 + $0x58] sm:$0xff] %v1109
      %1142 = vst [vmem:[#allocation3 + $0x60] sm:$0xff] %v1110
      %1143 = vst [vmem:[#allocation3 + $0x68] sm:$0xff] %v1111
      %1144 = vst [vmem:[#allocation3 + $0x70] sm:$0xff] %v1112
      %1145 = vst [vmem:[#allocation3 + $0x78] sm:$0xff] %v1113
      %1146 = vst [vmem:[#allocation3 + $0x80] sm:$0xff] %v1114
      %1147 = vst [vmem:[#allocation3 + $0x88] sm:$0xff] %v1115
      %1148 = vst [vmem:[#allocation3 + $0x90] sm:$0xff] %v1116
      %1149 = vst [vmem:[#allocation3 + $0x98] sm:$0xff] %v1117
      %1150 = vst [vmem:[#allocation3 + $0xa0] sm:$0xff] %v1118
      %1151 = vst [vmem:[#allocation3 + $0xa8] sm:$0xff] %v1119
      %1152 = vst [vmem:[#allocation3 + $0xb0] sm:$0xff] %v1120
      %1153 = vst [vmem:[#allocation3 + $0xb8] sm:$0xff] %v1121
      %1154 = vst [vmem:[#allocation3 + $0xc0] sm:$0xff] %v1122
      %1155 = vst [vmem:[#allocation3 + $0xc8] sm:$0xff] %v1123
      %1156 = vst [vmem:[#allocation3 + $0xd0] sm:$0xff] %v1124
      %1157 = vst [vmem:[#allocation3 + $0xd8] sm:$0xff] %v1125
      %1158 = vst [vmem:[#allocation3 + $0xe0] sm:$0xff] %v1126
      %1159 = vst [vmem:[#allocation3 + $0xe8] sm:$0xff] %v1127
      %1160 = vst [vmem:[#allocation3 + $0xf0] sm:$0xff] %v1128
      %1161 = vst [vmem:[#allocation3 + $0xf8] sm:$0xff] %v1129
      %v1162 = vld [vmem:[#allocation2 + $0x2] sm:$0xff]
      %v1163 = vld [vmem:[#allocation2 + $0xa] sm:$0xff]
      %v1164 = vld [vmem:[#allocation2 + $0x1a] sm:$0xff]
      %v1165 = vld [vmem:[#allocation2 + $0x22] sm:$0xff]
      %v1166 = vld [vmem:[#allocation2 + $0x32] sm:$0xff]
      %v1167 = vld [vmem:[#allocation2 + $0x3a] sm:$0xff]
      %v1168 = vld [vmem:[#allocation2 + $0x4a] sm:$0xff]
      %v1169 = vld [vmem:[#allocation2 + $0x52] sm:$0xff]
      %v1170 = vld [vmem:[#allocation2 + $0x62] sm:$0xff]
      %v1171 = vld [vmem:[#allocation2 + $0x6a] sm:$0xff]
      %v1172 = vld [vmem:[#allocation2 + $0x7a] sm:$0xff]
      %v1173 = vld [vmem:[#allocation2 + $0x82] sm:$0xff]
      %v1174 = vld [vmem:[#allocation2 + $0x92] sm:$0xff]
      %v1175 = vld [vmem:[#allocation2 + $0x9a] sm:$0xff]
      %v1176 = vld [vmem:[#allocation2 + $0xaa] sm:$0xff]
      %v1177 = vld [vmem:[#allocation2 + $0xb2] sm:$0xff]
      %v1178 = vld [vmem:[#allocation2 + $0xc2] sm:$0xff]
      %v1179 = vld [vmem:[#allocation2 + $0xca] sm:$0xff]
      %v1180 = vld [vmem:[#allocation2 + $0xda] sm:$0xff]
      %v1181 = vld [vmem:[#allocation2 + $0xe2] sm:$0xff]
      %v1182 = vld [vmem:[#allocation2 + $0xf2] sm:$0xff]
      %v1183 = vld [vmem:[#allocation2 + $0xfa] sm:$0xff]
      %v1184 = vld [vmem:[#allocation2 + $0x10a] sm:$0xff]
      %v1185 = vld [vmem:[#allocation2 + $0x112] sm:$0xff]
      %v1186 = vld [vmem:[#allocation2 + $0x122] sm:$0xff]
      %v1187 = vld [vmem:[#allocation2 + $0x12a] sm:$0xff]
      %v1188 = vld [vmem:[#allocation2 + $0x13a] sm:$0xff]
      %v1189 = vld [vmem:[#allocation2 + $0x142] sm:$0xff]
      %v1190 = vld [vmem:[#allocation2 + $0x152] sm:$0xff]
      %v1191 = vld [vmem:[#allocation2 + $0x15a] sm:$0xff]
      %v1192 = vld [vmem:[#allocation2 + $0x16a] sm:$0xff]
      %v1193 = vld [vmem:[#allocation2 + $0x172] sm:$0xff]
      %v1194 = vpack.c.bf16 %v1163, %v1162
      %v1195 = vpack.c.bf16 %v1165, %v1164
      %v1196 = vpack.c.bf16 %v1167, %v1166
      %v1197 = vpack.c.bf16 %v1169, %v1168
      %v1198 = vpack.c.bf16 %v1171, %v1170
      %v1199 = vpack.c.bf16 %v1173, %v1172
      %v1200 = vpack.c.bf16 %v1175, %v1174
      %v1201 = vpack.c.bf16 %v1177, %v1176
      %v1202 = vpack.c.bf16 %v1179, %v1178
      %v1203 = vpack.c.bf16 %v1181, %v1180
      %v1204 = vpack.c.bf16 %v1183, %v1182
      %v1205 = vpack.c.bf16 %v1185, %v1184
      %v1206 = vpack.c.bf16 %v1187, %v1186
      %v1207 = vpack.c.bf16 %v1189, %v1188
      %v1208 = vpack.c.bf16 %v1191, %v1190
      %v1209 = vpack.c.bf16 %v1193, %v1192
      %s1210 = scalar_lea.vmem %s3, 128
      %v1211 = vld [vmem:[%s1210] sm:$0xf]
      %v1212 = vld [vmem:[%s1210 + $0x4] sm:$0xf]
      %v1213 = vld [vmem:[%s1210 + $0x8] sm:$0xf]
      %v1214 = vld [vmem:[%s1210 + $0xc] sm:$0xf]
      %v1215 = vld [vmem:[%s1210 + $0x10] sm:$0xf]
      %v1216 = vld [vmem:[%s1210 + $0x14] sm:$0xf]
      %v1217 = vld [vmem:[%s1210 + $0x18] sm:$0xf]
      %v1218 = vld [vmem:[%s1210 + $0x1c] sm:$0xf]
      %v1219 = vld [vmem:[%s1210 + $0x20] sm:$0xf]
      %v1220 = vld [vmem:[%s1210 + $0x24] sm:$0xf]
      %v1221 = vld [vmem:[%s1210 + $0x28] sm:$0xf]
      %v1222 = vld [vmem:[%s1210 + $0x2c] sm:$0xf]
      %v1223 = vld [vmem:[%s1210 + $0x30] sm:$0xf]
      %v1224 = vld [vmem:[%s1210 + $0x34] sm:$0xf]
      %v1225 = vld [vmem:[%s1210 + $0x38] sm:$0xf]
      %v1226 = vld [vmem:[%s1210 + $0x3c] sm:$0xf]
      %v1243 = vunpack.c.l.b16 %v1211
      %v1244 = vunpack.c.l.b16 %v1212
      %v1245 = vunpack.c.l.b16 %v1213
      %v1246 = vunpack.c.l.b16 %v1214
      %v1247 = vunpack.c.l.b16 %v1215
      %v1248 = vunpack.c.l.b16 %v1216
      %v1249 = vunpack.c.l.b16 %v1217
      %v1250 = vunpack.c.l.b16 %v1218
      %v1251 = vunpack.c.l.b16 %v1219
      %v1252 = vunpack.c.l.b16 %v1220
      %v1253 = vunpack.c.l.b16 %v1221
      %v1254 = vunpack.c.l.b16 %v1222
      %v1255 = vunpack.c.l.b16 %v1223
      %v1256 = vunpack.c.l.b16 %v1224
      %v1257 = vunpack.c.l.b16 %v1225
      %v1258 = vunpack.c.l.b16 %v1226
      %v1259 = vpack.c.b16 %v1244, %v1243
      %v1260 = vpack.c.b16 %v1246, %v1245
      %v1261 = vpack.c.b16 %v1248, %v1247
      %v1262 = vpack.c.b16 %v1250, %v1249
      %v1263 = vpack.c.b16 %v1252, %v1251
      %v1264 = vpack.c.b16 %v1254, %v1253
      %v1265 = vpack.c.b16 %v1256, %v1255
      %v1266 = vpack.c.b16 %v1258, %v1257
      %1275 = vmatprep.subr.bf16.mxu0 0
      %1276 = vmatpush1.bf16.msra.mxu0 %v1259
      %1277 = vmatprep.subr.bf16.mxu0 0
      %1278 = vmatpush1.bf16.msra.mxu0 %v1260
      %1279 = vmatprep.subr.bf16.mxu0 0
      %1280 = vmatpush1.bf16.msra.mxu0 %v1261
      %1281 = vmatprep.subr.bf16.mxu0 0
      %1282 = vmatpush1.bf16.msra.mxu0 %v1262
      %1283 = vmatprep.subr.bf16.mxu0 0
      %1284 = vmatpush1.bf16.msra.mxu0 %v1263
      %1285 = vmatprep.subr.bf16.mxu0 0
      %1286 = vmatpush1.bf16.msra.mxu0 %v1264
      %1287 = vmatprep.subr.bf16.mxu0 0
      %1288 = vmatpush1.bf16.msra.mxu0 %v1265
      %1289 = vmatprep.subr.bf16.mxu0 0
      %1290 = vmatpush1.bf16.msra.mxu0 %v1266
      %1291 = vmatprep.subr.bf16.mxu0 0
      %1292 = vmatpush1.bf16.msra.mxu0 0
      %1293 = vmatprep.subr.bf16.mxu0 0
      %1294 = vmatpush1.bf16.msra.mxu0 0
      %1295 = vmatprep.subr.bf16.mxu0 0
      %1296 = vmatpush1.bf16.msra.mxu0 0
      %1297 = vmatprep.subr.bf16.mxu0 0
      %1298 = vmatpush1.bf16.msra.mxu0 0
      %1299 = vmatprep.subr.bf16.mxu0 0
      %1300 = vmatpush1.bf16.msra.mxu0 0
      %1301 = vmatprep.subr.bf16.mxu0 0
      %1302 = vmatpush1.bf16.msra.mxu0 0
      %1303 = vmatprep.subr.bf16.mxu0 0
      %1304 = vmatpush1.bf16.msra.mxu0 0
      %1305 = vmatprep.subr.bf16.mxu0 0
      %1306 = vmatpush1.bf16.msra.mxu0 0
      %1307 = vmatprep.mubr.bf16.mxu0 0
      %1308 = vmatmul.mubr.bf16.gmra.mrb[0].mxu0 %v1194
      %v1309 = vpop.f32.mrb[0].mxu0
      %v1310 = vadd.f32 0.0, %v1309
      %v1311 = vpop.f32.mrb[0].mxu0
      %v1312 = vpop.f32.mrb[0].mxu0
      %v1313 = vadd.f32 0.0, %v1312
      %v1314 = vpop.f32.mrb[0].mxu0
      %1315 = vmatprep.mubr.bf16.mxu0 0
      %1316 = vmatmul.mubr.bf16.gmra.mrb[0].mxu0 %v1195
      %v1317 = vpop.f32.mrb[0].mxu0
      %v1318 = vadd.f32 0.0, %v1317
      %v1319 = vpop.f32.mrb[0].mxu0
      %v1320 = vpop.f32.mrb[0].mxu0
      %v1321 = vadd.f32 0.0, %v1320
      %v1322 = vpop.f32.mrb[0].mxu0
      %1323 = vmatprep.mubr.bf16.mxu0 0
      %1324 = vmatmul.mubr.bf16.gmra.mrb[0].mxu0 %v1196
      %v1325 = vpop.f32.mrb[0].mxu0
      %v1326 = vadd.f32 0.0, %v1325
      %v1327 = vpop.f32.mrb[0].mxu0
      %v1328 = vpop.f32.mrb[0].mxu0
      %v1329 = vadd.f32 0.0, %v1328
      %v1330 = vpop.f32.mrb[0].mxu0
      %1331 = vmatprep.mubr.bf16.mxu0 0
      %1332 = vmatmul.mubr.bf16.gmra.mrb[0].mxu0 %v1197
      %v1333 = vpop.f32.mrb[0].mxu0
      %v1334 = vadd.f32 0.0, %v1333
      %v1335 = vpop.f32.mrb[0].mxu0
      %v1336 = vpop.f32.mrb[0].mxu0
      %v1337 = vadd.f32 0.0, %v1336
      %v1338 = vpop.f32.mrb[0].mxu0
      %1339 = vmatprep.mubr.bf16.mxu0 0
      %1340 = vmatmul.mubr.bf16.gmra.mrb[0].mxu0 %v1198
      %v1341 = vpop.f32.mrb[0].mxu0
      %v1342 = vadd.f32 0.0, %v1341
      %v1343 = vpop.f32.mrb[0].mxu0
      %v1344 = vpop.f32.mrb[0].mxu0
      %v1345 = vadd.f32 0.0, %v1344
      %v1346 = vpop.f32.mrb[0].mxu0
      %1347 = vmatprep.mubr.bf16.mxu0 0
      %1348 = vmatmul.mubr.bf16.gmra.mrb[0].mxu0 %v1199
      %v1349 = vpop.f32.mrb[0].mxu0
      %v1350 = vadd.f32 0.0, %v1349
      %v1351 = vpop.f32.mrb[0].mxu0
      %v1352 = vpop.f32.mrb[0].mxu0
      %v1353 = vadd.f32 0.0, %v1352
      %v1354 = vpop.f32.mrb[0].mxu0
      %1355 = vmatprep.mubr.bf16.mxu0 0
      %1356 = vmatmul.mubr.bf16.gmra.mrb[0].mxu0 %v1200
      %v1357 = vpop.f32.mrb[0].mxu0
      %v1358 = vadd.f32 0.0, %v1357
      %v1359 = vpop.f32.mrb[0].mxu0
      %v1360 = vpop.f32.mrb[0].mxu0
      %v1361 = vadd.f32 0.0, %v1360
      %v1362 = vpop.f32.mrb[0].mxu0
      %1363 = vmatprep.mubr.bf16.mxu0 0
      %1364 = vmatmul.mubr.bf16.gmra.mrb[0].mxu0 %v1201
      %v1365 = vpop.f32.mrb[0].mxu0
      %v1366 = vadd.f32 0.0, %v1365
      %v1367 = vpop.f32.mrb[0].mxu0
      %v1368 = vpop.f32.mrb[0].mxu0
      %v1369 = vadd.f32 0.0, %v1368
      %v1370 = vpop.f32.mrb[0].mxu0
      %1371 = vmatprep.mubr.bf16.mxu0 0
      %1372 = vmatmul.mubr.bf16.gmra.mrb[0].mxu0 %v1202
      %v1373 = vpop.f32.mrb[0].mxu0
      %v1374 = vadd.f32 0.0, %v1373
      %v1375 = vpop.f32.mrb[0].mxu0
      %v1376 = vpop.f32.mrb[0].mxu0
      %v1377 = vadd.f32 0.0, %v1376
      %v1378 = vpop.f32.mrb[0].mxu0
      %1379 = vmatprep.mubr.bf16.mxu0 0
      %1380 = vmatmul.mubr.bf16.gmra.mrb[0].mxu0 %v1203
      %v1381 = vpop.f32.mrb[0].mxu0
      %v1382 = vadd.f32 0.0, %v1381
      %v1383 = vpop.f32.mrb[0].mxu0
      %v1384 = vpop.f32.mrb[0].mxu0
      %v1385 = vadd.f32 0.0, %v1384
      %v1386 = vpop.f32.mrb[0].mxu0
      %1387 = vmatprep.mubr.bf16.mxu0 0
      %1388 = vmatmul.mubr.bf16.gmra.mrb[0].mxu0 %v1204
      %v1389 = vpop.f32.mrb[0].mxu0
      %v1390 = vadd.f32 0.0, %v1389
      %v1391 = vpop.f32.mrb[0].mxu0
      %v1392 = vpop.f32.mrb[0].mxu0
      %v1393 = vadd.f32 0.0, %v1392
      %v1394 = vpop.f32.mrb[0].mxu0
      %1395 = vmatprep.mubr.bf16.mxu0 0
      %1396 = vmatmul.mubr.bf16.gmra.mrb[0].mxu0 %v1205
      %v1397 = vpop.f32.mrb[0].mxu0
      %v1398 = vadd.f32 0.0, %v1397
      %v1399 = vpop.f32.mrb[0].mxu0
      %v1400 = vpop.f32.mrb[0].mxu0
      %v1401 = vadd.f32 0.0, %v1400
      %v1402 = vpop.f32.mrb[0].mxu0
      %1403 = vmatprep.mubr.bf16.mxu0 0
      %1404 = vmatmul.mubr.bf16.gmra.mrb[0].mxu0 %v1206
      %v1405 = vpop.f32.mrb[0].mxu0
      %v1406 = vadd.f32 0.0, %v1405
      %v1407 = vpop.f32.mrb[0].mxu0
      %v1408 = vpop.f32.mrb[0].mxu0
      %v1409 = vadd.f32 0.0, %v1408
      %v1410 = vpop.f32.mrb[0].mxu0
      %1411 = vmatprep.mubr.bf16.mxu0 0
      %1412 = vmatmul.mubr.bf16.gmra.mrb[0].mxu0 %v1207
      %v1413 = vpop.f32.mrb[0].mxu0
      %v1414 = vadd.f32 0.0, %v1413
      %v1415 = vpop.f32.mrb[0].mxu0
      %v1416 = vpop.f32.mrb[0].mxu0
      %v1417 = vadd.f32 0.0, %v1416
      %v1418 = vpop.f32.mrb[0].mxu0
      %1419 = vmatprep.mubr.bf16.mxu0 0
      %1420 = vmatmul.mubr.bf16.gmra.mrb[0].mxu0 %v1208
      %v1421 = vpop.f32.mrb[0].mxu0
      %v1422 = vadd.f32 0.0, %v1421
      %v1423 = vpop.f32.mrb[0].mxu0
      %v1424 = vpop.f32.mrb[0].mxu0
      %v1425 = vadd.f32 0.0, %v1424
      %v1426 = vpop.f32.mrb[0].mxu0
      %1427 = vmatprep.mubr.bf16.mxu0 0
      %1428 = vmatmul.mubr.bf16.gmra.mrb[0].mxu0 %v1209
      %v1429 = vpop.f32.mrb[0].mxu0
      %v1430 = vadd.f32 0.0, %v1429
      %v1431 = vpop.f32.mrb[0].mxu0
      %v1432 = vpop.f32.mrb[0].mxu0
      %v1433 = vadd.f32 0.0, %v1432
      %v1434 = vpop.f32.mrb[0].mxu0
      %1435 = vdwg.mxu0
      %v1436 = vld [vmem:[#allocation3] sm:$0xff]
      %v1437 = vld [vmem:[#allocation3 + $0x8] sm:$0xff]
      %v1438 = vld [vmem:[#allocation3 + $0x10] sm:$0xff]
      %v1439 = vld [vmem:[#allocation3 + $0x18] sm:$0xff]
      %v1440 = vld [vmem:[#allocation3 + $0x20] sm:$0xff]
      %v1441 = vld [vmem:[#allocation3 + $0x28] sm:$0xff]
      %v1442 = vld [vmem:[#allocation3 + $0x30] sm:$0xff]
      %v1443 = vld [vmem:[#allocation3 + $0x38] sm:$0xff]
      %v1444 = vld [vmem:[#allocation3 + $0x40] sm:$0xff]
      %v1445 = vld [vmem:[#allocation3 + $0x48] sm:$0xff]
      %v1446 = vld [vmem:[#allocation3 + $0x50] sm:$0xff]
      %v1447 = vld [vmem:[#allocation3 + $0x58] sm:$0xff]
      %v1448 = vld [vmem:[#allocation3 + $0x60] sm:$0xff]
      %v1449 = vld [vmem:[#allocation3 + $0x68] sm:$0xff]
      %v1450 = vld [vmem:[#allocation3 + $0x70] sm:$0xff]
      %v1451 = vld [vmem:[#allocation3 + $0x78] sm:$0xff]
      %v1452 = vld [vmem:[#allocation3 + $0x80] sm:$0xff]
      %v1453 = vld [vmem:[#allocation3 + $0x88] sm:$0xff]
      %v1454 = vld [vmem:[#allocation3 + $0x90] sm:$0xff]
      %v1455 = vld [vmem:[#allocation3 + $0x98] sm:$0xff]
      %v1456 = vld [vmem:[#allocation3 + $0xa0] sm:$0xff]
      %v1457 = vld [vmem:[#allocation3 + $0xa8] sm:$0xff]
      %v1458 = vld [vmem:[#allocation3 + $0xb0] sm:$0xff]
      %v1459 = vld [vmem:[#allocation3 + $0xb8] sm:$0xff]
      %v1460 = vld [vmem:[#allocation3 + $0xc0] sm:$0xff]
      %v1461 = vld [vmem:[#allocation3 + $0xc8] sm:$0xff]
      %v1462 = vld [vmem:[#allocation3 + $0xd0] sm:$0xff]
      %v1463 = vld [vmem:[#allocation3 + $0xd8] sm:$0xff]
      %v1464 = vld [vmem:[#allocation3 + $0xe0] sm:$0xff]
      %v1465 = vld [vmem:[#allocation3 + $0xe8] sm:$0xff]
      %v1466 = vld [vmem:[#allocation3 + $0xf0] sm:$0xff]
      %v1467 = vld [vmem:[#allocation3 + $0xf8] sm:$0xff]
      %v1468 = vadd.f32 %v1436, %v1310
      %v1469 = vadd.f32 %v1437, %v1313
      %v1470 = vadd.f32 %v1438, %v1318
      %v1471 = vadd.f32 %v1439, %v1321
      %v1472 = vadd.f32 %v1440, %v1326
      %v1473 = vadd.f32 %v1441, %v1329
      %v1474 = vadd.f32 %v1442, %v1334
      %v1475 = vadd.f32 %v1443, %v1337
      %v1476 = vadd.f32 %v1444, %v1342
      %v1477 = vadd.f32 %v1445, %v1345
      %v1478 = vadd.f32 %v1446, %v1350
      %v1479 = vadd.f32 %v1447, %v1353
      %v1480 = vadd.f32 %v1448, %v1358
      %v1481 = vadd.f32 %v1449, %v1361
      %v1482 = vadd.f32 %v1450, %v1366
      %v1483 = vadd.f32 %v1451, %v1369
      %v1484 = vadd.f32 %v1452, %v1374
      %v1485 = vadd.f32 %v1453, %v1377
      %v1486 = vadd.f32 %v1454, %v1382
      %v1487 = vadd.f32 %v1455, %v1385
      %v1488 = vadd.f32 %v1456, %v1390
      %v1489 = vadd.f32 %v1457, %v1393
      %v1490 = vadd.f32 %v1458, %v1398
      %v1491 = vadd.f32 %v1459, %v1401
      %v1492 = vadd.f32 %v1460, %v1406
      %v1493 = vadd.f32 %v1461, %v1409
      %v1494 = vadd.f32 %v1462, %v1414
      %v1495 = vadd.f32 %v1463, %v1417
      %v1496 = vadd.f32 %v1464, %v1422
      %v1497 = vadd.f32 %v1465, %v1425
      %v1498 = vadd.f32 %v1466, %v1430
      %v1499 = vadd.f32 %v1467, %v1433
      %1500 = vst [vmem:[#allocation3] sm:$0xff] %v1468
      %1501 = vst [vmem:[#allocation3 + $0x8] sm:$0xff] %v1469
      %1502 = vst [vmem:[#allocation3 + $0x10] sm:$0xff] %v1470
      %1503 = vst [vmem:[#allocation3 + $0x18] sm:$0xff] %v1471
      %1504 = vst [vmem:[#allocation3 + $0x20] sm:$0xff] %v1472
      %1505 = vst [vmem:[#allocation3 + $0x28] sm:$0xff] %v1473
      %1506 = vst [vmem:[#allocation3 + $0x30] sm:$0xff] %v1474
      %1507 = vst [vmem:[#allocation3 + $0x38] sm:$0xff] %v1475
      %1508 = vst [vmem:[#allocation3 + $0x40] sm:$0xff] %v1476
      %1509 = vst [vmem:[#allocation3 + $0x48] sm:$0xff] %v1477
      %1510 = vst [vmem:[#allocation3 + $0x50] sm:$0xff] %v1478
      %1511 = vst [vmem:[#allocation3 + $0x58] sm:$0xff] %v1479
      %1512 = vst [vmem:[#allocation3 + $0x60] sm:$0xff] %v1480
      %1513 = vst [vmem:[#allocation3 + $0x68] sm:$0xff] %v1481
      %1514 = vst [vmem:[#allocation3 + $0x70] sm:$0xff] %v1482
      %1515 = vst [vmem:[#allocation3 + $0x78] sm:$0xff] %v1483
      %1516 = vst [vmem:[#allocation3 + $0x80] sm:$0xff] %v1484
      %1517 = vst [vmem:[#allocation3 + $0x88] sm:$0xff] %v1485
      %1518 = vst [vmem:[#allocation3 + $0x90] sm:$0xff] %v1486
      %1519 = vst [vmem:[#allocation3 + $0x98] sm:$0xff] %v1487
      %1520 = vst [vmem:[#allocation3 + $0xa0] sm:$0xff] %v1488
      %1521 = vst [vmem:[#allocation3 + $0xa8] sm:$0xff] %v1489
      %1522 = vst [vmem:[#allocation3 + $0xb0] sm:$0xff] %v1490
      %1523 = vst [vmem:[#allocation3 + $0xb8] sm:$0xff] %v1491
      %1524 = vst [vmem:[#allocation3 + $0xc0] sm:$0xff] %v1492
      %1525 = vst [vmem:[#allocation3 + $0xc8] sm:$0xff] %v1493
      %1526 = vst [vmem:[#allocation3 + $0xd0] sm:$0xff] %v1494
      %1527 = vst [vmem:[#allocation3 + $0xd8] sm:$0xff] %v1495
      %1528 = vst [vmem:[#allocation3 + $0xe0] sm:$0xff] %v1496
      %1529 = vst [vmem:[#allocation3 + $0xe8] sm:$0xff] %v1497
      %1530 = vst [vmem:[#allocation3 + $0xf0] sm:$0xff] %v1498
      %1531 = vst [vmem:[#allocation3 + $0xf8] sm:$0xff] %v1499
      %v1532 = vld [vmem:[%s454] sm:$0xff]
      %v1533 = vld [vmem:[%s454 + $0x8] sm:$0xff]
      %v1534 = vld [vmem:[%s454 + $0x18] sm:$0xff]
      %v1535 = vld [vmem:[%s454 + $0x20] sm:$0xff]
      %v1536 = vld [vmem:[%s454 + $0x30] sm:$0xff]
      %v1537 = vld [vmem:[%s454 + $0x38] sm:$0xff]
      %v1538 = vld [vmem:[%s454 + $0x48] sm:$0xff]
      %v1539 = vld [vmem:[%s454 + $0x50] sm:$0xff]
      %v1540 = vld [vmem:[%s454 + $0x60] sm:$0xff]
      %v1541 = vld [vmem:[%s454 + $0x68] sm:$0xff]
      %v1542 = vld [vmem:[%s454 + $0x78] sm:$0xff]
      %v1543 = vld [vmem:[%s454 + $0x80] sm:$0xff]
      %v1544 = vld [vmem:[%s454 + $0x90] sm:$0xff]
      %v1545 = vld [vmem:[%s454 + $0x98] sm:$0xff]
      %v1546 = vld [vmem:[%s454 + $0xa8] sm:$0xff]
      %v1547 = vld [vmem:[%s454 + $0xb0] sm:$0xff]
      %v1548 = vld [vmem:[%s454 + $0xc0] sm:$0xff]
      %v1549 = vld [vmem:[%s454 + $0xc8] sm:$0xff]
      %v1550 = vld [vmem:[%s454 + $0xd8] sm:$0xff]
      %v1551 = vld [vmem:[%s454 + $0xe0] sm:$0xff]
      %v1552 = vld [vmem:[%s454 + $0xf0] sm:$0xff]
      %v1553 = vld [vmem:[%s454 + $0xf8] sm:$0xff]
      %v1554 = vld [vmem:[%s454 + $0x108] sm:$0xff]
      %v1555 = vld [vmem:[%s454 + $0x110] sm:$0xff]
      %v1556 = vld [vmem:[%s454 + $0x120] sm:$0xff]
      %v1557 = vld [vmem:[%s454 + $0x128] sm:$0xff]
      %v1558 = vld [vmem:[%s454 + $0x138] sm:$0xff]
      %v1559 = vld [vmem:[%s454 + $0x140] sm:$0xff]
      %v1560 = vld [vmem:[%s454 + $0x150] sm:$0xff]
      %v1561 = vld [vmem:[%s454 + $0x158] sm:$0xff]
      %v1562 = vld [vmem:[%s454 + $0x168] sm:$0xff]
      %v1563 = vld [vmem:[%s454 + $0x170] sm:$0xff]
      %v1564 = vpack.c.bf16 %v1533, %v1532
      %v1565 = vpack.c.bf16 %v1535, %v1534
      %v1566 = vpack.c.bf16 %v1537, %v1536
      %v1567 = vpack.c.bf16 %v1539, %v1538
      %v1568 = vpack.c.bf16 %v1541, %v1540
      %v1569 = vpack.c.bf16 %v1543, %v1542
      %v1570 = vpack.c.bf16 %v1545, %v1544
      %v1571 = vpack.c.bf16 %v1547, %v1546
      %v1572 = vpack.c.bf16 %v1549, %v1548
      %v1573 = vpack.c.bf16 %v1551, %v1550
      %v1574 = vpack.c.bf16 %v1553, %v1552
      %v1575 = vpack.c.bf16 %v1555, %v1554
      %v1576 = vpack.c.bf16 %v1557, %v1556
      %v1577 = vpack.c.bf16 %v1559, %v1558
      %v1578 = vpack.c.bf16 %v1561, %v1560
      %v1579 = vpack.c.bf16 %v1563, %v1562
      %s1580 = scalar_lea.vmem %s3, 192
      %v1581 = vld [vmem:[%s1580] sm:$0xf]
      %v1582 = vld [vmem:[%s1580 + $0x4] sm:$0xf]
      %v1583 = vld [vmem:[%s1580 + $0x8] sm:$0xf]
      %v1584 = vld [vmem:[%s1580 + $0xc] sm:$0xf]
      %v1585 = vld [vmem:[%s1580 + $0x10] sm:$0xf]
      %v1586 = vld [vmem:[%s1580 + $0x14] sm:$0xf]
      %v1587 = vld [vmem:[%s1580 + $0x18] sm:$0xf]
      %v1588 = vld [vmem:[%s1580 + $0x1c] sm:$0xf]
      %v1589 = vld [vmem:[%s1580 + $0x20] sm:$0xf]
      %v1590 = vld [vmem:[%s1580 + $0x24] sm:$0xf]
      %v1591 = vld [vmem:[%s1580 + $0x28] sm:$0xf]
      %v1592 = vld [vmem:[%s1580 + $0x2c] sm:$0xf]
      %v1593 = vld [vmem:[%s1580 + $0x30] sm:$0xf]
      %v1594 = vld [vmem:[%s1580 + $0x34] sm:$0xf]
      %v1595 = vld [vmem:[%s1580 + $0x38] sm:$0xf]
      %v1596 = vld [vmem:[%s1580 + $0x3c] sm:$0xf]
      %v1613 = vunpack.c.l.b16 %v1581
      %v1614 = vunpack.c.l.b16 %v1582
      %v1615 = vunpack.c.l.b16 %v1583
      %v1616 = vunpack.c.l.b16 %v1584
      %v1617 = vunpack.c.l.b16 %v1585
      %v1618 = vunpack.c.l.b16 %v1586
      %v1619 = vunpack.c.l.b16 %v1587
      %v1620 = vunpack.c.l.b16 %v1588
      %v1621 = vunpack.c.l.b16 %v1589
      %v1622 = vunpack.c.l.b16 %v1590
      %v1623 = vunpack.c.l.b16 %v1591
      %v1624 = vunpack.c.l.b16 %v1592
      %v1625 = vunpack.c.l.b16 %v1593
      %v1626 = vunpack.c.l.b16 %v1594
      %v1627 = vunpack.c.l.b16 %v1595
      %v1628 = vunpack.c.l.b16 %v1596
      %v1629 = vpack.c.b16 %v1614, %v1613
      %v1630 = vpack.c.b16 %v1616, %v1615
      %v1631 = vpack.c.b16 %v1618, %v1617
      %v1632 = vpack.c.b16 %v1620, %v1619
      %v1633 = vpack.c.b16 %v1622, %v1621
      %v1634 = vpack.c.b16 %v1624, %v1623
      %v1635 = vpack.c.b16 %v1626, %v1625
      %v1636 = vpack.c.b16 %v1628, %v1627
      %1645 = vmatprep.subr.bf16.mxu0 0
      %1646 = vmatpush1.bf16.msra.mxu0 %v1629
      %1647 = vmatprep.subr.bf16.mxu0 0
      %1648 = vmatpush1.bf16.msra.mxu0 %v1630
      %1649 = vmatprep.subr.bf16.mxu0 0
      %1650 = vmatpush1.bf16.msra.mxu0 %v1631
      %1651 = vmatprep.subr.bf16.mxu0 0
      %1652 = vmatpush1.bf16.msra.mxu0 %v1632
      %1653 = vmatprep.subr.bf16.mxu0 0
      %1654 = vmatpush1.bf16.msra.mxu0 %v1633
      %1655 = vmatprep.subr.bf16.mxu0 0
      %1656 = vmatpush1.bf16.msra.mxu0 %v1634
      %1657 = vmatprep.subr.bf16.mxu0 0
      %1658 = vmatpush1.bf16.msra.mxu0 %v1635
      %1659 = vmatprep.subr.bf16.mxu0 0
      %1660 = vmatpush1.bf16.msra.mxu0 %v1636
      %1661 = vmatprep.subr.bf16.mxu0 0
      %1662 = vmatpush1.bf16.msra.mxu0 0
      %1663 = vmatprep.subr.bf16.mxu0 0
      %1664 = vmatpush1.bf16.msra.mxu0 0
      %1665 = vmatprep.subr.bf16.mxu0 0
      %1666 = vmatpush1.bf16.msra.mxu0 0
      %1667 = vmatprep.subr.bf16.mxu0 0
      %1668 = vmatpush1.bf16.msra.mxu0 0
      %1669 = vmatprep.subr.bf16.mxu0 0
      %1670 = vmatpush1.bf16.msra.mxu0 0
      %1671 = vmatprep.subr.bf16.mxu0 0
      %1672 = vmatpush1.bf16.msra.mxu0 0
      %1673 = vmatprep.subr.bf16.mxu0 0
      %1674 = vmatpush1.bf16.msra.mxu0 0
      %1675 = vmatprep.subr.bf16.mxu0 0
      %1676 = vmatpush1.bf16.msra.mxu0 0
      %1677 = vmatprep.mubr.bf16.mxu0 0
      %1678 = vmatmul.mubr.bf16.gmra.mrb[0].mxu0 %v1564
      %v1679 = vpop.f32.mrb[0].mxu0
      %v1680 = vadd.f32 0.0, %v1679
      %v1681 = vpop.f32.mrb[0].mxu0
      %v1682 = vpop.f32.mrb[0].mxu0
      %v1683 = vadd.f32 0.0, %v1682
      %v1684 = vpop.f32.mrb[0].mxu0
      %1685 = vmatprep.mubr.bf16.mxu0 0
      %1686 = vmatmul.mubr.bf16.gmra.mrb[0].mxu0 %v1565
      %v1687 = vpop.f32.mrb[0].mxu0
      %v1688 = vadd.f32 0.0, %v1687
      %v1689 = vpop.f32.mrb[0].mxu0
      %v1690 = vpop.f32.mrb[0].mxu0
      %v1691 = vadd.f32 0.0, %v1690
      %v1692 = vpop.f32.mrb[0].mxu0
      %1693 = vmatprep.mubr.bf16.mxu0 0
      %1694 = vmatmul.mubr.bf16.gmra.mrb[0].mxu0 %v1566
      %v1695 = vpop.f32.mrb[0].mxu0
      %v1696 = vadd.f32 0.0, %v1695
      %v1697 = vpop.f32.mrb[0].mxu0
      %v1698 = vpop.f32.mrb[0].mxu0
      %v1699 = vadd.f32 0.0, %v1698
      %v1700 = vpop.f32.mrb[0].mxu0
      %1701 = vmatprep.mubr.bf16.mxu0 0
      %1702 = vmatmul.mubr.bf16.gmra.mrb[0].mxu0 %v1567
      %v1703 = vpop.f32.mrb[0].mxu0
      %v1704 = vadd.f32 0.0, %v1703
      %v1705 = vpop.f32.mrb[0].mxu0
      %v1706 = vpop.f32.mrb[0].mxu0
      %v1707 = vadd.f32 0.0, %v1706
      %v1708 = vpop.f32.mrb[0].mxu0
      %1709 = vmatprep.mubr.bf16.mxu0 0
      %1710 = vmatmul.mubr.bf16.gmra.mrb[0].mxu0 %v1568
      %v1711 = vpop.f32.mrb[0].mxu0
      %v1712 = vadd.f32 0.0, %v1711
      %v1713 = vpop.f32.mrb[0].mxu0
      %v1714 = vpop.f32.mrb[0].mxu0
      %v1715 = vadd.f32 0.0, %v1714
      %v1716 = vpop.f32.mrb[0].mxu0
      %1717 = vmatprep.mubr.bf16.mxu0 0
      %1718 = vmatmul.mubr.bf16.gmra.mrb[0].mxu0 %v1569
      %v1719 = vpop.f32.mrb[0].mxu0
      %v1720 = vadd.f32 0.0, %v1719
      %v1721 = vpop.f32.mrb[0].mxu0
      %v1722 = vpop.f32.mrb[0].mxu0
      %v1723 = vadd.f32 0.0, %v1722
      %v1724 = vpop.f32.mrb[0].mxu0
      %1725 = vmatprep.mubr.bf16.mxu0 0
      %1726 = vmatmul.mubr.bf16.gmra.mrb[0].mxu0 %v1570
      %v1727 = vpop.f32.mrb[0].mxu0
      %v1728 = vadd.f32 0.0, %v1727
      %v1729 = vpop.f32.mrb[0].mxu0
      %v1730 = vpop.f32.mrb[0].mxu0
      %v1731 = vadd.f32 0.0, %v1730
      %v1732 = vpop.f32.mrb[0].mxu0
      %1733 = vmatprep.mubr.bf16.mxu0 0
      %1734 = vmatmul.mubr.bf16.gmra.mrb[0].mxu0 %v1571
      %v1735 = vpop.f32.mrb[0].mxu0
      %v1736 = vadd.f32 0.0, %v1735
      %v1737 = vpop.f32.mrb[0].mxu0
      %v1738 = vpop.f32.mrb[0].mxu0
      %v1739 = vadd.f32 0.0, %v1738
      %v1740 = vpop.f32.mrb[0].mxu0
      %1741 = vmatprep.mubr.bf16.mxu0 0
      %1742 = vmatmul.mubr.bf16.gmra.mrb[0].mxu0 %v1572
      %v1743 = vpop.f32.mrb[0].mxu0
      %v1744 = vadd.f32 0.0, %v1743
      %v1745 = vpop.f32.mrb[0].mxu0
      %v1746 = vpop.f32.mrb[0].mxu0
      %v1747 = vadd.f32 0.0, %v1746
      %v1748 = vpop.f32.mrb[0].mxu0
      %1749 = vmatprep.mubr.bf16.mxu0 0
      %1750 = vmatmul.mubr.bf16.gmra.mrb[0].mxu0 %v1573
      %v1751 = vpop.f32.mrb[0].mxu0
      %v1752 = vadd.f32 0.0, %v1751
      %v1753 = vpop.f32.mrb[0].mxu0
      %v1754 = vpop.f32.mrb[0].mxu0
      %v1755 = vadd.f32 0.0, %v1754
      %v1756 = vpop.f32.mrb[0].mxu0
      %1757 = vmatprep.mubr.bf16.mxu0 0
      %1758 = vmatmul.mubr.bf16.gmra.mrb[0].mxu0 %v1574
      %v1759 = vpop.f32.mrb[0].mxu0
      %v1760 = vadd.f32 0.0, %v1759
      %v1761 = vpop.f32.mrb[0].mxu0
      %v1762 = vpop.f32.mrb[0].mxu0
      %v1763 = vadd.f32 0.0, %v1762
      %v1764 = vpop.f32.mrb[0].mxu0
      %1765 = vmatprep.mubr.bf16.mxu0 0
      %1766 = vmatmul.mubr.bf16.gmra.mrb[0].mxu0 %v1575
      %v1767 = vpop.f32.mrb[0].mxu0
      %v1768 = vadd.f32 0.0, %v1767
      %v1769 = vpop.f32.mrb[0].mxu0
      %v1770 = vpop.f32.mrb[0].mxu0
      %v1771 = vadd.f32 0.0, %v1770
      %v1772 = vpop.f32.mrb[0].mxu0
      %1773 = vmatprep.mubr.bf16.mxu0 0
      %1774 = vmatmul.mubr.bf16.gmra.mrb[0].mxu0 %v1576
      %v1775 = vpop.f32.mrb[0].mxu0
      %v1776 = vadd.f32 0.0, %v1775
      %v1777 = vpop.f32.mrb[0].mxu0
      %v1778 = vpop.f32.mrb[0].mxu0
      %v1779 = vadd.f32 0.0, %v1778
      %v1780 = vpop.f32.mrb[0].mxu0
      %1781 = vmatprep.mubr.bf16.mxu0 0
      %1782 = vmatmul.mubr.bf16.gmra.mrb[0].mxu0 %v1577
      %v1783 = vpop.f32.mrb[0].mxu0
      %v1784 = vadd.f32 0.0, %v1783
      %v1785 = vpop.f32.mrb[0].mxu0
      %v1786 = vpop.f32.mrb[0].mxu0
      %v1787 = vadd.f32 0.0, %v1786
      %v1788 = vpop.f32.mrb[0].mxu0
      %1789 = vmatprep.mubr.bf16.mxu0 0
      %1790 = vmatmul.mubr.bf16.gmra.mrb[0].mxu0 %v1578
      %v1791 = vpop.f32.mrb[0].mxu0
      %v1792 = vadd.f32 0.0, %v1791
      %v1793 = vpop.f32.mrb[0].mxu0
      %v1794 = vpop.f32.mrb[0].mxu0
      %v1795 = vadd.f32 0.0, %v1794
      %v1796 = vpop.f32.mrb[0].mxu0
      %1797 = vmatprep.mubr.bf16.mxu0 0
      %1798 = vmatmul.mubr.bf16.gmra.mrb[0].mxu0 %v1579
      %v1799 = vpop.f32.mrb[0].mxu0
      %v1800 = vadd.f32 0.0, %v1799
      %v1801 = vpop.f32.mrb[0].mxu0
      %v1802 = vpop.f32.mrb[0].mxu0
      %v1803 = vadd.f32 0.0, %v1802
      %v1804 = vpop.f32.mrb[0].mxu0
      %1805 = vdwg.mxu0
      %v1806 = vld [vmem:[#allocation3] sm:$0xff]
      %v1807 = vld [vmem:[#allocation3 + $0x8] sm:$0xff]
      %v1808 = vld [vmem:[#allocation3 + $0x10] sm:$0xff]
      %v1809 = vld [vmem:[#allocation3 + $0x18] sm:$0xff]
      %v1810 = vld [vmem:[#allocation3 + $0x20] sm:$0xff]
      %v1811 = vld [vmem:[#allocation3 + $0x28] sm:$0xff]
      %v1812 = vld [vmem:[#allocation3 + $0x30] sm:$0xff]
      %v1813 = vld [vmem:[#allocation3 + $0x38] sm:$0xff]
      %v1814 = vld [vmem:[#allocation3 + $0x40] sm:$0xff]
      %v1815 = vld [vmem:[#allocation3 + $0x48] sm:$0xff]
      %v1816 = vld [vmem:[#allocation3 + $0x50] sm:$0xff]
      %v1817 = vld [vmem:[#allocation3 + $0x58] sm:$0xff]
      %v1818 = vld [vmem:[#allocation3 + $0x60] sm:$0xff]
      %v1819 = vld [vmem:[#allocation3 + $0x68] sm:$0xff]
      %v1820 = vld [vmem:[#allocation3 + $0x70] sm:$0xff]
      %v1821 = vld [vmem:[#allocation3 + $0x78] sm:$0xff]
      %v1822 = vld [vmem:[#allocation3 + $0x80] sm:$0xff]
      %v1823 = vld [vmem:[#allocation3 + $0x88] sm:$0xff]
      %v1824 = vld [vmem:[#allocation3 + $0x90] sm:$0xff]
      %v1825 = vld [vmem:[#allocation3 + $0x98] sm:$0xff]
      %v1826 = vld [vmem:[#allocation3 + $0xa0] sm:$0xff]
      %v1827 = vld [vmem:[#allocation3 + $0xa8] sm:$0xff]
      %v1828 = vld [vmem:[#allocation3 + $0xb0] sm:$0xff]
      %v1829 = vld [vmem:[#allocation3 + $0xb8] sm:$0xff]
      %v1830 = vld [vmem:[#allocation3 + $0xc0] sm:$0xff]
      %v1831 = vld [vmem:[#allocation3 + $0xc8] sm:$0xff]
      %v1832 = vld [vmem:[#allocation3 + $0xd0] sm:$0xff]
      %v1833 = vld [vmem:[#allocation3 + $0xd8] sm:$0xff]
      %v1834 = vld [vmem:[#allocation3 + $0xe0] sm:$0xff]
      %v1835 = vld [vmem:[#allocation3 + $0xe8] sm:$0xff]
      %v1836 = vld [vmem:[#allocation3 + $0xf0] sm:$0xff]
      %v1837 = vld [vmem:[#allocation3 + $0xf8] sm:$0xff]
      %v1838 = vadd.f32 %v1806, %v1680
      %v1839 = vadd.f32 %v1807, %v1683
      %v1840 = vadd.f32 %v1808, %v1688
      %v1841 = vadd.f32 %v1809, %v1691
      %v1842 = vadd.f32 %v1810, %v1696
      %v1843 = vadd.f32 %v1811, %v1699
      %v1844 = vadd.f32 %v1812, %v1704
      %v1845 = vadd.f32 %v1813, %v1707
      %v1846 = vadd.f32 %v1814, %v1712
      %v1847 = vadd.f32 %v1815, %v1715
      %v1848 = vadd.f32 %v1816, %v1720
      %v1849 = vadd.f32 %v1817, %v1723
      %v1850 = vadd.f32 %v1818, %v1728
      %v1851 = vadd.f32 %v1819, %v1731
      %v1852 = vadd.f32 %v1820, %v1736
      %v1853 = vadd.f32 %v1821, %v1739
      %v1854 = vadd.f32 %v1822, %v1744
      %v1855 = vadd.f32 %v1823, %v1747
      %v1856 = vadd.f32 %v1824, %v1752
      %v1857 = vadd.f32 %v1825, %v1755
      %v1858 = vadd.f32 %v1826, %v1760
      %v1859 = vadd.f32 %v1827, %v1763
      %v1860 = vadd.f32 %v1828, %v1768
      %v1861 = vadd.f32 %v1829, %v1771
      %v1862 = vadd.f32 %v1830, %v1776
      %v1863 = vadd.f32 %v1831, %v1779
      %v1864 = vadd.f32 %v1832, %v1784
      %v1865 = vadd.f32 %v1833, %v1787
      %v1866 = vadd.f32 %v1834, %v1792
      %v1867 = vadd.f32 %v1835, %v1795
      %v1868 = vadd.f32 %v1836, %v1800
      %v1869 = vadd.f32 %v1837, %v1803
      %1870 = vst [vmem:[#allocation3] sm:$0xff] %v1838
      %1871 = vst [vmem:[#allocation3 + $0x8] sm:$0xff] %v1839
      %1872 = vst [vmem:[#allocation3 + $0x10] sm:$0xff] %v1840
      %1873 = vst [vmem:[#allocation3 + $0x18] sm:$0xff] %v1841
      %1874 = vst [vmem:[#allocation3 + $0x20] sm:$0xff] %v1842
      %1875 = vst [vmem:[#allocation3 + $0x28] sm:$0xff] %v1843
      %1876 = vst [vmem:[#allocation3 + $0x30] sm:$0xff] %v1844
      %1877 = vst [vmem:[#allocation3 + $0x38] sm:$0xff] %v1845
      %1878 = vst [vmem:[#allocation3 + $0x40] sm:$0xff] %v1846
      %1879 = vst [vmem:[#allocation3 + $0x48] sm:$0xff] %v1847
      %1880 = vst [vmem:[#allocation3 + $0x50] sm:$0xff] %v1848
      %1881 = vst [vmem:[#allocation3 + $0x58] sm:$0xff] %v1849
      %1882 = vst [vmem:[#allocation3 + $0x60] sm:$0xff] %v1850
      %1883 = vst [vmem:[#allocation3 + $0x68] sm:$0xff] %v1851
      %1884 = vst [vmem:[#allocation3 + $0x70] sm:$0xff] %v1852
      %1885 = vst [vmem:[#allocation3 + $0x78] sm:$0xff] %v1853
      %1886 = vst [vmem:[#allocation3 + $0x80] sm:$0xff] %v1854
      %1887 = vst [vmem:[#allocation3 + $0x88] sm:$0xff] %v1855
      %1888 = vst [vmem:[#allocation3 + $0x90] sm:$0xff] %v1856
      %1889 = vst [vmem:[#allocation3 + $0x98] sm:$0xff] %v1857
      %1890 = vst [vmem:[#allocation3 + $0xa0] sm:$0xff] %v1858
      %1891 = vst [vmem:[#allocation3 + $0xa8] sm:$0xff] %v1859
      %1892 = vst [vmem:[#allocation3 + $0xb0] sm:$0xff] %v1860
      %1893 = vst [vmem:[#allocation3 + $0xb8] sm:$0xff] %v1861
      %1894 = vst [vmem:[#allocation3 + $0xc0] sm:$0xff] %v1862
      %1895 = vst [vmem:[#allocation3 + $0xc8] sm:$0xff] %v1863
      %1896 = vst [vmem:[#allocation3 + $0xd0] sm:$0xff] %v1864
      %1897 = vst [vmem:[#allocation3 + $0xd8] sm:$0xff] %v1865
      %1898 = vst [vmem:[#allocation3 + $0xe0] sm:$0xff] %v1866
      %1899 = vst [vmem:[#allocation3 + $0xe8] sm:$0xff] %v1867
      %1900 = vst [vmem:[#allocation3 + $0xf0] sm:$0xff] %v1868
      %1901 = vst [vmem:[#allocation3 + $0xf8] sm:$0xff] %v1869
      %v1902 = vld [vmem:[%s454 + $0x1] sm:$0xff]
      %v1903 = vld [vmem:[%s454 + $0x9] sm:$0xff]
      %v1904 = vld [vmem:[%s454 + $0x19] sm:$0xff]
      %v1905 = vld [vmem:[%s454 + $0x21] sm:$0xff]
      %v1906 = vld [vmem:[%s454 + $0x31] sm:$0xff]
      %v1907 = vld [vmem:[%s454 + $0x39] sm:$0xff]
      %v1908 = vld [vmem:[%s454 + $0x49] sm:$0xff]
      %v1909 = vld [vmem:[%s454 + $0x51] sm:$0xff]
      %v1910 = vld [vmem:[%s454 + $0x61] sm:$0xff]
      %v1911 = vld [vmem:[%s454 + $0x69] sm:$0xff]
      %v1912 = vld [vmem:[%s454 + $0x79] sm:$0xff]
      %v1913 = vld [vmem:[%s454 + $0x81] sm:$0xff]
      %v1914 = vld [vmem:[%s454 + $0x91] sm:$0xff]
      %v1915 = vld [vmem:[%s454 + $0x99] sm:$0xff]
      %v1916 = vld [vmem:[%s454 + $0xa9] sm:$0xff]
      %v1917 = vld [vmem:[%s454 + $0xb1] sm:$0xff]
      %v1918 = vld [vmem:[%s454 + $0xc1] sm:$0xff]
      %v1919 = vld [vmem:[%s454 + $0xc9] sm:$0xff]
      %v1920 = vld [vmem:[%s454 + $0xd9] sm:$0xff]
      %v1921 = vld [vmem:[%s454 + $0xe1] sm:$0xff]
      %v1922 = vld [vmem:[%s454 + $0xf1] sm:$0xff]
      %v1923 = vld [vmem:[%s454 + $0xf9] sm:$0xff]
      %v1924 = vld [vmem:[%s454 + $0x109] sm:$0xff]
      %v1925 = vld [vmem:[%s454 + $0x111] sm:$0xff]
      %v1926 = vld [vmem:[%s454 + $0x121] sm:$0xff]
      %v1927 = vld [vmem:[%s454 + $0x129] sm:$0xff]
      %v1928 = vld [vmem:[%s454 + $0x139] sm:$0xff]
      %v1929 = vld [vmem:[%s454 + $0x141] sm:$0xff]
      %v1930 = vld [vmem:[%s454 + $0x151] sm:$0xff]
      %v1931 = vld [vmem:[%s454 + $0x159] sm:$0xff]
      %v1932 = vld [vmem:[%s454 + $0x169] sm:$0xff]
      %v1933 = vld [vmem:[%s454 + $0x171] sm:$0xff]
      %v1934 = vpack.c.bf16 %v1903, %v1902
      %v1935 = vpack.c.bf16 %v1905, %v1904
      %v1936 = vpack.c.bf16 %v1907, %v1906
      %v1937 = vpack.c.bf16 %v1909, %v1908
      %v1938 = vpack.c.bf16 %v1911, %v1910
      %v1939 = vpack.c.bf16 %v1913, %v1912
      %v1940 = vpack.c.bf16 %v1915, %v1914
      %v1941 = vpack.c.bf16 %v1917, %v1916
      %v1942 = vpack.c.bf16 %v1919, %v1918
      %v1943 = vpack.c.bf16 %v1921, %v1920
      %v1944 = vpack.c.bf16 %v1923, %v1922
      %v1945 = vpack.c.bf16 %v1925, %v1924
      %v1946 = vpack.c.bf16 %v1927, %v1926
      %v1947 = vpack.c.bf16 %v1929, %v1928
      %v1948 = vpack.c.bf16 %v1931, %v1930
      %v1949 = vpack.c.bf16 %v1933, %v1932
      %s1950 = scalar_lea.vmem %s3, 256
      %v1951 = vld [vmem:[%s1950] sm:$0xf]
      %v1952 = vld [vmem:[%s1950 + $0x4] sm:$0xf]
      %v1953 = vld [vmem:[%s1950 + $0x8] sm:$0xf]
      %v1954 = vld [vmem:[%s1950 + $0xc] sm:$0xf]
      %v1955 = vld [vmem:[%s1950 + $0x10] sm:$0xf]
      %v1956 = vld [vmem:[%s1950 + $0x14] sm:$0xf]
      %v1957 = vld [vmem:[%s1950 + $0x18] sm:$0xf]
      %v1958 = vld [vmem:[%s1950 + $0x1c] sm:$0xf]
      %v1959 = vld [vmem:[%s1950 + $0x20] sm:$0xf]
      %v1960 = vld [vmem:[%s1950 + $0x24] sm:$0xf]
      %v1961 = vld [vmem:[%s1950 + $0x28] sm:$0xf]
      %v1962 = vld [vmem:[%s1950 + $0x2c] sm:$0xf]
      %v1963 = vld [vmem:[%s1950 + $0x30] sm:$0xf]
      %v1964 = vld [vmem:[%s1950 + $0x34] sm:$0xf]
      %v1965 = vld [vmem:[%s1950 + $0x38] sm:$0xf]
      %v1966 = vld [vmem:[%s1950 + $0x3c] sm:$0xf]
      %v1983 = vunpack.c.l.b16 %v1951
      %v1984 = vunpack.c.l.b16 %v1952
      %v1985 = vunpack.c.l.b16 %v1953
      %v1986 = vunpack.c.l.b16 %v1954
      %v1987 = vunpack.c.l.b16 %v1955
      %v1988 = vunpack.c.l.b16 %v1956
      %v1989 = vunpack.c.l.b16 %v1957
      %v1990 = vunpack.c.l.b16 %v1958
      %v1991 = vunpack.c.l.b16 %v1959
      %v1992 = vunpack.c.l.b16 %v1960
      %v1993 = vunpack.c.l.b16 %v1961
      %v1994 = vunpack.c.l.b16 %v1962
      %v1995 = vunpack.c.l.b16 %v1963
      %v1996 = vunpack.c.l.b16 %v1964
      %v1997 = vunpack.c.l.b16 %v1965
      %v1998 = vunpack.c.l.b16 %v1966
      %v1999 = vpack.c.b16 %v1984, %v1983
      %v2000 = vpack.c.b16 %v1986, %v1985
      %v2001 = vpack.c.b16 %v1988, %v1987
      %v2002 = vpack.c.b16 %v1990, %v1989
      %v2003 = vpack.c.b16 %v1992, %v1991
      %v2004 = vpack.c.b16 %v1994, %v1993
      %v2005 = vpack.c.b16 %v1996, %v1995
      %v2006 = vpack.c.b16 %v1998, %v1997
      %2015 = vmatprep.subr.bf16.mxu0 0
      %2016 = vmatpush1.bf16.msra.mxu0 %v1999
      %2017 = vmatprep.subr.bf16.mxu0 0
      %2018 = vmatpush1.bf16.msra.mxu0 %v2000
      %2019 = vmatprep.subr.bf16.mxu0 0
      %2020 = vmatpush1.bf16.msra.mxu0 %v2001
      %2021 = vmatprep.subr.bf16.mxu0 0
      %2022 = vmatpush1.bf16.msra.mxu0 %v2002
      %2023 = vmatprep.subr.bf16.mxu0 0
      %2024 = vmatpush1.bf16.msra.mxu0 %v2003
      %2025 = vmatprep.subr.bf16.mxu0 0
      %2026 = vmatpush1.bf16.msra.mxu0 %v2004
      %2027 = vmatprep.subr.bf16.mxu0 0
      %2028 = vmatpush1.bf16.msra.mxu0 %v2005
      %2029 = vmatprep.subr.bf16.mxu0 0
      %2030 = vmatpush1.bf16.msra.mxu0 %v2006
      %2031 = vmatprep.subr.bf16.mxu0 0
      %2032 = vmatpush1.bf16.msra.mxu0 0
      %2033 = vmatprep.subr.bf16.mxu0 0
      %2034 = vmatpush1.bf16.msra.mxu0 0
      %2035 = vmatprep.subr.bf16.mxu0 0
      %2036 = vmatpush1.bf16.msra.mxu0 0
      %2037 = vmatprep.subr.bf16.mxu0 0
      %2038 = vmatpush1.bf16.msra.mxu0 0
      %2039 = vmatprep.subr.bf16.mxu0 0
      %2040 = vmatpush1.bf16.msra.mxu0 0
      %2041 = vmatprep.subr.bf16.mxu0 0
      %2042 = vmatpush1.bf16.msra.mxu0 0
      %2043 = vmatprep.subr.bf16.mxu0 0
      %2044 = vmatpush1.bf16.msra.mxu0 0
      %2045 = vmatprep.subr.bf16.mxu0 0
      %2046 = vmatpush1.bf16.msra.mxu0 0
      %2047 = vmatprep.mubr.bf16.mxu0 0
      %2048 = vmatmul.mubr.bf16.gmra.mrb[0].mxu0 %v1934
      %v2049 = vpop.f32.mrb[0].mxu0
      %v2050 = vadd.f32 0.0, %v2049
      %v2051 = vpop.f32.mrb[0].mxu0
      %v2052 = vpop.f32.mrb[0].mxu0
      %v2053 = vadd.f32 0.0, %v2052
      %v2054 = vpop.f32.mrb[0].mxu0
      %2055 = vmatprep.mubr.bf16.mxu0 0
      %2056 = vmatmul.mubr.bf16.gmra.mrb[0].mxu0 %v1935
      %v2057 = vpop.f32.mrb[0].mxu0
      %v2058 = vadd.f32 0.0, %v2057
      %v2059 = vpop.f32.mrb[0].mxu0
      %v2060 = vpop.f32.mrb[0].mxu0
      %v2061 = vadd.f32 0.0, %v2060
      %v2062 = vpop.f32.mrb[0].mxu0
      %2063 = vmatprep.mubr.bf16.mxu0 0
      %2064 = vmatmul.mubr.bf16.gmra.mrb[0].mxu0 %v1936
      %v2065 = vpop.f32.mrb[0].mxu0
      %v2066 = vadd.f32 0.0, %v2065
      %v2067 = vpop.f32.mrb[0].mxu0
      %v2068 = vpop.f32.mrb[0].mxu0
      %v2069 = vadd.f32 0.0, %v2068
      %v2070 = vpop.f32.mrb[0].mxu0
      %2071 = vmatprep.mubr.bf16.mxu0 0
      %2072 = vmatmul.mubr.bf16.gmra.mrb[0].mxu0 %v1937
      %v2073 = vpop.f32.mrb[0].mxu0
      %v2074 = vadd.f32 0.0, %v2073
      %v2075 = vpop.f32.mrb[0].mxu0
      %v2076 = vpop.f32.mrb[0].mxu0
      %v2077 = vadd.f32 0.0, %v2076
      %v2078 = vpop.f32.mrb[0].mxu0
      %2079 = vmatprep.mubr.bf16.mxu0 0
      %2080 = vmatmul.mubr.bf16.gmra.mrb[0].mxu0 %v1938
      %v2081 = vpop.f32.mrb[0].mxu0
      %v2082 = vadd.f32 0.0, %v2081
      %v2083 = vpop.f32.mrb[0].mxu0
      %v2084 = vpop.f32.mrb[0].mxu0
      %v2085 = vadd.f32 0.0, %v2084
      %v2086 = vpop.f32.mrb[0].mxu0
      %2087 = vmatprep.mubr.bf16.mxu0 0
      %2088 = vmatmul.mubr.bf16.gmra.mrb[0].mxu0 %v1939
      %v2089 = vpop.f32.mrb[0].mxu0
      %v2090 = vadd.f32 0.0, %v2089
      %v2091 = vpop.f32.mrb[0].mxu0
      %v2092 = vpop.f32.mrb[0].mxu0
      %v2093 = vadd.f32 0.0, %v2092
      %v2094 = vpop.f32.mrb[0].mxu0
      %2095 = vmatprep.mubr.bf16.mxu0 0
      %2096 = vmatmul.mubr.bf16.gmra.mrb[0].mxu0 %v1940
      %v2097 = vpop.f32.mrb[0].mxu0
      %v2098 = vadd.f32 0.0, %v2097
      %v2099 = vpop.f32.mrb[0].mxu0
      %v2100 = vpop.f32.mrb[0].mxu0
      %v2101 = vadd.f32 0.0, %v2100
      %v2102 = vpop.f32.mrb[0].mxu0
      %2103 = vmatprep.mubr.bf16.mxu0 0
      %2104 = vmatmul.mubr.bf16.gmra.mrb[0].mxu0 %v1941
      %v2105 = vpop.f32.mrb[0].mxu0
      %v2106 = vadd.f32 0.0, %v2105
      %v2107 = vpop.f32.mrb[0].mxu0
      %v2108 = vpop.f32.mrb[0].mxu0
      %v2109 = vadd.f32 0.0, %v2108
      %v2110 = vpop.f32.mrb[0].mxu0
      %2111 = vmatprep.mubr.bf16.mxu0 0
      %2112 = vmatmul.mubr.bf16.gmra.mrb[0].mxu0 %v1942
      %v2113 = vpop.f32.mrb[0].mxu0
      %v2114 = vadd.f32 0.0, %v2113
      %v2115 = vpop.f32.mrb[0].mxu0
      %v2116 = vpop.f32.mrb[0].mxu0
      %v2117 = vadd.f32 0.0, %v2116
      %v2118 = vpop.f32.mrb[0].mxu0
      %2119 = vmatprep.mubr.bf16.mxu0 0
      %2120 = vmatmul.mubr.bf16.gmra.mrb[0].mxu0 %v1943
      %v2121 = vpop.f32.mrb[0].mxu0
      %v2122 = vadd.f32 0.0, %v2121
      %v2123 = vpop.f32.mrb[0].mxu0
      %v2124 = vpop.f32.mrb[0].mxu0
      %v2125 = vadd.f32 0.0, %v2124
      %v2126 = vpop.f32.mrb[0].mxu0
      %2127 = vmatprep.mubr.bf16.mxu0 0
      %2128 = vmatmul.mubr.bf16.gmra.mrb[0].mxu0 %v1944
      %v2129 = vpop.f32.mrb[0].mxu0
      %v2130 = vadd.f32 0.0, %v2129
      %v2131 = vpop.f32.mrb[0].mxu0
      %v2132 = vpop.f32.mrb[0].mxu0
      %v2133 = vadd.f32 0.0, %v2132
      %v2134 = vpop.f32.mrb[0].mxu0
      %2135 = vmatprep.mubr.bf16.mxu0 0
      %2136 = vmatmul.mubr.bf16.gmra.mrb[0].mxu0 %v1945
      %v2137 = vpop.f32.mrb[0].mxu0
      %v2138 = vadd.f32 0.0, %v2137
      %v2139 = vpop.f32.mrb[0].mxu0
      %v2140 = vpop.f32.mrb[0].mxu0
      %v2141 = vadd.f32 0.0, %v2140
      %v2142 = vpop.f32.mrb[0].mxu0
      %2143 = vmatprep.mubr.bf16.mxu0 0
      %2144 = vmatmul.mubr.bf16.gmra.mrb[0].mxu0 %v1946
      %v2145 = vpop.f32.mrb[0].mxu0
      %v2146 = vadd.f32 0.0, %v2145
      %v2147 = vpop.f32.mrb[0].mxu0
      %v2148 = vpop.f32.mrb[0].mxu0
      %v2149 = vadd.f32 0.0, %v2148
      %v2150 = vpop.f32.mrb[0].mxu0
      %2151 = vmatprep.mubr.bf16.mxu0 0
      %2152 = vmatmul.mubr.bf16.gmra.mrb[0].mxu0 %v1947
      %v2153 = vpop.f32.mrb[0].mxu0
      %v2154 = vadd.f32 0.0, %v2153
      %v2155 = vpop.f32.mrb[0].mxu0
      %v2156 = vpop.f32.mrb[0].mxu0
      %v2157 = vadd.f32 0.0, %v2156
      %v2158 = vpop.f32.mrb[0].mxu0
      %2159 = vmatprep.mubr.bf16.mxu0 0
      %2160 = vmatmul.mubr.bf16.gmra.mrb[0].mxu0 %v1948
      %v2161 = vpop.f32.mrb[0].mxu0
      %v2162 = vadd.f32 0.0, %v2161
      %v2163 = vpop.f32.mrb[0].mxu0
      %v2164 = vpop.f32.mrb[0].mxu0
      %v2165 = vadd.f32 0.0, %v2164
      %v2166 = vpop.f32.mrb[0].mxu0
      %2167 = vmatprep.mubr.bf16.mxu0 0
      %2168 = vmatmul.mubr.bf16.gmra.mrb[0].mxu0 %v1949
      %v2169 = vpop.f32.mrb[0].mxu0
      %v2170 = vadd.f32 0.0, %v2169
      %v2171 = vpop.f32.mrb[0].mxu0
      %v2172 = vpop.f32.mrb[0].mxu0
      %v2173 = vadd.f32 0.0, %v2172
      %v2174 = vpop.f32.mrb[0].mxu0
      %2175 = vdwg.mxu0
      %v2176 = vld [vmem:[#allocation3] sm:$0xff]
      %v2177 = vld [vmem:[#allocation3 + $0x8] sm:$0xff]
      %v2178 = vld [vmem:[#allocation3 + $0x10] sm:$0xff]
      %v2179 = vld [vmem:[#allocation3 + $0x18] sm:$0xff]
      %v2180 = vld [vmem:[#allocation3 + $0x20] sm:$0xff]
      %v2181 = vld [vmem:[#allocation3 + $0x28] sm:$0xff]
      %v2182 = vld [vmem:[#allocation3 + $0x30] sm:$0xff]
      %v2183 = vld [vmem:[#allocation3 + $0x38] sm:$0xff]
      %v2184 = vld [vmem:[#allocation3 + $0x40] sm:$0xff]
      %v2185 = vld [vmem:[#allocation3 + $0x48] sm:$0xff]
      %v2186 = vld [vmem:[#allocation3 + $0x50] sm:$0xff]
      %v2187 = vld [vmem:[#allocation3 + $0x58] sm:$0xff]
      %v2188 = vld [vmem:[#allocation3 + $0x60] sm:$0xff]
      %v2189 = vld [vmem:[#allocation3 + $0x68] sm:$0xff]
      %v2190 = vld [vmem:[#allocation3 + $0x70] sm:$0xff]
      %v2191 = vld [vmem:[#allocation3 + $0x78] sm:$0xff]
      %v2192 = vld [vmem:[#allocation3 + $0x80] sm:$0xff]
      %v2193 = vld [vmem:[#allocation3 + $0x88] sm:$0xff]
      %v2194 = vld [vmem:[#allocation3 + $0x90] sm:$0xff]
      %v2195 = vld [vmem:[#allocation3 + $0x98] sm:$0xff]
      %v2196 = vld [vmem:[#allocation3 + $0xa0] sm:$0xff]
      %v2197 = vld [vmem:[#allocation3 + $0xa8] sm:$0xff]
      %v2198 = vld [vmem:[#allocation3 + $0xb0] sm:$0xff]
      %v2199 = vld [vmem:[#allocation3 + $0xb8] sm:$0xff]
      %v2200 = vld [vmem:[#allocation3 + $0xc0] sm:$0xff]
      %v2201 = vld [vmem:[#allocation3 + $0xc8] sm:$0xff]
      %v2202 = vld [vmem:[#allocation3 + $0xd0] sm:$0xff]
      %v2203 = vld [vmem:[#allocation3 + $0xd8] sm:$0xff]
      %v2204 = vld [vmem:[#allocation3 + $0xe0] sm:$0xff]
      %v2205 = vld [vmem:[#allocation3 + $0xe8] sm:$0xff]
      %v2206 = vld [vmem:[#allocation3 + $0xf0] sm:$0xff]
      %v2207 = vld [vmem:[#allocation3 + $0xf8] sm:$0xff]
      %v2208 = vadd.f32 %v2176, %v2050
      %v2209 = vadd.f32 %v2177, %v2053
      %v2210 = vadd.f32 %v2178, %v2058
      %v2211 = vadd.f32 %v2179, %v2061
      %v2212 = vadd.f32 %v2180, %v2066
      %v2213 = vadd.f32 %v2181, %v2069
      %v2214 = vadd.f32 %v2182, %v2074
      %v2215 = vadd.f32 %v2183, %v2077
      %v2216 = vadd.f32 %v2184, %v2082
      %v2217 = vadd.f32 %v2185, %v2085
      %v2218 = vadd.f32 %v2186, %v2090
      %v2219 = vadd.f32 %v2187, %v2093
      %v2220 = vadd.f32 %v2188, %v2098
      %v2221 = vadd.f32 %v2189, %v2101
      %v2222 = vadd.f32 %v2190, %v2106
      %v2223 = vadd.f32 %v2191, %v2109
      %v2224 = vadd.f32 %v2192, %v2114
      %v2225 = vadd.f32 %v2193, %v2117
      %v2226 = vadd.f32 %v2194, %v2122
      %v2227 = vadd.f32 %v2195, %v2125
      %v2228 = vadd.f32 %v2196, %v2130
      %v2229 = vadd.f32 %v2197, %v2133
      %v2230 = vadd.f32 %v2198, %v2138
      %v2231 = vadd.f32 %v2199, %v2141
      %v2232 = vadd.f32 %v2200, %v2146
      %v2233 = vadd.f32 %v2201, %v2149
      %v2234 = vadd.f32 %v2202, %v2154
      %v2235 = vadd.f32 %v2203, %v2157
      %v2236 = vadd.f32 %v2204, %v2162
      %v2237 = vadd.f32 %v2205, %v2165
      %v2238 = vadd.f32 %v2206, %v2170
      %v2239 = vadd.f32 %v2207, %v2173
      %2240 = vst [vmem:[#allocation3] sm:$0xff] %v2208
      %2241 = vst [vmem:[#allocation3 + $0x8] sm:$0xff] %v2209
      %2242 = vst [vmem:[#allocation3 + $0x10] sm:$0xff] %v2210
      %2243 = vst [vmem:[#allocation3 + $0x18] sm:$0xff] %v2211
      %2244 = vst [vmem:[#allocation3 + $0x20] sm:$0xff] %v2212
      %2245 = vst [vmem:[#allocation3 + $0x28] sm:$0xff] %v2213
      %2246 = vst [vmem:[#allocation3 + $0x30] sm:$0xff] %v2214
      %2247 = vst [vmem:[#allocation3 + $0x38] sm:$0xff] %v2215
      %2248 = vst [vmem:[#allocation3 + $0x40] sm:$0xff] %v2216
      %2249 = vst [vmem:[#allocation3 + $0x48] sm:$0xff] %v2217
      %2250 = vst [vmem:[#allocation3 + $0x50] sm:$0xff] %v2218
      %2251 = vst [vmem:[#allocation3 + $0x58] sm:$0xff] %v2219
      %2252 = vst [vmem:[#allocation3 + $0x60] sm:$0xff] %v2220
      %2253 = vst [vmem:[#allocation3 + $0x68] sm:$0xff] %v2221
      %2254 = vst [vmem:[#allocation3 + $0x70] sm:$0xff] %v2222
      %2255 = vst [vmem:[#allocation3 + $0x78] sm:$0xff] %v2223
      %2256 = vst [vmem:[#allocation3 + $0x80] sm:$0xff] %v2224
      %2257 = vst [vmem:[#allocation3 + $0x88] sm:$0xff] %v2225
      %2258 = vst [vmem:[#allocation3 + $0x90] sm:$0xff] %v2226
      %2259 = vst [vmem:[#allocation3 + $0x98] sm:$0xff] %v2227
      %2260 = vst [vmem:[#allocation3 + $0xa0] sm:$0xff] %v2228
      %2261 = vst [vmem:[#allocation3 + $0xa8] sm:$0xff] %v2229
      %2262 = vst [vmem:[#allocation3 + $0xb0] sm:$0xff] %v2230
      %2263 = vst [vmem:[#allocation3 + $0xb8] sm:$0xff] %v2231
      %2264 = vst [vmem:[#allocation3 + $0xc0] sm:$0xff] %v2232
      %2265 = vst [vmem:[#allocation3 + $0xc8] sm:$0xff] %v2233
      %2266 = vst [vmem:[#allocation3 + $0xd0] sm:$0xff] %v2234
      %2267 = vst [vmem:[#allocation3 + $0xd8] sm:$0xff] %v2235
      %2268 = vst [vmem:[#allocation3 + $0xe0] sm:$0xff] %v2236
      %2269 = vst [vmem:[#allocation3 + $0xe8] sm:$0xff] %v2237
      %2270 = vst [vmem:[#allocation3 + $0xf0] sm:$0xff] %v2238
      %2271 = vst [vmem:[#allocation3 + $0xf8] sm:$0xff] %v2239
      %v2272 = vld [vmem:[%s454 + $0x2] sm:$0xff]
      %v2273 = vld [vmem:[%s454 + $0xa] sm:$0xff]
      %v2274 = vld [vmem:[%s454 + $0x1a] sm:$0xff]
      %v2275 = vld [vmem:[%s454 + $0x22] sm:$0xff]
      %v2276 = vld [vmem:[%s454 + $0x32] sm:$0xff]
      %v2277 = vld [vmem:[%s454 + $0x3a] sm:$0xff]
      %v2278 = vld [vmem:[%s454 + $0x4a] sm:$0xff]
      %v2279 = vld [vmem:[%s454 + $0x52] sm:$0xff]
      %v2280 = vld [vmem:[%s454 + $0x62] sm:$0xff]
      %v2281 = vld [vmem:[%s454 + $0x6a] sm:$0xff]
      %v2282 = vld [vmem:[%s454 + $0x7a] sm:$0xff]
      %v2283 = vld [vmem:[%s454 + $0x82] sm:$0xff]
      %v2284 = vld [vmem:[%s454 + $0x92] sm:$0xff]
      %v2285 = vld [vmem:[%s454 + $0x9a] sm:$0xff]
      %v2286 = vld [vmem:[%s454 + $0xaa] sm:$0xff]
      %v2287 = vld [vmem:[%s454 + $0xb2] sm:$0xff]
      %v2288 = vld [vmem:[%s454 + $0xc2] sm:$0xff]
      %v2289 = vld [vmem:[%s454 + $0xca] sm:$0xff]
      %v2290 = vld [vmem:[%s454 + $0xda] sm:$0xff]
      %v2291 = vld [vmem:[%s454 + $0xe2] sm:$0xff]
      %v2292 = vld [vmem:[%s454 + $0xf2] sm:$0xff]
      %v2293 = vld [vmem:[%s454 + $0xfa] sm:$0xff]
      %v2294 = vld [vmem:[%s454 + $0x10a] sm:$0xff]
      %v2295 = vld [vmem:[%s454 + $0x112] sm:$0xff]
      %v2296 = vld [vmem:[%s454 + $0x122] sm:$0xff]
      %v2297 = vld [vmem:[%s454 + $0x12a] sm:$0xff]
      %v2298 = vld [vmem:[%s454 + $0x13a] sm:$0xff]
      %v2299 = vld [vmem:[%s454 + $0x142] sm:$0xff]
      %v2300 = vld [vmem:[%s454 + $0x152] sm:$0xff]
      %v2301 = vld [vmem:[%s454 + $0x15a] sm:$0xff]
      %v2302 = vld [vmem:[%s454 + $0x16a] sm:$0xff]
      %v2303 = vld [vmem:[%s454 + $0x172] sm:$0xff]
      %v2304 = vpack.c.bf16 %v2273, %v2272
      %v2305 = vpack.c.bf16 %v2275, %v2274
      %v2306 = vpack.c.bf16 %v2277, %v2276
      %v2307 = vpack.c.bf16 %v2279, %v2278
      %v2308 = vpack.c.bf16 %v2281, %v2280
      %v2309 = vpack.c.bf16 %v2283, %v2282
      %v2310 = vpack.c.bf16 %v2285, %v2284
      %v2311 = vpack.c.bf16 %v2287, %v2286
      %v2312 = vpack.c.bf16 %v2289, %v2288
      %v2313 = vpack.c.bf16 %v2291, %v2290
      %v2314 = vpack.c.bf16 %v2293, %v2292
      %v2315 = vpack.c.bf16 %v2295, %v2294
      %v2316 = vpack.c.bf16 %v2297, %v2296
      %v2317 = vpack.c.bf16 %v2299, %v2298
      %v2318 = vpack.c.bf16 %v2301, %v2300
      %v2319 = vpack.c.bf16 %v2303, %v2302
      %s2320 = scalar_lea.vmem %s3, 320
      %v2321 = vld [vmem:[%s2320] sm:$0xf]
      %v2322 = vld [vmem:[%s2320 + $0x4] sm:$0xf]
      %v2323 = vld [vmem:[%s2320 + $0x8] sm:$0xf]
      %v2324 = vld [vmem:[%s2320 + $0xc] sm:$0xf]
      %v2325 = vld [vmem:[%s2320 + $0x10] sm:$0xf]
      %v2326 = vld [vmem:[%s2320 + $0x14] sm:$0xf]
      %v2327 = vld [vmem:[%s2320 + $0x18] sm:$0xf]
      %v2328 = vld [vmem:[%s2320 + $0x1c] sm:$0xf]
      %v2329 = vld [vmem:[%s2320 + $0x20] sm:$0xf]
      %v2330 = vld [vmem:[%s2320 + $0x24] sm:$0xf]
      %v2331 = vld [vmem:[%s2320 + $0x28] sm:$0xf]
      %v2332 = vld [vmem:[%s2320 + $0x2c] sm:$0xf]
      %v2333 = vld [vmem:[%s2320 + $0x30] sm:$0xf]
      %v2334 = vld [vmem:[%s2320 + $0x34] sm:$0xf]
      %v2335 = vld [vmem:[%s2320 + $0x38] sm:$0xf]
      %v2336 = vld [vmem:[%s2320 + $0x3c] sm:$0xf]
      %v2353 = vunpack.c.l.b16 %v2321
      %v2354 = vunpack.c.l.b16 %v2322
      %v2355 = vunpack.c.l.b16 %v2323
      %v2356 = vunpack.c.l.b16 %v2324
      %v2357 = vunpack.c.l.b16 %v2325
      %v2358 = vunpack.c.l.b16 %v2326
      %v2359 = vunpack.c.l.b16 %v2327
      %v2360 = vunpack.c.l.b16 %v2328
      %v2361 = vunpack.c.l.b16 %v2329
      %v2362 = vunpack.c.l.b16 %v2330
      %v2363 = vunpack.c.l.b16 %v2331
      %v2364 = vunpack.c.l.b16 %v2332
      %v2365 = vunpack.c.l.b16 %v2333
      %v2366 = vunpack.c.l.b16 %v2334
      %v2367 = vunpack.c.l.b16 %v2335
      %v2368 = vunpack.c.l.b16 %v2336
      %v2369 = vpack.c.b16 %v2354, %v2353
      %v2370 = vpack.c.b16 %v2356, %v2355
      %v2371 = vpack.c.b16 %v2358, %v2357
      %v2372 = vpack.c.b16 %v2360, %v2359
      %v2373 = vpack.c.b16 %v2362, %v2361
      %v2374 = vpack.c.b16 %v2364, %v2363
      %v2375 = vpack.c.b16 %v2366, %v2365
      %v2376 = vpack.c.b16 %v2368, %v2367
      %2385 = vmatprep.subr.bf16.mxu0 0
      %2386 = vmatpush1.bf16.msra.mxu0 %v2369
      %2387 = vmatprep.subr.bf16.mxu0 0
      %2388 = vmatpush1.bf16.msra.mxu0 %v2370
      %2389 = vmatprep.subr.bf16.mxu0 0
      %2390 = vmatpush1.bf16.msra.mxu0 %v2371
      %2391 = vmatprep.subr.bf16.mxu0 0
      %2392 = vmatpush1.bf16.msra.mxu0 %v2372
      %2393 = vmatprep.subr.bf16.mxu0 0
      %2394 = vmatpush1.bf16.msra.mxu0 %v2373
      %2395 = vmatprep.subr.bf16.mxu0 0
      %2396 = vmatpush1.bf16.msra.mxu0 %v2374
      %2397 = vmatprep.subr.bf16.mxu0 0
      %2398 = vmatpush1.bf16.msra.mxu0 %v2375
      %2399 = vmatprep.subr.bf16.mxu0 0
      %2400 = vmatpush1.bf16.msra.mxu0 %v2376
      %2401 = vmatprep.subr.bf16.mxu0 0
      %2402 = vmatpush1.bf16.msra.mxu0 0
      %2403 = vmatprep.subr.bf16.mxu0 0
      %2404 = vmatpush1.bf16.msra.mxu0 0
      %2405 = vmatprep.subr.bf16.mxu0 0
      %2406 = vmatpush1.bf16.msra.mxu0 0
      %2407 = vmatprep.subr.bf16.mxu0 0
      %2408 = vmatpush1.bf16.msra.mxu0 0
      %2409 = vmatprep.subr.bf16.mxu0 0
      %2410 = vmatpush1.bf16.msra.mxu0 0
      %2411 = vmatprep.subr.bf16.mxu0 0
      %2412 = vmatpush1.bf16.msra.mxu0 0
      %2413 = vmatprep.subr.bf16.mxu0 0
      %2414 = vmatpush1.bf16.msra.mxu0 0
      %2415 = vmatprep.subr.bf16.mxu0 0
      %2416 = vmatpush1.bf16.msra.mxu0 0
      %2417 = vmatprep.mubr.bf16.mxu0 0
      %2418 = vmatmul.mubr.bf16.gmra.mrb[0].mxu0 %v2304
      %v2419 = vpop.f32.mrb[0].mxu0
      %v2420 = vadd.f32 0.0, %v2419
      %v2421 = vpop.f32.mrb[0].mxu0
      %v2422 = vpop.f32.mrb[0].mxu0
      %v2423 = vadd.f32 0.0, %v2422
      %v2424 = vpop.f32.mrb[0].mxu0
      %2425 = vmatprep.mubr.bf16.mxu0 0
      %2426 = vmatmul.mubr.bf16.gmra.mrb[0].mxu0 %v2305
      %v2427 = vpop.f32.mrb[0].mxu0
      %v2428 = vadd.f32 0.0, %v2427
      %v2429 = vpop.f32.mrb[0].mxu0
      %v2430 = vpop.f32.mrb[0].mxu0
      %v2431 = vadd.f32 0.0, %v2430
      %v2432 = vpop.f32.mrb[0].mxu0
      %2433 = vmatprep.mubr.bf16.mxu0 0
      %2434 = vmatmul.mubr.bf16.gmra.mrb[0].mxu0 %v2306
      %v2435 = vpop.f32.mrb[0].mxu0
      %v2436 = vadd.f32 0.0, %v2435
      %v2437 = vpop.f32.mrb[0].mxu0
      %v2438 = vpop.f32.mrb[0].mxu0
      %v2439 = vadd.f32 0.0, %v2438
      %v2440 = vpop.f32.mrb[0].mxu0
      %2441 = vmatprep.mubr.bf16.mxu0 0
      %2442 = vmatmul.mubr.bf16.gmra.mrb[0].mxu0 %v2307
      %v2443 = vpop.f32.mrb[0].mxu0
      %v2444 = vadd.f32 0.0, %v2443
      %v2445 = vpop.f32.mrb[0].mxu0
      %v2446 = vpop.f32.mrb[0].mxu0
      %v2447 = vadd.f32 0.0, %v2446
      %v2448 = vpop.f32.mrb[0].mxu0
      %2449 = vmatprep.mubr.bf16.mxu0 0
      %2450 = vmatmul.mubr.bf16.gmra.mrb[0].mxu0 %v2308
      %v2451 = vpop.f32.mrb[0].mxu0
      %v2452 = vadd.f32 0.0, %v2451
      %v2453 = vpop.f32.mrb[0].mxu0
      %v2454 = vpop.f32.mrb[0].mxu0
      %v2455 = vadd.f32 0.0, %v2454
      %v2456 = vpop.f32.mrb[0].mxu0
      %2457 = vmatprep.mubr.bf16.mxu0 0
      %2458 = vmatmul.mubr.bf16.gmra.mrb[0].mxu0 %v2309
      %v2459 = vpop.f32.mrb[0].mxu0
      %v2460 = vadd.f32 0.0, %v2459
      %v2461 = vpop.f32.mrb[0].mxu0
      %v2462 = vpop.f32.mrb[0].mxu0
      %v2463 = vadd.f32 0.0, %v2462
      %v2464 = vpop.f32.mrb[0].mxu0
      %2465 = vmatprep.mubr.bf16.mxu0 0
      %2466 = vmatmul.mubr.bf16.gmra.mrb[0].mxu0 %v2310
      %v2467 = vpop.f32.mrb[0].mxu0
      %v2468 = vadd.f32 0.0, %v2467
      %v2469 = vpop.f32.mrb[0].mxu0
      %v2470 = vpop.f32.mrb[0].mxu0
      %v2471 = vadd.f32 0.0, %v2470
      %v2472 = vpop.f32.mrb[0].mxu0
      %2473 = vmatprep.mubr.bf16.mxu0 0
      %2474 = vmatmul.mubr.bf16.gmra.mrb[0].mxu0 %v2311
      %v2475 = vpop.f32.mrb[0].mxu0
      %v2476 = vadd.f32 0.0, %v2475
      %v2477 = vpop.f32.mrb[0].mxu0
      %v2478 = vpop.f32.mrb[0].mxu0
      %v2479 = vadd.f32 0.0, %v2478
      %v2480 = vpop.f32.mrb[0].mxu0
      %2481 = vmatprep.mubr.bf16.mxu0 0
      %2482 = vmatmul.mubr.bf16.gmra.mrb[0].mxu0 %v2312
      %v2483 = vpop.f32.mrb[0].mxu0
      %v2484 = vadd.f32 0.0, %v2483
      %v2485 = vpop.f32.mrb[0].mxu0
      %v2486 = vpop.f32.mrb[0].mxu0
      %v2487 = vadd.f32 0.0, %v2486
      %v2488 = vpop.f32.mrb[0].mxu0
      %2489 = vmatprep.mubr.bf16.mxu0 0
      %2490 = vmatmul.mubr.bf16.gmra.mrb[0].mxu0 %v2313
      %v2491 = vpop.f32.mrb[0].mxu0
      %v2492 = vadd.f32 0.0, %v2491
      %v2493 = vpop.f32.mrb[0].mxu0
      %v2494 = vpop.f32.mrb[0].mxu0
      %v2495 = vadd.f32 0.0, %v2494
      %v2496 = vpop.f32.mrb[0].mxu0
      %2497 = vmatprep.mubr.bf16.mxu0 0
      %2498 = vmatmul.mubr.bf16.gmra.mrb[0].mxu0 %v2314
      %v2499 = vpop.f32.mrb[0].mxu0
      %v2500 = vadd.f32 0.0, %v2499
      %v2501 = vpop.f32.mrb[0].mxu0
      %v2502 = vpop.f32.mrb[0].mxu0
      %v2503 = vadd.f32 0.0, %v2502
      %v2504 = vpop.f32.mrb[0].mxu0
      %2505 = vmatprep.mubr.bf16.mxu0 0
      %2506 = vmatmul.mubr.bf16.gmra.mrb[0].mxu0 %v2315
      %v2507 = vpop.f32.mrb[0].mxu0
      %v2508 = vadd.f32 0.0, %v2507
      %v2509 = vpop.f32.mrb[0].mxu0
      %v2510 = vpop.f32.mrb[0].mxu0
      %v2511 = vadd.f32 0.0, %v2510
      %v2512 = vpop.f32.mrb[0].mxu0
      %2513 = vmatprep.mubr.bf16.mxu0 0
      %2514 = vmatmul.mubr.bf16.gmra.mrb[0].mxu0 %v2316
      %v2515 = vpop.f32.mrb[0].mxu0
      %v2516 = vadd.f32 0.0, %v2515
      %v2517 = vpop.f32.mrb[0].mxu0
      %v2518 = vpop.f32.mrb[0].mxu0
      %v2519 = vadd.f32 0.0, %v2518
      %v2520 = vpop.f32.mrb[0].mxu0
      %2521 = vmatprep.mubr.bf16.mxu0 0
      %2522 = vmatmul.mubr.bf16.gmra.mrb[0].mxu0 %v2317
      %v2523 = vpop.f32.mrb[0].mxu0
      %v2524 = vadd.f32 0.0, %v2523
      %v2525 = vpop.f32.mrb[0].mxu0
      %v2526 = vpop.f32.mrb[0].mxu0
      %v2527 = vadd.f32 0.0, %v2526
      %v2528 = vpop.f32.mrb[0].mxu0
      %2529 = vmatprep.mubr.bf16.mxu0 0
      %2530 = vmatmul.mubr.bf16.gmra.mrb[0].mxu0 %v2318
      %v2531 = vpop.f32.mrb[0].mxu0
      %v2532 = vadd.f32 0.0, %v2531
      %v2533 = vpop.f32.mrb[0].mxu0
      %v2534 = vpop.f32.mrb[0].mxu0
      %v2535 = vadd.f32 0.0, %v2534
      %v2536 = vpop.f32.mrb[0].mxu0
      %2537 = vmatprep.mubr.bf16.mxu0 0
      %2538 = vmatmul.mubr.bf16.gmra.mrb[0].mxu0 %v2319
      %v2539 = vpop.f32.mrb[0].mxu0
      %v2540 = vadd.f32 0.0, %v2539
      %v2541 = vpop.f32.mrb[0].mxu0
      %v2542 = vpop.f32.mrb[0].mxu0
      %v2543 = vadd.f32 0.0, %v2542
      %v2544 = vpop.f32.mrb[0].mxu0
      %2545 = vdwg.mxu0
      %v2546 = vld [vmem:[#allocation3] sm:$0xff]
      %v2547 = vld [vmem:[#allocation3 + $0x8] sm:$0xff]
      %v2548 = vld [vmem:[#allocation3 + $0x10] sm:$0xff]
      %v2549 = vld [vmem:[#allocation3 + $0x18] sm:$0xff]
      %v2550 = vld [vmem:[#allocation3 + $0x20] sm:$0xff]
      %v2551 = vld [vmem:[#allocation3 + $0x28] sm:$0xff]
      %v2552 = vld [vmem:[#allocation3 + $0x30] sm:$0xff]
      %v2553 = vld [vmem:[#allocation3 + $0x38] sm:$0xff]
      %v2554 = vld [vmem:[#allocation3 + $0x40] sm:$0xff]
      %v2555 = vld [vmem:[#allocation3 + $0x48] sm:$0xff]
      %v2556 = vld [vmem:[#allocation3 + $0x50] sm:$0xff]
      %v2557 = vld [vmem:[#allocation3 + $0x58] sm:$0xff]
      %v2558 = vld [vmem:[#allocation3 + $0x60] sm:$0xff]
      %v2559 = vld [vmem:[#allocation3 + $0x68] sm:$0xff]
      %v2560 = vld [vmem:[#allocation3 + $0x70] sm:$0xff]
      %v2561 = vld [vmem:[#allocation3 + $0x78] sm:$0xff]
      %v2562 = vld [vmem:[#allocation3 + $0x80] sm:$0xff]
      %v2563 = vld [vmem:[#allocation3 + $0x88] sm:$0xff]
      %v2564 = vld [vmem:[#allocation3 + $0x90] sm:$0xff]
      %v2565 = vld [vmem:[#allocation3 + $0x98] sm:$0xff]
      %v2566 = vld [vmem:[#allocation3 + $0xa0] sm:$0xff]
      %v2567 = vld [vmem:[#allocation3 + $0xa8] sm:$0xff]
      %v2568 = vld [vmem:[#allocation3 + $0xb0] sm:$0xff]
      %v2569 = vld [vmem:[#allocation3 + $0xb8] sm:$0xff]
      %v2570 = vld [vmem:[#allocation3 + $0xc0] sm:$0xff]
      %v2571 = vld [vmem:[#allocation3 + $0xc8] sm:$0xff]
      %v2572 = vld [vmem:[#allocation3 + $0xd0] sm:$0xff]
      %v2573 = vld [vmem:[#allocation3 + $0xd8] sm:$0xff]
      %v2574 = vld [vmem:[#allocation3 + $0xe0] sm:$0xff]
      %v2575 = vld [vmem:[#allocation3 + $0xe8] sm:$0xff]
      %v2576 = vld [vmem:[#allocation3 + $0xf0] sm:$0xff]
      %v2577 = vld [vmem:[#allocation3 + $0xf8] sm:$0xff]
      %v2578 = vadd.f32 %v2546, %v2420
      %v2579 = vadd.f32 %v2547, %v2423
      %v2580 = vadd.f32 %v2548, %v2428
      %v2581 = vadd.f32 %v2549, %v2431
      %v2582 = vadd.f32 %v2550, %v2436
      %v2583 = vadd.f32 %v2551, %v2439
      %v2584 = vadd.f32 %v2552, %v2444
      %v2585 = vadd.f32 %v2553, %v2447
      %v2586 = vadd.f32 %v2554, %v2452
      %v2587 = vadd.f32 %v2555, %v2455
      %v2588 = vadd.f32 %v2556, %v2460
      %v2589 = vadd.f32 %v2557, %v2463
      %v2590 = vadd.f32 %v2558, %v2468
      %v2591 = vadd.f32 %v2559, %v2471
      %v2592 = vadd.f32 %v2560, %v2476
      %v2593 = vadd.f32 %v2561, %v2479
      %v2594 = vadd.f32 %v2562, %v2484
      %v2595 = vadd.f32 %v2563, %v2487
      %v2596 = vadd.f32 %v2564, %v2492
      %v2597 = vadd.f32 %v2565, %v2495
      %v2598 = vadd.f32 %v2566, %v2500
      %v2599 = vadd.f32 %v2567, %v2503
      %v2600 = vadd.f32 %v2568, %v2508
      %v2601 = vadd.f32 %v2569, %v2511
      %v2602 = vadd.f32 %v2570, %v2516
      %v2603 = vadd.f32 %v2571, %v2519
      %v2604 = vadd.f32 %v2572, %v2524
      %v2605 = vadd.f32 %v2573, %v2527
      %v2606 = vadd.f32 %v2574, %v2532
      %v2607 = vadd.f32 %v2575, %v2535
      %v2608 = vadd.f32 %v2576, %v2540
      %v2609 = vadd.f32 %v2577, %v2543
      %2610 = vst [vmem:[#allocation3] sm:$0xff] %v2578
      %2611 = vst [vmem:[#allocation3 + $0x8] sm:$0xff] %v2579
      %2612 = vst [vmem:[#allocation3 + $0x10] sm:$0xff] %v2580
      %2613 = vst [vmem:[#allocation3 + $0x18] sm:$0xff] %v2581
      %2614 = vst [vmem:[#allocation3 + $0x20] sm:$0xff] %v2582
      %2615 = vst [vmem:[#allocation3 + $0x28] sm:$0xff] %v2583
      %2616 = vst [vmem:[#allocation3 + $0x30] sm:$0xff] %v2584
      %2617 = vst [vmem:[#allocation3 + $0x38] sm:$0xff] %v2585
      %2618 = vst [vmem:[#allocation3 + $0x40] sm:$0xff] %v2586
      %2619 = vst [vmem:[#allocation3 + $0x48] sm:$0xff] %v2587
      %2620 = vst [vmem:[#allocation3 + $0x50] sm:$0xff] %v2588
      %2621 = vst [vmem:[#allocation3 + $0x58] sm:$0xff] %v2589
      %2622 = vst [vmem:[#allocation3 + $0x60] sm:$0xff] %v2590
      %2623 = vst [vmem:[#allocation3 + $0x68] sm:$0xff] %v2591
      %2624 = vst [vmem:[#allocation3 + $0x70] sm:$0xff] %v2592
      %2625 = vst [vmem:[#allocation3 + $0x78] sm:$0xff] %v2593
      %2626 = vst [vmem:[#allocation3 + $0x80] sm:$0xff] %v2594
      %2627 = vst [vmem:[#allocation3 + $0x88] sm:$0xff] %v2595
      %2628 = vst [vmem:[#allocation3 + $0x90] sm:$0xff] %v2596
      %2629 = vst [vmem:[#allocation3 + $0x98] sm:$0xff] %v2597
      %2630 = vst [vmem:[#allocation3 + $0xa0] sm:$0xff] %v2598
      %2631 = vst [vmem:[#allocation3 + $0xa8] sm:$0xff] %v2599
      %2632 = vst [vmem:[#allocation3 + $0xb0] sm:$0xff] %v2600
      %2633 = vst [vmem:[#allocation3 + $0xb8] sm:$0xff] %v2601
      %2634 = vst [vmem:[#allocation3 + $0xc0] sm:$0xff] %v2602
      %2635 = vst [vmem:[#allocation3 + $0xc8] sm:$0xff] %v2603
      %2636 = vst [vmem:[#allocation3 + $0xd0] sm:$0xff] %v2604
      %2637 = vst [vmem:[#allocation3 + $0xd8] sm:$0xff] %v2605
      %2638 = vst [vmem:[#allocation3 + $0xe0] sm:$0xff] %v2606
      %2639 = vst [vmem:[#allocation3 + $0xe8] sm:$0xff] %v2607
      %2640 = vst [vmem:[#allocation3 + $0xf0] sm:$0xff] %v2608
      %2641 = vst [vmem:[#allocation3 + $0xf8] sm:$0xff] %v2609
      %s2642 = scalar_lea.vmem [#allocation2], 48
      %v2643 = vld [vmem:[%s2642] sm:$0xff]
      %v2644 = vld [vmem:[%s2642 + $0x8] sm:$0xff]
      %v2645 = vld [vmem:[%s2642 + $0x18] sm:$0xff]
      %v2646 = vld [vmem:[%s2642 + $0x20] sm:$0xff]
      %v2647 = vld [vmem:[%s2642 + $0x30] sm:$0xff]
      %v2648 = vld [vmem:[%s2642 + $0x38] sm:$0xff]
      %v2649 = vld [vmem:[%s2642 + $0x48] sm:$0xff]
      %v2650 = vld [vmem:[%s2642 + $0x50] sm:$0xff]
      %v2651 = vld [vmem:[%s2642 + $0x60] sm:$0xff]
      %v2652 = vld [vmem:[%s2642 + $0x68] sm:$0xff]
      %v2653 = vld [vmem:[%s2642 + $0x78] sm:$0xff]
      %v2654 = vld [vmem:[%s2642 + $0x80] sm:$0xff]
      %v2655 = vld [vmem:[%s2642 + $0x90] sm:$0xff]
      %v2656 = vld [vmem:[%s2642 + $0x98] sm:$0xff]
      %v2657 = vld [vmem:[%s2642 + $0xa8] sm:$0xff]
      %v2658 = vld [vmem:[%s2642 + $0xb0] sm:$0xff]
      %v2659 = vld [vmem:[%s2642 + $0xc0] sm:$0xff]
      %v2660 = vld [vmem:[%s2642 + $0xc8] sm:$0xff]
      %v2661 = vld [vmem:[%s2642 + $0xd8] sm:$0xff]
      %v2662 = vld [vmem:[%s2642 + $0xe0] sm:$0xff]
      %v2663 = vld [vmem:[%s2642 + $0xf0] sm:$0xff]
      %v2664 = vld [vmem:[%s2642 + $0xf8] sm:$0xff]
      %v2665 = vld [vmem:[%s2642 + $0x108] sm:$0xff]
      %v2666 = vld [vmem:[%s2642 + $0x110] sm:$0xff]
      %v2667 = vld [vmem:[%s2642 + $0x120] sm:$0xff]
      %v2668 = vld [vmem:[%s2642 + $0x128] sm:$0xff]
      %v2669 = vld [vmem:[%s2642 + $0x138] sm:$0xff]
      %v2670 = vld [vmem:[%s2642 + $0x140] sm:$0xff]
      %v2671 = vld [vmem:[%s2642 + $0x150] sm:$0xff]
      %v2672 = vld [vmem:[%s2642 + $0x158] sm:$0xff]
      %v2673 = vld [vmem:[%s2642 + $0x168] sm:$0xff]
      %v2674 = vld [vmem:[%s2642 + $0x170] sm:$0xff]
      %v2675 = vpack.c.bf16 %v2644, %v2643
      %v2676 = vpack.c.bf16 %v2646, %v2645
      %v2677 = vpack.c.bf16 %v2648, %v2647
      %v2678 = vpack.c.bf16 %v2650, %v2649
      %v2679 = vpack.c.bf16 %v2652, %v2651
      %v2680 = vpack.c.bf16 %v2654, %v2653
      %v2681 = vpack.c.bf16 %v2656, %v2655
      %v2682 = vpack.c.bf16 %v2658, %v2657
      %v2683 = vpack.c.bf16 %v2660, %v2659
      %v2684 = vpack.c.bf16 %v2662, %v2661
      %v2685 = vpack.c.bf16 %v2664, %v2663
      %v2686 = vpack.c.bf16 %v2666, %v2665
      %v2687 = vpack.c.bf16 %v2668, %v2667
      %v2688 = vpack.c.bf16 %v2670, %v2669
      %v2689 = vpack.c.bf16 %v2672, %v2671
      %v2690 = vpack.c.bf16 %v2674, %v2673
      %s2691 = scalar_lea.vmem %s3, 384
      %v2692 = vld [vmem:[%s2691] sm:$0xf]
      %v2693 = vld [vmem:[%s2691 + $0x4] sm:$0xf]
      %v2694 = vld [vmem:[%s2691 + $0x8] sm:$0xf]
      %v2695 = vld [vmem:[%s2691 + $0xc] sm:$0xf]
      %v2696 = vld [vmem:[%s2691 + $0x10] sm:$0xf]
      %v2697 = vld [vmem:[%s2691 + $0x14] sm:$0xf]
      %v2698 = vld [vmem:[%s2691 + $0x18] sm:$0xf]
      %v2699 = vld [vmem:[%s2691 + $0x1c] sm:$0xf]
      %v2700 = vld [vmem:[%s2691 + $0x20] sm:$0xf]
      %v2701 = vld [vmem:[%s2691 + $0x24] sm:$0xf]
      %v2702 = vld [vmem:[%s2691 + $0x28] sm:$0xf]
      %v2703 = vld [vmem:[%s2691 + $0x2c] sm:$0xf]
      %v2704 = vld [vmem:[%s2691 + $0x30] sm:$0xf]
      %v2705 = vld [vmem:[%s2691 + $0x34] sm:$0xf]
      %v2706 = vld [vmem:[%s2691 + $0x38] sm:$0xf]
      %v2707 = vld [vmem:[%s2691 + $0x3c] sm:$0xf]
      %v2724 = vunpack.c.l.b16 %v2692
      %v2725 = vunpack.c.l.b16 %v2693
      %v2726 = vunpack.c.l.b16 %v2694
      %v2727 = vunpack.c.l.b16 %v2695
      %v2728 = vunpack.c.l.b16 %v2696
      %v2729 = vunpack.c.l.b16 %v2697
      %v2730 = vunpack.c.l.b16 %v2698
      %v2731 = vunpack.c.l.b16 %v2699
      %v2732 = vunpack.c.l.b16 %v2700
      %v2733 = vunpack.c.l.b16 %v2701
      %v2734 = vunpack.c.l.b16 %v2702
      %v2735 = vunpack.c.l.b16 %v2703
      %v2736 = vunpack.c.l.b16 %v2704
      %v2737 = vunpack.c.l.b16 %v2705
      %v2738 = vunpack.c.l.b16 %v2706
      %v2739 = vunpack.c.l.b16 %v2707
      %v2740 = vpack.c.b16 %v2725, %v2724
      %v2741 = vpack.c.b16 %v2727, %v2726
      %v2742 = vpack.c.b16 %v2729, %v2728
      %v2743 = vpack.c.b16 %v2731, %v2730
      %v2744 = vpack.c.b16 %v2733, %v2732
      %v2745 = vpack.c.b16 %v2735, %v2734
      %v2746 = vpack.c.b16 %v2737, %v2736
      %v2747 = vpack.c.b16 %v2739, %v2738
      %2756 = vmatprep.subr.bf16.mxu0 0
      %2757 = vmatpush1.bf16.msra.mxu0 %v2740
      %2758 = vmatprep.subr.bf16.mxu0 0
      %2759 = vmatpush1.bf16.msra.mxu0 %v2741
      %2760 = vmatprep.subr.bf16.mxu0 0
      %2761 = vmatpush1.bf16.msra.mxu0 %v2742
      %2762 = vmatprep.subr.bf16.mxu0 0
      %2763 = vmatpush1.bf16.msra.mxu0 %v2743
      %2764 = vmatprep.subr.bf16.mxu0 0
      %2765 = vmatpush1.bf16.msra.mxu0 %v2744
      %2766 = vmatprep.subr.bf16.mxu0 0
      %2767 = vmatpush1.bf16.msra.mxu0 %v2745
      %2768 = vmatprep.subr.bf16.mxu0 0
      %2769 = vmatpush1.bf16.msra.mxu0 %v2746
      %2770 = vmatprep.subr.bf16.mxu0 0
      %2771 = vmatpush1.bf16.msra.mxu0 %v2747
      %2772 = vmatprep.subr.bf16.mxu0 0
      %2773 = vmatpush1.bf16.msra.mxu0 0
      %2774 = vmatprep.subr.bf16.mxu0 0
      %2775 = vmatpush1.bf16.msra.mxu0 0
      %2776 = vmatprep.subr.bf16.mxu0 0
      %2777 = vmatpush1.bf16.msra.mxu0 0
      %2778 = vmatprep.subr.bf16.mxu0 0
      %2779 = vmatpush1.bf16.msra.mxu0 0
      %2780 = vmatprep.subr.bf16.mxu0 0
      %2781 = vmatpush1.bf16.msra.mxu0 0
      %2782 = vmatprep.subr.bf16.mxu0 0
      %2783 = vmatpush1.bf16.msra.mxu0 0
      %2784 = vmatprep.subr.bf16.mxu0 0
      %2785 = vmatpush1.bf16.msra.mxu0 0
      %2786 = vmatprep.subr.bf16.mxu0 0
      %2787 = vmatpush1.bf16.msra.mxu0 0
      %2788 = vmatprep.mubr.bf16.mxu0 0
      %2789 = vmatmul.mubr.bf16.gmra.mrb[0].mxu0 %v2675
      %v2790 = vpop.f32.mrb[0].mxu0
      %v2791 = vadd.f32 0.0, %v2790
      %v2792 = vpop.f32.mrb[0].mxu0
      %v2793 = vpop.f32.mrb[0].mxu0
      %v2794 = vadd.f32 0.0, %v2793
      %v2795 = vpop.f32.mrb[0].mxu0
      %2796 = vmatprep.mubr.bf16.mxu0 0
      %2797 = vmatmul.mubr.bf16.gmra.mrb[0].mxu0 %v2676
      %v2798 = vpop.f32.mrb[0].mxu0
      %v2799 = vadd.f32 0.0, %v2798
      %v2800 = vpop.f32.mrb[0].mxu0
      %v2801 = vpop.f32.mrb[0].mxu0
      %v2802 = vadd.f32 0.0, %v2801
      %v2803 = vpop.f32.mrb[0].mxu0
      %2804 = vmatprep.mubr.bf16.mxu0 0
      %2805 = vmatmul.mubr.bf16.gmra.mrb[0].mxu0 %v2677
      %v2806 = vpop.f32.mrb[0].mxu0
      %v2807 = vadd.f32 0.0, %v2806
      %v2808 = vpop.f32.mrb[0].mxu0
      %v2809 = vpop.f32.mrb[0].mxu0
      %v2810 = vadd.f32 0.0, %v2809
      %v2811 = vpop.f32.mrb[0].mxu0
      %2812 = vmatprep.mubr.bf16.mxu0 0
      %2813 = vmatmul.mubr.bf16.gmra.mrb[0].mxu0 %v2678
      %v2814 = vpop.f32.mrb[0].mxu0
      %v2815 = vadd.f32 0.0, %v2814
      %v2816 = vpop.f32.mrb[0].mxu0
      %v2817 = vpop.f32.mrb[0].mxu0
      %v2818 = vadd.f32 0.0, %v2817
      %v2819 = vpop.f32.mrb[0].mxu0
      %2820 = vmatprep.mubr.bf16.mxu0 0
      %2821 = vmatmul.mubr.bf16.gmra.mrb[0].mxu0 %v2679
      %v2822 = vpop.f32.mrb[0].mxu0
      %v2823 = vadd.f32 0.0, %v2822
      %v2824 = vpop.f32.mrb[0].mxu0
      %v2825 = vpop.f32.mrb[0].mxu0
      %v2826 = vadd.f32 0.0, %v2825
      %v2827 = vpop.f32.mrb[0].mxu0
      %2828 = vmatprep.mubr.bf16.mxu0 0
      %2829 = vmatmul.mubr.bf16.gmra.mrb[0].mxu0 %v2680
      %v2830 = vpop.f32.mrb[0].mxu0
      %v2831 = vadd.f32 0.0, %v2830
      %v2832 = vpop.f32.mrb[0].mxu0
      %v2833 = vpop.f32.mrb[0].mxu0
      %v2834 = vadd.f32 0.0, %v2833
      %v2835 = vpop.f32.mrb[0].mxu0
      %2836 = vmatprep.mubr.bf16.mxu0 0
      %2837 = vmatmul.mubr.bf16.gmra.mrb[0].mxu0 %v2681
      %v2838 = vpop.f32.mrb[0].mxu0
      %v2839 = vadd.f32 0.0, %v2838
      %v2840 = vpop.f32.mrb[0].mxu0
      %v2841 = vpop.f32.mrb[0].mxu0
      %v2842 = vadd.f32 0.0, %v2841
      %v2843 = vpop.f32.mrb[0].mxu0
      %2844 = vmatprep.mubr.bf16.mxu0 0
      %2845 = vmatmul.mubr.bf16.gmra.mrb[0].mxu0 %v2682
      %v2846 = vpop.f32.mrb[0].mxu0
      %v2847 = vadd.f32 0.0, %v2846
      %v2848 = vpop.f32.mrb[0].mxu0
      %v2849 = vpop.f32.mrb[0].mxu0
      %v2850 = vadd.f32 0.0, %v2849
      %v2851 = vpop.f32.mrb[0].mxu0
      %2852 = vmatprep.mubr.bf16.mxu0 0
      %2853 = vmatmul.mubr.bf16.gmra.mrb[0].mxu0 %v2683
      %v2854 = vpop.f32.mrb[0].mxu0
      %v2855 = vadd.f32 0.0, %v2854
      %v2856 = vpop.f32.mrb[0].mxu0
      %v2857 = vpop.f32.mrb[0].mxu0
      %v2858 = vadd.f32 0.0, %v2857
      %v2859 = vpop.f32.mrb[0].mxu0
      %2860 = vmatprep.mubr.bf16.mxu0 0
      %2861 = vmatmul.mubr.bf16.gmra.mrb[0].mxu0 %v2684
      %v2862 = vpop.f32.mrb[0].mxu0
      %v2863 = vadd.f32 0.0, %v2862
      %v2864 = vpop.f32.mrb[0].mxu0
      %v2865 = vpop.f32.mrb[0].mxu0
      %v2866 = vadd.f32 0.0, %v2865
      %v2867 = vpop.f32.mrb[0].mxu0
      %2868 = vmatprep.mubr.bf16.mxu0 0
      %2869 = vmatmul.mubr.bf16.gmra.mrb[0].mxu0 %v2685
      %v2870 = vpop.f32.mrb[0].mxu0
      %v2871 = vadd.f32 0.0, %v2870
      %v2872 = vpop.f32.mrb[0].mxu0
      %v2873 = vpop.f32.mrb[0].mxu0
      %v2874 = vadd.f32 0.0, %v2873
      %v2875 = vpop.f32.mrb[0].mxu0
      %2876 = vmatprep.mubr.bf16.mxu0 0
      %2877 = vmatmul.mubr.bf16.gmra.mrb[0].mxu0 %v2686
      %v2878 = vpop.f32.mrb[0].mxu0
      %v2879 = vadd.f32 0.0, %v2878
      %v2880 = vpop.f32.mrb[0].mxu0
      %v2881 = vpop.f32.mrb[0].mxu0
      %v2882 = vadd.f32 0.0, %v2881
      %v2883 = vpop.f32.mrb[0].mxu0
      %2884 = vmatprep.mubr.bf16.mxu0 0
      %2885 = vmatmul.mubr.bf16.gmra.mrb[0].mxu0 %v2687
      %v2886 = vpop.f32.mrb[0].mxu0
      %v2887 = vadd.f32 0.0, %v2886
      %v2888 = vpop.f32.mrb[0].mxu0
      %v2889 = vpop.f32.mrb[0].mxu0
      %v2890 = vadd.f32 0.0, %v2889
      %v2891 = vpop.f32.mrb[0].mxu0
      %2892 = vmatprep.mubr.bf16.mxu0 0
      %2893 = vmatmul.mubr.bf16.gmra.mrb[0].mxu0 %v2688
      %v2894 = vpop.f32.mrb[0].mxu0
      %v2895 = vadd.f32 0.0, %v2894
      %v2896 = vpop.f32.mrb[0].mxu0
      %v2897 = vpop.f32.mrb[0].mxu0
      %v2898 = vadd.f32 0.0, %v2897
      %v2899 = vpop.f32.mrb[0].mxu0
      %2900 = vmatprep.mubr.bf16.mxu0 0
      %2901 = vmatmul.mubr.bf16.gmra.mrb[0].mxu0 %v2689
      %v2902 = vpop.f32.mrb[0].mxu0
      %v2903 = vadd.f32 0.0, %v2902
      %v2904 = vpop.f32.mrb[0].mxu0
      %v2905 = vpop.f32.mrb[0].mxu0
      %v2906 = vadd.f32 0.0, %v2905
      %v2907 = vpop.f32.mrb[0].mxu0
      %2908 = vmatprep.mubr.bf16.mxu0 0
      %2909 = vmatmul.mubr.bf16.gmra.mrb[0].mxu0 %v2690
      %v2910 = vpop.f32.mrb[0].mxu0
      %v2911 = vadd.f32 0.0, %v2910
      %v2912 = vpop.f32.mrb[0].mxu0
      %v2913 = vpop.f32.mrb[0].mxu0
      %v2914 = vadd.f32 0.0, %v2913
      %v2915 = vpop.f32.mrb[0].mxu0
      %2916 = vdwg.mxu0
      %v2917 = vld [vmem:[#allocation3] sm:$0xff]
      %v2918 = vld [vmem:[#allocation3 + $0x8] sm:$0xff]
      %v2919 = vld [vmem:[#allocation3 + $0x10] sm:$0xff]
      %v2920 = vld [vmem:[#allocation3 + $0x18] sm:$0xff]
      %v2921 = vld [vmem:[#allocation3 + $0x20] sm:$0xff]
      %v2922 = vld [vmem:[#allocation3 + $0x28] sm:$0xff]
      %v2923 = vld [vmem:[#allocation3 + $0x30] sm:$0xff]
      %v2924 = vld [vmem:[#allocation3 + $0x38] sm:$0xff]
      %v2925 = vld [vmem:[#allocation3 + $0x40] sm:$0xff]
      %v2926 = vld [vmem:[#allocation3 + $0x48] sm:$0xff]
      %v2927 = vld [vmem:[#allocation3 + $0x50] sm:$0xff]
      %v2928 = vld [vmem:[#allocation3 + $0x58] sm:$0xff]
      %v2929 = vld [vmem:[#allocation3 + $0x60] sm:$0xff]
      %v2930 = vld [vmem:[#allocation3 + $0x68] sm:$0xff]
      %v2931 = vld [vmem:[#allocation3 + $0x70] sm:$0xff]
      %v2932 = vld [vmem:[#allocation3 + $0x78] sm:$0xff]
      %v2933 = vld [vmem:[#allocation3 + $0x80] sm:$0xff]
      %v2934 = vld [vmem:[#allocation3 + $0x88] sm:$0xff]
      %v2935 = vld [vmem:[#allocation3 + $0x90] sm:$0xff]
      %v2936 = vld [vmem:[#allocation3 + $0x98] sm:$0xff]
      %v2937 = vld [vmem:[#allocation3 + $0xa0] sm:$0xff]
      %v2938 = vld [vmem:[#allocation3 + $0xa8] sm:$0xff]
      %v2939 = vld [vmem:[#allocation3 + $0xb0] sm:$0xff]
      %v2940 = vld [vmem:[#allocation3 + $0xb8] sm:$0xff]
      %v2941 = vld [vmem:[#allocation3 + $0xc0] sm:$0xff]
      %v2942 = vld [vmem:[#allocation3 + $0xc8] sm:$0xff]
      %v2943 = vld [vmem:[#allocation3 + $0xd0] sm:$0xff]
      %v2944 = vld [vmem:[#allocation3 + $0xd8] sm:$0xff]
      %v2945 = vld [vmem:[#allocation3 + $0xe0] sm:$0xff]
      %v2946 = vld [vmem:[#allocation3 + $0xe8] sm:$0xff]
      %v2947 = vld [vmem:[#allocation3 + $0xf0] sm:$0xff]
      %v2948 = vld [vmem:[#allocation3 + $0xf8] sm:$0xff]
      %v2949 = vadd.f32 %v2917, %v2791
      %v2950 = vadd.f32 %v2918, %v2794
      %v2951 = vadd.f32 %v2919, %v2799
      %v2952 = vadd.f32 %v2920, %v2802
      %v2953 = vadd.f32 %v2921, %v2807
      %v2954 = vadd.f32 %v2922, %v2810
      %v2955 = vadd.f32 %v2923, %v2815
      %v2956 = vadd.f32 %v2924, %v2818
      %v2957 = vadd.f32 %v2925, %v2823
      %v2958 = vadd.f32 %v2926, %v2826
      %v2959 = vadd.f32 %v2927, %v2831
      %v2960 = vadd.f32 %v2928, %v2834
      %v2961 = vadd.f32 %v2929, %v2839
      %v2962 = vadd.f32 %v2930, %v2842
      %v2963 = vadd.f32 %v2931, %v2847
      %v2964 = vadd.f32 %v2932, %v2850
      %v2965 = vadd.f32 %v2933, %v2855
      %v2966 = vadd.f32 %v2934, %v2858
      %v2967 = vadd.f32 %v2935, %v2863
      %v2968 = vadd.f32 %v2936, %v2866
      %v2969 = vadd.f32 %v2937, %v2871
      %v2970 = vadd.f32 %v2938, %v2874
      %v2971 = vadd.f32 %v2939, %v2879
      %v2972 = vadd.f32 %v2940, %v2882
      %v2973 = vadd.f32 %v2941, %v2887
      %v2974 = vadd.f32 %v2942, %v2890
      %v2975 = vadd.f32 %v2943, %v2895
      %v2976 = vadd.f32 %v2944, %v2898
      %v2977 = vadd.f32 %v2945, %v2903
      %v2978 = vadd.f32 %v2946, %v2906
      %v2979 = vadd.f32 %v2947, %v2911
      %v2980 = vadd.f32 %v2948, %v2914
      %2981 = vst [vmem:[#allocation3] sm:$0xff] %v2949
      %2982 = vst [vmem:[#allocation3 + $0x8] sm:$0xff] %v2950
      %2983 = vst [vmem:[#allocation3 + $0x10] sm:$0xff] %v2951
      %2984 = vst [vmem:[#allocation3 + $0x18] sm:$0xff] %v2952
      %2985 = vst [vmem:[#allocation3 + $0x20] sm:$0xff] %v2953
      %2986 = vst [vmem:[#allocation3 + $0x28] sm:$0xff] %v2954
      %2987 = vst [vmem:[#allocation3 + $0x30] sm:$0xff] %v2955
      %2988 = vst [vmem:[#allocation3 + $0x38] sm:$0xff] %v2956
      %2989 = vst [vmem:[#allocation3 + $0x40] sm:$0xff] %v2957
      %2990 = vst [vmem:[#allocation3 + $0x48] sm:$0xff] %v2958
      %2991 = vst [vmem:[#allocation3 + $0x50] sm:$0xff] %v2959
      %2992 = vst [vmem:[#allocation3 + $0x58] sm:$0xff] %v2960
      %2993 = vst [vmem:[#allocation3 + $0x60] sm:$0xff] %v2961
      %2994 = vst [vmem:[#allocation3 + $0x68] sm:$0xff] %v2962
      %2995 = vst [vmem:[#allocation3 + $0x70] sm:$0xff] %v2963
      %2996 = vst [vmem:[#allocation3 + $0x78] sm:$0xff] %v2964
      %2997 = vst [vmem:[#allocation3 + $0x80] sm:$0xff] %v2965
      %2998 = vst [vmem:[#allocation3 + $0x88] sm:$0xff] %v2966
      %2999 = vst [vmem:[#allocation3 + $0x90] sm:$0xff] %v2967
      %3000 = vst [vmem:[#allocation3 + $0x98] sm:$0xff] %v2968
      %3001 = vst [vmem:[#allocation3 + $0xa0] sm:$0xff] %v2969
      %3002 = vst [vmem:[#allocation3 + $0xa8] sm:$0xff] %v2970
      %3003 = vst [vmem:[#allocation3 + $0xb0] sm:$0xff] %v2971
      %3004 = vst [vmem:[#allocation3 + $0xb8] sm:$0xff] %v2972
      %3005 = vst [vmem:[#allocation3 + $0xc0] sm:$0xff] %v2973
      %3006 = vst [vmem:[#allocation3 + $0xc8] sm:$0xff] %v2974
      %3007 = vst [vmem:[#allocation3 + $0xd0] sm:$0xff] %v2975
      %3008 = vst [vmem:[#allocation3 + $0xd8] sm:$0xff] %v2976
      %3009 = vst [vmem:[#allocation3 + $0xe0] sm:$0xff] %v2977
      %3010 = vst [vmem:[#allocation3 + $0xe8] sm:$0xff] %v2978
      %3011 = vst [vmem:[#allocation3 + $0xf0] sm:$0xff] %v2979
      %3012 = vst [vmem:[#allocation3 + $0xf8] sm:$0xff] %v2980
      %v3013 = vld [vmem:[%s2642 + $0x1] sm:$0xff]
      %v3014 = vld [vmem:[%s2642 + $0x9] sm:$0xff]
      %v3015 = vld [vmem:[%s2642 + $0x19] sm:$0xff]
      %v3016 = vld [vmem:[%s2642 + $0x21] sm:$0xff]
      %v3017 = vld [vmem:[%s2642 + $0x31] sm:$0xff]
      %v3018 = vld [vmem:[%s2642 + $0x39] sm:$0xff]
      %v3019 = vld [vmem:[%s2642 + $0x49] sm:$0xff]
      %v3020 = vld [vmem:[%s2642 + $0x51] sm:$0xff]
      %v3021 = vld [vmem:[%s2642 + $0x61] sm:$0xff]
      %v3022 = vld [vmem:[%s2642 + $0x69] sm:$0xff]
      %v3023 = vld [vmem:[%s2642 + $0x79] sm:$0xff]
      %v3024 = vld [vmem:[%s2642 + $0x81] sm:$0xff]
      %v3025 = vld [vmem:[%s2642 + $0x91] sm:$0xff]
      %v3026 = vld [vmem:[%s2642 + $0x99] sm:$0xff]
      %v3027 = vld [vmem:[%s2642 + $0xa9] sm:$0xff]
      %v3028 = vld [vmem:[%s2642 + $0xb1] sm:$0xff]
      %v3029 = vld [vmem:[%s2642 + $0xc1] sm:$0xff]
      %v3030 = vld [vmem:[%s2642 + $0xc9] sm:$0xff]
      %v3031 = vld [vmem:[%s2642 + $0xd9] sm:$0xff]
      %v3032 = vld [vmem:[%s2642 + $0xe1] sm:$0xff]
      %v3033 = vld [vmem:[%s2642 + $0xf1] sm:$0xff]
      %v3034 = vld [vmem:[%s2642 + $0xf9] sm:$0xff]
      %v3035 = vld [vmem:[%s2642 + $0x109] sm:$0xff]
      %v3036 = vld [vmem:[%s2642 + $0x111] sm:$0xff]
      %v3037 = vld [vmem:[%s2642 + $0x121] sm:$0xff]
      %v3038 = vld [vmem:[%s2642 + $0x129] sm:$0xff]
      %v3039 = vld [vmem:[%s2642 + $0x139] sm:$0xff]
      %v3040 = vld [vmem:[%s2642 + $0x141] sm:$0xff]
      %v3041 = vld [vmem:[%s2642 + $0x151] sm:$0xff]
      %v3042 = vld [vmem:[%s2642 + $0x159] sm:$0xff]
      %v3043 = vld [vmem:[%s2642 + $0x169] sm:$0xff]
      %v3044 = vld [vmem:[%s2642 + $0x171] sm:$0xff]
      %v3045 = vpack.c.bf16 %v3014, %v3013
      %v3046 = vpack.c.bf16 %v3016, %v3015
      %v3047 = vpack.c.bf16 %v3018, %v3017
      %v3048 = vpack.c.bf16 %v3020, %v3019
      %v3049 = vpack.c.bf16 %v3022, %v3021
      %v3050 = vpack.c.bf16 %v3024, %v3023
      %v3051 = vpack.c.bf16 %v3026, %v3025
      %v3052 = vpack.c.bf16 %v3028, %v3027
      %v3053 = vpack.c.bf16 %v3030, %v3029
      %v3054 = vpack.c.bf16 %v3032, %v3031
      %v3055 = vpack.c.bf16 %v3034, %v3033
      %v3056 = vpack.c.bf16 %v3036, %v3035
      %v3057 = vpack.c.bf16 %v3038, %v3037
      %v3058 = vpack.c.bf16 %v3040, %v3039
      %v3059 = vpack.c.bf16 %v3042, %v3041
      %v3060 = vpack.c.bf16 %v3044, %v3043
      %s3061 = scalar_lea.vmem %s3, 448
      %v3062 = vld [vmem:[%s3061] sm:$0xf]
      %v3063 = vld [vmem:[%s3061 + $0x4] sm:$0xf]
      %v3064 = vld [vmem:[%s3061 + $0x8] sm:$0xf]
      %v3065 = vld [vmem:[%s3061 + $0xc] sm:$0xf]
      %v3066 = vld [vmem:[%s3061 + $0x10] sm:$0xf]
      %v3067 = vld [vmem:[%s3061 + $0x14] sm:$0xf]
      %v3068 = vld [vmem:[%s3061 + $0x18] sm:$0xf]
      %v3069 = vld [vmem:[%s3061 + $0x1c] sm:$0xf]
      %v3070 = vld [vmem:[%s3061 + $0x20] sm:$0xf]
      %v3071 = vld [vmem:[%s3061 + $0x24] sm:$0xf]
      %v3072 = vld [vmem:[%s3061 + $0x28] sm:$0xf]
      %v3073 = vld [vmem:[%s3061 + $0x2c] sm:$0xf]
      %v3074 = vld [vmem:[%s3061 + $0x30] sm:$0xf]
      %v3075 = vld [vmem:[%s3061 + $0x34] sm:$0xf]
      %v3076 = vld [vmem:[%s3061 + $0x38] sm:$0xf]
      %v3077 = vld [vmem:[%s3061 + $0x3c] sm:$0xf]
      %v3094 = vunpack.c.l.b16 %v3062
      %v3095 = vunpack.c.l.b16 %v3063
      %v3096 = vunpack.c.l.b16 %v3064
      %v3097 = vunpack.c.l.b16 %v3065
      %v3098 = vunpack.c.l.b16 %v3066
      %v3099 = vunpack.c.l.b16 %v3067
      %v3100 = vunpack.c.l.b16 %v3068
      %v3101 = vunpack.c.l.b16 %v3069
      %v3102 = vunpack.c.l.b16 %v3070
      %v3103 = vunpack.c.l.b16 %v3071
      %v3104 = vunpack.c.l.b16 %v3072
      %v3105 = vunpack.c.l.b16 %v3073
      %v3106 = vunpack.c.l.b16 %v3074
      %v3107 = vunpack.c.l.b16 %v3075
      %v3108 = vunpack.c.l.b16 %v3076
      %v3109 = vunpack.c.l.b16 %v3077
      %v3110 = vpack.c.b16 %v3095, %v3094
      %v3111 = vpack.c.b16 %v3097, %v3096
      %v3112 = vpack.c.b16 %v3099, %v3098
      %v3113 = vpack.c.b16 %v3101, %v3100
      %v3114 = vpack.c.b16 %v3103, %v3102
      %v3115 = vpack.c.b16 %v3105, %v3104
      %v3116 = vpack.c.b16 %v3107, %v3106
      %v3117 = vpack.c.b16 %v3109, %v3108
      %3126 = vmatprep.subr.bf16.mxu0 0
      %3127 = vmatpush1.bf16.msra.mxu0 %v3110
      %3128 = vmatprep.subr.bf16.mxu0 0
      %3129 = vmatpush1.bf16.msra.mxu0 %v3111
      %3130 = vmatprep.subr.bf16.mxu0 0
      %3131 = vmatpush1.bf16.msra.mxu0 %v3112
      %3132 = vmatprep.subr.bf16.mxu0 0
      %3133 = vmatpush1.bf16.msra.mxu0 %v3113
      %3134 = vmatprep.subr.bf16.mxu0 0
      %3135 = vmatpush1.bf16.msra.mxu0 %v3114
      %3136 = vmatprep.subr.bf16.mxu0 0
      %3137 = vmatpush1.bf16.msra.mxu0 %v3115
      %3138 = vmatprep.subr.bf16.mxu0 0
      %3139 = vmatpush1.bf16.msra.mxu0 %v3116
      %3140 = vmatprep.subr.bf16.mxu0 0
      %3141 = vmatpush1.bf16.msra.mxu0 %v3117
      %3142 = vmatprep.subr.bf16.mxu0 0
      %3143 = vmatpush1.bf16.msra.mxu0 0
      %3144 = vmatprep.subr.bf16.mxu0 0
      %3145 = vmatpush1.bf16.msra.mxu0 0
      %3146 = vmatprep.subr.bf16.mxu0 0
      %3147 = vmatpush1.bf16.msra.mxu0 0
      %3148 = vmatprep.subr.bf16.mxu0 0
      %3149 = vmatpush1.bf16.msra.mxu0 0
      %3150 = vmatprep.subr.bf16.mxu0 0
      %3151 = vmatpush1.bf16.msra.mxu0 0
      %3152 = vmatprep.subr.bf16.mxu0 0
      %3153 = vmatpush1.bf16.msra.mxu0 0
      %3154 = vmatprep.subr.bf16.mxu0 0
      %3155 = vmatpush1.bf16.msra.mxu0 0
      %3156 = vmatprep.subr.bf16.mxu0 0
      %3157 = vmatpush1.bf16.msra.mxu0 0
      %3158 = vmatprep.mubr.bf16.mxu0 0
      %3159 = vmatmul.mubr.bf16.gmra.mrb[0].mxu0 %v3045
      %v3160 = vpop.f32.mrb[0].mxu0
      %v3161 = vadd.f32 0.0, %v3160
      %v3162 = vpop.f32.mrb[0].mxu0
      %v3163 = vpop.f32.mrb[0].mxu0
      %v3164 = vadd.f32 0.0, %v3163
      %v3165 = vpop.f32.mrb[0].mxu0
      %3166 = vmatprep.mubr.bf16.mxu0 0
      %3167 = vmatmul.mubr.bf16.gmra.mrb[0].mxu0 %v3046
      %v3168 = vpop.f32.mrb[0].mxu0
      %v3169 = vadd.f32 0.0, %v3168
      %v3170 = vpop.f32.mrb[0].mxu0
      %v3171 = vpop.f32.mrb[0].mxu0
      %v3172 = vadd.f32 0.0, %v3171
      %v3173 = vpop.f32.mrb[0].mxu0
      %3174 = vmatprep.mubr.bf16.mxu0 0
      %3175 = vmatmul.mubr.bf16.gmra.mrb[0].mxu0 %v3047
      %v3176 = vpop.f32.mrb[0].mxu0
      %v3177 = vadd.f32 0.0, %v3176
      %v3178 = vpop.f32.mrb[0].mxu0
      %v3179 = vpop.f32.mrb[0].mxu0
      %v3180 = vadd.f32 0.0, %v3179
      %v3181 = vpop.f32.mrb[0].mxu0
      %3182 = vmatprep.mubr.bf16.mxu0 0
      %3183 = vmatmul.mubr.bf16.gmra.mrb[0].mxu0 %v3048
      %v3184 = vpop.f32.mrb[0].mxu0
      %v3185 = vadd.f32 0.0, %v3184
      %v3186 = vpop.f32.mrb[0].mxu0
      %v3187 = vpop.f32.mrb[0].mxu0
      %v3188 = vadd.f32 0.0, %v3187
      %v3189 = vpop.f32.mrb[0].mxu0
      %3190 = vmatprep.mubr.bf16.mxu0 0
      %3191 = vmatmul.mubr.bf16.gmra.mrb[0].mxu0 %v3049
      %v3192 = vpop.f32.mrb[0].mxu0
      %v3193 = vadd.f32 0.0, %v3192
      %v3194 = vpop.f32.mrb[0].mxu0
      %v3195 = vpop.f32.mrb[0].mxu0
      %v3196 = vadd.f32 0.0, %v3195
      %v3197 = vpop.f32.mrb[0].mxu0
      %3198 = vmatprep.mubr.bf16.mxu0 0
      %3199 = vmatmul.mubr.bf16.gmra.mrb[0].mxu0 %v3050
      %v3200 = vpop.f32.mrb[0].mxu0
      %v3201 = vadd.f32 0.0, %v3200
      %v3202 = vpop.f32.mrb[0].mxu0
      %v3203 = vpop.f32.mrb[0].mxu0
      %v3204 = vadd.f32 0.0, %v3203
      %v3205 = vpop.f32.mrb[0].mxu0
      %3206 = vmatprep.mubr.bf16.mxu0 0
      %3207 = vmatmul.mubr.bf16.gmra.mrb[0].mxu0 %v3051
      %v3208 = vpop.f32.mrb[0].mxu0
      %v3209 = vadd.f32 0.0, %v3208
      %v3210 = vpop.f32.mrb[0].mxu0
      %v3211 = vpop.f32.mrb[0].mxu0
      %v3212 = vadd.f32 0.0, %v3211
      %v3213 = vpop.f32.mrb[0].mxu0
      %3214 = vmatprep.mubr.bf16.mxu0 0
      %3215 = vmatmul.mubr.bf16.gmra.mrb[0].mxu0 %v3052
      %v3216 = vpop.f32.mrb[0].mxu0
      %v3217 = vadd.f32 0.0, %v3216
      %v3218 = vpop.f32.mrb[0].mxu0
      %v3219 = vpop.f32.mrb[0].mxu0
      %v3220 = vadd.f32 0.0, %v3219
      %v3221 = vpop.f32.mrb[0].mxu0
      %3222 = vmatprep.mubr.bf16.mxu0 0
      %3223 = vmatmul.mubr.bf16.gmra.mrb[0].mxu0 %v3053
      %v3224 = vpop.f32.mrb[0].mxu0
      %v3225 = vadd.f32 0.0, %v3224
      %v3226 = vpop.f32.mrb[0].mxu0
      %v3227 = vpop.f32.mrb[0].mxu0
      %v3228 = vadd.f32 0.0, %v3227
      %v3229 = vpop.f32.mrb[0].mxu0
      %3230 = vmatprep.mubr.bf16.mxu0 0
      %3231 = vmatmul.mubr.bf16.gmra.mrb[0].mxu0 %v3054
      %v3232 = vpop.f32.mrb[0].mxu0
      %v3233 = vadd.f32 0.0, %v3232
      %v3234 = vpop.f32.mrb[0].mxu0
      %v3235 = vpop.f32.mrb[0].mxu0
      %v3236 = vadd.f32 0.0, %v3235
      %v3237 = vpop.f32.mrb[0].mxu0
      %3238 = vmatprep.mubr.bf16.mxu0 0
      %3239 = vmatmul.mubr.bf16.gmra.mrb[0].mxu0 %v3055
      %v3240 = vpop.f32.mrb[0].mxu0
      %v3241 = vadd.f32 0.0, %v3240
      %v3242 = vpop.f32.mrb[0].mxu0
      %v3243 = vpop.f32.mrb[0].mxu0
      %v3244 = vadd.f32 0.0, %v3243
      %v3245 = vpop.f32.mrb[0].mxu0
      %3246 = vmatprep.mubr.bf16.mxu0 0
      %3247 = vmatmul.mubr.bf16.gmra.mrb[0].mxu0 %v3056
      %v3248 = vpop.f32.mrb[0].mxu0
      %v3249 = vadd.f32 0.0, %v3248
      %v3250 = vpop.f32.mrb[0].mxu0
      %v3251 = vpop.f32.mrb[0].mxu0
      %v3252 = vadd.f32 0.0, %v3251
      %v3253 = vpop.f32.mrb[0].mxu0
      %3254 = vmatprep.mubr.bf16.mxu0 0
      %3255 = vmatmul.mubr.bf16.gmra.mrb[0].mxu0 %v3057
      %v3256 = vpop.f32.mrb[0].mxu0
      %v3257 = vadd.f32 0.0, %v3256
      %v3258 = vpop.f32.mrb[0].mxu0
      %v3259 = vpop.f32.mrb[0].mxu0
      %v3260 = vadd.f32 0.0, %v3259
      %v3261 = vpop.f32.mrb[0].mxu0
      %3262 = vmatprep.mubr.bf16.mxu0 0
      %3263 = vmatmul.mubr.bf16.gmra.mrb[0].mxu0 %v3058
      %v3264 = vpop.f32.mrb[0].mxu0
      %v3265 = vadd.f32 0.0, %v3264
      %v3266 = vpop.f32.mrb[0].mxu0
      %v3267 = vpop.f32.mrb[0].mxu0
      %v3268 = vadd.f32 0.0, %v3267
      %v3269 = vpop.f32.mrb[0].mxu0
      %3270 = vmatprep.mubr.bf16.mxu0 0
      %3271 = vmatmul.mubr.bf16.gmra.mrb[0].mxu0 %v3059
      %v3272 = vpop.f32.mrb[0].mxu0
      %v3273 = vadd.f32 0.0, %v3272
      %v3274 = vpop.f32.mrb[0].mxu0
      %v3275 = vpop.f32.mrb[0].mxu0
      %v3276 = vadd.f32 0.0, %v3275
      %v3277 = vpop.f32.mrb[0].mxu0
      %3278 = vmatprep.mubr.bf16.mxu0 0
      %3279 = vmatmul.mubr.bf16.gmra.mrb[0].mxu0 %v3060
      %v3280 = vpop.f32.mrb[0].mxu0
      %v3281 = vadd.f32 0.0, %v3280
      %v3282 = vpop.f32.mrb[0].mxu0
      %v3283 = vpop.f32.mrb[0].mxu0
      %v3284 = vadd.f32 0.0, %v3283
      %v3285 = vpop.f32.mrb[0].mxu0
      %3286 = vdwg.mxu0
      %v3287 = vld [vmem:[#allocation3] sm:$0xff]
      %v3288 = vld [vmem:[#allocation3 + $0x8] sm:$0xff]
      %v3289 = vld [vmem:[#allocation3 + $0x10] sm:$0xff]
      %v3290 = vld [vmem:[#allocation3 + $0x18] sm:$0xff]
      %v3291 = vld [vmem:[#allocation3 + $0x20] sm:$0xff]
      %v3292 = vld [vmem:[#allocation3 + $0x28] sm:$0xff]
      %v3293 = vld [vmem:[#allocation3 + $0x30] sm:$0xff]
      %v3294 = vld [vmem:[#allocation3 + $0x38] sm:$0xff]
      %v3295 = vld [vmem:[#allocation3 + $0x40] sm:$0xff]
      %v3296 = vld [vmem:[#allocation3 + $0x48] sm:$0xff]
      %v3297 = vld [vmem:[#allocation3 + $0x50] sm:$0xff]
      %v3298 = vld [vmem:[#allocation3 + $0x58] sm:$0xff]
      %v3299 = vld [vmem:[#allocation3 + $0x60] sm:$0xff]
      %v3300 = vld [vmem:[#allocation3 + $0x68] sm:$0xff]
      %v3301 = vld [vmem:[#allocation3 + $0x70] sm:$0xff]
      %v3302 = vld [vmem:[#allocation3 + $0x78] sm:$0xff]
      %v3303 = vld [vmem:[#allocation3 + $0x80] sm:$0xff]
      %v3304 = vld [vmem:[#allocation3 + $0x88] sm:$0xff]
      %v3305 = vld [vmem:[#allocation3 + $0x90] sm:$0xff]
      %v3306 = vld [vmem:[#allocation3 + $0x98] sm:$0xff]
      %v3307 = vld [vmem:[#allocation3 + $0xa0] sm:$0xff]
      %v3308 = vld [vmem:[#allocation3 + $0xa8] sm:$0xff]
      %v3309 = vld [vmem:[#allocation3 + $0xb0] sm:$0xff]
      %v3310 = vld [vmem:[#allocation3 + $0xb8] sm:$0xff]
      %v3311 = vld [vmem:[#allocation3 + $0xc0] sm:$0xff]
      %v3312 = vld [vmem:[#allocation3 + $0xc8] sm:$0xff]
      %v3313 = vld [vmem:[#allocation3 + $0xd0] sm:$0xff]
      %v3314 = vld [vmem:[#allocation3 + $0xd8] sm:$0xff]
      %v3315 = vld [vmem:[#allocation3 + $0xe0] sm:$0xff]
      %v3316 = vld [vmem:[#allocation3 + $0xe8] sm:$0xff]
      %v3317 = vld [vmem:[#allocation3 + $0xf0] sm:$0xff]
      %v3318 = vld [vmem:[#allocation3 + $0xf8] sm:$0xff]
      %v3319 = vadd.f32 %v3287, %v3161
      %v3320 = vadd.f32 %v3288, %v3164
      %v3321 = vadd.f32 %v3289, %v3169
      %v3322 = vadd.f32 %v3290, %v3172
      %v3323 = vadd.f32 %v3291, %v3177
      %v3324 = vadd.f32 %v3292, %v3180
      %v3325 = vadd.f32 %v3293, %v3185
      %v3326 = vadd.f32 %v3294, %v3188
      %v3327 = vadd.f32 %v3295, %v3193
      %v3328 = vadd.f32 %v3296, %v3196
      %v3329 = vadd.f32 %v3297, %v3201
      %v3330 = vadd.f32 %v3298, %v3204
      %v3331 = vadd.f32 %v3299, %v3209
      %v3332 = vadd.f32 %v3300, %v3212
      %v3333 = vadd.f32 %v3301, %v3217
      %v3334 = vadd.f32 %v3302, %v3220
      %v3335 = vadd.f32 %v3303, %v3225
      %v3336 = vadd.f32 %v3304, %v3228
      %v3337 = vadd.f32 %v3305, %v3233
      %v3338 = vadd.f32 %v3306, %v3236
      %v3339 = vadd.f32 %v3307, %v3241
      %v3340 = vadd.f32 %v3308, %v3244
      %v3341 = vadd.f32 %v3309, %v3249
      %v3342 = vadd.f32 %v3310, %v3252
      %v3343 = vadd.f32 %v3311, %v3257
      %v3344 = vadd.f32 %v3312, %v3260
      %v3345 = vadd.f32 %v3313, %v3265
      %v3346 = vadd.f32 %v3314, %v3268
      %v3347 = vadd.f32 %v3315, %v3273
      %v3348 = vadd.f32 %v3316, %v3276
      %v3349 = vadd.f32 %v3317, %v3281
      %v3350 = vadd.f32 %v3318, %v3284
      %3351 = vst [vmem:[#allocation3] sm:$0xff] %v3319
      %3352 = vst [vmem:[#allocation3 + $0x8] sm:$0xff] %v3320
      %3353 = vst [vmem:[#allocation3 + $0x10] sm:$0xff] %v3321
      %3354 = vst [vmem:[#allocation3 + $0x18] sm:$0xff] %v3322
      %3355 = vst [vmem:[#allocation3 + $0x20] sm:$0xff] %v3323
      %3356 = vst [vmem:[#allocation3 + $0x28] sm:$0xff] %v3324
      %3357 = vst [vmem:[#allocation3 + $0x30] sm:$0xff] %v3325
      %3358 = vst [vmem:[#allocation3 + $0x38] sm:$0xff] %v3326
      %3359 = vst [vmem:[#allocation3 + $0x40] sm:$0xff] %v3327
      %3360 = vst [vmem:[#allocation3 + $0x48] sm:$0xff] %v3328
      %3361 = vst [vmem:[#allocation3 + $0x50] sm:$0xff] %v3329
      %3362 = vst [vmem:[#allocation3 + $0x58] sm:$0xff] %v3330
      %3363 = vst [vmem:[#allocation3 + $0x60] sm:$0xff] %v3331
      %3364 = vst [vmem:[#allocation3 + $0x68] sm:$0xff] %v3332
      %3365 = vst [vmem:[#allocation3 + $0x70] sm:$0xff] %v3333
      %3366 = vst [vmem:[#allocation3 + $0x78] sm:$0xff] %v3334
      %3367 = vst [vmem:[#allocation3 + $0x80] sm:$0xff] %v3335
      %3368 = vst [vmem:[#allocation3 + $0x88] sm:$0xff] %v3336
      %3369 = vst [vmem:[#allocation3 + $0x90] sm:$0xff] %v3337
      %3370 = vst [vmem:[#allocation3 + $0x98] sm:$0xff] %v3338
      %3371 = vst [vmem:[#allocation3 + $0xa0] sm:$0xff] %v3339
      %3372 = vst [vmem:[#allocation3 + $0xa8] sm:$0xff] %v3340
      %3373 = vst [vmem:[#allocation3 + $0xb0] sm:$0xff] %v3341
      %3374 = vst [vmem:[#allocation3 + $0xb8] sm:$0xff] %v3342
      %3375 = vst [vmem:[#allocation3 + $0xc0] sm:$0xff] %v3343
      %3376 = vst [vmem:[#allocation3 + $0xc8] sm:$0xff] %v3344
      %3377 = vst [vmem:[#allocation3 + $0xd0] sm:$0xff] %v3345
      %3378 = vst [vmem:[#allocation3 + $0xd8] sm:$0xff] %v3346
      %3379 = vst [vmem:[#allocation3 + $0xe0] sm:$0xff] %v3347
      %3380 = vst [vmem:[#allocation3 + $0xe8] sm:$0xff] %v3348
      %3381 = vst [vmem:[#allocation3 + $0xf0] sm:$0xff] %v3349
      %3382 = vst [vmem:[#allocation3 + $0xf8] sm:$0xff] %v3350
      %v3383 = vld [vmem:[%s2642 + $0x2] sm:$0xff]
      %v3384 = vld [vmem:[%s2642 + $0xa] sm:$0xff]
      %v3385 = vld [vmem:[%s2642 + $0x1a] sm:$0xff]
      %v3386 = vld [vmem:[%s2642 + $0x22] sm:$0xff]
      %v3387 = vld [vmem:[%s2642 + $0x32] sm:$0xff]
      %v3388 = vld [vmem:[%s2642 + $0x3a] sm:$0xff]
      %v3389 = vld [vmem:[%s2642 + $0x4a] sm:$0xff]
      %v3390 = vld [vmem:[%s2642 + $0x52] sm:$0xff]
      %v3391 = vld [vmem:[%s2642 + $0x62] sm:$0xff]
      %v3392 = vld [vmem:[%s2642 + $0x6a] sm:$0xff]
      %v3393 = vld [vmem:[%s2642 + $0x7a] sm:$0xff]
      %v3394 = vld [vmem:[%s2642 + $0x82] sm:$0xff]
      %v3395 = vld [vmem:[%s2642 + $0x92] sm:$0xff]
      %v3396 = vld [vmem:[%s2642 + $0x9a] sm:$0xff]
      %v3397 = vld [vmem:[%s2642 + $0xaa] sm:$0xff]
      %v3398 = vld [vmem:[%s2642 + $0xb2] sm:$0xff]
      %v3399 = vld [vmem:[%s2642 + $0xc2] sm:$0xff]
      %v3400 = vld [vmem:[%s2642 + $0xca] sm:$0xff]
      %v3401 = vld [vmem:[%s2642 + $0xda] sm:$0xff]
      %v3402 = vld [vmem:[%s2642 + $0xe2] sm:$0xff]
      %v3403 = vld [vmem:[%s2642 + $0xf2] sm:$0xff]
      %v3404 = vld [vmem:[%s2642 + $0xfa] sm:$0xff]
      %v3405 = vld [vmem:[%s2642 + $0x10a] sm:$0xff]
      %v3406 = vld [vmem:[%s2642 + $0x112] sm:$0xff]
      %v3407 = vld [vmem:[%s2642 + $0x122] sm:$0xff]
      %v3408 = vld [vmem:[%s2642 + $0x12a] sm:$0xff]
      %v3409 = vld [vmem:[%s2642 + $0x13a] sm:$0xff]
      %v3410 = vld [vmem:[%s2642 + $0x142] sm:$0xff]
      %v3411 = vld [vmem:[%s2642 + $0x152] sm:$0xff]
      %v3412 = vld [vmem:[%s2642 + $0x15a] sm:$0xff]
      %v3413 = vld [vmem:[%s2642 + $0x16a] sm:$0xff]
      %v3414 = vld [vmem:[%s2642 + $0x172] sm:$0xff]
      %v3415 = vpack.c.bf16 %v3384, %v3383
      %v3416 = vpack.c.bf16 %v3386, %v3385
      %v3417 = vpack.c.bf16 %v3388, %v3387
      %v3418 = vpack.c.bf16 %v3390, %v3389
      %v3419 = vpack.c.bf16 %v3392, %v3391
      %v3420 = vpack.c.bf16 %v3394, %v3393
      %v3421 = vpack.c.bf16 %v3396, %v3395
      %v3422 = vpack.c.bf16 %v3398, %v3397
      %v3423 = vpack.c.bf16 %v3400, %v3399
      %v3424 = vpack.c.bf16 %v3402, %v3401
      %v3425 = vpack.c.bf16 %v3404, %v3403
      %v3426 = vpack.c.bf16 %v3406, %v3405
      %v3427 = vpack.c.bf16 %v3408, %v3407
      %v3428 = vpack.c.bf16 %v3410, %v3409
      %v3429 = vpack.c.bf16 %v3412, %v3411
      %v3430 = vpack.c.bf16 %v3414, %v3413
      %s3431 = scalar_lea.vmem %s3, 512
      %v3432 = vld [vmem:[%s3431] sm:$0xf]
      %v3433 = vld [vmem:[%s3431 + $0x4] sm:$0xf]
      %v3434 = vld [vmem:[%s3431 + $0x8] sm:$0xf]
      %v3435 = vld [vmem:[%s3431 + $0xc] sm:$0xf]
      %v3436 = vld [vmem:[%s3431 + $0x10] sm:$0xf]
      %v3437 = vld [vmem:[%s3431 + $0x14] sm:$0xf]
      %v3438 = vld [vmem:[%s3431 + $0x18] sm:$0xf]
      %v3439 = vld [vmem:[%s3431 + $0x1c] sm:$0xf]
      %v3440 = vld [vmem:[%s3431 + $0x20] sm:$0xf]
      %v3441 = vld [vmem:[%s3431 + $0x24] sm:$0xf]
      %v3442 = vld [vmem:[%s3431 + $0x28] sm:$0xf]
      %v3443 = vld [vmem:[%s3431 + $0x2c] sm:$0xf]
      %v3444 = vld [vmem:[%s3431 + $0x30] sm:$0xf]
      %v3445 = vld [vmem:[%s3431 + $0x34] sm:$0xf]
      %v3446 = vld [vmem:[%s3431 + $0x38] sm:$0xf]
      %v3447 = vld [vmem:[%s3431 + $0x3c] sm:$0xf]
      %v3464 = vunpack.c.l.b16 %v3432
      %v3465 = vunpack.c.l.b16 %v3433
      %v3466 = vunpack.c.l.b16 %v3434
      %v3467 = vunpack.c.l.b16 %v3435
      %v3468 = vunpack.c.l.b16 %v3436
      %v3469 = vunpack.c.l.b16 %v3437
      %v3470 = vunpack.c.l.b16 %v3438
      %v3471 = vunpack.c.l.b16 %v3439
      %v3472 = vunpack.c.l.b16 %v3440
      %v3473 = vunpack.c.l.b16 %v3441
      %v3474 = vunpack.c.l.b16 %v3442
      %v3475 = vunpack.c.l.b16 %v3443
      %v3476 = vunpack.c.l.b16 %v3444
      %v3477 = vunpack.c.l.b16 %v3445
      %v3478 = vunpack.c.l.b16 %v3446
      %v3479 = vunpack.c.l.b16 %v3447
      %v3480 = vpack.c.b16 %v3465, %v3464
      %v3481 = vpack.c.b16 %v3467, %v3466
      %v3482 = vpack.c.b16 %v3469, %v3468
      %v3483 = vpack.c.b16 %v3471, %v3470
      %v3484 = vpack.c.b16 %v3473, %v3472
      %v3485 = vpack.c.b16 %v3475, %v3474
      %v3486 = vpack.c.b16 %v3477, %v3476
      %v3487 = vpack.c.b16 %v3479, %v3478
      %3496 = vmatprep.subr.bf16.mxu0 0
      %3497 = vmatpush1.bf16.msra.mxu0 %v3480
      %3498 = vmatprep.subr.bf16.mxu0 0
      %3499 = vmatpush1.bf16.msra.mxu0 %v3481
      %3500 = vmatprep.subr.bf16.mxu0 0
      %3501 = vmatpush1.bf16.msra.mxu0 %v3482
      %3502 = vmatprep.subr.bf16.mxu0 0
      %3503 = vmatpush1.bf16.msra.mxu0 %v3483
      %3504 = vmatprep.subr.bf16.mxu0 0
      %3505 = vmatpush1.bf16.msra.mxu0 %v3484
      %3506 = vmatprep.subr.bf16.mxu0 0
      %3507 = vmatpush1.bf16.msra.mxu0 %v3485
      %3508 = vmatprep.subr.bf16.mxu0 0
      %3509 = vmatpush1.bf16.msra.mxu0 %v3486
      %3510 = vmatprep.subr.bf16.mxu0 0
      %3511 = vmatpush1.bf16.msra.mxu0 %v3487
      %3512 = vmatprep.subr.bf16.mxu0 0
      %3513 = vmatpush1.bf16.msra.mxu0 0
      %3514 = vmatprep.subr.bf16.mxu0 0
      %3515 = vmatpush1.bf16.msra.mxu0 0
      %3516 = vmatprep.subr.bf16.mxu0 0
      %3517 = vmatpush1.bf16.msra.mxu0 0
      %3518 = vmatprep.subr.bf16.mxu0 0
      %3519 = vmatpush1.bf16.msra.mxu0 0
      %3520 = vmatprep.subr.bf16.mxu0 0
      %3521 = vmatpush1.bf16.msra.mxu0 0
      %3522 = vmatprep.subr.bf16.mxu0 0
      %3523 = vmatpush1.bf16.msra.mxu0 0
      %3524 = vmatprep.subr.bf16.mxu0 0
      %3525 = vmatpush1.bf16.msra.mxu0 0
      %3526 = vmatprep.subr.bf16.mxu0 0
      %3527 = vmatpush1.bf16.msra.mxu0 0
      %3528 = vmatprep.mubr.bf16.mxu0 0
      %3529 = vmatmul.mubr.bf16.gmra.mrb[0].mxu0 %v3415
      %v3530 = vpop.f32.mrb[0].mxu0
      %v3531 = vadd.f32 0.0, %v3530
      %v3532 = vpop.f32.mrb[0].mxu0
      %v3533 = vpop.f32.mrb[0].mxu0
      %v3534 = vadd.f32 0.0, %v3533
      %v3535 = vpop.f32.mrb[0].mxu0
      %3536 = vmatprep.mubr.bf16.mxu0 0
      %3537 = vmatmul.mubr.bf16.gmra.mrb[0].mxu0 %v3416
      %v3538 = vpop.f32.mrb[0].mxu0
      %v3539 = vadd.f32 0.0, %v3538
      %v3540 = vpop.f32.mrb[0].mxu0
      %v3541 = vpop.f32.mrb[0].mxu0
      %v3542 = vadd.f32 0.0, %v3541
      %v3543 = vpop.f32.mrb[0].mxu0
      %3544 = vmatprep.mubr.bf16.mxu0 0
      %3545 = vmatmul.mubr.bf16.gmra.mrb[0].mxu0 %v3417
      %v3546 = vpop.f32.mrb[0].mxu0
      %v3547 = vadd.f32 0.0, %v3546
      %v3548 = vpop.f32.mrb[0].mxu0
      %v3549 = vpop.f32.mrb[0].mxu0
      %v3550 = vadd.f32 0.0, %v3549
      %v3551 = vpop.f32.mrb[0].mxu0
      %3552 = vmatprep.mubr.bf16.mxu0 0
      %3553 = vmatmul.mubr.bf16.gmra.mrb[0].mxu0 %v3418
      %v3554 = vpop.f32.mrb[0].mxu0
      %v3555 = vadd.f32 0.0, %v3554
      %v3556 = vpop.f32.mrb[0].mxu0
      %v3557 = vpop.f32.mrb[0].mxu0
      %v3558 = vadd.f32 0.0, %v3557
      %v3559 = vpop.f32.mrb[0].mxu0
      %3560 = vmatprep.mubr.bf16.mxu0 0
      %3561 = vmatmul.mubr.bf16.gmra.mrb[0].mxu0 %v3419
      %v3562 = vpop.f32.mrb[0].mxu0
      %v3563 = vadd.f32 0.0, %v3562
      %v3564 = vpop.f32.mrb[0].mxu0
      %v3565 = vpop.f32.mrb[0].mxu0
      %v3566 = vadd.f32 0.0, %v3565
      %v3567 = vpop.f32.mrb[0].mxu0
      %3568 = vmatprep.mubr.bf16.mxu0 0
      %3569 = vmatmul.mubr.bf16.gmra.mrb[0].mxu0 %v3420
      %v3570 = vpop.f32.mrb[0].mxu0
      %v3571 = vadd.f32 0.0, %v3570
      %v3572 = vpop.f32.mrb[0].mxu0
      %v3573 = vpop.f32.mrb[0].mxu0
      %v3574 = vadd.f32 0.0, %v3573
      %v3575 = vpop.f32.mrb[0].mxu0
      %3576 = vmatprep.mubr.bf16.mxu0 0
      %3577 = vmatmul.mubr.bf16.gmra.mrb[0].mxu0 %v3421
      %v3578 = vpop.f32.mrb[0].mxu0
      %v3579 = vadd.f32 0.0, %v3578
      %v3580 = vpop.f32.mrb[0].mxu0
      %v3581 = vpop.f32.mrb[0].mxu0
      %v3582 = vadd.f32 0.0, %v3581
      %v3583 = vpop.f32.mrb[0].mxu0
      %3584 = vmatprep.mubr.bf16.mxu0 0
      %3585 = vmatmul.mubr.bf16.gmra.mrb[0].mxu0 %v3422
      %v3586 = vpop.f32.mrb[0].mxu0
      %v3587 = vadd.f32 0.0, %v3586
      %v3588 = vpop.f32.mrb[0].mxu0
      %v3589 = vpop.f32.mrb[0].mxu0
      %v3590 = vadd.f32 0.0, %v3589
      %v3591 = vpop.f32.mrb[0].mxu0
      %3592 = vmatprep.mubr.bf16.mxu0 0
      %3593 = vmatmul.mubr.bf16.gmra.mrb[0].mxu0 %v3423
      %v3594 = vpop.f32.mrb[0].mxu0
      %v3595 = vadd.f32 0.0, %v3594
      %v3596 = vpop.f32.mrb[0].mxu0
      %v3597 = vpop.f32.mrb[0].mxu0
      %v3598 = vadd.f32 0.0, %v3597
      %v3599 = vpop.f32.mrb[0].mxu0
      %3600 = vmatprep.mubr.bf16.mxu0 0
      %3601 = vmatmul.mubr.bf16.gmra.mrb[0].mxu0 %v3424
      %v3602 = vpop.f32.mrb[0].mxu0
      %v3603 = vadd.f32 0.0, %v3602
      %v3604 = vpop.f32.mrb[0].mxu0
      %v3605 = vpop.f32.mrb[0].mxu0
      %v3606 = vadd.f32 0.0, %v3605
      %v3607 = vpop.f32.mrb[0].mxu0
      %3608 = vmatprep.mubr.bf16.mxu0 0
      %3609 = vmatmul.mubr.bf16.gmra.mrb[0].mxu0 %v3425
      %v3610 = vpop.f32.mrb[0].mxu0
      %v3611 = vadd.f32 0.0, %v3610
      %v3612 = vpop.f32.mrb[0].mxu0
      %v3613 = vpop.f32.mrb[0].mxu0
      %v3614 = vadd.f32 0.0, %v3613
      %v3615 = vpop.f32.mrb[0].mxu0
      %3616 = vmatprep.mubr.bf16.mxu0 0
      %3617 = vmatmul.mubr.bf16.gmra.mrb[0].mxu0 %v3426
      %v3618 = vpop.f32.mrb[0].mxu0
      %v3619 = vadd.f32 0.0, %v3618
      %v3620 = vpop.f32.mrb[0].mxu0
      %v3621 = vpop.f32.mrb[0].mxu0
      %v3622 = vadd.f32 0.0, %v3621
      %v3623 = vpop.f32.mrb[0].mxu0
      %3624 = vmatprep.mubr.bf16.mxu0 0
      %3625 = vmatmul.mubr.bf16.gmra.mrb[0].mxu0 %v3427
      %v3626 = vpop.f32.mrb[0].mxu0
      %v3627 = vadd.f32 0.0, %v3626
      %v3628 = vpop.f32.mrb[0].mxu0
      %v3629 = vpop.f32.mrb[0].mxu0
      %v3630 = vadd.f32 0.0, %v3629
      %v3631 = vpop.f32.mrb[0].mxu0
      %3632 = vmatprep.mubr.bf16.mxu0 0
      %3633 = vmatmul.mubr.bf16.gmra.mrb[0].mxu0 %v3428
      %v3634 = vpop.f32.mrb[0].mxu0
      %v3635 = vadd.f32 0.0, %v3634
      %v3636 = vpop.f32.mrb[0].mxu0
      %v3637 = vpop.f32.mrb[0].mxu0
      %v3638 = vadd.f32 0.0, %v3637
      %v3639 = vpop.f32.mrb[0].mxu0
      %3640 = vmatprep.mubr.bf16.mxu0 0
      %3641 = vmatmul.mubr.bf16.gmra.mrb[0].mxu0 %v3429
      %v3642 = vpop.f32.mrb[0].mxu0
      %v3643 = vadd.f32 0.0, %v3642
      %v3644 = vpop.f32.mrb[0].mxu0
      %v3645 = vpop.f32.mrb[0].mxu0
      %v3646 = vadd.f32 0.0, %v3645
      %v3647 = vpop.f32.mrb[0].mxu0
      %3648 = vmatprep.mubr.bf16.mxu0 0
      %3649 = vmatmul.mubr.bf16.gmra.mrb[0].mxu0 %v3430
      %v3650 = vpop.f32.mrb[0].mxu0
      %v3651 = vadd.f32 0.0, %v3650
      %v3652 = vpop.f32.mrb[0].mxu0
      %v3653 = vpop.f32.mrb[0].mxu0
      %v3654 = vadd.f32 0.0, %v3653
      %v3655 = vpop.f32.mrb[0].mxu0
      %3656 = vdwg.mxu0
      %v3657 = vld [vmem:[#allocation3] sm:$0xff]
      %v3658 = vld [vmem:[#allocation3 + $0x8] sm:$0xff]
      %v3659 = vld [vmem:[#allocation3 + $0x10] sm:$0xff]
      %v3660 = vld [vmem:[#allocation3 + $0x18] sm:$0xff]
      %v3661 = vld [vmem:[#allocation3 + $0x20] sm:$0xff]
      %v3662 = vld [vmem:[#allocation3 + $0x28] sm:$0xff]
      %v3663 = vld [vmem:[#allocation3 + $0x30] sm:$0xff]
      %v3664 = vld [vmem:[#allocation3 + $0x38] sm:$0xff]
      %v3665 = vld [vmem:[#allocation3 + $0x40] sm:$0xff]
      %v3666 = vld [vmem:[#allocation3 + $0x48] sm:$0xff]
      %v3667 = vld [vmem:[#allocation3 + $0x50] sm:$0xff]
      %v3668 = vld [vmem:[#allocation3 + $0x58] sm:$0xff]
      %v3669 = vld [vmem:[#allocation3 + $0x60] sm:$0xff]
      %v3670 = vld [vmem:[#allocation3 + $0x68] sm:$0xff]
      %v3671 = vld [vmem:[#allocation3 + $0x70] sm:$0xff]
      %v3672 = vld [vmem:[#allocation3 + $0x78] sm:$0xff]
      %v3673 = vld [vmem:[#allocation3 + $0x80] sm:$0xff]
      %v3674 = vld [vmem:[#allocation3 + $0x88] sm:$0xff]
      %v3675 = vld [vmem:[#allocation3 + $0x90] sm:$0xff]
      %v3676 = vld [vmem:[#allocation3 + $0x98] sm:$0xff]
      %v3677 = vld [vmem:[#allocation3 + $0xa0] sm:$0xff]
      %v3678 = vld [vmem:[#allocation3 + $0xa8] sm:$0xff]
      %v3679 = vld [vmem:[#allocation3 + $0xb0] sm:$0xff]
      %v3680 = vld [vmem:[#allocation3 + $0xb8] sm:$0xff]
      %v3681 = vld [vmem:[#allocation3 + $0xc0] sm:$0xff]
      %v3682 = vld [vmem:[#allocation3 + $0xc8] sm:$0xff]
      %v3683 = vld [vmem:[#allocation3 + $0xd0] sm:$0xff]
      %v3684 = vld [vmem:[#allocation3 + $0xd8] sm:$0xff]
      %v3685 = vld [vmem:[#allocation3 + $0xe0] sm:$0xff]
      %v3686 = vld [vmem:[#allocation3 + $0xe8] sm:$0xff]
      %v3687 = vld [vmem:[#allocation3 + $0xf0] sm:$0xff]
      %v3688 = vld [vmem:[#allocation3 + $0xf8] sm:$0xff]
      %v3689 = vadd.f32 %v3657, %v3531
      %v3690 = vadd.f32 %v3658, %v3534
      %v3691 = vadd.f32 %v3659, %v3539
      %v3692 = vadd.f32 %v3660, %v3542
      %v3693 = vadd.f32 %v3661, %v3547
      %v3694 = vadd.f32 %v3662, %v3550
      %v3695 = vadd.f32 %v3663, %v3555
      %v3696 = vadd.f32 %v3664, %v3558
      %v3697 = vadd.f32 %v3665, %v3563
      %v3698 = vadd.f32 %v3666, %v3566
      %v3699 = vadd.f32 %v3667, %v3571
      %v3700 = vadd.f32 %v3668, %v3574
      %v3701 = vadd.f32 %v3669, %v3579
      %v3702 = vadd.f32 %v3670, %v3582
      %v3703 = vadd.f32 %v3671, %v3587
      %v3704 = vadd.f32 %v3672, %v3590
      %v3705 = vadd.f32 %v3673, %v3595
      %v3706 = vadd.f32 %v3674, %v3598
      %v3707 = vadd.f32 %v3675, %v3603
      %v3708 = vadd.f32 %v3676, %v3606
      %v3709 = vadd.f32 %v3677, %v3611
      %v3710 = vadd.f32 %v3678, %v3614
      %v3711 = vadd.f32 %v3679, %v3619
      %v3712 = vadd.f32 %v3680, %v3622
      %v3713 = vadd.f32 %v3681, %v3627
      %v3714 = vadd.f32 %v3682, %v3630
      %v3715 = vadd.f32 %v3683, %v3635
      %v3716 = vadd.f32 %v3684, %v3638
      %v3717 = vadd.f32 %v3685, %v3643
      %v3718 = vadd.f32 %v3686, %v3646
      %v3719 = vadd.f32 %v3687, %v3651
      %v3720 = vadd.f32 %v3688, %v3654
      %3721 = vst [vmem:[#allocation3] sm:$0xff] %v3689
      %3722 = vst [vmem:[#allocation3 + $0x8] sm:$0xff] %v3690
      %3723 = vst [vmem:[#allocation3 + $0x10] sm:$0xff] %v3691
      %3724 = vst [vmem:[#allocation3 + $0x18] sm:$0xff] %v3692
      %3725 = vst [vmem:[#allocation3 + $0x20] sm:$0xff] %v3693
      %3726 = vst [vmem:[#allocation3 + $0x28] sm:$0xff] %v3694
      %3727 = vst [vmem:[#allocation3 + $0x30] sm:$0xff] %v3695
      %3728 = vst [vmem:[#allocation3 + $0x38] sm:$0xff] %v3696
      %3729 = vst [vmem:[#allocation3 + $0x40] sm:$0xff] %v3697
      %3730 = vst [vmem:[#allocation3 + $0x48] sm:$0xff] %v3698
      %3731 = vst [vmem:[#allocation3 + $0x50] sm:$0xff] %v3699
      %3732 = vst [vmem:[#allocation3 + $0x58] sm:$0xff] %v3700
      %3733 = vst [vmem:[#allocation3 + $0x60] sm:$0xff] %v3701
      %3734 = vst [vmem:[#allocation3 + $0x68] sm:$0xff] %v3702
      %3735 = vst [vmem:[#allocation3 + $0x70] sm:$0xff] %v3703
      %3736 = vst [vmem:[#allocation3 + $0x78] sm:$0xff] %v3704
      %3737 = vst [vmem:[#allocation3 + $0x80] sm:$0xff] %v3705
      %3738 = vst [vmem:[#allocation3 + $0x88] sm:$0xff] %v3706
      %3739 = vst [vmem:[#allocation3 + $0x90] sm:$0xff] %v3707
      %3740 = vst [vmem:[#allocation3 + $0x98] sm:$0xff] %v3708
      %3741 = vst [vmem:[#allocation3 + $0xa0] sm:$0xff] %v3709
      %3742 = vst [vmem:[#allocation3 + $0xa8] sm:$0xff] %v3710
      %3743 = vst [vmem:[#allocation3 + $0xb0] sm:$0xff] %v3711
      %3744 = vst [vmem:[#allocation3 + $0xb8] sm:$0xff] %v3712
      %3745 = vst [vmem:[#allocation3 + $0xc0] sm:$0xff] %v3713
      %3746 = vst [vmem:[#allocation3 + $0xc8] sm:$0xff] %v3714
      %3747 = vst [vmem:[#allocation3 + $0xd0] sm:$0xff] %v3715
      %3748 = vst [vmem:[#allocation3 + $0xd8] sm:$0xff] %v3716
      %3749 = vst [vmem:[#allocation3 + $0xe0] sm:$0xff] %v3717
      %3750 = vst [vmem:[#allocation3 + $0xe8] sm:$0xff] %v3718
      %3751 = vst [vmem:[#allocation3 + $0xf0] sm:$0xff] %v3719
      %3752 = vst [vmem:[#allocation3 + $0xf8] sm:$0xff] %v3720
      %v3753 = vld [vmem:[#allocation3] sm:$0xff]
      %v3754 = vld [vmem:[#allocation3 + $0x8] sm:$0xff]
      %v3755 = vld [vmem:[#allocation3 + $0x10] sm:$0xff]
      %v3756 = vld [vmem:[#allocation3 + $0x18] sm:$0xff]
      %v3757 = vld [vmem:[#allocation3 + $0x20] sm:$0xff]
      %v3758 = vld [vmem:[#allocation3 + $0x28] sm:$0xff]
      %v3759 = vld [vmem:[#allocation3 + $0x30] sm:$0xff]
      %v3760 = vld [vmem:[#allocation3 + $0x38] sm:$0xff]
      %v3761 = vld [vmem:[#allocation3 + $0x40] sm:$0xff]
      %v3762 = vld [vmem:[#allocation3 + $0x48] sm:$0xff]
      %v3763 = vld [vmem:[#allocation3 + $0x50] sm:$0xff]
      %v3764 = vld [vmem:[#allocation3 + $0x58] sm:$0xff]
      %v3765 = vld [vmem:[#allocation3 + $0x60] sm:$0xff]
      %v3766 = vld [vmem:[#allocation3 + $0x68] sm:$0xff]
      %v3767 = vld [vmem:[#allocation3 + $0x70] sm:$0xff]
      %v3768 = vld [vmem:[#allocation3 + $0x78] sm:$0xff]
      %v3769 = vld [vmem:[#allocation3 + $0x80] sm:$0xff]
      %v3770 = vld [vmem:[#allocation3 + $0x88] sm:$0xff]
      %v3771 = vld [vmem:[#allocation3 + $0x90] sm:$0xff]
      %v3772 = vld [vmem:[#allocation3 + $0x98] sm:$0xff]
      %v3773 = vld [vmem:[#allocation3 + $0xa0] sm:$0xff]
      %v3774 = vld [vmem:[#allocation3 + $0xa8] sm:$0xff]
      %v3775 = vld [vmem:[#allocation3 + $0xb0] sm:$0xff]
      %v3776 = vld [vmem:[#allocation3 + $0xb8] sm:$0xff]
      %v3777 = vld [vmem:[#allocation3 + $0xc0] sm:$0xff]
      %v3778 = vld [vmem:[#allocation3 + $0xc8] sm:$0xff]
      %v3779 = vld [vmem:[#allocation3 + $0xd0] sm:$0xff]
      %v3780 = vld [vmem:[#allocation3 + $0xd8] sm:$0xff]
      %v3781 = vld [vmem:[#allocation3 + $0xe0] sm:$0xff]
      %v3782 = vld [vmem:[#allocation3 + $0xe8] sm:$0xff]
      %v3783 = vld [vmem:[#allocation3 + $0xf0] sm:$0xff]
      %v3784 = vld [vmem:[#allocation3 + $0xf8] sm:$0xff]
      %v3785 = vpack.c.bf16 %v3754, %v3753
      %v3786 = vpack.c.bf16 %v3756, %v3755
      %v3787 = vpack.c.bf16 %v3758, %v3757
      %v3788 = vpack.c.bf16 %v3760, %v3759
      %v3789 = vpack.c.bf16 %v3762, %v3761
      %v3790 = vpack.c.bf16 %v3764, %v3763
      %v3791 = vpack.c.bf16 %v3766, %v3765
      %v3792 = vpack.c.bf16 %v3768, %v3767
      %v3793 = vpack.c.bf16 %v3770, %v3769
      %v3794 = vpack.c.bf16 %v3772, %v3771
      %v3795 = vpack.c.bf16 %v3774, %v3773
      %v3796 = vpack.c.bf16 %v3776, %v3775
      %v3797 = vpack.c.bf16 %v3778, %v3777
      %v3798 = vpack.c.bf16 %v3780, %v3779
      %v3799 = vpack.c.bf16 %v3782, %v3781
      %v3800 = vpack.c.bf16 %v3784, %v3783
      %v3817 = vunpack.c.l.b16 %v3785
      %v3818 = vunpack.c.h.b16 %v3785
      %v3819 = vunpack.c.l.b16 %v3786
      %v3820 = vunpack.c.h.b16 %v3786
      %v3821 = vunpack.c.l.b16 %v3787
      %v3822 = vunpack.c.h.b16 %v3787
      %v3823 = vunpack.c.l.b16 %v3788
      %v3824 = vunpack.c.h.b16 %v3788
      %v3825 = vunpack.c.l.b16 %v3789
      %v3826 = vunpack.c.h.b16 %v3789
      %v3827 = vunpack.c.l.b16 %v3790
      %v3828 = vunpack.c.h.b16 %v3790
      %v3829 = vunpack.c.l.b16 %v3791
      %v3830 = vunpack.c.h.b16 %v3791
      %v3831 = vunpack.c.l.b16 %v3792
      %v3832 = vunpack.c.h.b16 %v3792
      %v3833 = vunpack.c.l.b16 %v3793
      %v3834 = vunpack.c.h.b16 %v3793
      %v3835 = vunpack.c.l.b16 %v3794
      %v3836 = vunpack.c.h.b16 %v3794
      %v3837 = vunpack.c.l.b16 %v3795
      %v3838 = vunpack.c.h.b16 %v3795
      %v3839 = vunpack.c.l.b16 %v3796
      %v3840 = vunpack.c.h.b16 %v3796
      %v3841 = vunpack.c.l.b16 %v3797
      %v3842 = vunpack.c.h.b16 %v3797
      %v3843 = vunpack.c.l.b16 %v3798
      %v3844 = vunpack.c.h.b16 %v3798
      %v3845 = vunpack.c.l.b16 %v3799
      %v3846 = vunpack.c.h.b16 %v3799
      %v3847 = vunpack.c.l.b16 %v3800
      %v3848 = vunpack.c.h.b16 %v3800
      %v3849 = vpack.c.b16 %v3817, %v3817
      %v3850 = vpack.c.b16 %v3818, %v3818
      %v3851 = vpack.c.b16 %v3819, %v3819
      %v3852 = vpack.c.b16 %v3820, %v3820
      %v3853 = vpack.c.b16 %v3821, %v3821
      %v3854 = vpack.c.b16 %v3822, %v3822
      %v3855 = vpack.c.b16 %v3823, %v3823
      %v3856 = vpack.c.b16 %v3824, %v3824
      %v3857 = vpack.c.b16 %v3825, %v3825
      %v3858 = vpack.c.b16 %v3826, %v3826
      %v3859 = vpack.c.b16 %v3827, %v3827
      %v3860 = vpack.c.b16 %v3828, %v3828
      %v3861 = vpack.c.b16 %v3829, %v3829
      %v3862 = vpack.c.b16 %v3830, %v3830
      %v3863 = vpack.c.b16 %v3831, %v3831
      %v3864 = vpack.c.b16 %v3832, %v3832
      %v3865 = vpack.c.b16 %v3833, %v3833
      %v3866 = vpack.c.b16 %v3834, %v3834
      %v3867 = vpack.c.b16 %v3835, %v3835
      %v3868 = vpack.c.b16 %v3836, %v3836
      %v3869 = vpack.c.b16 %v3837, %v3837
      %v3870 = vpack.c.b16 %v3838, %v3838
      %v3871 = vpack.c.b16 %v3839, %v3839
      %v3872 = vpack.c.b16 %v3840, %v3840
      %v3873 = vpack.c.b16 %v3841, %v3841
      %v3874 = vpack.c.b16 %v3842, %v3842
      %v3875 = vpack.c.b16 %v3843, %v3843
      %v3876 = vpack.c.b16 %v3844, %v3844
      %v3877 = vpack.c.b16 %v3845, %v3845
      %v3878 = vpack.c.b16 %v3846, %v3846
      %v3879 = vpack.c.b16 %v3847, %v3847
      %v3880 = vpack.c.b16 %v3848, %v3848
      %3913 = vst [vmem:[%s231] sm:$0xf] %v3849
      %3914 = vst [vmem:[%s231 + $0x4] sm:$0xf] %v3850
      %3915 = vst [vmem:[%s231 + $0x8] sm:$0xf] %v3851
      %3916 = vst [vmem:[%s231 + $0xc] sm:$0xf] %v3852
      %3917 = vst [vmem:[%s231 + $0x10] sm:$0xf] %v3853
      %3918 = vst [vmem:[%s231 + $0x14] sm:$0xf] %v3854
      %3919 = vst [vmem:[%s231 + $0x18] sm:$0xf] %v3855
      %3920 = vst [vmem:[%s231 + $0x1c] sm:$0xf] %v3856
      %3921 = vst [vmem:[%s231 + $0x20] sm:$0xf] %v3857
      %3922 = vst [vmem:[%s231 + $0x24] sm:$0xf] %v3858
      %3923 = vst [vmem:[%s231 + $0x28] sm:$0xf] %v3859
      %3924 = vst [vmem:[%s231 + $0x2c] sm:$0xf] %v3860
      %3925 = vst [vmem:[%s231 + $0x30] sm:$0xf] %v3861
      %3926 = vst [vmem:[%s231 + $0x34] sm:$0xf] %v3862
      %3927 = vst [vmem:[%s231 + $0x38] sm:$0xf] %v3863
      %3928 = vst [vmem:[%s231 + $0x3c] sm:$0xf] %v3864
      %3929 = vst [vmem:[%s231 + $0x40] sm:$0xf] %v3865
      %3930 = vst [vmem:[%s231 + $0x44] sm:$0xf] %v3866
      %3931 = vst [vmem:[%s231 + $0x48] sm:$0xf] %v3867
      %3932 = vst [vmem:[%s231 + $0x4c] sm:$0xf] %v3868
      %3933 = vst [vmem:[%s231 + $0x50] sm:$0xf] %v3869
      %3934 = vst [vmem:[%s231 + $0x54] sm:$0xf] %v3870
      %3935 = vst [vmem:[%s231 + $0x58] sm:$0xf] %v3871
      %3936 = vst [vmem:[%s231 + $0x5c] sm:$0xf] %v3872
      %3937 = vst [vmem:[%s231 + $0x60] sm:$0xf] %v3873
      %3938 = vst [vmem:[%s231 + $0x64] sm:$0xf] %v3874
      %3939 = vst [vmem:[%s231 + $0x68] sm:$0xf] %v3875
      %3940 = vst [vmem:[%s231 + $0x6c] sm:$0xf] %v3876
      %3941 = vst [vmem:[%s231 + $0x70] sm:$0xf] %v3877
      %3942 = vst [vmem:[%s231 + $0x74] sm:$0xf] %v3878
      %3943 = vst [vmem:[%s231 + $0x78] sm:$0xf] %v3879
      %3944 = vst [vmem:[%s231 + $0x7c] sm:$0xf] %v3880
      %v3945 = vadd.f32 %v3753, %v3754
      %v3946 = vadd.f32 %v3945, %v3755
      %v3947 = vadd.f32 %v3946, %v3756
      %v3948 = vadd.f32 %v3947, %v3757
      %v3949 = vadd.f32 %v3948, %v3758
      %v3950 = vadd.f32 %v3949, %v3759
      %v3951 = vadd.f32 %v3950, %v3760
      %v3952 = vadd.f32 %v3951, %v3761
      %v3953 = vadd.f32 %v3952, %v3762
      %v3954 = vadd.f32 %v3953, %v3763
      %v3955 = vadd.f32 %v3954, %v3764
      %v3956 = vadd.f32 %v3955, %v3765
      %v3957 = vadd.f32 %v3956, %v3766
      %v3958 = vadd.f32 %v3957, %v3767
      %v3959 = vadd.f32 %v3958, %v3768
      %v3960 = vadd.f32 %v3959, %v3769
      %v3961 = vadd.f32 %v3960, %v3770
      %v3962 = vadd.f32 %v3961, %v3771
      %v3963 = vadd.f32 %v3962, %v3772
      %v3964 = vadd.f32 %v3963, %v3773
      %v3965 = vadd.f32 %v3964, %v3774
      %v3966 = vadd.f32 %v3965, %v3775
      %v3967 = vadd.f32 %v3966, %v3776
      %v3968 = vadd.f32 %v3967, %v3777
      %v3969 = vadd.f32 %v3968, %v3778
      %v3970 = vadd.f32 %v3969, %v3779
      %v3971 = vadd.f32 %v3970, %v3780
      %v3972 = vadd.f32 %v3971, %v3781
      %v3973 = vadd.f32 %v3972, %v3782
      %v3974 = vadd.f32 %v3973, %v3783
      %v3975 = vadd.f32 %v3974, %v3784
      %v3976 = vrot.slane %v3975, 4
      %v3977 = vadd.f32 %v3975, %v3976
      %v3978 = vrot.slane %v3977, 2
      %v3979 = vadd.f32 %v3977, %v3978
      %v3980 = vrot.slane %v3979, 1
      %v3981 = vadd.f32 %v3979, %v3980
      %v3982 = vmul.f32 %v3753, %v3753
      %v3983 = vmul.f32 %v3754, %v3754
      %v3984 = vmul.f32 %v3755, %v3755
      %v3985 = vmul.f32 %v3756, %v3756
      %v3986 = vmul.f32 %v3757, %v3757
      %v3987 = vmul.f32 %v3758, %v3758
      %v3988 = vmul.f32 %v3759, %v3759
      %v3989 = vmul.f32 %v3760, %v3760
      %v3990 = vmul.f32 %v3761, %v3761
      %v3991 = vmul.f32 %v3762, %v3762
      %v3992 = vmul.f32 %v3763, %v3763
      %v3993 = vmul.f32 %v3764, %v3764
      %v3994 = vmul.f32 %v3765, %v3765
      %v3995 = vmul.f32 %v3766, %v3766
      %v3996 = vmul.f32 %v3767, %v3767
      %v3997 = vmul.f32 %v3768, %v3768
      %v3998 = vmul.f32 %v3769, %v3769
      %v3999 = vmul.f32 %v3770, %v3770
      %v4000 = vmul.f32 %v3771, %v3771
      %v4001 = vmul.f32 %v3772, %v3772
      %v4002 = vmul.f32 %v3773, %v3773
      %v4003 = vmul.f32 %v3774, %v3774
      %v4004 = vmul.f32 %v3775, %v3775
      %v4005 = vmul.f32 %v3776, %v3776
      %v4006 = vmul.f32 %v3777, %v3777
      %v4007 = vmul.f32 %v3778, %v3778
      %v4008 = vmul.f32 %v3779, %v3779
      %v4009 = vmul.f32 %v3780, %v3780
      %v4010 = vmul.f32 %v3781, %v3781
      %v4011 = vmul.f32 %v3782, %v3782
      %v4012 = vmul.f32 %v3783, %v3783
      %v4013 = vmul.f32 %v3784, %v3784
      %v4014 = vadd.f32 %v3982, %v3983
      %v4015 = vadd.f32 %v4014, %v3984
      %v4016 = vadd.f32 %v4015, %v3985
      %v4017 = vadd.f32 %v4016, %v3986
      %v4018 = vadd.f32 %v4017, %v3987
      %v4019 = vadd.f32 %v4018, %v3988
      %v4020 = vadd.f32 %v4019, %v3989
      %v4021 = vadd.f32 %v4020, %v3990
      %v4022 = vadd.f32 %v4021, %v3991
      %v4023 = vadd.f32 %v4022, %v3992
      %v4024 = vadd.f32 %v4023, %v3993
      %v4025 = vadd.f32 %v4024, %v3994
      %v4026 = vadd.f32 %v4025, %v3995
      %v4027 = vadd.f32 %v4026, %v3996
      %v4028 = vadd.f32 %v4027, %v3997
      %v4029 = vadd.f32 %v4028, %v3998
      %v4030 = vadd.f32 %v4029, %v3999
      %v4031 = vadd.f32 %v4030, %v4000
      %v4032 = vadd.f32 %v4031, %v4001
      %v4033 = vadd.f32 %v4032, %v4002
      %v4034 = vadd.f32 %v4033, %v4003
      %v4035 = vadd.f32 %v4034, %v4004
      %v4036 = vadd.f32 %v4035, %v4005
      %v4037 = vadd.f32 %v4036, %v4006
      %v4038 = vadd.f32 %v4037, %v4007
      %v4039 = vadd.f32 %v4038, %v4008
      %v4040 = vadd.f32 %v4039, %v4009
      %v4041 = vadd.f32 %v4040, %v4010
      %v4042 = vadd.f32 %v4041, %v4011
      %v4043 = vadd.f32 %v4042, %v4012
      %v4044 = vadd.f32 %v4043, %v4013
      %v4045 = vrot.slane %v4044, 4
      %v4046 = vadd.f32 %v4044, %v4045
      %v4047 = vrot.slane %v4046, 2
      %v4048 = vadd.f32 %v4046, %v4047
      %v4049 = vrot.slane %v4048, 1
      %v4050 = vadd.f32 %v4048, %v4049
      %v4051 = vlaneseq
      %v4052 = vshrl.u32 %v4051, 7
      %vm4053 = vcmp.eq.s32.totalorder %v4052, 0
      %v4054 = vsel %vm4053, %v3981, 0.0
      %vm4055 = vcmp.eq.s32.totalorder %v4052, 1
      %v4056 = vsel %vm4055, %v4050, 0.0
      %v4057 = vadd.f32 %v4054, %v4056
      %4058 = vst [vmem:[%s235] sm:$0xff] %v4057
      %p4059 = scmp.lt.s32.totalorder %s17, 1
      %s4060 = scalar_select %p4059, %s17, 1
      %s4061 = smul.addr %s4060, 32
      %s4062 = smul.addr %s4061, 4
      %s4063 = scalar_lea.vmem %s4, %s4062
      %p4064 = scmp.lt.s32.totalorder %s17, 1
      %s4065 = scalar_select %p4064, %s17, 1
      %s4066 = smul.addr %s4065, 8
      %s4067 = scalar_lea.vmem %s5, %s4066
      // Predicated region
      $region37: #{residual_block_forward.6} parent=35 // pred_check
        %p4068 = pneg %p124
      $region38: #{residual_block_forward.6} parent=35 // pred_check_branch
        %4070 = sbr.rel (%p4068) target = $region40
      $region39: #{residual_block_forward.6} parent=35 // pred_region
        _
      $region40: #{residual_block_forward.6} parent=35 // pred_fallthru
        _
      // Predicated region
      $region41: #{residual_block_forward.6} parent=35 // pred_check
        %p4071 = pneg %p150
      $region42: #{residual_block_forward.6} parent=35 // pred_check_branch
        %4073 = sbr.rel (%p4071) target = $region44
      $region43: #{residual_block_forward.6} parent=35 // pred_region
        _
      $region44: #{residual_block_forward.6} parent=35 // pred_fallthru
        _
    $region36: #{residual_block_forward.6} parent=5 // pred_fallthru
      _
    %p4074 = scmp.le.s32.totalorder 2, %s12
    // Predicated region
    $region45: #{residual_block_forward.6} parent=5 // pred_check
      %p4075 = pneg %p4074
    $region46: #{residual_block_forward.6} parent=5 // pred_check_branch
      %4077 = sbr.rel (%p4075) target = $region48
    $region47: #{residual_block_forward.6} parent=5 // pred_region
      %s4078 = ssub.s32 %s12, 2
      // Predicated region
      $region49: #{residual_block_forward.6} parent=47 // pred_check
        %p4079 = pneg %p130
      $region50: #{residual_block_forward.6} parent=47 // pred_check_branch
        %4081 = sbr.rel (%p4079) target = $region52
      $region51: #{residual_block_forward.6} parent=47 // pred_region
        %p4082 = scmp.lt.s32.totalorder %s18, 1
        %s4083 = scalar_select %p4082, %s18, 1
        %s4084 = smul.addr %s4083, 32
        %s4085 = smul.addr %s4084, 4
        %s4086 = scalar_lea.vmem %s4, %s4085
      $region52: #{residual_block_forward.6} parent=47 // pred_fallthru
        _
      // Predicated region
      $region53: #{residual_block_forward.6} parent=47 // pred_check
        %p4087 = pneg %p156
      $region54: #{residual_block_forward.6} parent=47 // pred_check_branch
        %4089 = sbr.rel (%p4087) target = $region56
      $region55: #{residual_block_forward.6} parent=47 // pred_region
        %p4090 = scmp.lt.s32.totalorder %s18, 1
        %s4091 = scalar_select %p4090, %s18, 1
        %s4092 = smul.addr %s4091, 8
        %s4093 = scalar_lea.vmem %s5, %s4092
      $region56: #{residual_block_forward.6} parent=47 // pred_fallthru
        _
    $region48: #{residual_block_forward.6} parent=5 // pred_fallthru
      _
  $region6: #{residual_block_forward.6} parent=0 // loop_footer
    %s16 = sadd.s32 1, %s12
  $region7: #{residual_block_forward.6} parent=0 // loop_footer_branch
    %11 = sbr.rel target = $region3
  $region8: #{residual_block_forward.6} parent=0 // loop_exit
    _

</llo_original>
